<compile_context>
chip_gen: v6e
topology: v6e:2x2x1
jax: 0.10.0
libtpu: 0.0.40
codegen_flags: <defaults>
</compile_context>

<pallas_src>
import functools
import math

import jax
import jax.numpy as jnp
from jax.experimental import pallas as pl
from jax.experimental.pallas import tpu as pltpu


def _gelu(x):
    # TODO(synk): PyTorch nn.GELU() defaults to the exact erf form; erf lowering
    # is not guaranteed in Mosaic across generations, so the tanh approximation
    # (~1e-3 abs) is used.
    c = math.sqrt(2.0 / math.pi)
    return 0.5 * x * (1.0 + jnp.tanh(c * (x + 0.044715 * x * x * x)))


def conditional_mlp_kernel(*refs, n_blocks, has_class):
    """One batch tile of the ConditionalMLP forward, in (feature, batch) layout."""
    if has_class:
        (xt_ref, ce_ref, fx_ref, ft_ref, w0_ref, b0_ref,
         wb_ref, bb_ref, wf_ref, bf_ref, out_ref) = refs
    else:
        (xt_ref, fx_ref, ft_ref, w0_ref, b0_ref,
         wb_ref, bb_ref, wf_ref, bf_ref, out_ref) = refs
        ce_ref = None

    xt = xt_ref[...]            # (3, TB): rows = x[:,0], x[:,1], t
    fx = fx_ref[...]            # (half, 1), already holds input_scale * freqs
    ft = ft_ref[...]            # (half, 1)

    def sinusoidal(freqs, row):
        arg = freqs * row                              # (half, TB) outer product
        return [jnp.sin(arg), jnp.cos(arg)]

    # Concat order matches PyTorch: [x1_emb, x2_emb, t_emb, class_emb].
    pieces = (sinusoidal(fx, xt[0:1, :])
              + sinusoidal(fx, xt[1:2, :])
              + sinusoidal(ft, xt[2:3, :]))
    if has_class:
        pieces.append(ce_ref[...])
    emb = jnp.concatenate(pieces, axis=0)              # (3*emb[+emb], TB) sublane stack

    # joint_mlp first Linear + GELU: single MXU dot over the full concat width.
    h = _gelu(jnp.dot(w0_ref[...], emb, preferred_element_type=jnp.float32)
              + b0_ref[...])                            # (hidden, TB)

    # residual Blocks: h = h + GELU(W_i^T @ h + b_i)
    for i in range(n_blocks):
        h = h + _gelu(jnp.dot(wb_ref[i], h, preferred_element_type=jnp.float32)
                      + bb_ref[i])

    # final Linear(hidden -> 2): lane-dense (2, TB) store.
    out_ref[...] = (jnp.dot(wf_ref[...], h, preferred_element_type=jnp.float32)
                    + bf_ref[...]).astype(out_ref.dtype)


def init_params(key, emb_size, hidden_size, hidden_layers, num_classes=1):
    """Deterministic synthetic parameters (PyTorch Linear-style uniform init),
    stored transposed as (out, in) so the kernel computes W^T @ h^T."""
    concat = 4 * emb_size
    ks = jax.random.split(key, 3 + hidden_layers)

    def linear_t(k, fan_in, fan_out):
        kw, kb = jax.random.split(k)
        lim = 1.0 / math.sqrt(fan_in)
        w = jax.random.uniform(kw, (fan_out, fan_in), jnp.float32, -lim, lim)
        b = jax.random.uniform(kb, (fan_out, 1), jnp.float32, -lim, lim)
        return w, b

    w0, b0 = linear_t(ks[0], concat, hidden_size)            # (hidden, 4*emb)
    wbs, bbs = [], []
    for i in range(hidden_layers):
        w, b = linear_t(ks[1 + i], hidden_size, hidden_size)
        wbs.append(w)
        bbs.append(b)
    wf, bf = linear_t(ks[1 + hidden_layers], hidden_size, 2)  # (2, hidden)
    class_table = jax.random.normal(ks[2 + hidden_layers],
                                    (num_classes, emb_size), jnp.float32)
    return dict(w0=w0, b0=b0,
                wb=jnp.stack(wbs), bb=jnp.stack(bbs),
                wf=wf, bf=bf, class_table=class_table)


def conditional_mlp(x, t, params, class_labels=None, *,
                    emb_size=128, hidden_layers=3, input_scale=25.0,
                    batch_tile=256):
    B = x.shape[0]
    half = emb_size // 2
    hidden = params["w0"].shape[0]
    has_class = class_labels is not None

    TB = batch_tile
    B_pad = pl.cdiv(B, TB) * TB
    pad = B_pad - B

    # Lane-dense (3, B) activation slab: rows = x[:,0], x[:,1], t.
    xt = jnp.concatenate([x.astype(jnp.float32).T,
                          t.reshape(1, B).astype(jnp.float32)], axis=0)
    if pad:
        xt = jnp.pad(xt, ((0, 0), (0, pad)))

    # Frequency columns (trace-time constants); input_scale folded into fx.
    log_step = math.log(10000.0) / (half - 1)
    base = jnp.exp(-log_step * jnp.arange(half, dtype=jnp.float32))[:, None]
    fx = base * input_scale                               # (half, 1)
    ft = base                                             # (half, 1)

    w0 = params["w0"]                                     # (hidden, 4*emb) == W0^T
    w0_used = w0 if has_class else w0[:, :3 * emb_size]   # drop zero-class columns
    concat = w0_used.shape[1]

    def act_spec(rows):                     # pipelined per-batch-tile block
        return pl.BlockSpec((rows, TB), lambda i: (0, i))

    def resident(shape):                    # same block every grid step -> stays in VMEM
        return pl.BlockSpec(shape, lambda i, _s=len(shape): (0,) * _s)

    in_specs = [act_spec(3)]
    inputs = [xt]
    if has_class:
        ce = jnp.take(params["class_table"], class_labels, axis=0)
        ce = ce.astype(jnp.float32).T                     # (emb, B)
        if pad:
            ce = jnp.pad(ce, ((0, 0), (0, pad)))
        in_specs.append(act_spec(emb_size))
        inputs.append(ce)

    in_specs += [resident((half, 1)), resident((half, 1)),
                 resident((hidden, concat)), resident((hidden, 1)),
                 resident((hidden_layers, hidden, hidden)),
                 resident((hidden_layers, hidden, 1)),
                 resident((2, hidden)), resident((2, 1))]
    inputs += [fx, ft, w0_used, params["b0"], params["wb"], params["bb"],
               params["wf"], params["bf"]]

    kernel = functools.partial(conditional_mlp_kernel,
                               n_blocks=hidden_layers, has_class=has_class)

    out_t = pl.pallas_call(
        kernel,
        out_shape=jax.ShapeDtypeStruct((2, B_pad), jnp.float32),
        grid=(B_pad // TB,),
        in_specs=in_specs,
        out_specs=pl.BlockSpec((2, TB), lambda i: (0, i)),
        compiler_params=pltpu.CompilerParams(
            dimension_semantics=("parallel",)),
    )(*inputs)

    return out_t[:, :B].T                                 # (B, 2)


def reference(x, t, params, class_labels, *, emb_size, hidden_layers,
              input_scale=25.0):
    """Pure-JAX reference matching the PyTorch forward (tanh-GELU)."""
    half = emb_size // 2
    log_step = math.log(10000.0) / (half - 1)
    freqs = jnp.exp(-log_step * jnp.arange(half, dtype=jnp.float32))

    def sin_emb(v, scale):
        arg = (v * scale)[:, None] * freqs[None, :]
        return jnp.concatenate([jnp.sin(arg), jnp.cos(arg)], axis=-1)

    x1 = sin_emb(x[:, 0], input_scale)
    x2 = sin_emb(x[:, 1], input_scale)
    te = sin_emb(t, 1.0)
    if class_labels is None:
        ce = jnp.zeros((x.shape[0], emb_size), jnp.float32)
    else:
        ce = jnp.take(params["class_table"], class_labels, axis=0)
    h = jnp.concatenate([x1, x2, te, ce], axis=-1)
    h = _gelu(h @ params["w0"].T + params["b0"][:, 0])
    for i in range(hidden_layers):
        h = h + _gelu(h @ params["wb"][i].T + params["bb"][i][:, 0])
    return h @ params["wf"].T + params["bf"][:, 0]


if __name__ == "__main__":
    B = 300            # non-multiple of the tile: exercises padding + multi-step grid
    EMB = 128          # module defaults
    HIDDEN = 128
    LAYERS = 3
    NUM_CLASSES = 4
    TB = 128

    key = jax.random.PRNGKey(0)
    kx, kt, kp, kc = jax.random.split(key, 4)
    x = jax.random.normal(kx, (B, 2), jnp.float32)
    t = jax.random.uniform(kt, (B,), jnp.float32, minval=0.0, maxval=50.0)
    params = init_params(kp, EMB, HIDDEN, LAYERS, num_classes=NUM_CLASSES)

    # class_labels=None path (zero class embedding folded away entirely).
    out = conditional_mlp(x, t, params, class_labels=None,
                          emb_size=EMB, hidden_layers=LAYERS, batch_tile=TB)
    jax.block_until_ready(out)
    assert out.shape == (B, 2) and out.dtype == jnp.float32
    ref = reference(x, t, params, None, emb_size=EMB, hidden_layers=LAYERS)
    assert jnp.allclose(out, ref, rtol=1e-4, atol=1e-4)

    # class-conditioned path (embedding gather in wrapper, concat in kernel).
    labels = jax.random.randint(kc, (B,), 0, NUM_CLASSES)
    out_c = conditional_mlp(x, t, params, class_labels=labels,
                            emb_size=EMB, hidden_layers=LAYERS, batch_tile=TB)
    jax.block_until_ready(out_c)
    assert out_c.shape == (B, 2) and out_c.dtype == jnp.float32
    ref_c = reference(x, t, params, labels, emb_size=EMB, hidden_layers=LAYERS)
    assert jnp.allclose(out_c, ref_c, rtol=1e-4, atol=1e-4)

    print("KERNEL_OK")
</pallas_src>

<mosaic_0001>
module attributes {stable_mosaic.version = 11 : i64} {
  func.func @conditional_mlp_kernel(%arg0: i32, %arg1: memref<3x128xf32, #tpu.memory_space<vmem>>, %arg2: memref<64x1xf32, #tpu.memory_space<vmem>>, %arg3: memref<64x1xf32, #tpu.memory_space<vmem>>, %arg4: memref<128x384xf32, #tpu.memory_space<vmem>>, %arg5: memref<128x1xf32, #tpu.memory_space<vmem>>, %arg6: memref<3x128x128xf32, #tpu.memory_space<vmem>>, %arg7: memref<3x128x1xf32, #tpu.memory_space<vmem>>, %arg8: memref<2x128xf32, #tpu.memory_space<vmem>>, %arg9: memref<2x1xf32, #tpu.memory_space<vmem>>, %arg10: memref<2x128xf32, #tpu.memory_space<vmem>>) attributes {dimension_semantics = [#tpu.dimension_semantics<parallel>], iteration_bounds = array<i64: 3>, scalar_prefetch = 0 : i64, scratch_operands = 0 : i64, tpu.core_type = #tpu.core_type<tc>, window_params = [{transform_indices = @transform_0, window_bounds = array<i64: 3, 128>}, {pipeline_mode = #tpu.pipeline_mode<synchronous>, transform_indices = @transform_1, window_bounds = array<i64: 64, 1>}, {pipeline_mode = #tpu.pipeline_mode<synchronous>, transform_indices = @transform_2, window_bounds = array<i64: 64, 1>}, {pipeline_mode = #tpu.pipeline_mode<synchronous>, transform_indices = @transform_3, window_bounds = array<i64: 128, 384>}, {pipeline_mode = #tpu.pipeline_mode<synchronous>, transform_indices = @transform_4, window_bounds = array<i64: 128, 1>}, {pipeline_mode = #tpu.pipeline_mode<synchronous>, transform_indices = @transform_5, window_bounds = array<i64: 3, 128, 128>}, {pipeline_mode = #tpu.pipeline_mode<synchronous>, transform_indices = @transform_6, window_bounds = array<i64: 3, 128, 1>}, {pipeline_mode = #tpu.pipeline_mode<synchronous>, transform_indices = @transform_7, window_bounds = array<i64: 2, 128>}, {pipeline_mode = #tpu.pipeline_mode<synchronous>, transform_indices = @transform_8, window_bounds = array<i64: 2, 1>}, {transform_indices = @transform_9, window_bounds = array<i64: 2, 128>}]} {
    %c0 = arith.constant 0 : index
    %c0_0 = arith.constant 0 : index
    %0 = vector.load %arg1[%c0, %c0_0] : memref<3x128xf32, #tpu.memory_space<vmem>>, vector<3x128xf32>
    %c0_1 = arith.constant 0 : index
    %c0_2 = arith.constant 0 : index
    %1 = vector.load %arg2[%c0_1, %c0_2] : memref<64x1xf32, #tpu.memory_space<vmem>>, vector<64x1xf32>
    %c0_3 = arith.constant 0 : index
    %c0_4 = arith.constant 0 : index
    %2 = vector.load %arg3[%c0_3, %c0_4] : memref<64x1xf32, #tpu.memory_space<vmem>>, vector<64x1xf32>
    %3 = vector.extract_strided_slice %0 {offsets = [0, 0], sizes = [1, 128], strides = [1, 1]} : vector<3x128xf32> to vector<1x128xf32>
    %4 = vector.broadcast %1 : vector<64x1xf32> to vector<64x128xf32>
    %5 = vector.broadcast %3 : vector<1x128xf32> to vector<64x128xf32>
    %6 = arith.mulf %4, %5 : vector<64x128xf32>
    %7 = math.sin %6 : vector<64x128xf32>
    %8 = math.cos %6 : vector<64x128xf32>
    %9 = vector.extract_strided_slice %0 {offsets = [1, 0], sizes = [1, 128], strides = [1, 1]} : vector<3x128xf32> to vector<1x128xf32>
    %10 = vector.broadcast %1 : vector<64x1xf32> to vector<64x128xf32>
    %11 = vector.broadcast %9 : vector<1x128xf32> to vector<64x128xf32>
    %12 = arith.mulf %10, %11 : vector<64x128xf32>
    %13 = math.sin %12 : vector<64x128xf32>
    %14 = math.cos %12 : vector<64x128xf32>
    %15 = vector.extract_strided_slice %0 {offsets = [2, 0], sizes = [1, 128], strides = [1, 1]} : vector<3x128xf32> to vector<1x128xf32>
    %16 = vector.broadcast %2 : vector<64x1xf32> to vector<64x128xf32>
    %17 = vector.broadcast %15 : vector<1x128xf32> to vector<64x128xf32>
    %18 = arith.mulf %16, %17 : vector<64x128xf32>
    %19 = math.sin %18 : vector<64x128xf32>
    %20 = math.cos %18 : vector<64x128xf32>
    %21 = tpu.concatenate %7, %8, %13, %14, %19, %20 in 0 : vector<64x128xf32>, vector<64x128xf32>, vector<64x128xf32>, vector<64x128xf32>, vector<64x128xf32>, vector<64x128xf32> -> vector<384x128xf32>
    %c0_5 = arith.constant 0 : index
    %c0_6 = arith.constant 0 : index
    %22 = vector.load %arg4[%c0_5, %c0_6] : memref<128x384xf32, #tpu.memory_space<vmem>>, vector<128x384xf32>
    %cst = arith.constant dense<0.000000e+00> : vector<128x128xf32>
    %23 = tpu.matmul %22, %21, %cst {dimension_numbers = #tpu.dot_dimension_numbers<[1], [0], [0], [1], [0, 0, 1, 1], [], []>} : vector<128x384xf32>, vector<384x128xf32>, vector<128x128xf32> -> vector<128x128xf32>
    %c0_7 = arith.constant 0 : index
    %c0_8 = arith.constant 0 : index
    %24 = vector.load %arg5[%c0_7, %c0_8] : memref<128x1xf32, #tpu.memory_space<vmem>>, vector<128x1xf32>
    %25 = vector.broadcast %24 : vector<128x1xf32> to vector<128x128xf32>
    %26 = arith.addf %23, %25 : vector<128x128xf32>
    %cst_9 = arith.constant 5.000000e-01 : f32
    %27 = vector.broadcast %cst_9 : f32 to vector<128x128xf32>
    %28 = arith.mulf %27, %26 : vector<128x128xf32>
    %cst_10 = arith.constant 4.471500e-02 : f32
    %29 = vector.broadcast %cst_10 : f32 to vector<128x128xf32>
    %30 = arith.mulf %29, %26 : vector<128x128xf32>
    %31 = arith.mulf %30, %26 : vector<128x128xf32>
    %32 = arith.mulf %31, %26 : vector<128x128xf32>
    %33 = arith.addf %26, %32 : vector<128x128xf32>
    %cst_11 = arith.constant 0.797884583 : f32
    %34 = vector.broadcast %cst_11 : f32 to vector<128x128xf32>
    %35 = arith.mulf %34, %33 : vector<128x128xf32>
    %36 = math.tanh %35 : vector<128x128xf32>
    %cst_12 = arith.constant 1.000000e+00 : f32
    %37 = vector.broadcast %cst_12 : f32 to vector<128x128xf32>
    %38 = arith.addf %37, %36 : vector<128x128xf32>
    %39 = arith.mulf %28, %38 : vector<128x128xf32>
    %c0_13 = arith.constant 0 : index
    %c0_14 = arith.constant 0 : index
    %c0_15 = arith.constant 0 : index
    %40 = vector.load %arg6[%c0_13, %c0_14, %c0_15] : memref<3x128x128xf32, #tpu.memory_space<vmem>>, vector<1x128x128xf32>
    %41 = vector.shape_cast %40 : vector<1x128x128xf32> to vector<128x128xf32>
    %cst_16 = arith.constant dense<0.000000e+00> : vector<128x128xf32>
    %42 = tpu.matmul %41, %39, %cst_16 {dimension_numbers = #tpu.dot_dimension_numbers<[1], [0], [0], [1], [0, 0, 1, 1], [], []>} : vector<128x128xf32>, vector<128x128xf32>, vector<128x128xf32> -> vector<128x128xf32>
    %c0_17 = arith.constant 0 : index
    %c0_18 = arith.constant 0 : index
    %c0_19 = arith.constant 0 : index
    %43 = vector.load %arg7[%c0_17, %c0_18, %c0_19] : memref<3x128x1xf32, #tpu.memory_space<vmem>>, vector<1x128x1xf32>
    %44 = vector.shape_cast %43 : vector<1x128x1xf32> to vector<128x1xf32>
    %45 = vector.broadcast %44 : vector<128x1xf32> to vector<128x128xf32>
    %46 = arith.addf %42, %45 : vector<128x128xf32>
    %cst_20 = arith.constant 5.000000e-01 : f32
    %47 = vector.broadcast %cst_20 : f32 to vector<128x128xf32>
    %48 = arith.mulf %47, %46 : vector<128x128xf32>
    %cst_21 = arith.constant 4.471500e-02 : f32
    %49 = vector.broadcast %cst_21 : f32 to vector<128x128xf32>
    %50 = arith.mulf %49, %46 : vector<128x128xf32>
    %51 = arith.mulf %50, %46 : vector<128x128xf32>
    %52 = arith.mulf %51, %46 : vector<128x128xf32>
    %53 = arith.addf %46, %52 : vector<128x128xf32>
    %cst_22 = arith.constant 0.797884583 : f32
    %54 = vector.broadcast %cst_22 : f32 to vector<128x128xf32>
    %55 = arith.mulf %54, %53 : vector<128x128xf32>
    %56 = math.tanh %55 : vector<128x128xf32>
    %cst_23 = arith.constant 1.000000e+00 : f32
    %57 = vector.broadcast %cst_23 : f32 to vector<128x128xf32>
    %58 = arith.addf %57, %56 : vector<128x128xf32>
    %59 = arith.mulf %48, %58 : vector<128x128xf32>
    %60 = arith.addf %39, %59 : vector<128x128xf32>
    %c1 = arith.constant 1 : index
    %c0_24 = arith.constant 0 : index
    %c0_25 = arith.constant 0 : index
    %61 = vector.load %arg6[%c1, %c0_24, %c0_25] : memref<3x128x128xf32, #tpu.memory_space<vmem>>, vector<1x128x128xf32>
    %62 = vector.shape_cast %61 : vector<1x128x128xf32> to vector<128x128xf32>
    %cst_26 = arith.constant dense<0.000000e+00> : vector<128x128xf32>
    %63 = tpu.matmul %62, %60, %cst_26 {dimension_numbers = #tpu.dot_dimension_numbers<[1], [0], [0], [1], [0, 0, 1, 1], [], []>} : vector<128x128xf32>, vector<128x128xf32>, vector<128x128xf32> -> vector<128x128xf32>
    %c1_27 = arith.constant 1 : index
    %c0_28 = arith.constant 0 : index
    %c0_29 = arith.constant 0 : index
    %64 = vector.load %arg7[%c1_27, %c0_28, %c0_29] : memref<3x128x1xf32, #tpu.memory_space<vmem>>, vector<1x128x1xf32>
    %65 = vector.shape_cast %64 : vector<1x128x1xf32> to vector<128x1xf32>
    %66 = vector.broadcast %65 : vector<128x1xf32> to vector<128x128xf32>
    %67 = arith.addf %63, %66 : vector<128x128xf32>
    %cst_30 = arith.constant 5.000000e-01 : f32
    %68 = vector.broadcast %cst_30 : f32 to vector<128x128xf32>
    %69 = arith.mulf %68, %67 : vector<128x128xf32>
    %cst_31 = arith.constant 4.471500e-02 : f32
    %70 = vector.broadcast %cst_31 : f32 to vector<128x128xf32>
    %71 = arith.mulf %70, %67 : vector<128x128xf32>
    %72 = arith.mulf %71, %67 : vector<128x128xf32>
    %73 = arith.mulf %72, %67 : vector<128x128xf32>
    %74 = arith.addf %67, %73 : vector<128x128xf32>
    %cst_32 = arith.constant 0.797884583 : f32
    %75 = vector.broadcast %cst_32 : f32 to vector<128x128xf32>
    %76 = arith.mulf %75, %74 : vector<128x128xf32>
    %77 = math.tanh %76 : vector<128x128xf32>
    %cst_33 = arith.constant 1.000000e+00 : f32
    %78 = vector.broadcast %cst_33 : f32 to vector<128x128xf32>
    %79 = arith.addf %78, %77 : vector<128x128xf32>
    %80 = arith.mulf %69, %79 : vector<128x128xf32>
    %81 = arith.addf %60, %80 : vector<128x128xf32>
    %c2 = arith.constant 2 : index
    %c0_34 = arith.constant 0 : index
    %c0_35 = arith.constant 0 : index
    %82 = vector.load %arg6[%c2, %c0_34, %c0_35] : memref<3x128x128xf32, #tpu.memory_space<vmem>>, vector<1x128x128xf32>
    %83 = vector.shape_cast %82 : vector<1x128x128xf32> to vector<128x128xf32>
    %cst_36 = arith.constant dense<0.000000e+00> : vector<128x128xf32>
    %84 = tpu.matmul %83, %81, %cst_36 {dimension_numbers = #tpu.dot_dimension_numbers<[1], [0], [0], [1], [0, 0, 1, 1], [], []>} : vector<128x128xf32>, vector<128x128xf32>, vector<128x128xf32> -> vector<128x128xf32>
    %c2_37 = arith.constant 2 : index
    %c0_38 = arith.constant 0 : index
    %c0_39 = arith.constant 0 : index
    %85 = vector.load %arg7[%c2_37, %c0_38, %c0_39] : memref<3x128x1xf32, #tpu.memory_space<vmem>>, vector<1x128x1xf32>
    %86 = vector.shape_cast %85 : vector<1x128x1xf32> to vector<128x1xf32>
    %87 = vector.broadcast %86 : vector<128x1xf32> to vector<128x128xf32>
    %88 = arith.addf %84, %87 : vector<128x128xf32>
    %cst_40 = arith.constant 5.000000e-01 : f32
    %89 = vector.broadcast %cst_40 : f32 to vector<128x128xf32>
    %90 = arith.mulf %89, %88 : vector<128x128xf32>
    %cst_41 = arith.constant 4.471500e-02 : f32
    %91 = vector.broadcast %cst_41 : f32 to vector<128x128xf32>
    %92 = arith.mulf %91, %88 : vector<128x128xf32>
    %93 = arith.mulf %92, %88 : vector<128x128xf32>
    %94 = arith.mulf %93, %88 : vector<128x128xf32>
    %95 = arith.addf %88, %94 : vector<128x128xf32>
    %cst_42 = arith.constant 0.797884583 : f32
    %96 = vector.broadcast %cst_42 : f32 to vector<128x128xf32>
    %97 = arith.mulf %96, %95 : vector<128x128xf32>
    %98 = math.tanh %97 : vector<128x128xf32>
    %cst_43 = arith.constant 1.000000e+00 : f32
    %99 = vector.broadcast %cst_43 : f32 to vector<128x128xf32>
    %100 = arith.addf %99, %98 : vector<128x128xf32>
    %101 = arith.mulf %90, %100 : vector<128x128xf32>
    %102 = arith.addf %81, %101 : vector<128x128xf32>
    %c0_44 = arith.constant 0 : index
    %c0_45 = arith.constant 0 : index
    %103 = vector.load %arg8[%c0_44, %c0_45] : memref<2x128xf32, #tpu.memory_space<vmem>>, vector<2x128xf32>
    %cst_46 = arith.constant dense<0.000000e+00> : vector<2x128xf32>
    %104 = tpu.matmul %103, %102, %cst_46 {dimension_numbers = #tpu.dot_dimension_numbers<[1], [0], [0], [1], [0, 0, 1, 1], [], []>} : vector<2x128xf32>, vector<128x128xf32>, vector<2x128xf32> -> vector<2x128xf32>
    %c0_47 = arith.constant 0 : index
    %c0_48 = arith.constant 0 : index
    %105 = vector.load %arg9[%c0_47, %c0_48] : memref<2x1xf32, #tpu.memory_space<vmem>>, vector<2x1xf32>
    %106 = vector.broadcast %105 : vector<2x1xf32> to vector<2x128xf32>
    %107 = arith.addf %104, %106 : vector<2x128xf32>
    %c0_49 = arith.constant 0 : index
    %c0_50 = arith.constant 0 : index
    %108 = vector.load %arg10[%c0_49, %c0_50] : memref<2x128xf32, #tpu.memory_space<vmem>>, vector<2x128xf32>
    tpu.vector_store %arg10[%c0_49, %c0_50], %107 {strides = array<i32>} : memref<2x128xf32, #tpu.memory_space<vmem>>, vector<2x128xf32>,
    return
  }
  func.func @transform_0(%arg0: i32) -> (i32, i32) {
    %c0_i32 = arith.constant 0 : i32
    %c0_i32_0 = arith.constant 0 : i32
    return %c0_i32, %arg0 : i32, i32
  }
  func.func @transform_1(%arg0: i32) -> (i32, i32) {
    %c0_i32 = arith.constant 0 : i32
    %c0_i32_0 = arith.constant 0 : i32
    %c0_i32_1 = arith.constant 0 : i32
    return %c0_i32, %c0_i32_0 : i32, i32
  }
  func.func @transform_2(%arg0: i32) -> (i32, i32) {
    %c0_i32 = arith.constant 0 : i32
    %c0_i32_0 = arith.constant 0 : i32
    %c0_i32_1 = arith.constant 0 : i32
    return %c0_i32, %c0_i32_0 : i32, i32
  }
  func.func @transform_3(%arg0: i32) -> (i32, i32) {
    %c0_i32 = arith.constant 0 : i32
    %c0_i32_0 = arith.constant 0 : i32
    %c0_i32_1 = arith.constant 0 : i32
    return %c0_i32, %c0_i32_0 : i32, i32
  }
  func.func @transform_4(%arg0: i32) -> (i32, i32) {
    %c0_i32 = arith.constant 0 : i32
    %c0_i32_0 = arith.constant 0 : i32
    %c0_i32_1 = arith.constant 0 : i32
    return %c0_i32, %c0_i32_0 : i32, i32
  }
  func.func @transform_5(%arg0: i32) -> (i32, i32, i32) {
    %c0_i32 = arith.constant 0 : i32
    %c0_i32_0 = arith.constant 0 : i32
    %c0_i32_1 = arith.constant 0 : i32
    %c0_i32_2 = arith.constant 0 : i32
    return %c0_i32, %c0_i32_0, %c0_i32_1 : i32, i32, i32
  }
  func.func @transform_6(%arg0: i32) -> (i32, i32, i32) {
    %c0_i32 = arith.constant 0 : i32
    %c0_i32_0 = arith.constant 0 : i32
    %c0_i32_1 = arith.constant 0 : i32
    %c0_i32_2 = arith.constant 0 : i32
    return %c0_i32, %c0_i32_0, %c0_i32_1 : i32, i32, i32
  }
  func.func @transform_7(%arg0: i32) -> (i32, i32) {
    %c0_i32 = arith.constant 0 : i32
    %c0_i32_0 = arith.constant 0 : i32
    %c0_i32_1 = arith.constant 0 : i32
    return %c0_i32, %c0_i32_0 : i32, i32
  }
  func.func @transform_8(%arg0: i32) -> (i32, i32) {
    %c0_i32 = arith.constant 0 : i32
    %c0_i32_0 = arith.constant 0 : i32
    %c0_i32_1 = arith.constant 0 : i32
    return %c0_i32, %c0_i32_0 : i32, i32
  }
  func.func @transform_9(%arg0: i32) -> (i32, i32) {
    %c0_i32 = arith.constant 0 : i32
    %c0_i32_0 = arith.constant 0 : i32
    return %c0_i32, %arg0 : i32, i32
  }
}

</mosaic_0001>

<llo_original>
// kernel: tpu_custom_call.1
$region0: #{tpu_custom_call.1}
  #allocation0 [shape = 'u32[]', space=smem, size = 0x4, offset = 0x4, fixed_abs, tag = 'smem constant byte address 0x4 - core index']
  #allocation1 [shape = 'u32[144,128]{1,0:T(1,128)}', space=vmem, size = 0x12000, scoped, tag = 'internal scratch']
  %s0 = inlined_call_operand.vmem [shape: f32[3,384], index: 0, kind: input, shape index: {}]
  %s1 = inlined_call_operand.vmem [shape: f32[64,1], index: 1, kind: input, shape index: {}]
  %s2 = inlined_call_operand.vmem [shape: f32[64,1], index: 2, kind: input, shape index: {}]
  %s3 = inlined_call_operand.vmem [shape: f32[128,384], index: 3, kind: input, shape index: {}]
  %s4 = inlined_call_operand.vmem [shape: f32[128,1], index: 4, kind: input, shape index: {}]
  %s5 = inlined_call_operand.hbm [shape: f32[3,128,128], index: 5, kind: input, shape index: {}]
  %s6 = inlined_call_operand.vmem [shape: f32[3,128,1], index: 6, kind: input, shape index: {}]
  %s7 = inlined_call_operand.vmem [shape: f32[2,128], index: 7, kind: input, shape index: {}]
  %s8 = inlined_call_operand.vmem [shape: f32[2,1], index: 8, kind: input, shape index: {}]
  %s9 = inlined_call_operand.hbm [shape: f32[2,384], index: 9, kind: output, shape index: {}]
  %s10 = sld [smem:[#allocation0]]
  $region73: #{tpu_custom_call.1} parent=0
    _
  %s12 = ssub.s32 1, %s10
  %s13 = scalar_select 0, %s12, %s10
  $region1: #{tpu_custom_call.1} parent=0
    #allocation2 [shape = 'u8[196608]{0}', space=vmem, size = 0x30000, scoped, tag = 'input window, operand 5, single buffered']
    #allocation3 [shape = 's32[2]{0}', space=sflag, size = 0x8, scoped, tag = 'scoped memory for tpu_custom_call.1']
    #allocation4 [shape = 's32[2]{0}', space=sflag, size = 0x8, scoped, tag = 'scoped memory for tpu_custom_call.1']
    #allocation5 [shape = 'u8[2048]{0}', space=vmem, size = 0x800, scoped, tag = 'output window, operand 0']
    %14 = vsyncpa [#allocation3], 0
    %15 = vsyncpa [#allocation4], 0
    %s16 = scalar_lea.sflag [#allocation4], 1
    %17 = vsyncpa %s16, 0
    loop: start=0, step=1, limit=5
    $region2: #{tpu_custom_call.1} parent=1 // loop_pre_header
      _
    $region3: #{tpu_custom_call.1} parent=1 // loop_header
      %s19 = sphi 0, %s23
      %p20 = scmp.ge.s32.totalorder %s19, 5
      %s29 = sphi 0, %s31
      %s32 = sphi 0, %s29
      %s33 = sphi 0, %s32
      %s49 = sphi 0, %s33
      %s53 = sphi 0, %s53
      %s55 = sphi 0, %s53
      %s56 = sphi 0, %s55
      %s70 = sphi 0, %s56
      %s74 = sphi 0, %s74
      %s76 = sphi 0, %s74
      %s77 = sphi 0, %s76
      %s91 = sphi 0, %s77
      %s95 = sphi 0, %s95
      %s97 = sphi 0, %s95
      %s98 = sphi 0, %s97
      %s112 = sphi 0, %s98
      %s116 = sphi 0, %s116
      %s118 = sphi 0, %s116
      %s119 = sphi 0, %s118
      %s133 = sphi 0, %s119
      %s137 = sphi 0, %s137
      %s139 = sphi 0, %s137
      %s140 = sphi 0, %s139
      %s154 = sphi 0, %s140
      %s158 = sphi 0, %s158
      %s160 = sphi 0, %s158
      %s161 = sphi 0, %s160
      %s175 = sphi 0, %s161
      %s179 = sphi 0, %s179
      %s181 = sphi 0, %s179
      %s182 = sphi 0, %s181
      %s196 = sphi 0, %s182
      %s200 = sphi 0, %s200
      %s202 = sphi 0, %s200
      %s203 = sphi 0, %s202
      %s217 = sphi 0, %s203
      %s223 = sphi 0, %s225
      %s226 = sphi 0, %s223
      %s227 = sphi 0, %s226
      %s243 = sphi 0, %s227
    $region4: #{tpu_custom_call.1} parent=1 // loop_header_branch
      %22 = sbr.rel (%p20) target = $region8
    $region5: #{tpu_custom_call.1} parent=1 // loop_body
      %s24 = ssub.s32 %s19, 1
      %s25 = ssub.s32 %s19, 2
      %s26 = sadd.s32 %s19, 1
      %s27 = ssub.s32 %s19, %s26
      %p28 = scmp.eq.s32.totalorder %s27, 0
      %s30 = sadd.s32 %s29, 1
      %s31 = scalar_select %p28, %s29, %s30
      %p34 = pneg %p28
      %p35 = scmp.eq.s32.totalorder %s19, 2
      %p36 = por %p34, %p35
      %p37 = scmp.ne.s32.totalorder %s29, %s32
      %p38 = scmp.eq.s32.totalorder %s19, 0
      %p39 = por %p37, %p38
      %p40 = scmp.ne.s32.totalorder %s29, %s32
      %p41 = scmp.eq.s32.totalorder %s24, 2
      %p42 = por %p40, %p41
      %p43 = scmp.ne.s32.totalorder %s32, %s33
      %p44 = scmp.eq.s32.totalorder %s24, 0
      %p45 = por %p43, %p44
      %p46 = scmp.ne.s32.totalorder %s32, %s33
      %p47 = scmp.eq.s32.totalorder %s25, 2
      %p48 = por %p46, %p47
      %p50 = scmp.ne.s32.totalorder %s33, %s49
      %p51 = scmp.eq.s32.totalorder %s25, 0
      %p52 = por %p50, %p51
      %s54 = sadd.s32 %s53, 1
      %p57 = scmp.eq.s32.totalorder %s19, 2
      %p58 = scmp.ne.s32.totalorder %s53, %s55
      %p59 = scmp.eq.s32.totalorder %s19, 0
      %p60 = por %p58, %p59
      %p61 = scmp.ne.s32.totalorder %s53, %s55
      %p62 = scmp.eq.s32.totalorder %s24, 2
      %p63 = por %p61, %p62
      %p64 = scmp.ne.s32.totalorder %s55, %s56
      %p65 = scmp.eq.s32.totalorder %s24, 0
      %p66 = por %p64, %p65
      %p67 = scmp.ne.s32.totalorder %s55, %s56
      %p68 = scmp.eq.s32.totalorder %s25, 2
      %p69 = por %p67, %p68
      %p71 = scmp.ne.s32.totalorder %s56, %s70
      %p72 = scmp.eq.s32.totalorder %s25, 0
      %p73 = por %p71, %p72
      %s75 = sadd.s32 %s74, 1
      %p78 = scmp.eq.s32.totalorder %s19, 2
      %p79 = scmp.ne.s32.totalorder %s74, %s76
      %p80 = scmp.eq.s32.totalorder %s19, 0
      %p81 = por %p79, %p80
      %p82 = scmp.ne.s32.totalorder %s74, %s76
      %p83 = scmp.eq.s32.totalorder %s24, 2
      %p84 = por %p82, %p83
      %p85 = scmp.ne.s32.totalorder %s76, %s77
      %p86 = scmp.eq.s32.totalorder %s24, 0
      %p87 = por %p85, %p86
      %p88 = scmp.ne.s32.totalorder %s76, %s77
      %p89 = scmp.eq.s32.totalorder %s25, 2
      %p90 = por %p88, %p89
      %p92 = scmp.ne.s32.totalorder %s77, %s91
      %p93 = scmp.eq.s32.totalorder %s25, 0
      %p94 = por %p92, %p93
      %s96 = sadd.s32 %s95, 1
      %p99 = scmp.eq.s32.totalorder %s19, 2
      %p100 = scmp.ne.s32.totalorder %s95, %s97
      %p101 = scmp.eq.s32.totalorder %s19, 0
      %p102 = por %p100, %p101
      %p103 = scmp.ne.s32.totalorder %s95, %s97
      %p104 = scmp.eq.s32.totalorder %s24, 2
      %p105 = por %p103, %p104
      %p106 = scmp.ne.s32.totalorder %s97, %s98
      %p107 = scmp.eq.s32.totalorder %s24, 0
      %p108 = por %p106, %p107
      %p109 = scmp.ne.s32.totalorder %s97, %s98
      %p110 = scmp.eq.s32.totalorder %s25, 2
      %p111 = por %p109, %p110
      %p113 = scmp.ne.s32.totalorder %s98, %s112
      %p114 = scmp.eq.s32.totalorder %s25, 0
      %p115 = por %p113, %p114
      %s117 = sadd.s32 %s116, 1
      %p120 = scmp.eq.s32.totalorder %s19, 2
      %p121 = scmp.ne.s32.totalorder %s116, %s118
      %p122 = scmp.eq.s32.totalorder %s19, 0
      %p123 = por %p121, %p122
      %p124 = scmp.ne.s32.totalorder %s116, %s118
      %p125 = scmp.eq.s32.totalorder %s24, 2
      %p126 = por %p124, %p125
      %p127 = scmp.ne.s32.totalorder %s118, %s119
      %p128 = scmp.eq.s32.totalorder %s24, 0
      %p129 = por %p127, %p128
      %p130 = scmp.ne.s32.totalorder %s118, %s119
      %p131 = scmp.eq.s32.totalorder %s25, 2
      %p132 = por %p130, %p131
      %p134 = scmp.ne.s32.totalorder %s119, %s133
      %p135 = scmp.eq.s32.totalorder %s25, 0
      %p136 = por %p134, %p135
      %s138 = sadd.s32 %s137, 1
      %p141 = scmp.eq.s32.totalorder %s19, 2
      %p142 = scmp.ne.s32.totalorder %s137, %s139
      %p143 = scmp.eq.s32.totalorder %s19, 0
      %p144 = por %p142, %p143
      %p145 = scmp.ne.s32.totalorder %s137, %s139
      %p146 = scmp.eq.s32.totalorder %s24, 2
      %p147 = por %p145, %p146
      %p148 = scmp.ne.s32.totalorder %s139, %s140
      %p149 = scmp.eq.s32.totalorder %s24, 0
      %p150 = por %p148, %p149
      %p151 = scmp.ne.s32.totalorder %s139, %s140
      %p152 = scmp.eq.s32.totalorder %s25, 2
      %p153 = por %p151, %p152
      %p155 = scmp.ne.s32.totalorder %s140, %s154
      %p156 = scmp.eq.s32.totalorder %s25, 0
      %p157 = por %p155, %p156
      %s159 = sadd.s32 %s158, 1
      %p162 = scmp.eq.s32.totalorder %s19, 2
      %p163 = scmp.ne.s32.totalorder %s158, %s160
      %p164 = scmp.eq.s32.totalorder %s19, 0
      %p165 = por %p163, %p164
      %p166 = scmp.ne.s32.totalorder %s158, %s160
      %p167 = scmp.eq.s32.totalorder %s24, 2
      %p168 = por %p166, %p167
      %p169 = scmp.ne.s32.totalorder %s160, %s161
      %p170 = scmp.eq.s32.totalorder %s24, 0
      %p171 = por %p169, %p170
      %p172 = scmp.ne.s32.totalorder %s160, %s161
      %p173 = scmp.eq.s32.totalorder %s25, 2
      %p174 = por %p172, %p173
      %p176 = scmp.ne.s32.totalorder %s161, %s175
      %p177 = scmp.eq.s32.totalorder %s25, 0
      %p178 = por %p176, %p177
      %s180 = sadd.s32 %s179, 1
      %p183 = scmp.eq.s32.totalorder %s19, 2
      %p184 = scmp.ne.s32.totalorder %s179, %s181
      %p185 = scmp.eq.s32.totalorder %s19, 0
      %p186 = por %p184, %p185
      %p187 = scmp.ne.s32.totalorder %s179, %s181
      %p188 = scmp.eq.s32.totalorder %s24, 2
      %p189 = por %p187, %p188
      %p190 = scmp.ne.s32.totalorder %s181, %s182
      %p191 = scmp.eq.s32.totalorder %s24, 0
      %p192 = por %p190, %p191
      %p193 = scmp.ne.s32.totalorder %s181, %s182
      %p194 = scmp.eq.s32.totalorder %s25, 2
      %p195 = por %p193, %p194
      %p197 = scmp.ne.s32.totalorder %s182, %s196
      %p198 = scmp.eq.s32.totalorder %s25, 0
      %p199 = por %p197, %p198
      %s201 = sadd.s32 %s200, 1
      %p204 = scmp.eq.s32.totalorder %s19, 2
      %p205 = scmp.ne.s32.totalorder %s200, %s202
      %p206 = scmp.eq.s32.totalorder %s19, 0
      %p207 = por %p205, %p206
      %p208 = scmp.ne.s32.totalorder %s200, %s202
      %p209 = scmp.eq.s32.totalorder %s24, 2
      %p210 = por %p208, %p209
      %p211 = scmp.ne.s32.totalorder %s202, %s203
      %p212 = scmp.eq.s32.totalorder %s24, 0
      %p213 = por %p211, %p212
      %p214 = scmp.ne.s32.totalorder %s202, %s203
      %p215 = scmp.eq.s32.totalorder %s25, 2
      %p216 = por %p214, %p215
      %p218 = scmp.ne.s32.totalorder %s203, %s217
      %p219 = scmp.eq.s32.totalorder %s25, 0
      %p220 = por %p218, %p219
      %s221 = ssub.s32 %s19, %s26
      %p222 = scmp.eq.s32.totalorder %s221, 0
      %s224 = sadd.s32 %s223, 1
      %s225 = scalar_select %p222, %s223, %s224
      %p228 = pneg %p222
      %p229 = scmp.eq.s32.totalorder %s19, 2
      %p230 = por %p228, %p229
      %p231 = scmp.ne.s32.totalorder %s223, %s226
      %p232 = scmp.eq.s32.totalorder %s19, 0
      %p233 = por %p231, %p232
      %p234 = scmp.ne.s32.totalorder %s223, %s226
      %p235 = scmp.eq.s32.totalorder %s24, 2
      %p236 = por %p234, %p235
      %p237 = scmp.ne.s32.totalorder %s226, %s227
      %p238 = scmp.eq.s32.totalorder %s24, 0
      %p239 = por %p237, %p238
      %p240 = scmp.ne.s32.totalorder %s226, %s227
      %p241 = scmp.eq.s32.totalorder %s25, 2
      %p242 = por %p240, %p241
      %p244 = scmp.ne.s32.totalorder %s227, %s243
      %p245 = scmp.eq.s32.totalorder %s25, 0
      %p246 = por %p244, %p245
      %p247 = scmp.le.s32.totalorder 1, %s19
      %p248 = scmp.lt.s32.totalorder %s19, 4
      %p249 = pnand %p247, %p248
      %p250 = pneg %p249
      // Predicated region
      $region9: #{tpu_custom_call.1} parent=5 // pred_check
        _
      $region10: #{tpu_custom_call.1} parent=5 // pred_check_branch
        %252 = sbr.rel (%p249) target = $region12
      $region11: #{tpu_custom_call.1} parent=5 // pred_region
        %s253 = ssub.s32 %s19, 1
        // Predicated region
        $region13: #{tpu_custom_call.1} parent=11 // pred_check
          %p254 = pneg %p66
        $region14: #{tpu_custom_call.1} parent=11 // pred_check_branch
          %256 = sbr.rel (%p254) target = $region16
        $region15: #{tpu_custom_call.1} parent=11 // pred_region
          _
        $region16: #{tpu_custom_call.1} parent=11 // pred_fallthru
          _
        // Predicated region
        $region17: #{tpu_custom_call.1} parent=11 // pred_check
          %p257 = pneg %p87
        $region18: #{tpu_custom_call.1} parent=11 // pred_check_branch
          %259 = sbr.rel (%p257) target = $region20
        $region19: #{tpu_custom_call.1} parent=11 // pred_region
          _
        $region20: #{tpu_custom_call.1} parent=11 // pred_fallthru
          _
        // Predicated region
        $region21: #{tpu_custom_call.1} parent=11 // pred_check
          %p260 = pneg %p108
        $region22: #{tpu_custom_call.1} parent=11 // pred_check_branch
          %262 = sbr.rel (%p260) target = $region24
        $region23: #{tpu_custom_call.1} parent=11 // pred_region
          _
        $region24: #{tpu_custom_call.1} parent=11 // pred_fallthru
          _
        // Predicated region
        $region25: #{tpu_custom_call.1} parent=11 // pred_check
          %p263 = pneg %p129
        $region26: #{tpu_custom_call.1} parent=11 // pred_check_branch
          %265 = sbr.rel (%p263) target = $region28
        $region27: #{tpu_custom_call.1} parent=11 // pred_region
          _
        $region28: #{tpu_custom_call.1} parent=11 // pred_fallthru
          _
        // Predicated region
        $region29: #{tpu_custom_call.1} parent=11 // pred_check
          %p266 = pneg %p150
        $region30: #{tpu_custom_call.1} parent=11 // pred_check_branch
          %268 = sbr.rel (%p266) target = $region32
        $region31: #{tpu_custom_call.1} parent=11 // pred_region
          %s270 = ssub.s32 6144, 6144
          %271 = vsyncadd [#allocation3], %s270
          %s272 = sshll.u32 [#allocation2], 4
          %s273 = int_to_ptr.vmem [resolvable:$true] %s272
          %278 = dma.hbm_to_vmem [thread:$0]  %s5, 6144, %s273, [#allocation3], 128, 128, 8
        $region32: #{tpu_custom_call.1} parent=11 // pred_fallthru
          _
        // Predicated region
        $region33: #{tpu_custom_call.1} parent=11 // pred_check
          %p279 = pneg %p171
        $region34: #{tpu_custom_call.1} parent=11 // pred_check_branch
          %281 = sbr.rel (%p279) target = $region36
        $region35: #{tpu_custom_call.1} parent=11 // pred_region
          _
        $region36: #{tpu_custom_call.1} parent=11 // pred_fallthru
          _
        // Predicated region
        $region37: #{tpu_custom_call.1} parent=11 // pred_check
          %p282 = pneg %p192
        $region38: #{tpu_custom_call.1} parent=11 // pred_check_branch
          %284 = sbr.rel (%p282) target = $region40
        $region39: #{tpu_custom_call.1} parent=11 // pred_region
          _
        $region40: #{tpu_custom_call.1} parent=11 // pred_fallthru
          _
        // Predicated region
        $region41: #{tpu_custom_call.1} parent=11 // pred_check
          %p285 = pneg %p213
        $region42: #{tpu_custom_call.1} parent=11 // pred_check_branch
          %287 = sbr.rel (%p285) target = $region44
        $region43: #{tpu_custom_call.1} parent=11 // pred_region
          _
        $region44: #{tpu_custom_call.1} parent=11 // pred_fallthru
          _
      $region12: #{tpu_custom_call.1} parent=5 // pred_fallthru
        _
      %p288 = scmp.lt.s32.totalorder %s19, 3
      // Predicated region
      $region45: #{tpu_custom_call.1} parent=5 // pred_check
        %p289 = pneg %p288
      $region46: #{tpu_custom_call.1} parent=5 // pred_check_branch
        %291 = sbr.rel (%p289) target = $region48
      $region47: #{tpu_custom_call.1} parent=5 // pred_region
        // Predicated region
        $region49: #{tpu_custom_call.1} parent=47 // pred_check
          %p292 = pneg %p39
        $region50: #{tpu_custom_call.1} parent=47 // pred_check_branch
          %294 = sbr.rel (%p292) target = $region52
        $region51: #{tpu_custom_call.1} parent=47 // pred_region
          %p295 = scmp.lt.s32.totalorder %s19, 2
          %s296 = scalar_select %p295, %s19, 2
          %s297 = smul.addr %s296, 4
          %s298 = scalar_lea.vmem %s0, %s297
        $region52: #{tpu_custom_call.1} parent=47 // pred_fallthru
          _
      $region48: #{tpu_custom_call.1} parent=5 // pred_fallthru
        _
      %p299 = scmp.le.s32.totalorder 1, %s19
      %p300 = scmp.lt.s32.totalorder %s19, 4
      %p301 = pnand %p299, %p300
      %p302 = pneg %p301
      // Predicated region
      $region53: #{tpu_custom_call.1} parent=5 // pred_check
        _
      $region54: #{tpu_custom_call.1} parent=5 // pred_check_branch
        %304 = sbr.rel (%p301) target = $region56
      $region55: #{tpu_custom_call.1} parent=5 // pred_region
        %s305 = ssub.s32 %s19, 1
        // Predicated region
        $region57: #{tpu_custom_call.1} parent=55 // pred_check
          %p306 = pneg %p150
        $region58: #{tpu_custom_call.1} parent=55 // pred_check_branch
          %308 = sbr.rel (%p306) target = $region60
        $region59: #{tpu_custom_call.1} parent=55 // pred_region
          %309 = dma.done [#allocation3], 6144
        $region60: #{tpu_custom_call.1} parent=55 // pred_fallthru
          _
        %p310 = scmp.lt.s32.totalorder %s24, 2
        %s311 = scalar_select %p310, %s24, 2
        %s312 = smul.addr %s311, 4
        %s313 = scalar_lea.vmem %s0, %s312
        %p314 = pneg %p45
        %p315 = pneg %p42
        %p316 = pneg %p66
        %p317 = pneg %p63
        %p318 = pneg %p87
        %p319 = pneg %p84
        %p320 = pneg %p108
        %p321 = pneg %p105
        %p322 = pneg %p129
        %p323 = pneg %p126
        %p324 = pneg %p150
        %p325 = pneg %p147
        %p326 = pneg %p171
        %p327 = pneg %p168
        %p328 = pneg %p192
        %p329 = pneg %p189
        %p330 = pneg %p213
        %p331 = pneg %p210
        %p332 = pneg %p239
        %p333 = pneg %p236
        %s334 = sand.u32 %s226, 1
        %s335 = scalar_lea.sflag [#allocation4], %s334
        %s336 = sand.u32 %s226, 1
        %s337 = smul.addr %s336, 2
        %s338 = scalar_lea.vmem [#allocation5], %s337
        %p339 = scmp.lt.s32.totalorder %s24, 2
        %s340 = scalar_select %p339, %s24, 2
        %s341 = smul.addr %s340, 4
        %s342 = scalar_lea.vmem %s0, %s341
        %v343 = vld [vmem:[%s342] sm:$0x7]
        %v344 = vld [vmem:[%s1] sm:$0xff]
        %v345 = vld [vmem:[%s1 + $0x8] sm:$0xff]
        %v346 = vld [vmem:[%s1 + $0x10] sm:$0xff]
        %v347 = vld [vmem:[%s1 + $0x18] sm:$0xff]
        %v348 = vld [vmem:[%s1 + $0x20] sm:$0xff]
        %v349 = vld [vmem:[%s1 + $0x28] sm:$0xff]
        %v350 = vld [vmem:[%s1 + $0x30] sm:$0xff]
        %v351 = vld [vmem:[%s1 + $0x38] sm:$0xff]
        %v352 = vld [vmem:[%s2] sm:$0xff]
        %v353 = vld [vmem:[%s2 + $0x8] sm:$0xff]
        %v354 = vld [vmem:[%s2 + $0x10] sm:$0xff]
        %v355 = vld [vmem:[%s2 + $0x18] sm:$0xff]
        %v356 = vld [vmem:[%s2 + $0x20] sm:$0xff]
        %v357 = vld [vmem:[%s2 + $0x28] sm:$0xff]
        %v358 = vld [vmem:[%s2 + $0x30] sm:$0xff]
        %v359 = vld [vmem:[%s2 + $0x38] sm:$0xff]
        %361 = vset.pattern.permute.xlu0 0
        %362 = vperm.xlu0 %361, %v344
        %v363 = vpop.permute.xlu0 %362
        %366 = vset.pattern.permute.xlu0 0
        %367 = vperm.xlu0 %366, %v345
        %v368 = vpop.permute.xlu0 %367
        %371 = vset.pattern.permute.xlu0 0
        %372 = vperm.xlu0 %371, %v346
        %v373 = vpop.permute.xlu0 %372
        %376 = vset.pattern.permute.xlu0 0
        %377 = vperm.xlu0 %376, %v347
        %v378 = vpop.permute.xlu0 %377
        %381 = vset.pattern.permute.xlu0 0
        %382 = vperm.xlu0 %381, %v348
        %v383 = vpop.permute.xlu0 %382
        %386 = vset.pattern.permute.xlu0 0
        %387 = vperm.xlu0 %386, %v349
        %v388 = vpop.permute.xlu0 %387
        %391 = vset.pattern.permute.xlu0 0
        %392 = vperm.xlu0 %391, %v350
        %v393 = vpop.permute.xlu0 %392
        %396 = vset.pattern.permute.xlu0 0
        %397 = vperm.xlu0 %396, %v351
        %v398 = vpop.permute.xlu0 %397
        %v400 = vlaneseq
        %v401 = vshrl.u32 %v400, 7
        %v402 = vsub.s32 0, %v401
        %v403 = vrot.slane %v343, %v402
        %v404 = vmul.f32 %v363, %v403
        %v405 = vmul.f32 %v368, %v403
        %v406 = vmul.f32 %v373, %v403
        %v407 = vmul.f32 %v378, %v403
        %v408 = vmul.f32 %v383, %v403
        %v409 = vmul.f32 %v388, %v403
        %v410 = vmul.f32 %v393, %v403
        %v411 = vmul.f32 %v398, %v403
        %v412 = vand.u32 2147483647, %v404
        %vm413 = vcmp.le.f32.partialorder %v412, 0.7853982
        %vm414 = vcmp.lt.s32.totalorder %v404, 0
        %v415 = vand.u32 %v404, 2139095040
        %v416 = vshrl.u32 %v415, 23
        %v417 = vsub.s32 %v416, 127
        %v418 = vand.u32 2147483647, %v404
        %v419 = vand.u32 %v418, 8388607
        %v420 = vor.u32 %v419, 8388608
        %v421 = vsub.s32 0, %v420
        %v422 = vadd.s32 %v417, 1
        %vm423 = vcmp.gt.s32.totalorder %v422, 0
        %v424 = vsel %vm423, %v422, 0
        %v425 = vshrl.u32 %v424, 5
        %v426 = vand.u32 %v424, 31
        %v427 = vsub.s32 32, %v426
        %v428 = vshrl.u32 683565275, %v427
        %v429 = vshll.u32 683565275, %v426
        %v430 = vshrl.u32 2475754826, %v427
        %v431 = vor.u32 %v429, %v430
        %v432 = vshll.u32 2475754826, %v426
        %v433 = vshrl.u32 2131351028, %v427
        %v434 = vor.u32 %v432, %v433
        %v435 = vshll.u32 2131351028, %v426
        %v436 = vshrl.u32 2102212464, %v427
        %v437 = vor.u32 %v435, %v436
        %v438 = vshll.u32 2102212464, %v426
        %v439 = vshrl.u32 920167782, %v427
        %v440 = vor.u32 %v438, %v439
        %v441 = vshll.u32 920167782, %v426
        %v442 = vshrl.u32 1326507024, %v427
        %v443 = vor.u32 %v441, %v442
        %vm444 = vcmp.lt.s32.totalorder %v425, 1
        %vm445 = vcmp.lt.s32.totalorder %v425, 2
        %vm446 = vcmp.lt.s32.totalorder %v425, 3
        %vm447 = vcmp.lt.s32.totalorder %v425, 4
        %v448 = vsel %vm444, %v428, %v431
        %v449 = vsel %vm447, %v437, 2102212464
        %v450 = vsel %vm446, %v434, %v449
        %v451 = vsel %vm445, %v448, %v450
        %v452 = vsel %vm444, %v431, %v434
        %v453 = vsel %vm447, %v440, 920167782
        %v454 = vsel %vm446, %v437, %v453
        %v455 = vsel %vm445, %v452, %v454
        %v456 = vsel %vm444, %v434, %v437
        %v457 = vsel %vm447, %v443, 1326507024
        %v458 = vsel %vm446, %v440, %v457
        %v459 = vsel %vm445, %v456, %v458
        %v460 = vshll.u32 %v420, 8
        %v461 = vmul.u32.u64.compose %v460, %v459
        %v462 = vextract.low.u32 %v461
        %v463 = vextract.high.u32 %v461
        %v464 = vmul.u32.u64.compose %v460, %v455
        %v465 = vextract.low.u32 %v464
        %v466 = vextract.high.u32 %v464
        %v467 = vmul.u32 %v460, %v451
        %v468 = vadd.s32 %v463, %v465
        %vm469 = vc.u32 %v463, %v465
        %v470 = vadd.s32 %v466, 1
        %v471 = vsel %vm469, %v470, %v466
        %v472 = vadd.s32 %v467, %v471
        %v473 = vadd.s32 %v472, 536870912
        %v474 = vshrl.u32 %v473, 30
        %v475 = vshll.u32 %v474, 30
        %v476 = vsub.s32 %v472, %v475
        %vm477 = vcmp.lt.s32.totalorder %v476, 0
        %v478 = vsub.s32 0, %v476
        %v479 = vsel %vm477, %v478, %v476
        %v480 = vclz %v479
        %v481 = vsub.s32 %v480, 2
        %vm482 = vcmp.gt.s32.totalorder 0, %v481
        %v483 = vsel %vm482, 0, %v481
        %v484 = vsub.s32 32, %v483
        %v485 = vshll.u32 %v476, %v483
        %v486 = vshrl.u32 %v468, %v484
        %v487 = vor.u32 %v485, %v486
        %v488 = vsub.s32 4294967266, %v483
        %v489 = vadd.s32 %v488, 127
        %v490 = vshll.u32 %v489, 23
        %v491 = vor.u32 4788187, %v490
        %v492 = vand.u32 2147483647, %v491
        %v494 = vcvt.s32.f32 %v487
        %v495 = vmul.f32 %v494, %v492
        %v496 = vxor.u32 %v495, 2147483648
        %v497 = vsel %vm414, %v496, %v495
        %v498 = vsub.s32 4, %v474
        %v499 = vsel %vm414, %v498, %v474
        %v500 = vsel %vm413, %v404, %v497
        %v501 = vsel %vm413, 0, %v499
        %v502 = vcosq.f32.pop %v500
        %v503 = vsinq.f32.pop %v500
        %vm504 = vweird.f32 %v404
        %v505 = vadd.s32 %v501, 3
        %v506 = vand.u32 %v505, 3
        %vm507 = vcmp.lt.s32.totalorder %v506, 2
        %vm508 = vcmp.eq.s32.totalorder %v506, 0
        %v509 = vxor.u32 %v503, 2147483648
        %v510 = vsel %vm508, %v502, %v509
        %vm511 = vcmp.eq.s32.totalorder %v506, 2
        %v512 = vxor.u32 %v502, 2147483648
        %v513 = vsel %vm511, %v512, %v503
        %v514 = vsel %vm507, %v510, %v513
        %v515 = vsel %vm504, nan, %v514
        %v516 = vand.u32 2147483647, %v405
        %vm517 = vcmp.le.f32.partialorder %v516, 0.7853982
        %vm518 = vcmp.lt.s32.totalorder %v405, 0
        %v519 = vand.u32 %v405, 2139095040
        %v520 = vshrl.u32 %v519, 23
        %v521 = vsub.s32 %v520, 127
        %v522 = vand.u32 2147483647, %v405
        %v523 = vand.u32 %v522, 8388607
        %v524 = vor.u32 %v523, 8388608
        %v525 = vsub.s32 0, %v524
        %v526 = vadd.s32 %v521, 1
        %vm527 = vcmp.gt.s32.totalorder %v526, 0
        %v528 = vsel %vm527, %v526, 0
        %v529 = vshrl.u32 %v528, 5
        %v530 = vand.u32 %v528, 31
        %v531 = vsub.s32 32, %v530
        %v532 = vshrl.u32 683565275, %v531
        %v533 = vshll.u32 683565275, %v530
        %v534 = vshrl.u32 2475754826, %v531
        %v535 = vor.u32 %v533, %v534
        %v536 = vshll.u32 2475754826, %v530
        %v537 = vshrl.u32 2131351028, %v531
        %v538 = vor.u32 %v536, %v537
        %v539 = vshll.u32 2131351028, %v530
        %v540 = vshrl.u32 2102212464, %v531
        %v541 = vor.u32 %v539, %v540
        %v542 = vshll.u32 2102212464, %v530
        %v543 = vshrl.u32 920167782, %v531
        %v544 = vor.u32 %v542, %v543
        %v545 = vshll.u32 920167782, %v530
        %v546 = vshrl.u32 1326507024, %v531
        %v547 = vor.u32 %v545, %v546
        %vm548 = vcmp.lt.s32.totalorder %v529, 1
        %vm549 = vcmp.lt.s32.totalorder %v529, 2
        %vm550 = vcmp.lt.s32.totalorder %v529, 3
        %vm551 = vcmp.lt.s32.totalorder %v529, 4
        %v552 = vsel %vm548, %v532, %v535
        %v553 = vsel %vm551, %v541, 2102212464
        %v554 = vsel %vm550, %v538, %v553
        %v555 = vsel %vm549, %v552, %v554
        %v556 = vsel %vm548, %v535, %v538
        %v557 = vsel %vm551, %v544, 920167782
        %v558 = vsel %vm550, %v541, %v557
        %v559 = vsel %vm549, %v556, %v558
        %v560 = vsel %vm548, %v538, %v541
        %v561 = vsel %vm551, %v547, 1326507024
        %v562 = vsel %vm550, %v544, %v561
        %v563 = vsel %vm549, %v560, %v562
        %v564 = vshll.u32 %v524, 8
        %v565 = vmul.u32.u64.compose %v564, %v563
        %v566 = vextract.low.u32 %v565
        %v567 = vextract.high.u32 %v565
        %v568 = vmul.u32.u64.compose %v564, %v559
        %v569 = vextract.low.u32 %v568
        %v570 = vextract.high.u32 %v568
        %v571 = vmul.u32 %v564, %v555
        %v572 = vadd.s32 %v567, %v569
        %vm573 = vc.u32 %v567, %v569
        %v574 = vadd.s32 %v570, 1
        %v575 = vsel %vm573, %v574, %v570
        %v576 = vadd.s32 %v571, %v575
        %v577 = vadd.s32 %v576, 536870912
        %v578 = vshrl.u32 %v577, 30
        %v579 = vshll.u32 %v578, 30
        %v580 = vsub.s32 %v576, %v579
        %vm581 = vcmp.lt.s32.totalorder %v580, 0
        %v582 = vsub.s32 0, %v580
        %v583 = vsel %vm581, %v582, %v580
        %v584 = vclz %v583
        %v585 = vsub.s32 %v584, 2
        %vm586 = vcmp.gt.s32.totalorder 0, %v585
        %v587 = vsel %vm586, 0, %v585
        %v588 = vsub.s32 32, %v587
        %v589 = vshll.u32 %v580, %v587
        %v590 = vshrl.u32 %v572, %v588
        %v591 = vor.u32 %v589, %v590
        %v592 = vsub.s32 4294967266, %v587
        %v593 = vadd.s32 %v592, 127
        %v594 = vshll.u32 %v593, 23
        %v595 = vor.u32 4788187, %v594
        %v596 = vand.u32 2147483647, %v595
        %v598 = vcvt.s32.f32 %v591
        %v599 = vmul.f32 %v598, %v596
        %v600 = vxor.u32 %v599, 2147483648
        %v601 = vsel %vm518, %v600, %v599
        %v602 = vsub.s32 4, %v578
        %v603 = vsel %vm518, %v602, %v578
        %v604 = vsel %vm517, %v405, %v601
        %v605 = vsel %vm517, 0, %v603
        %v606 = vcosq.f32.pop %v604
        %v607 = vsinq.f32.pop %v604
        %vm608 = vweird.f32 %v405
        %v609 = vadd.s32 %v605, 3
        %v610 = vand.u32 %v609, 3
        %vm611 = vcmp.lt.s32.totalorder %v610, 2
        %vm612 = vcmp.eq.s32.totalorder %v610, 0
        %v613 = vxor.u32 %v607, 2147483648
        %v614 = vsel %vm612, %v606, %v613
        %vm615 = vcmp.eq.s32.totalorder %v610, 2
        %v616 = vxor.u32 %v606, 2147483648
        %v617 = vsel %vm615, %v616, %v607
        %v618 = vsel %vm611, %v614, %v617
        %v619 = vsel %vm608, nan, %v618
        %v620 = vand.u32 2147483647, %v406
        %vm621 = vcmp.le.f32.partialorder %v620, 0.7853982
        %vm622 = vcmp.lt.s32.totalorder %v406, 0
        %v623 = vand.u32 %v406, 2139095040
        %v624 = vshrl.u32 %v623, 23
        %v625 = vsub.s32 %v624, 127
        %v626 = vand.u32 2147483647, %v406
        %v627 = vand.u32 %v626, 8388607
        %v628 = vor.u32 %v627, 8388608
        %v629 = vsub.s32 0, %v628
        %v630 = vadd.s32 %v625, 1
        %vm631 = vcmp.gt.s32.totalorder %v630, 0
        %v632 = vsel %vm631, %v630, 0
        %v633 = vshrl.u32 %v632, 5
        %v634 = vand.u32 %v632, 31
        %v635 = vsub.s32 32, %v634
        %v636 = vshrl.u32 683565275, %v635
        %v637 = vshll.u32 683565275, %v634
        %v638 = vshrl.u32 2475754826, %v635
        %v639 = vor.u32 %v637, %v638
        %v640 = vshll.u32 2475754826, %v634
        %v641 = vshrl.u32 2131351028, %v635
        %v642 = vor.u32 %v640, %v641
        %v643 = vshll.u32 2131351028, %v634
        %v644 = vshrl.u32 2102212464, %v635
        %v645 = vor.u32 %v643, %v644
        %v646 = vshll.u32 2102212464, %v634
        %v647 = vshrl.u32 920167782, %v635
        %v648 = vor.u32 %v646, %v647
        %v649 = vshll.u32 920167782, %v634
        %v650 = vshrl.u32 1326507024, %v635
        %v651 = vor.u32 %v649, %v650
        %vm652 = vcmp.lt.s32.totalorder %v633, 1
        %vm653 = vcmp.lt.s32.totalorder %v633, 2
        %vm654 = vcmp.lt.s32.totalorder %v633, 3
        %vm655 = vcmp.lt.s32.totalorder %v633, 4
        %v656 = vsel %vm652, %v636, %v639
        %v657 = vsel %vm655, %v645, 2102212464
        %v658 = vsel %vm654, %v642, %v657
        %v659 = vsel %vm653, %v656, %v658
        %v660 = vsel %vm652, %v639, %v642
        %v661 = vsel %vm655, %v648, 920167782
        %v662 = vsel %vm654, %v645, %v661
        %v663 = vsel %vm653, %v660, %v662
        %v664 = vsel %vm652, %v642, %v645
        %v665 = vsel %vm655, %v651, 1326507024
        %v666 = vsel %vm654, %v648, %v665
        %v667 = vsel %vm653, %v664, %v666
        %v668 = vshll.u32 %v628, 8
        %v669 = vmul.u32.u64.compose %v668, %v667
        %v670 = vextract.low.u32 %v669
        %v671 = vextract.high.u32 %v669
        %v672 = vmul.u32.u64.compose %v668, %v663
        %v673 = vextract.low.u32 %v672
        %v674 = vextract.high.u32 %v672
        %v675 = vmul.u32 %v668, %v659
        %v676 = vadd.s32 %v671, %v673
        %vm677 = vc.u32 %v671, %v673
        %v678 = vadd.s32 %v674, 1
        %v679 = vsel %vm677, %v678, %v674
        %v680 = vadd.s32 %v675, %v679
        %v681 = vadd.s32 %v680, 536870912
        %v682 = vshrl.u32 %v681, 30
        %v683 = vshll.u32 %v682, 30
        %v684 = vsub.s32 %v680, %v683
        %vm685 = vcmp.lt.s32.totalorder %v684, 0
        %v686 = vsub.s32 0, %v684
        %v687 = vsel %vm685, %v686, %v684
        %v688 = vclz %v687
        %v689 = vsub.s32 %v688, 2
        %vm690 = vcmp.gt.s32.totalorder 0, %v689
        %v691 = vsel %vm690, 0, %v689
        %v692 = vsub.s32 32, %v691
        %v693 = vshll.u32 %v684, %v691
        %v694 = vshrl.u32 %v676, %v692
        %v695 = vor.u32 %v693, %v694
        %v696 = vsub.s32 4294967266, %v691
        %v697 = vadd.s32 %v696, 127
        %v698 = vshll.u32 %v697, 23
        %v699 = vor.u32 4788187, %v698
        %v700 = vand.u32 2147483647, %v699
        %v702 = vcvt.s32.f32 %v695
        %v703 = vmul.f32 %v702, %v700
        %v704 = vxor.u32 %v703, 2147483648
        %v705 = vsel %vm622, %v704, %v703
        %v706 = vsub.s32 4, %v682
        %v707 = vsel %vm622, %v706, %v682
        %v708 = vsel %vm621, %v406, %v705
        %v709 = vsel %vm621, 0, %v707
        %v710 = vcosq.f32.pop %v708
        %v711 = vsinq.f32.pop %v708
        %vm712 = vweird.f32 %v406
        %v713 = vadd.s32 %v709, 3
        %v714 = vand.u32 %v713, 3
        %vm715 = vcmp.lt.s32.totalorder %v714, 2
        %vm716 = vcmp.eq.s32.totalorder %v714, 0
        %v717 = vxor.u32 %v711, 2147483648
        %v718 = vsel %vm716, %v710, %v717
        %vm719 = vcmp.eq.s32.totalorder %v714, 2
        %v720 = vxor.u32 %v710, 2147483648
        %v721 = vsel %vm719, %v720, %v711
        %v722 = vsel %vm715, %v718, %v721
        %v723 = vsel %vm712, nan, %v722
        %v724 = vand.u32 2147483647, %v407
        %vm725 = vcmp.le.f32.partialorder %v724, 0.7853982
        %vm726 = vcmp.lt.s32.totalorder %v407, 0
        %v727 = vand.u32 %v407, 2139095040
        %v728 = vshrl.u32 %v727, 23
        %v729 = vsub.s32 %v728, 127
        %v730 = vand.u32 2147483647, %v407
        %v731 = vand.u32 %v730, 8388607
        %v732 = vor.u32 %v731, 8388608
        %v733 = vsub.s32 0, %v732
        %v734 = vadd.s32 %v729, 1
        %vm735 = vcmp.gt.s32.totalorder %v734, 0
        %v736 = vsel %vm735, %v734, 0
        %v737 = vshrl.u32 %v736, 5
        %v738 = vand.u32 %v736, 31
        %v739 = vsub.s32 32, %v738
        %v740 = vshrl.u32 683565275, %v739
        %v741 = vshll.u32 683565275, %v738
        %v742 = vshrl.u32 2475754826, %v739
        %v743 = vor.u32 %v741, %v742
        %v744 = vshll.u32 2475754826, %v738
        %v745 = vshrl.u32 2131351028, %v739
        %v746 = vor.u32 %v744, %v745
        %v747 = vshll.u32 2131351028, %v738
        %v748 = vshrl.u32 2102212464, %v739
        %v749 = vor.u32 %v747, %v748
        %v750 = vshll.u32 2102212464, %v738
        %v751 = vshrl.u32 920167782, %v739
        %v752 = vor.u32 %v750, %v751
        %v753 = vshll.u32 920167782, %v738
        %v754 = vshrl.u32 1326507024, %v739
        %v755 = vor.u32 %v753, %v754
        %vm756 = vcmp.lt.s32.totalorder %v737, 1
        %vm757 = vcmp.lt.s32.totalorder %v737, 2
        %vm758 = vcmp.lt.s32.totalorder %v737, 3
        %vm759 = vcmp.lt.s32.totalorder %v737, 4
        %v760 = vsel %vm756, %v740, %v743
        %v761 = vsel %vm759, %v749, 2102212464
        %v762 = vsel %vm758, %v746, %v761
        %v763 = vsel %vm757, %v760, %v762
        %v764 = vsel %vm756, %v743, %v746
        %v765 = vsel %vm759, %v752, 920167782
        %v766 = vsel %vm758, %v749, %v765
        %v767 = vsel %vm757, %v764, %v766
        %v768 = vsel %vm756, %v746, %v749
        %v769 = vsel %vm759, %v755, 1326507024
        %v770 = vsel %vm758, %v752, %v769
        %v771 = vsel %vm757, %v768, %v770
        %v772 = vshll.u32 %v732, 8
        %v773 = vmul.u32.u64.compose %v772, %v771
        %v774 = vextract.low.u32 %v773
        %v775 = vextract.high.u32 %v773
        %v776 = vmul.u32.u64.compose %v772, %v767
        %v777 = vextract.low.u32 %v776
        %v778 = vextract.high.u32 %v776
        %v779 = vmul.u32 %v772, %v763
        %v780 = vadd.s32 %v775, %v777
        %vm781 = vc.u32 %v775, %v777
        %v782 = vadd.s32 %v778, 1
        %v783 = vsel %vm781, %v782, %v778
        %v784 = vadd.s32 %v779, %v783
        %v785 = vadd.s32 %v784, 536870912
        %v786 = vshrl.u32 %v785, 30
        %v787 = vshll.u32 %v786, 30
        %v788 = vsub.s32 %v784, %v787
        %vm789 = vcmp.lt.s32.totalorder %v788, 0
        %v790 = vsub.s32 0, %v788
        %v791 = vsel %vm789, %v790, %v788
        %v792 = vclz %v791
        %v793 = vsub.s32 %v792, 2
        %vm794 = vcmp.gt.s32.totalorder 0, %v793
        %v795 = vsel %vm794, 0, %v793
        %v796 = vsub.s32 32, %v795
        %v797 = vshll.u32 %v788, %v795
        %v798 = vshrl.u32 %v780, %v796
        %v799 = vor.u32 %v797, %v798
        %v800 = vsub.s32 4294967266, %v795
        %v801 = vadd.s32 %v800, 127
        %v802 = vshll.u32 %v801, 23
        %v803 = vor.u32 4788187, %v802
        %v804 = vand.u32 2147483647, %v803
        %v806 = vcvt.s32.f32 %v799
        %v807 = vmul.f32 %v806, %v804
        %v808 = vxor.u32 %v807, 2147483648
        %v809 = vsel %vm726, %v808, %v807
        %v810 = vsub.s32 4, %v786
        %v811 = vsel %vm726, %v810, %v786
        %v812 = vsel %vm725, %v407, %v809
        %v813 = vsel %vm725, 0, %v811
        %v814 = vcosq.f32.pop %v812
        %v815 = vsinq.f32.pop %v812
        %vm816 = vweird.f32 %v407
        %v817 = vadd.s32 %v813, 3
        %v818 = vand.u32 %v817, 3
        %vm819 = vcmp.lt.s32.totalorder %v818, 2
        %vm820 = vcmp.eq.s32.totalorder %v818, 0
        %v821 = vxor.u32 %v815, 2147483648
        %v822 = vsel %vm820, %v814, %v821
        %vm823 = vcmp.eq.s32.totalorder %v818, 2
        %v824 = vxor.u32 %v814, 2147483648
        %v825 = vsel %vm823, %v824, %v815
        %v826 = vsel %vm819, %v822, %v825
        %v827 = vsel %vm816, nan, %v826
        %v828 = vand.u32 2147483647, %v408
        %vm829 = vcmp.le.f32.partialorder %v828, 0.7853982
        %vm830 = vcmp.lt.s32.totalorder %v408, 0
        %v831 = vand.u32 %v408, 2139095040
        %v832 = vshrl.u32 %v831, 23
        %v833 = vsub.s32 %v832, 127
        %v834 = vand.u32 2147483647, %v408
        %v835 = vand.u32 %v834, 8388607
        %v836 = vor.u32 %v835, 8388608
        %v837 = vsub.s32 0, %v836
        %v838 = vadd.s32 %v833, 1
        %vm839 = vcmp.gt.s32.totalorder %v838, 0
        %v840 = vsel %vm839, %v838, 0
        %v841 = vshrl.u32 %v840, 5
        %v842 = vand.u32 %v840, 31
        %v843 = vsub.s32 32, %v842
        %v844 = vshrl.u32 683565275, %v843
        %v845 = vshll.u32 683565275, %v842
        %v846 = vshrl.u32 2475754826, %v843
        %v847 = vor.u32 %v845, %v846
        %v848 = vshll.u32 2475754826, %v842
        %v849 = vshrl.u32 2131351028, %v843
        %v850 = vor.u32 %v848, %v849
        %v851 = vshll.u32 2131351028, %v842
        %v852 = vshrl.u32 2102212464, %v843
        %v853 = vor.u32 %v851, %v852
        %v854 = vshll.u32 2102212464, %v842
        %v855 = vshrl.u32 920167782, %v843
        %v856 = vor.u32 %v854, %v855
        %v857 = vshll.u32 920167782, %v842
        %v858 = vshrl.u32 1326507024, %v843
        %v859 = vor.u32 %v857, %v858
        %vm860 = vcmp.lt.s32.totalorder %v841, 1
        %vm861 = vcmp.lt.s32.totalorder %v841, 2
        %vm862 = vcmp.lt.s32.totalorder %v841, 3
        %vm863 = vcmp.lt.s32.totalorder %v841, 4
        %v864 = vsel %vm860, %v844, %v847
        %v865 = vsel %vm863, %v853, 2102212464
        %v866 = vsel %vm862, %v850, %v865
        %v867 = vsel %vm861, %v864, %v866
        %v868 = vsel %vm860, %v847, %v850
        %v869 = vsel %vm863, %v856, 920167782
        %v870 = vsel %vm862, %v853, %v869
        %v871 = vsel %vm861, %v868, %v870
        %v872 = vsel %vm860, %v850, %v853
        %v873 = vsel %vm863, %v859, 1326507024
        %v874 = vsel %vm862, %v856, %v873
        %v875 = vsel %vm861, %v872, %v874
        %v876 = vshll.u32 %v836, 8
        %v877 = vmul.u32.u64.compose %v876, %v875
        %v878 = vextract.low.u32 %v877
        %v879 = vextract.high.u32 %v877
        %v880 = vmul.u32.u64.compose %v876, %v871
        %v881 = vextract.low.u32 %v880
        %v882 = vextract.high.u32 %v880
        %v883 = vmul.u32 %v876, %v867
        %v884 = vadd.s32 %v879, %v881
        %vm885 = vc.u32 %v879, %v881
        %v886 = vadd.s32 %v882, 1
        %v887 = vsel %vm885, %v886, %v882
        %v888 = vadd.s32 %v883, %v887
        %v889 = vadd.s32 %v888, 536870912
        %v890 = vshrl.u32 %v889, 30
        %v891 = vshll.u32 %v890, 30
        %v892 = vsub.s32 %v888, %v891
        %vm893 = vcmp.lt.s32.totalorder %v892, 0
        %v894 = vsub.s32 0, %v892
        %v895 = vsel %vm893, %v894, %v892
        %v896 = vclz %v895
        %v897 = vsub.s32 %v896, 2
        %vm898 = vcmp.gt.s32.totalorder 0, %v897
        %v899 = vsel %vm898, 0, %v897
        %v900 = vsub.s32 32, %v899
        %v901 = vshll.u32 %v892, %v899
        %v902 = vshrl.u32 %v884, %v900
        %v903 = vor.u32 %v901, %v902
        %v904 = vsub.s32 4294967266, %v899
        %v905 = vadd.s32 %v904, 127
        %v906 = vshll.u32 %v905, 23
        %v907 = vor.u32 4788187, %v906
        %v908 = vand.u32 2147483647, %v907
        %v910 = vcvt.s32.f32 %v903
        %v911 = vmul.f32 %v910, %v908
        %v912 = vxor.u32 %v911, 2147483648
        %v913 = vsel %vm830, %v912, %v911
        %v914 = vsub.s32 4, %v890
        %v915 = vsel %vm830, %v914, %v890
        %v916 = vsel %vm829, %v408, %v913
        %v917 = vsel %vm829, 0, %v915
        %v918 = vcosq.f32.pop %v916
        %v919 = vsinq.f32.pop %v916
        %vm920 = vweird.f32 %v408
        %v921 = vadd.s32 %v917, 3
        %v922 = vand.u32 %v921, 3
        %vm923 = vcmp.lt.s32.totalorder %v922, 2
        %vm924 = vcmp.eq.s32.totalorder %v922, 0
        %v925 = vxor.u32 %v919, 2147483648
        %v926 = vsel %vm924, %v918, %v925
        %vm927 = vcmp.eq.s32.totalorder %v922, 2
        %v928 = vxor.u32 %v918, 2147483648
        %v929 = vsel %vm927, %v928, %v919
        %v930 = vsel %vm923, %v926, %v929
        %v931 = vsel %vm920, nan, %v930
        %v932 = vand.u32 2147483647, %v409
        %vm933 = vcmp.le.f32.partialorder %v932, 0.7853982
        %vm934 = vcmp.lt.s32.totalorder %v409, 0
        %v935 = vand.u32 %v409, 2139095040
        %v936 = vshrl.u32 %v935, 23
        %v937 = vsub.s32 %v936, 127
        %v938 = vand.u32 2147483647, %v409
        %v939 = vand.u32 %v938, 8388607
        %v940 = vor.u32 %v939, 8388608
        %v941 = vsub.s32 0, %v940
        %v942 = vadd.s32 %v937, 1
        %vm943 = vcmp.gt.s32.totalorder %v942, 0
        %v944 = vsel %vm943, %v942, 0
        %v945 = vshrl.u32 %v944, 5
        %v946 = vand.u32 %v944, 31
        %v947 = vsub.s32 32, %v946
        %v948 = vshrl.u32 683565275, %v947
        %v949 = vshll.u32 683565275, %v946
        %v950 = vshrl.u32 2475754826, %v947
        %v951 = vor.u32 %v949, %v950
        %v952 = vshll.u32 2475754826, %v946
        %v953 = vshrl.u32 2131351028, %v947
        %v954 = vor.u32 %v952, %v953
        %v955 = vshll.u32 2131351028, %v946
        %v956 = vshrl.u32 2102212464, %v947
        %v957 = vor.u32 %v955, %v956
        %v958 = vshll.u32 2102212464, %v946
        %v959 = vshrl.u32 920167782, %v947
        %v960 = vor.u32 %v958, %v959
        %v961 = vshll.u32 920167782, %v946
        %v962 = vshrl.u32 1326507024, %v947
        %v963 = vor.u32 %v961, %v962
        %vm964 = vcmp.lt.s32.totalorder %v945, 1
        %vm965 = vcmp.lt.s32.totalorder %v945, 2
        %vm966 = vcmp.lt.s32.totalorder %v945, 3
        %vm967 = vcmp.lt.s32.totalorder %v945, 4
        %v968 = vsel %vm964, %v948, %v951
        %v969 = vsel %vm967, %v957, 2102212464
        %v970 = vsel %vm966, %v954, %v969
        %v971 = vsel %vm965, %v968, %v970
        %v972 = vsel %vm964, %v951, %v954
        %v973 = vsel %vm967, %v960, 920167782
        %v974 = vsel %vm966, %v957, %v973
        %v975 = vsel %vm965, %v972, %v974
        %v976 = vsel %vm964, %v954, %v957
        %v977 = vsel %vm967, %v963, 1326507024
        %v978 = vsel %vm966, %v960, %v977
        %v979 = vsel %vm965, %v976, %v978
        %v980 = vshll.u32 %v940, 8
        %v981 = vmul.u32.u64.compose %v980, %v979
        %v982 = vextract.low.u32 %v981
        %v983 = vextract.high.u32 %v981
        %v984 = vmul.u32.u64.compose %v980, %v975
        %v985 = vextract.low.u32 %v984
        %v986 = vextract.high.u32 %v984
        %v987 = vmul.u32 %v980, %v971
        %v988 = vadd.s32 %v983, %v985
        %vm989 = vc.u32 %v983, %v985
        %v990 = vadd.s32 %v986, 1
        %v991 = vsel %vm989, %v990, %v986
        %v992 = vadd.s32 %v987, %v991
        %v993 = vadd.s32 %v992, 536870912
        %v994 = vshrl.u32 %v993, 30
        %v995 = vshll.u32 %v994, 30
        %v996 = vsub.s32 %v992, %v995
        %vm997 = vcmp.lt.s32.totalorder %v996, 0
        %v998 = vsub.s32 0, %v996
        %v999 = vsel %vm997, %v998, %v996
        %v1000 = vclz %v999
        %v1001 = vsub.s32 %v1000, 2
        %vm1002 = vcmp.gt.s32.totalorder 0, %v1001
        %v1003 = vsel %vm1002, 0, %v1001
        %v1004 = vsub.s32 32, %v1003
        %v1005 = vshll.u32 %v996, %v1003
        %v1006 = vshrl.u32 %v988, %v1004
        %v1007 = vor.u32 %v1005, %v1006
        %v1008 = vsub.s32 4294967266, %v1003
        %v1009 = vadd.s32 %v1008, 127
        %v1010 = vshll.u32 %v1009, 23
        %v1011 = vor.u32 4788187, %v1010
        %v1012 = vand.u32 2147483647, %v1011
        %v1014 = vcvt.s32.f32 %v1007
        %v1015 = vmul.f32 %v1014, %v1012
        %v1016 = vxor.u32 %v1015, 2147483648
        %v1017 = vsel %vm934, %v1016, %v1015
        %v1018 = vsub.s32 4, %v994
        %v1019 = vsel %vm934, %v1018, %v994
        %v1020 = vsel %vm933, %v409, %v1017
        %v1021 = vsel %vm933, 0, %v1019
        %v1022 = vcosq.f32.pop %v1020
        %v1023 = vsinq.f32.pop %v1020
        %vm1024 = vweird.f32 %v409
        %v1025 = vadd.s32 %v1021, 3
        %v1026 = vand.u32 %v1025, 3
        %vm1027 = vcmp.lt.s32.totalorder %v1026, 2
        %vm1028 = vcmp.eq.s32.totalorder %v1026, 0
        %v1029 = vxor.u32 %v1023, 2147483648
        %v1030 = vsel %vm1028, %v1022, %v1029
        %vm1031 = vcmp.eq.s32.totalorder %v1026, 2
        %v1032 = vxor.u32 %v1022, 2147483648
        %v1033 = vsel %vm1031, %v1032, %v1023
        %v1034 = vsel %vm1027, %v1030, %v1033
        %v1035 = vsel %vm1024, nan, %v1034
        %v1036 = vand.u32 2147483647, %v410
        %vm1037 = vcmp.le.f32.partialorder %v1036, 0.7853982
        %vm1038 = vcmp.lt.s32.totalorder %v410, 0
        %v1039 = vand.u32 %v410, 2139095040
        %v1040 = vshrl.u32 %v1039, 23
        %v1041 = vsub.s32 %v1040, 127
        %v1042 = vand.u32 2147483647, %v410
        %v1043 = vand.u32 %v1042, 8388607
        %v1044 = vor.u32 %v1043, 8388608
        %v1045 = vsub.s32 0, %v1044
        %v1046 = vadd.s32 %v1041, 1
        %vm1047 = vcmp.gt.s32.totalorder %v1046, 0
        %v1048 = vsel %vm1047, %v1046, 0
        %v1049 = vshrl.u32 %v1048, 5
        %v1050 = vand.u32 %v1048, 31
        %v1051 = vsub.s32 32, %v1050
        %v1052 = vshrl.u32 683565275, %v1051
        %v1053 = vshll.u32 683565275, %v1050
        %v1054 = vshrl.u32 2475754826, %v1051
        %v1055 = vor.u32 %v1053, %v1054
        %v1056 = vshll.u32 2475754826, %v1050
        %v1057 = vshrl.u32 2131351028, %v1051
        %v1058 = vor.u32 %v1056, %v1057
        %v1059 = vshll.u32 2131351028, %v1050
        %v1060 = vshrl.u32 2102212464, %v1051
        %v1061 = vor.u32 %v1059, %v1060
        %v1062 = vshll.u32 2102212464, %v1050
        %v1063 = vshrl.u32 920167782, %v1051
        %v1064 = vor.u32 %v1062, %v1063
        %v1065 = vshll.u32 920167782, %v1050
        %v1066 = vshrl.u32 1326507024, %v1051
        %v1067 = vor.u32 %v1065, %v1066
        %vm1068 = vcmp.lt.s32.totalorder %v1049, 1
        %vm1069 = vcmp.lt.s32.totalorder %v1049, 2
        %vm1070 = vcmp.lt.s32.totalorder %v1049, 3
        %vm1071 = vcmp.lt.s32.totalorder %v1049, 4
        %v1072 = vsel %vm1068, %v1052, %v1055
        %v1073 = vsel %vm1071, %v1061, 2102212464
        %v1074 = vsel %vm1070, %v1058, %v1073
        %v1075 = vsel %vm1069, %v1072, %v1074
        %v1076 = vsel %vm1068, %v1055, %v1058
        %v1077 = vsel %vm1071, %v1064, 920167782
        %v1078 = vsel %vm1070, %v1061, %v1077
        %v1079 = vsel %vm1069, %v1076, %v1078
        %v1080 = vsel %vm1068, %v1058, %v1061
        %v1081 = vsel %vm1071, %v1067, 1326507024
        %v1082 = vsel %vm1070, %v1064, %v1081
        %v1083 = vsel %vm1069, %v1080, %v1082
        %v1084 = vshll.u32 %v1044, 8
        %v1085 = vmul.u32.u64.compose %v1084, %v1083
        %v1086 = vextract.low.u32 %v1085
        %v1087 = vextract.high.u32 %v1085
        %v1088 = vmul.u32.u64.compose %v1084, %v1079
        %v1089 = vextract.low.u32 %v1088
        %v1090 = vextract.high.u32 %v1088
        %v1091 = vmul.u32 %v1084, %v1075
        %v1092 = vadd.s32 %v1087, %v1089
        %vm1093 = vc.u32 %v1087, %v1089
        %v1094 = vadd.s32 %v1090, 1
        %v1095 = vsel %vm1093, %v1094, %v1090
        %v1096 = vadd.s32 %v1091, %v1095
        %v1097 = vadd.s32 %v1096, 536870912
        %v1098 = vshrl.u32 %v1097, 30
        %v1099 = vshll.u32 %v1098, 30
        %v1100 = vsub.s32 %v1096, %v1099
        %vm1101 = vcmp.lt.s32.totalorder %v1100, 0
        %v1102 = vsub.s32 0, %v1100
        %v1103 = vsel %vm1101, %v1102, %v1100
        %v1104 = vclz %v1103
        %v1105 = vsub.s32 %v1104, 2
        %vm1106 = vcmp.gt.s32.totalorder 0, %v1105
        %v1107 = vsel %vm1106, 0, %v1105
        %v1108 = vsub.s32 32, %v1107
        %v1109 = vshll.u32 %v1100, %v1107
        %v1110 = vshrl.u32 %v1092, %v1108
        %v1111 = vor.u32 %v1109, %v1110
        %v1112 = vsub.s32 4294967266, %v1107
        %v1113 = vadd.s32 %v1112, 127
        %v1114 = vshll.u32 %v1113, 23
        %v1115 = vor.u32 4788187, %v1114
        %v1116 = vand.u32 2147483647, %v1115
        %v1118 = vcvt.s32.f32 %v1111
        %v1119 = vmul.f32 %v1118, %v1116
        %v1120 = vxor.u32 %v1119, 2147483648
        %v1121 = vsel %vm1038, %v1120, %v1119
        %v1122 = vsub.s32 4, %v1098
        %v1123 = vsel %vm1038, %v1122, %v1098
        %v1124 = vsel %vm1037, %v410, %v1121
        %v1125 = vsel %vm1037, 0, %v1123
        %v1126 = vcosq.f32.pop %v1124
        %v1127 = vsinq.f32.pop %v1124
        %vm1128 = vweird.f32 %v410
        %v1129 = vadd.s32 %v1125, 3
        %v1130 = vand.u32 %v1129, 3
        %vm1131 = vcmp.lt.s32.totalorder %v1130, 2
        %vm1132 = vcmp.eq.s32.totalorder %v1130, 0
        %v1133 = vxor.u32 %v1127, 2147483648
        %v1134 = vsel %vm1132, %v1126, %v1133
        %vm1135 = vcmp.eq.s32.totalorder %v1130, 2
        %v1136 = vxor.u32 %v1126, 2147483648
        %v1137 = vsel %vm1135, %v1136, %v1127
        %v1138 = vsel %vm1131, %v1134, %v1137
        %v1139 = vsel %vm1128, nan, %v1138
        %v1140 = vand.u32 2147483647, %v411
        %vm1141 = vcmp.le.f32.partialorder %v1140, 0.7853982
        %vm1142 = vcmp.lt.s32.totalorder %v411, 0
        %v1143 = vand.u32 %v411, 2139095040
        %v1144 = vshrl.u32 %v1143, 23
        %v1145 = vsub.s32 %v1144, 127
        %v1146 = vand.u32 2147483647, %v411
        %v1147 = vand.u32 %v1146, 8388607
        %v1148 = vor.u32 %v1147, 8388608
        %v1149 = vsub.s32 0, %v1148
        %v1150 = vadd.s32 %v1145, 1
        %vm1151 = vcmp.gt.s32.totalorder %v1150, 0
        %v1152 = vsel %vm1151, %v1150, 0
        %v1153 = vshrl.u32 %v1152, 5
        %v1154 = vand.u32 %v1152, 31
        %v1155 = vsub.s32 32, %v1154
        %v1156 = vshrl.u32 683565275, %v1155
        %v1157 = vshll.u32 683565275, %v1154
        %v1158 = vshrl.u32 2475754826, %v1155
        %v1159 = vor.u32 %v1157, %v1158
        %v1160 = vshll.u32 2475754826, %v1154
        %v1161 = vshrl.u32 2131351028, %v1155
        %v1162 = vor.u32 %v1160, %v1161
        %v1163 = vshll.u32 2131351028, %v1154
        %v1164 = vshrl.u32 2102212464, %v1155
        %v1165 = vor.u32 %v1163, %v1164
        %v1166 = vshll.u32 2102212464, %v1154
        %v1167 = vshrl.u32 920167782, %v1155
        %v1168 = vor.u32 %v1166, %v1167
        %v1169 = vshll.u32 920167782, %v1154
        %v1170 = vshrl.u32 1326507024, %v1155
        %v1171 = vor.u32 %v1169, %v1170
        %vm1172 = vcmp.lt.s32.totalorder %v1153, 1
        %vm1173 = vcmp.lt.s32.totalorder %v1153, 2
        %vm1174 = vcmp.lt.s32.totalorder %v1153, 3
        %vm1175 = vcmp.lt.s32.totalorder %v1153, 4
        %v1176 = vsel %vm1172, %v1156, %v1159
        %v1177 = vsel %vm1175, %v1165, 2102212464
        %v1178 = vsel %vm1174, %v1162, %v1177
        %v1179 = vsel %vm1173, %v1176, %v1178
        %v1180 = vsel %vm1172, %v1159, %v1162
        %v1181 = vsel %vm1175, %v1168, 920167782
        %v1182 = vsel %vm1174, %v1165, %v1181
        %v1183 = vsel %vm1173, %v1180, %v1182
        %v1184 = vsel %vm1172, %v1162, %v1165
        %v1185 = vsel %vm1175, %v1171, 1326507024
        %v1186 = vsel %vm1174, %v1168, %v1185
        %v1187 = vsel %vm1173, %v1184, %v1186
        %v1188 = vshll.u32 %v1148, 8
        %v1189 = vmul.u32.u64.compose %v1188, %v1187
        %v1190 = vextract.low.u32 %v1189
        %v1191 = vextract.high.u32 %v1189
        %v1192 = vmul.u32.u64.compose %v1188, %v1183
        %v1193 = vextract.low.u32 %v1192
        %v1194 = vextract.high.u32 %v1192
        %v1195 = vmul.u32 %v1188, %v1179
        %v1196 = vadd.s32 %v1191, %v1193
        %vm1197 = vc.u32 %v1191, %v1193
        %v1198 = vadd.s32 %v1194, 1
        %v1199 = vsel %vm1197, %v1198, %v1194
        %v1200 = vadd.s32 %v1195, %v1199
        %v1201 = vadd.s32 %v1200, 536870912
        %v1202 = vshrl.u32 %v1201, 30
        %v1203 = vshll.u32 %v1202, 30
        %v1204 = vsub.s32 %v1200, %v1203
        %vm1205 = vcmp.lt.s32.totalorder %v1204, 0
        %v1206 = vsub.s32 0, %v1204
        %v1207 = vsel %vm1205, %v1206, %v1204
        %v1208 = vclz %v1207
        %v1209 = vsub.s32 %v1208, 2
        %vm1210 = vcmp.gt.s32.totalorder 0, %v1209
        %v1211 = vsel %vm1210, 0, %v1209
        %v1212 = vsub.s32 32, %v1211
        %v1213 = vshll.u32 %v1204, %v1211
        %v1214 = vshrl.u32 %v1196, %v1212
        %v1215 = vor.u32 %v1213, %v1214
        %v1216 = vsub.s32 4294967266, %v1211
        %v1217 = vadd.s32 %v1216, 127
        %v1218 = vshll.u32 %v1217, 23
        %v1219 = vor.u32 4788187, %v1218
        %v1220 = vand.u32 2147483647, %v1219
        %v1222 = vcvt.s32.f32 %v1215
        %v1223 = vmul.f32 %v1222, %v1220
        %v1224 = vxor.u32 %v1223, 2147483648
        %v1225 = vsel %vm1142, %v1224, %v1223
        %v1226 = vsub.s32 4, %v1202
        %v1227 = vsel %vm1142, %v1226, %v1202
        %v1228 = vsel %vm1141, %v411, %v1225
        %v1229 = vsel %vm1141, 0, %v1227
        %v1230 = vcosq.f32.pop %v1228
        %v1231 = vsinq.f32.pop %v1228
        %vm1232 = vweird.f32 %v411
        %v1233 = vadd.s32 %v1229, 3
        %v1234 = vand.u32 %v1233, 3
        %vm1235 = vcmp.lt.s32.totalorder %v1234, 2
        %vm1236 = vcmp.eq.s32.totalorder %v1234, 0
        %v1237 = vxor.u32 %v1231, 2147483648
        %v1238 = vsel %vm1236, %v1230, %v1237
        %vm1239 = vcmp.eq.s32.totalorder %v1234, 2
        %v1240 = vxor.u32 %v1230, 2147483648
        %v1241 = vsel %vm1239, %v1240, %v1231
        %v1242 = vsel %vm1235, %v1238, %v1241
        %v1243 = vsel %vm1232, nan, %v1242
        %v1244 = vand.u32 2147483647, %v404
        %vm1245 = vcmp.le.f32.partialorder %v1244, 0.7853982
        %vm1246 = vcmp.lt.s32.totalorder %v404, 0
        %v1247 = vand.u32 %v404, 2139095040
        %v1248 = vshrl.u32 %v1247, 23
        %v1249 = vsub.s32 %v1248, 127
        %v1250 = vand.u32 2147483647, %v404
        %v1251 = vand.u32 %v1250, 8388607
        %v1252 = vor.u32 %v1251, 8388608
        %v1253 = vsub.s32 0, %v1252
        %v1254 = vadd.s32 %v1249, 1
        %vm1255 = vcmp.gt.s32.totalorder %v1254, 0
        %v1256 = vsel %vm1255, %v1254, 0
        %v1257 = vshrl.u32 %v1256, 5
        %v1258 = vand.u32 %v1256, 31
        %v1259 = vsub.s32 32, %v1258
        %v1260 = vshrl.u32 683565275, %v1259
        %v1261 = vshll.u32 683565275, %v1258
        %v1262 = vshrl.u32 2475754826, %v1259
        %v1263 = vor.u32 %v1261, %v1262
        %v1264 = vshll.u32 2475754826, %v1258
        %v1265 = vshrl.u32 2131351028, %v1259
        %v1266 = vor.u32 %v1264, %v1265
        %v1267 = vshll.u32 2131351028, %v1258
        %v1268 = vshrl.u32 2102212464, %v1259
        %v1269 = vor.u32 %v1267, %v1268
        %v1270 = vshll.u32 2102212464, %v1258
        %v1271 = vshrl.u32 920167782, %v1259
        %v1272 = vor.u32 %v1270, %v1271
        %v1273 = vshll.u32 920167782, %v1258
        %v1274 = vshrl.u32 1326507024, %v1259
        %v1275 = vor.u32 %v1273, %v1274
        %vm1276 = vcmp.lt.s32.totalorder %v1257, 1
        %vm1277 = vcmp.lt.s32.totalorder %v1257, 2
        %vm1278 = vcmp.lt.s32.totalorder %v1257, 3
        %vm1279 = vcmp.lt.s32.totalorder %v1257, 4
        %v1280 = vsel %vm1276, %v1260, %v1263
        %v1281 = vsel %vm1279, %v1269, 2102212464
        %v1282 = vsel %vm1278, %v1266, %v1281
        %v1283 = vsel %vm1277, %v1280, %v1282
        %v1284 = vsel %vm1276, %v1263, %v1266
        %v1285 = vsel %vm1279, %v1272, 920167782
        %v1286 = vsel %vm1278, %v1269, %v1285
        %v1287 = vsel %vm1277, %v1284, %v1286
        %v1288 = vsel %vm1276, %v1266, %v1269
        %v1289 = vsel %vm1279, %v1275, 1326507024
        %v1290 = vsel %vm1278, %v1272, %v1289
        %v1291 = vsel %vm1277, %v1288, %v1290
        %v1292 = vshll.u32 %v1252, 8
        %v1293 = vmul.u32.u64.compose %v1292, %v1291
        %v1294 = vextract.low.u32 %v1293
        %v1295 = vextract.high.u32 %v1293
        %v1296 = vmul.u32.u64.compose %v1292, %v1287
        %v1297 = vextract.low.u32 %v1296
        %v1298 = vextract.high.u32 %v1296
        %v1299 = vmul.u32 %v1292, %v1283
        %v1300 = vadd.s32 %v1295, %v1297
        %vm1301 = vc.u32 %v1295, %v1297
        %v1302 = vadd.s32 %v1298, 1
        %v1303 = vsel %vm1301, %v1302, %v1298
        %v1304 = vadd.s32 %v1299, %v1303
        %v1305 = vadd.s32 %v1304, 536870912
        %v1306 = vshrl.u32 %v1305, 30
        %v1307 = vshll.u32 %v1306, 30
        %v1308 = vsub.s32 %v1304, %v1307
        %vm1309 = vcmp.lt.s32.totalorder %v1308, 0
        %v1310 = vsub.s32 0, %v1308
        %v1311 = vsel %vm1309, %v1310, %v1308
        %v1312 = vclz %v1311
        %v1313 = vsub.s32 %v1312, 2
        %vm1314 = vcmp.gt.s32.totalorder 0, %v1313
        %v1315 = vsel %vm1314, 0, %v1313
        %v1316 = vsub.s32 32, %v1315
        %v1317 = vshll.u32 %v1308, %v1315
        %v1318 = vshrl.u32 %v1300, %v1316
        %v1319 = vor.u32 %v1317, %v1318
        %v1320 = vsub.s32 4294967266, %v1315
        %v1321 = vadd.s32 %v1320, 127
        %v1322 = vshll.u32 %v1321, 23
        %v1323 = vor.u32 4788187, %v1322
        %v1324 = vand.u32 2147483647, %v1323
        %v1326 = vcvt.s32.f32 %v1319
        %v1327 = vmul.f32 %v1326, %v1324
        %v1328 = vxor.u32 %v1327, 2147483648
        %v1329 = vsel %vm1246, %v1328, %v1327
        %v1330 = vsub.s32 4, %v1306
        %v1331 = vsel %vm1246, %v1330, %v1306
        %v1332 = vsel %vm1245, %v404, %v1329
        %v1333 = vsel %vm1245, 0, %v1331
        %v1334 = vcosq.f32.pop %v1332
        %v1335 = vsinq.f32.pop %v1332
        %vm1336 = vweird.f32 %v404
        %v1337 = vand.u32 %v1333, 3
        %vm1338 = vcmp.lt.s32.totalorder %v1337, 2
        %vm1339 = vcmp.eq.s32.totalorder %v1337, 0
        %v1340 = vxor.u32 %v1335, 2147483648
        %v1341 = vsel %vm1339, %v1334, %v1340
        %vm1342 = vcmp.eq.s32.totalorder %v1337, 2
        %v1343 = vxor.u32 %v1334, 2147483648
        %v1344 = vsel %vm1342, %v1343, %v1335
        %v1345 = vsel %vm1338, %v1341, %v1344
        %v1346 = vsel %vm1336, nan, %v1345
        %v1347 = vand.u32 2147483647, %v405
        %vm1348 = vcmp.le.f32.partialorder %v1347, 0.7853982
        %vm1349 = vcmp.lt.s32.totalorder %v405, 0
        %v1350 = vand.u32 %v405, 2139095040
        %v1351 = vshrl.u32 %v1350, 23
        %v1352 = vsub.s32 %v1351, 127
        %v1353 = vand.u32 2147483647, %v405
        %v1354 = vand.u32 %v1353, 8388607
        %v1355 = vor.u32 %v1354, 8388608
        %v1356 = vsub.s32 0, %v1355
        %v1357 = vadd.s32 %v1352, 1
        %vm1358 = vcmp.gt.s32.totalorder %v1357, 0
        %v1359 = vsel %vm1358, %v1357, 0
        %v1360 = vshrl.u32 %v1359, 5
        %v1361 = vand.u32 %v1359, 31
        %v1362 = vsub.s32 32, %v1361
        %v1363 = vshrl.u32 683565275, %v1362
        %v1364 = vshll.u32 683565275, %v1361
        %v1365 = vshrl.u32 2475754826, %v1362
        %v1366 = vor.u32 %v1364, %v1365
        %v1367 = vshll.u32 2475754826, %v1361
        %v1368 = vshrl.u32 2131351028, %v1362
        %v1369 = vor.u32 %v1367, %v1368
        %v1370 = vshll.u32 2131351028, %v1361
        %v1371 = vshrl.u32 2102212464, %v1362
        %v1372 = vor.u32 %v1370, %v1371
        %v1373 = vshll.u32 2102212464, %v1361
        %v1374 = vshrl.u32 920167782, %v1362
        %v1375 = vor.u32 %v1373, %v1374
        %v1376 = vshll.u32 920167782, %v1361
        %v1377 = vshrl.u32 1326507024, %v1362
        %v1378 = vor.u32 %v1376, %v1377
        %vm1379 = vcmp.lt.s32.totalorder %v1360, 1
        %vm1380 = vcmp.lt.s32.totalorder %v1360, 2
        %vm1381 = vcmp.lt.s32.totalorder %v1360, 3
        %vm1382 = vcmp.lt.s32.totalorder %v1360, 4
        %v1383 = vsel %vm1379, %v1363, %v1366
        %v1384 = vsel %vm1382, %v1372, 2102212464
        %v1385 = vsel %vm1381, %v1369, %v1384
        %v1386 = vsel %vm1380, %v1383, %v1385
        %v1387 = vsel %vm1379, %v1366, %v1369
        %v1388 = vsel %vm1382, %v1375, 920167782
        %v1389 = vsel %vm1381, %v1372, %v1388
        %v1390 = vsel %vm1380, %v1387, %v1389
        %v1391 = vsel %vm1379, %v1369, %v1372
        %v1392 = vsel %vm1382, %v1378, 1326507024
        %v1393 = vsel %vm1381, %v1375, %v1392
        %v1394 = vsel %vm1380, %v1391, %v1393
        %v1395 = vshll.u32 %v1355, 8
        %v1396 = vmul.u32.u64.compose %v1395, %v1394
        %v1397 = vextract.low.u32 %v1396
        %v1398 = vextract.high.u32 %v1396
        %v1399 = vmul.u32.u64.compose %v1395, %v1390
        %v1400 = vextract.low.u32 %v1399
        %v1401 = vextract.high.u32 %v1399
        %v1402 = vmul.u32 %v1395, %v1386
        %v1403 = vadd.s32 %v1398, %v1400
        %vm1404 = vc.u32 %v1398, %v1400
        %v1405 = vadd.s32 %v1401, 1
        %v1406 = vsel %vm1404, %v1405, %v1401
        %v1407 = vadd.s32 %v1402, %v1406
        %v1408 = vadd.s32 %v1407, 536870912
        %v1409 = vshrl.u32 %v1408, 30
        %v1410 = vshll.u32 %v1409, 30
        %v1411 = vsub.s32 %v1407, %v1410
        %vm1412 = vcmp.lt.s32.totalorder %v1411, 0
        %v1413 = vsub.s32 0, %v1411
        %v1414 = vsel %vm1412, %v1413, %v1411
        %v1415 = vclz %v1414
        %v1416 = vsub.s32 %v1415, 2
        %vm1417 = vcmp.gt.s32.totalorder 0, %v1416
        %v1418 = vsel %vm1417, 0, %v1416
        %v1419 = vsub.s32 32, %v1418
        %v1420 = vshll.u32 %v1411, %v1418
        %v1421 = vshrl.u32 %v1403, %v1419
        %v1422 = vor.u32 %v1420, %v1421
        %v1423 = vsub.s32 4294967266, %v1418
        %v1424 = vadd.s32 %v1423, 127
        %v1425 = vshll.u32 %v1424, 23
        %v1426 = vor.u32 4788187, %v1425
        %v1427 = vand.u32 2147483647, %v1426
        %v1429 = vcvt.s32.f32 %v1422
        %v1430 = vmul.f32 %v1429, %v1427
        %v1431 = vxor.u32 %v1430, 2147483648
        %v1432 = vsel %vm1349, %v1431, %v1430
        %v1433 = vsub.s32 4, %v1409
        %v1434 = vsel %vm1349, %v1433, %v1409
        %v1435 = vsel %vm1348, %v405, %v1432
        %v1436 = vsel %vm1348, 0, %v1434
        %v1437 = vcosq.f32.pop %v1435
        %v1438 = vsinq.f32.pop %v1435
        %vm1439 = vweird.f32 %v405
        %v1440 = vand.u32 %v1436, 3
        %vm1441 = vcmp.lt.s32.totalorder %v1440, 2
        %vm1442 = vcmp.eq.s32.totalorder %v1440, 0
        %v1443 = vxor.u32 %v1438, 2147483648
        %v1444 = vsel %vm1442, %v1437, %v1443
        %vm1445 = vcmp.eq.s32.totalorder %v1440, 2
        %v1446 = vxor.u32 %v1437, 2147483648
        %v1447 = vsel %vm1445, %v1446, %v1438
        %v1448 = vsel %vm1441, %v1444, %v1447
        %v1449 = vsel %vm1439, nan, %v1448
        %v1450 = vand.u32 2147483647, %v406
        %vm1451 = vcmp.le.f32.partialorder %v1450, 0.7853982
        %vm1452 = vcmp.lt.s32.totalorder %v406, 0
        %v1453 = vand.u32 %v406, 2139095040
        %v1454 = vshrl.u32 %v1453, 23
        %v1455 = vsub.s32 %v1454, 127
        %v1456 = vand.u32 2147483647, %v406
        %v1457 = vand.u32 %v1456, 8388607
        %v1458 = vor.u32 %v1457, 8388608
        %v1459 = vsub.s32 0, %v1458
        %v1460 = vadd.s32 %v1455, 1
        %vm1461 = vcmp.gt.s32.totalorder %v1460, 0
        %v1462 = vsel %vm1461, %v1460, 0
        %v1463 = vshrl.u32 %v1462, 5
        %v1464 = vand.u32 %v1462, 31
        %v1465 = vsub.s32 32, %v1464
        %v1466 = vshrl.u32 683565275, %v1465
        %v1467 = vshll.u32 683565275, %v1464
        %v1468 = vshrl.u32 2475754826, %v1465
        %v1469 = vor.u32 %v1467, %v1468
        %v1470 = vshll.u32 2475754826, %v1464
        %v1471 = vshrl.u32 2131351028, %v1465
        %v1472 = vor.u32 %v1470, %v1471
        %v1473 = vshll.u32 2131351028, %v1464
        %v1474 = vshrl.u32 2102212464, %v1465
        %v1475 = vor.u32 %v1473, %v1474
        %v1476 = vshll.u32 2102212464, %v1464
        %v1477 = vshrl.u32 920167782, %v1465
        %v1478 = vor.u32 %v1476, %v1477
        %v1479 = vshll.u32 920167782, %v1464
        %v1480 = vshrl.u32 1326507024, %v1465
        %v1481 = vor.u32 %v1479, %v1480
        %vm1482 = vcmp.lt.s32.totalorder %v1463, 1
        %vm1483 = vcmp.lt.s32.totalorder %v1463, 2
        %vm1484 = vcmp.lt.s32.totalorder %v1463, 3
        %vm1485 = vcmp.lt.s32.totalorder %v1463, 4
        %v1486 = vsel %vm1482, %v1466, %v1469
        %v1487 = vsel %vm1485, %v1475, 2102212464
        %v1488 = vsel %vm1484, %v1472, %v1487
        %v1489 = vsel %vm1483, %v1486, %v1488
        %v1490 = vsel %vm1482, %v1469, %v1472
        %v1491 = vsel %vm1485, %v1478, 920167782
        %v1492 = vsel %vm1484, %v1475, %v1491
        %v1493 = vsel %vm1483, %v1490, %v1492
        %v1494 = vsel %vm1482, %v1472, %v1475
        %v1495 = vsel %vm1485, %v1481, 1326507024
        %v1496 = vsel %vm1484, %v1478, %v1495
        %v1497 = vsel %vm1483, %v1494, %v1496
        %v1498 = vshll.u32 %v1458, 8
        %v1499 = vmul.u32.u64.compose %v1498, %v1497
        %v1500 = vextract.low.u32 %v1499
        %v1501 = vextract.high.u32 %v1499
        %v1502 = vmul.u32.u64.compose %v1498, %v1493
        %v1503 = vextract.low.u32 %v1502
        %v1504 = vextract.high.u32 %v1502
        %v1505 = vmul.u32 %v1498, %v1489
        %v1506 = vadd.s32 %v1501, %v1503
        %vm1507 = vc.u32 %v1501, %v1503
        %v1508 = vadd.s32 %v1504, 1
        %v1509 = vsel %vm1507, %v1508, %v1504
        %v1510 = vadd.s32 %v1505, %v1509
        %v1511 = vadd.s32 %v1510, 536870912
        %v1512 = vshrl.u32 %v1511, 30
        %v1513 = vshll.u32 %v1512, 30
        %v1514 = vsub.s32 %v1510, %v1513
        %vm1515 = vcmp.lt.s32.totalorder %v1514, 0
        %v1516 = vsub.s32 0, %v1514
        %v1517 = vsel %vm1515, %v1516, %v1514
        %v1518 = vclz %v1517
        %v1519 = vsub.s32 %v1518, 2
        %vm1520 = vcmp.gt.s32.totalorder 0, %v1519
        %v1521 = vsel %vm1520, 0, %v1519
        %v1522 = vsub.s32 32, %v1521
        %v1523 = vshll.u32 %v1514, %v1521
        %v1524 = vshrl.u32 %v1506, %v1522
        %v1525 = vor.u32 %v1523, %v1524
        %v1526 = vsub.s32 4294967266, %v1521
        %v1527 = vadd.s32 %v1526, 127
        %v1528 = vshll.u32 %v1527, 23
        %v1529 = vor.u32 4788187, %v1528
        %v1530 = vand.u32 2147483647, %v1529
        %v1532 = vcvt.s32.f32 %v1525
        %v1533 = vmul.f32 %v1532, %v1530
        %v1534 = vxor.u32 %v1533, 2147483648
        %v1535 = vsel %vm1452, %v1534, %v1533
        %v1536 = vsub.s32 4, %v1512
        %v1537 = vsel %vm1452, %v1536, %v1512
        %v1538 = vsel %vm1451, %v406, %v1535
        %v1539 = vsel %vm1451, 0, %v1537
        %v1540 = vcosq.f32.pop %v1538
        %v1541 = vsinq.f32.pop %v1538
        %vm1542 = vweird.f32 %v406
        %v1543 = vand.u32 %v1539, 3
        %vm1544 = vcmp.lt.s32.totalorder %v1543, 2
        %vm1545 = vcmp.eq.s32.totalorder %v1543, 0
        %v1546 = vxor.u32 %v1541, 2147483648
        %v1547 = vsel %vm1545, %v1540, %v1546
        %vm1548 = vcmp.eq.s32.totalorder %v1543, 2
        %v1549 = vxor.u32 %v1540, 2147483648
        %v1550 = vsel %vm1548, %v1549, %v1541
        %v1551 = vsel %vm1544, %v1547, %v1550
        %v1552 = vsel %vm1542, nan, %v1551
        %v1553 = vand.u32 2147483647, %v407
        %vm1554 = vcmp.le.f32.partialorder %v1553, 0.7853982
        %vm1555 = vcmp.lt.s32.totalorder %v407, 0
        %v1556 = vand.u32 %v407, 2139095040
        %v1557 = vshrl.u32 %v1556, 23
        %v1558 = vsub.s32 %v1557, 127
        %v1559 = vand.u32 2147483647, %v407
        %v1560 = vand.u32 %v1559, 8388607
        %v1561 = vor.u32 %v1560, 8388608
        %v1562 = vsub.s32 0, %v1561
        %v1563 = vadd.s32 %v1558, 1
        %vm1564 = vcmp.gt.s32.totalorder %v1563, 0
        %v1565 = vsel %vm1564, %v1563, 0
        %v1566 = vshrl.u32 %v1565, 5
        %v1567 = vand.u32 %v1565, 31
        %v1568 = vsub.s32 32, %v1567
        %v1569 = vshrl.u32 683565275, %v1568
        %v1570 = vshll.u32 683565275, %v1567
        %v1571 = vshrl.u32 2475754826, %v1568
        %v1572 = vor.u32 %v1570, %v1571
        %v1573 = vshll.u32 2475754826, %v1567
        %v1574 = vshrl.u32 2131351028, %v1568
        %v1575 = vor.u32 %v1573, %v1574
        %v1576 = vshll.u32 2131351028, %v1567
        %v1577 = vshrl.u32 2102212464, %v1568
        %v1578 = vor.u32 %v1576, %v1577
        %v1579 = vshll.u32 2102212464, %v1567
        %v1580 = vshrl.u32 920167782, %v1568
        %v1581 = vor.u32 %v1579, %v1580
        %v1582 = vshll.u32 920167782, %v1567
        %v1583 = vshrl.u32 1326507024, %v1568
        %v1584 = vor.u32 %v1582, %v1583
        %vm1585 = vcmp.lt.s32.totalorder %v1566, 1
        %vm1586 = vcmp.lt.s32.totalorder %v1566, 2
        %vm1587 = vcmp.lt.s32.totalorder %v1566, 3
        %vm1588 = vcmp.lt.s32.totalorder %v1566, 4
        %v1589 = vsel %vm1585, %v1569, %v1572
        %v1590 = vsel %vm1588, %v1578, 2102212464
        %v1591 = vsel %vm1587, %v1575, %v1590
        %v1592 = vsel %vm1586, %v1589, %v1591
        %v1593 = vsel %vm1585, %v1572, %v1575
        %v1594 = vsel %vm1588, %v1581, 920167782
        %v1595 = vsel %vm1587, %v1578, %v1594
        %v1596 = vsel %vm1586, %v1593, %v1595
        %v1597 = vsel %vm1585, %v1575, %v1578
        %v1598 = vsel %vm1588, %v1584, 1326507024
        %v1599 = vsel %vm1587, %v1581, %v1598
        %v1600 = vsel %vm1586, %v1597, %v1599
        %v1601 = vshll.u32 %v1561, 8
        %v1602 = vmul.u32.u64.compose %v1601, %v1600
        %v1603 = vextract.low.u32 %v1602
        %v1604 = vextract.high.u32 %v1602
        %v1605 = vmul.u32.u64.compose %v1601, %v1596
        %v1606 = vextract.low.u32 %v1605
        %v1607 = vextract.high.u32 %v1605
        %v1608 = vmul.u32 %v1601, %v1592
        %v1609 = vadd.s32 %v1604, %v1606
        %vm1610 = vc.u32 %v1604, %v1606
        %v1611 = vadd.s32 %v1607, 1
        %v1612 = vsel %vm1610, %v1611, %v1607
        %v1613 = vadd.s32 %v1608, %v1612
        %v1614 = vadd.s32 %v1613, 536870912
        %v1615 = vshrl.u32 %v1614, 30
        %v1616 = vshll.u32 %v1615, 30
        %v1617 = vsub.s32 %v1613, %v1616
        %vm1618 = vcmp.lt.s32.totalorder %v1617, 0
        %v1619 = vsub.s32 0, %v1617
        %v1620 = vsel %vm1618, %v1619, %v1617
        %v1621 = vclz %v1620
        %v1622 = vsub.s32 %v1621, 2
        %vm1623 = vcmp.gt.s32.totalorder 0, %v1622
        %v1624 = vsel %vm1623, 0, %v1622
        %v1625 = vsub.s32 32, %v1624
        %v1626 = vshll.u32 %v1617, %v1624
        %v1627 = vshrl.u32 %v1609, %v1625
        %v1628 = vor.u32 %v1626, %v1627
        %v1629 = vsub.s32 4294967266, %v1624
        %v1630 = vadd.s32 %v1629, 127
        %v1631 = vshll.u32 %v1630, 23
        %v1632 = vor.u32 4788187, %v1631
        %v1633 = vand.u32 2147483647, %v1632
        %v1635 = vcvt.s32.f32 %v1628
        %v1636 = vmul.f32 %v1635, %v1633
        %v1637 = vxor.u32 %v1636, 2147483648
        %v1638 = vsel %vm1555, %v1637, %v1636
        %v1639 = vsub.s32 4, %v1615
        %v1640 = vsel %vm1555, %v1639, %v1615
        %v1641 = vsel %vm1554, %v407, %v1638
        %v1642 = vsel %vm1554, 0, %v1640
        %v1643 = vcosq.f32.pop %v1641
        %v1644 = vsinq.f32.pop %v1641
        %vm1645 = vweird.f32 %v407
        %v1646 = vand.u32 %v1642, 3
        %vm1647 = vcmp.lt.s32.totalorder %v1646, 2
        %vm1648 = vcmp.eq.s32.totalorder %v1646, 0
        %v1649 = vxor.u32 %v1644, 2147483648
        %v1650 = vsel %vm1648, %v1643, %v1649
        %vm1651 = vcmp.eq.s32.totalorder %v1646, 2
        %v1652 = vxor.u32 %v1643, 2147483648
        %v1653 = vsel %vm1651, %v1652, %v1644
        %v1654 = vsel %vm1647, %v1650, %v1653
        %v1655 = vsel %vm1645, nan, %v1654
        %v1656 = vand.u32 2147483647, %v408
        %vm1657 = vcmp.le.f32.partialorder %v1656, 0.7853982
        %vm1658 = vcmp.lt.s32.totalorder %v408, 0
        %v1659 = vand.u32 %v408, 2139095040
        %v1660 = vshrl.u32 %v1659, 23
        %v1661 = vsub.s32 %v1660, 127
        %v1662 = vand.u32 2147483647, %v408
        %v1663 = vand.u32 %v1662, 8388607
        %v1664 = vor.u32 %v1663, 8388608
        %v1665 = vsub.s32 0, %v1664
        %v1666 = vadd.s32 %v1661, 1
        %vm1667 = vcmp.gt.s32.totalorder %v1666, 0
        %v1668 = vsel %vm1667, %v1666, 0
        %v1669 = vshrl.u32 %v1668, 5
        %v1670 = vand.u32 %v1668, 31
        %v1671 = vsub.s32 32, %v1670
        %v1672 = vshrl.u32 683565275, %v1671
        %v1673 = vshll.u32 683565275, %v1670
        %v1674 = vshrl.u32 2475754826, %v1671
        %v1675 = vor.u32 %v1673, %v1674
        %v1676 = vshll.u32 2475754826, %v1670
        %v1677 = vshrl.u32 2131351028, %v1671
        %v1678 = vor.u32 %v1676, %v1677
        %v1679 = vshll.u32 2131351028, %v1670
        %v1680 = vshrl.u32 2102212464, %v1671
        %v1681 = vor.u32 %v1679, %v1680
        %v1682 = vshll.u32 2102212464, %v1670
        %v1683 = vshrl.u32 920167782, %v1671
        %v1684 = vor.u32 %v1682, %v1683
        %v1685 = vshll.u32 920167782, %v1670
        %v1686 = vshrl.u32 1326507024, %v1671
        %v1687 = vor.u32 %v1685, %v1686
        %vm1688 = vcmp.lt.s32.totalorder %v1669, 1
        %vm1689 = vcmp.lt.s32.totalorder %v1669, 2
        %vm1690 = vcmp.lt.s32.totalorder %v1669, 3
        %vm1691 = vcmp.lt.s32.totalorder %v1669, 4
        %v1692 = vsel %vm1688, %v1672, %v1675
        %v1693 = vsel %vm1691, %v1681, 2102212464
        %v1694 = vsel %vm1690, %v1678, %v1693
        %v1695 = vsel %vm1689, %v1692, %v1694
        %v1696 = vsel %vm1688, %v1675, %v1678
        %v1697 = vsel %vm1691, %v1684, 920167782
        %v1698 = vsel %vm1690, %v1681, %v1697
        %v1699 = vsel %vm1689, %v1696, %v1698
        %v1700 = vsel %vm1688, %v1678, %v1681
        %v1701 = vsel %vm1691, %v1687, 1326507024
        %v1702 = vsel %vm1690, %v1684, %v1701
        %v1703 = vsel %vm1689, %v1700, %v1702
        %v1704 = vshll.u32 %v1664, 8
        %v1705 = vmul.u32.u64.compose %v1704, %v1703
        %v1706 = vextract.low.u32 %v1705
        %v1707 = vextract.high.u32 %v1705
        %v1708 = vmul.u32.u64.compose %v1704, %v1699
        %v1709 = vextract.low.u32 %v1708
        %v1710 = vextract.high.u32 %v1708
        %v1711 = vmul.u32 %v1704, %v1695
        %v1712 = vadd.s32 %v1707, %v1709
        %vm1713 = vc.u32 %v1707, %v1709
        %v1714 = vadd.s32 %v1710, 1
        %v1715 = vsel %vm1713, %v1714, %v1710
        %v1716 = vadd.s32 %v1711, %v1715
        %v1717 = vadd.s32 %v1716, 536870912
        %v1718 = vshrl.u32 %v1717, 30
        %v1719 = vshll.u32 %v1718, 30
        %v1720 = vsub.s32 %v1716, %v1719
        %vm1721 = vcmp.lt.s32.totalorder %v1720, 0
        %v1722 = vsub.s32 0, %v1720
        %v1723 = vsel %vm1721, %v1722, %v1720
        %v1724 = vclz %v1723
        %v1725 = vsub.s32 %v1724, 2
        %vm1726 = vcmp.gt.s32.totalorder 0, %v1725
        %v1727 = vsel %vm1726, 0, %v1725
        %v1728 = vsub.s32 32, %v1727
        %v1729 = vshll.u32 %v1720, %v1727
        %v1730 = vshrl.u32 %v1712, %v1728
        %v1731 = vor.u32 %v1729, %v1730
        %v1732 = vsub.s32 4294967266, %v1727
        %v1733 = vadd.s32 %v1732, 127
        %v1734 = vshll.u32 %v1733, 23
        %v1735 = vor.u32 4788187, %v1734
        %v1736 = vand.u32 2147483647, %v1735
        %v1738 = vcvt.s32.f32 %v1731
        %v1739 = vmul.f32 %v1738, %v1736
        %v1740 = vxor.u32 %v1739, 2147483648
        %v1741 = vsel %vm1658, %v1740, %v1739
        %v1742 = vsub.s32 4, %v1718
        %v1743 = vsel %vm1658, %v1742, %v1718
        %v1744 = vsel %vm1657, %v408, %v1741
        %v1745 = vsel %vm1657, 0, %v1743
        %v1746 = vcosq.f32.pop %v1744
        %v1747 = vsinq.f32.pop %v1744
        %vm1748 = vweird.f32 %v408
        %v1749 = vand.u32 %v1745, 3
        %vm1750 = vcmp.lt.s32.totalorder %v1749, 2
        %vm1751 = vcmp.eq.s32.totalorder %v1749, 0
        %v1752 = vxor.u32 %v1747, 2147483648
        %v1753 = vsel %vm1751, %v1746, %v1752
        %vm1754 = vcmp.eq.s32.totalorder %v1749, 2
        %v1755 = vxor.u32 %v1746, 2147483648
        %v1756 = vsel %vm1754, %v1755, %v1747
        %v1757 = vsel %vm1750, %v1753, %v1756
        %v1758 = vsel %vm1748, nan, %v1757
        %v1759 = vand.u32 2147483647, %v409
        %vm1760 = vcmp.le.f32.partialorder %v1759, 0.7853982
        %vm1761 = vcmp.lt.s32.totalorder %v409, 0
        %v1762 = vand.u32 %v409, 2139095040
        %v1763 = vshrl.u32 %v1762, 23
        %v1764 = vsub.s32 %v1763, 127
        %v1765 = vand.u32 2147483647, %v409
        %v1766 = vand.u32 %v1765, 8388607
        %v1767 = vor.u32 %v1766, 8388608
        %v1768 = vsub.s32 0, %v1767
        %v1769 = vadd.s32 %v1764, 1
        %vm1770 = vcmp.gt.s32.totalorder %v1769, 0
        %v1771 = vsel %vm1770, %v1769, 0
        %v1772 = vshrl.u32 %v1771, 5
        %v1773 = vand.u32 %v1771, 31
        %v1774 = vsub.s32 32, %v1773
        %v1775 = vshrl.u32 683565275, %v1774
        %v1776 = vshll.u32 683565275, %v1773
        %v1777 = vshrl.u32 2475754826, %v1774
        %v1778 = vor.u32 %v1776, %v1777
        %v1779 = vshll.u32 2475754826, %v1773
        %v1780 = vshrl.u32 2131351028, %v1774
        %v1781 = vor.u32 %v1779, %v1780
        %v1782 = vshll.u32 2131351028, %v1773
        %v1783 = vshrl.u32 2102212464, %v1774
        %v1784 = vor.u32 %v1782, %v1783
        %v1785 = vshll.u32 2102212464, %v1773
        %v1786 = vshrl.u32 920167782, %v1774
        %v1787 = vor.u32 %v1785, %v1786
        %v1788 = vshll.u32 920167782, %v1773
        %v1789 = vshrl.u32 1326507024, %v1774
        %v1790 = vor.u32 %v1788, %v1789
        %vm1791 = vcmp.lt.s32.totalorder %v1772, 1
        %vm1792 = vcmp.lt.s32.totalorder %v1772, 2
        %vm1793 = vcmp.lt.s32.totalorder %v1772, 3
        %vm1794 = vcmp.lt.s32.totalorder %v1772, 4
        %v1795 = vsel %vm1791, %v1775, %v1778
        %v1796 = vsel %vm1794, %v1784, 2102212464
        %v1797 = vsel %vm1793, %v1781, %v1796
        %v1798 = vsel %vm1792, %v1795, %v1797
        %v1799 = vsel %vm1791, %v1778, %v1781
        %v1800 = vsel %vm1794, %v1787, 920167782
        %v1801 = vsel %vm1793, %v1784, %v1800
        %v1802 = vsel %vm1792, %v1799, %v1801
        %v1803 = vsel %vm1791, %v1781, %v1784
        %v1804 = vsel %vm1794, %v1790, 1326507024
        %v1805 = vsel %vm1793, %v1787, %v1804
        %v1806 = vsel %vm1792, %v1803, %v1805
        %v1807 = vshll.u32 %v1767, 8
        %v1808 = vmul.u32.u64.compose %v1807, %v1806
        %v1809 = vextract.low.u32 %v1808
        %v1810 = vextract.high.u32 %v1808
        %v1811 = vmul.u32.u64.compose %v1807, %v1802
        %v1812 = vextract.low.u32 %v1811
        %v1813 = vextract.high.u32 %v1811
        %v1814 = vmul.u32 %v1807, %v1798
        %v1815 = vadd.s32 %v1810, %v1812
        %vm1816 = vc.u32 %v1810, %v1812
        %v1817 = vadd.s32 %v1813, 1
        %v1818 = vsel %vm1816, %v1817, %v1813
        %v1819 = vadd.s32 %v1814, %v1818
        %v1820 = vadd.s32 %v1819, 536870912
        %v1821 = vshrl.u32 %v1820, 30
        %v1822 = vshll.u32 %v1821, 30
        %v1823 = vsub.s32 %v1819, %v1822
        %vm1824 = vcmp.lt.s32.totalorder %v1823, 0
        %v1825 = vsub.s32 0, %v1823
        %v1826 = vsel %vm1824, %v1825, %v1823
        %v1827 = vclz %v1826
        %v1828 = vsub.s32 %v1827, 2
        %vm1829 = vcmp.gt.s32.totalorder 0, %v1828
        %v1830 = vsel %vm1829, 0, %v1828
        %v1831 = vsub.s32 32, %v1830
        %v1832 = vshll.u32 %v1823, %v1830
        %v1833 = vshrl.u32 %v1815, %v1831
        %v1834 = vor.u32 %v1832, %v1833
        %v1835 = vsub.s32 4294967266, %v1830
        %v1836 = vadd.s32 %v1835, 127
        %v1837 = vshll.u32 %v1836, 23
        %v1838 = vor.u32 4788187, %v1837
        %v1839 = vand.u32 2147483647, %v1838
        %v1841 = vcvt.s32.f32 %v1834
        %v1842 = vmul.f32 %v1841, %v1839
        %v1843 = vxor.u32 %v1842, 2147483648
        %v1844 = vsel %vm1761, %v1843, %v1842
        %v1845 = vsub.s32 4, %v1821
        %v1846 = vsel %vm1761, %v1845, %v1821
        %v1847 = vsel %vm1760, %v409, %v1844
        %v1848 = vsel %vm1760, 0, %v1846
        %v1849 = vcosq.f32.pop %v1847
        %v1850 = vsinq.f32.pop %v1847
        %vm1851 = vweird.f32 %v409
        %v1852 = vand.u32 %v1848, 3
        %vm1853 = vcmp.lt.s32.totalorder %v1852, 2
        %vm1854 = vcmp.eq.s32.totalorder %v1852, 0
        %v1855 = vxor.u32 %v1850, 2147483648
        %v1856 = vsel %vm1854, %v1849, %v1855
        %vm1857 = vcmp.eq.s32.totalorder %v1852, 2
        %v1858 = vxor.u32 %v1849, 2147483648
        %v1859 = vsel %vm1857, %v1858, %v1850
        %v1860 = vsel %vm1853, %v1856, %v1859
        %v1861 = vsel %vm1851, nan, %v1860
        %v1862 = vand.u32 2147483647, %v410
        %vm1863 = vcmp.le.f32.partialorder %v1862, 0.7853982
        %vm1864 = vcmp.lt.s32.totalorder %v410, 0
        %v1865 = vand.u32 %v410, 2139095040
        %v1866 = vshrl.u32 %v1865, 23
        %v1867 = vsub.s32 %v1866, 127
        %v1868 = vand.u32 2147483647, %v410
        %v1869 = vand.u32 %v1868, 8388607
        %v1870 = vor.u32 %v1869, 8388608
        %v1871 = vsub.s32 0, %v1870
        %v1872 = vadd.s32 %v1867, 1
        %vm1873 = vcmp.gt.s32.totalorder %v1872, 0
        %v1874 = vsel %vm1873, %v1872, 0
        %v1875 = vshrl.u32 %v1874, 5
        %v1876 = vand.u32 %v1874, 31
        %v1877 = vsub.s32 32, %v1876
        %v1878 = vshrl.u32 683565275, %v1877
        %v1879 = vshll.u32 683565275, %v1876
        %v1880 = vshrl.u32 2475754826, %v1877
        %v1881 = vor.u32 %v1879, %v1880
        %v1882 = vshll.u32 2475754826, %v1876
        %v1883 = vshrl.u32 2131351028, %v1877
        %v1884 = vor.u32 %v1882, %v1883
        %v1885 = vshll.u32 2131351028, %v1876
        %v1886 = vshrl.u32 2102212464, %v1877
        %v1887 = vor.u32 %v1885, %v1886
        %v1888 = vshll.u32 2102212464, %v1876
        %v1889 = vshrl.u32 920167782, %v1877
        %v1890 = vor.u32 %v1888, %v1889
        %v1891 = vshll.u32 920167782, %v1876
        %v1892 = vshrl.u32 1326507024, %v1877
        %v1893 = vor.u32 %v1891, %v1892
        %vm1894 = vcmp.lt.s32.totalorder %v1875, 1
        %vm1895 = vcmp.lt.s32.totalorder %v1875, 2
        %vm1896 = vcmp.lt.s32.totalorder %v1875, 3
        %vm1897 = vcmp.lt.s32.totalorder %v1875, 4
        %v1898 = vsel %vm1894, %v1878, %v1881
        %v1899 = vsel %vm1897, %v1887, 2102212464
        %v1900 = vsel %vm1896, %v1884, %v1899
        %v1901 = vsel %vm1895, %v1898, %v1900
        %v1902 = vsel %vm1894, %v1881, %v1884
        %v1903 = vsel %vm1897, %v1890, 920167782
        %v1904 = vsel %vm1896, %v1887, %v1903
        %v1905 = vsel %vm1895, %v1902, %v1904
        %v1906 = vsel %vm1894, %v1884, %v1887
        %v1907 = vsel %vm1897, %v1893, 1326507024
        %v1908 = vsel %vm1896, %v1890, %v1907
        %v1909 = vsel %vm1895, %v1906, %v1908
        %v1910 = vshll.u32 %v1870, 8
        %v1911 = vmul.u32.u64.compose %v1910, %v1909
        %v1912 = vextract.low.u32 %v1911
        %v1913 = vextract.high.u32 %v1911
        %v1914 = vmul.u32.u64.compose %v1910, %v1905
        %v1915 = vextract.low.u32 %v1914
        %v1916 = vextract.high.u32 %v1914
        %v1917 = vmul.u32 %v1910, %v1901
        %v1918 = vadd.s32 %v1913, %v1915
        %vm1919 = vc.u32 %v1913, %v1915
        %v1920 = vadd.s32 %v1916, 1
        %v1921 = vsel %vm1919, %v1920, %v1916
        %v1922 = vadd.s32 %v1917, %v1921
        %v1923 = vadd.s32 %v1922, 536870912
        %v1924 = vshrl.u32 %v1923, 30
        %v1925 = vshll.u32 %v1924, 30
        %v1926 = vsub.s32 %v1922, %v1925
        %vm1927 = vcmp.lt.s32.totalorder %v1926, 0
        %v1928 = vsub.s32 0, %v1926
        %v1929 = vsel %vm1927, %v1928, %v1926
        %v1930 = vclz %v1929
        %v1931 = vsub.s32 %v1930, 2
        %vm1932 = vcmp.gt.s32.totalorder 0, %v1931
        %v1933 = vsel %vm1932, 0, %v1931
        %v1934 = vsub.s32 32, %v1933
        %v1935 = vshll.u32 %v1926, %v1933
        %v1936 = vshrl.u32 %v1918, %v1934
        %v1937 = vor.u32 %v1935, %v1936
        %v1938 = vsub.s32 4294967266, %v1933
        %v1939 = vadd.s32 %v1938, 127
        %v1940 = vshll.u32 %v1939, 23
        %v1941 = vor.u32 4788187, %v1940
        %v1942 = vand.u32 2147483647, %v1941
        %v1944 = vcvt.s32.f32 %v1937
        %v1945 = vmul.f32 %v1944, %v1942
        %v1946 = vxor.u32 %v1945, 2147483648
        %v1947 = vsel %vm1864, %v1946, %v1945
        %v1948 = vsub.s32 4, %v1924
        %v1949 = vsel %vm1864, %v1948, %v1924
        %v1950 = vsel %vm1863, %v410, %v1947
        %v1951 = vsel %vm1863, 0, %v1949
        %v1952 = vcosq.f32.pop %v1950
        %v1953 = vsinq.f32.pop %v1950
        %vm1954 = vweird.f32 %v410
        %v1955 = vand.u32 %v1951, 3
        %vm1956 = vcmp.lt.s32.totalorder %v1955, 2
        %vm1957 = vcmp.eq.s32.totalorder %v1955, 0
        %v1958 = vxor.u32 %v1953, 2147483648
        %v1959 = vsel %vm1957, %v1952, %v1958
        %vm1960 = vcmp.eq.s32.totalorder %v1955, 2
        %v1961 = vxor.u32 %v1952, 2147483648
        %v1962 = vsel %vm1960, %v1961, %v1953
        %v1963 = vsel %vm1956, %v1959, %v1962
        %v1964 = vsel %vm1954, nan, %v1963
        %v1965 = vand.u32 2147483647, %v411
        %vm1966 = vcmp.le.f32.partialorder %v1965, 0.7853982
        %vm1967 = vcmp.lt.s32.totalorder %v411, 0
        %v1968 = vand.u32 %v411, 2139095040
        %v1969 = vshrl.u32 %v1968, 23
        %v1970 = vsub.s32 %v1969, 127
        %v1971 = vand.u32 2147483647, %v411
        %v1972 = vand.u32 %v1971, 8388607
        %v1973 = vor.u32 %v1972, 8388608
        %v1974 = vsub.s32 0, %v1973
        %v1975 = vadd.s32 %v1970, 1
        %vm1976 = vcmp.gt.s32.totalorder %v1975, 0
        %v1977 = vsel %vm1976, %v1975, 0
        %v1978 = vshrl.u32 %v1977, 5
        %v1979 = vand.u32 %v1977, 31
        %v1980 = vsub.s32 32, %v1979
        %v1981 = vshrl.u32 683565275, %v1980
        %v1982 = vshll.u32 683565275, %v1979
        %v1983 = vshrl.u32 2475754826, %v1980
        %v1984 = vor.u32 %v1982, %v1983
        %v1985 = vshll.u32 2475754826, %v1979
        %v1986 = vshrl.u32 2131351028, %v1980
        %v1987 = vor.u32 %v1985, %v1986
        %v1988 = vshll.u32 2131351028, %v1979
        %v1989 = vshrl.u32 2102212464, %v1980
        %v1990 = vor.u32 %v1988, %v1989
        %v1991 = vshll.u32 2102212464, %v1979
        %v1992 = vshrl.u32 920167782, %v1980
        %v1993 = vor.u32 %v1991, %v1992
        %v1994 = vshll.u32 920167782, %v1979
        %v1995 = vshrl.u32 1326507024, %v1980
        %v1996 = vor.u32 %v1994, %v1995
        %vm1997 = vcmp.lt.s32.totalorder %v1978, 1
        %vm1998 = vcmp.lt.s32.totalorder %v1978, 2
        %vm1999 = vcmp.lt.s32.totalorder %v1978, 3
        %vm2000 = vcmp.lt.s32.totalorder %v1978, 4
        %v2001 = vsel %vm1997, %v1981, %v1984
        %v2002 = vsel %vm2000, %v1990, 2102212464
        %v2003 = vsel %vm1999, %v1987, %v2002
        %v2004 = vsel %vm1998, %v2001, %v2003
        %v2005 = vsel %vm1997, %v1984, %v1987
        %v2006 = vsel %vm2000, %v1993, 920167782
        %v2007 = vsel %vm1999, %v1990, %v2006
        %v2008 = vsel %vm1998, %v2005, %v2007
        %v2009 = vsel %vm1997, %v1987, %v1990
        %v2010 = vsel %vm2000, %v1996, 1326507024
        %v2011 = vsel %vm1999, %v1993, %v2010
        %v2012 = vsel %vm1998, %v2009, %v2011
        %v2013 = vshll.u32 %v1973, 8
        %v2014 = vmul.u32.u64.compose %v2013, %v2012
        %v2015 = vextract.low.u32 %v2014
        %v2016 = vextract.high.u32 %v2014
        %v2017 = vmul.u32.u64.compose %v2013, %v2008
        %v2018 = vextract.low.u32 %v2017
        %v2019 = vextract.high.u32 %v2017
        %v2020 = vmul.u32 %v2013, %v2004
        %v2021 = vadd.s32 %v2016, %v2018
        %vm2022 = vc.u32 %v2016, %v2018
        %v2023 = vadd.s32 %v2019, 1
        %v2024 = vsel %vm2022, %v2023, %v2019
        %v2025 = vadd.s32 %v2020, %v2024
        %v2026 = vadd.s32 %v2025, 536870912
        %v2027 = vshrl.u32 %v2026, 30
        %v2028 = vshll.u32 %v2027, 30
        %v2029 = vsub.s32 %v2025, %v2028
        %vm2030 = vcmp.lt.s32.totalorder %v2029, 0
        %v2031 = vsub.s32 0, %v2029
        %v2032 = vsel %vm2030, %v2031, %v2029
        %v2033 = vclz %v2032
        %v2034 = vsub.s32 %v2033, 2
        %vm2035 = vcmp.gt.s32.totalorder 0, %v2034
        %v2036 = vsel %vm2035, 0, %v2034
        %v2037 = vsub.s32 32, %v2036
        %v2038 = vshll.u32 %v2029, %v2036
        %v2039 = vshrl.u32 %v2021, %v2037
        %v2040 = vor.u32 %v2038, %v2039
        %v2041 = vsub.s32 4294967266, %v2036
        %v2042 = vadd.s32 %v2041, 127
        %v2043 = vshll.u32 %v2042, 23
        %v2044 = vor.u32 4788187, %v2043
        %v2045 = vand.u32 2147483647, %v2044
        %v2047 = vcvt.s32.f32 %v2040
        %v2048 = vmul.f32 %v2047, %v2045
        %v2049 = vxor.u32 %v2048, 2147483648
        %v2050 = vsel %vm1967, %v2049, %v2048
        %v2051 = vsub.s32 4, %v2027
        %v2052 = vsel %vm1967, %v2051, %v2027
        %v2053 = vsel %vm1966, %v411, %v2050
        %v2054 = vsel %vm1966, 0, %v2052
        %v2055 = vcosq.f32.pop %v2053
        %v2056 = vsinq.f32.pop %v2053
        %vm2057 = vweird.f32 %v411
        %v2058 = vand.u32 %v2054, 3
        %vm2059 = vcmp.lt.s32.totalorder %v2058, 2
        %vm2060 = vcmp.eq.s32.totalorder %v2058, 0
        %v2061 = vxor.u32 %v2056, 2147483648
        %v2062 = vsel %vm2060, %v2055, %v2061
        %vm2063 = vcmp.eq.s32.totalorder %v2058, 2
        %v2064 = vxor.u32 %v2055, 2147483648
        %v2065 = vsel %vm2063, %v2064, %v2056
        %v2066 = vsel %vm2059, %v2062, %v2065
        %v2067 = vsel %vm2057, nan, %v2066
        %v2068 = vlaneseq
        %v2069 = vshrl.u32 %v2068, 7
        %v2070 = vsub.s32 1, %v2069
        %v2071 = vrot.slane %v343, %v2070
        %v2072 = vmul.f32 %v363, %v2071
        %v2073 = vmul.f32 %v368, %v2071
        %v2074 = vmul.f32 %v373, %v2071
        %v2075 = vmul.f32 %v378, %v2071
        %v2076 = vmul.f32 %v383, %v2071
        %v2077 = vmul.f32 %v388, %v2071
        %v2078 = vmul.f32 %v393, %v2071
        %v2079 = vmul.f32 %v398, %v2071
        %v2080 = vand.u32 2147483647, %v2072
        %vm2081 = vcmp.le.f32.partialorder %v2080, 0.7853982
        %vm2082 = vcmp.lt.s32.totalorder %v2072, 0
        %v2083 = vand.u32 %v2072, 2139095040
        %v2084 = vshrl.u32 %v2083, 23
        %v2085 = vsub.s32 %v2084, 127
        %v2086 = vand.u32 2147483647, %v2072
        %v2087 = vand.u32 %v2086, 8388607
        %v2088 = vor.u32 %v2087, 8388608
        %v2089 = vsub.s32 0, %v2088
        %v2090 = vadd.s32 %v2085, 1
        %vm2091 = vcmp.gt.s32.totalorder %v2090, 0
        %v2092 = vsel %vm2091, %v2090, 0
        %v2093 = vshrl.u32 %v2092, 5
        %v2094 = vand.u32 %v2092, 31
        %v2095 = vsub.s32 32, %v2094
        %v2096 = vshrl.u32 683565275, %v2095
        %v2097 = vshll.u32 683565275, %v2094
        %v2098 = vshrl.u32 2475754826, %v2095
        %v2099 = vor.u32 %v2097, %v2098
        %v2100 = vshll.u32 2475754826, %v2094
        %v2101 = vshrl.u32 2131351028, %v2095
        %v2102 = vor.u32 %v2100, %v2101
        %v2103 = vshll.u32 2131351028, %v2094
        %v2104 = vshrl.u32 2102212464, %v2095
        %v2105 = vor.u32 %v2103, %v2104
        %v2106 = vshll.u32 2102212464, %v2094
        %v2107 = vshrl.u32 920167782, %v2095
        %v2108 = vor.u32 %v2106, %v2107
        %v2109 = vshll.u32 920167782, %v2094
        %v2110 = vshrl.u32 1326507024, %v2095
        %v2111 = vor.u32 %v2109, %v2110
        %vm2112 = vcmp.lt.s32.totalorder %v2093, 1
        %vm2113 = vcmp.lt.s32.totalorder %v2093, 2
        %vm2114 = vcmp.lt.s32.totalorder %v2093, 3
        %vm2115 = vcmp.lt.s32.totalorder %v2093, 4
        %v2116 = vsel %vm2112, %v2096, %v2099
        %v2117 = vsel %vm2115, %v2105, 2102212464
        %v2118 = vsel %vm2114, %v2102, %v2117
        %v2119 = vsel %vm2113, %v2116, %v2118
        %v2120 = vsel %vm2112, %v2099, %v2102
        %v2121 = vsel %vm2115, %v2108, 920167782
        %v2122 = vsel %vm2114, %v2105, %v2121
        %v2123 = vsel %vm2113, %v2120, %v2122
        %v2124 = vsel %vm2112, %v2102, %v2105
        %v2125 = vsel %vm2115, %v2111, 1326507024
        %v2126 = vsel %vm2114, %v2108, %v2125
        %v2127 = vsel %vm2113, %v2124, %v2126
        %v2128 = vshll.u32 %v2088, 8
        %v2129 = vmul.u32.u64.compose %v2128, %v2127
        %v2130 = vextract.low.u32 %v2129
        %v2131 = vextract.high.u32 %v2129
        %v2132 = vmul.u32.u64.compose %v2128, %v2123
        %v2133 = vextract.low.u32 %v2132
        %v2134 = vextract.high.u32 %v2132
        %v2135 = vmul.u32 %v2128, %v2119
        %v2136 = vadd.s32 %v2131, %v2133
        %vm2137 = vc.u32 %v2131, %v2133
        %v2138 = vadd.s32 %v2134, 1
        %v2139 = vsel %vm2137, %v2138, %v2134
        %v2140 = vadd.s32 %v2135, %v2139
        %v2141 = vadd.s32 %v2140, 536870912
        %v2142 = vshrl.u32 %v2141, 30
        %v2143 = vshll.u32 %v2142, 30
        %v2144 = vsub.s32 %v2140, %v2143
        %vm2145 = vcmp.lt.s32.totalorder %v2144, 0
        %v2146 = vsub.s32 0, %v2144
        %v2147 = vsel %vm2145, %v2146, %v2144
        %v2148 = vclz %v2147
        %v2149 = vsub.s32 %v2148, 2
        %vm2150 = vcmp.gt.s32.totalorder 0, %v2149
        %v2151 = vsel %vm2150, 0, %v2149
        %v2152 = vsub.s32 32, %v2151
        %v2153 = vshll.u32 %v2144, %v2151
        %v2154 = vshrl.u32 %v2136, %v2152
        %v2155 = vor.u32 %v2153, %v2154
        %v2156 = vsub.s32 4294967266, %v2151
        %v2157 = vadd.s32 %v2156, 127
        %v2158 = vshll.u32 %v2157, 23
        %v2159 = vor.u32 4788187, %v2158
        %v2160 = vand.u32 2147483647, %v2159
        %v2162 = vcvt.s32.f32 %v2155
        %v2163 = vmul.f32 %v2162, %v2160
        %v2164 = vxor.u32 %v2163, 2147483648
        %v2165 = vsel %vm2082, %v2164, %v2163
        %v2166 = vsub.s32 4, %v2142
        %v2167 = vsel %vm2082, %v2166, %v2142
        %v2168 = vsel %vm2081, %v2072, %v2165
        %v2169 = vsel %vm2081, 0, %v2167
        %v2170 = vcosq.f32.pop %v2168
        %v2171 = vsinq.f32.pop %v2168
        %vm2172 = vweird.f32 %v2072
        %v2173 = vadd.s32 %v2169, 3
        %v2174 = vand.u32 %v2173, 3
        %vm2175 = vcmp.lt.s32.totalorder %v2174, 2
        %vm2176 = vcmp.eq.s32.totalorder %v2174, 0
        %v2177 = vxor.u32 %v2171, 2147483648
        %v2178 = vsel %vm2176, %v2170, %v2177
        %vm2179 = vcmp.eq.s32.totalorder %v2174, 2
        %v2180 = vxor.u32 %v2170, 2147483648
        %v2181 = vsel %vm2179, %v2180, %v2171
        %v2182 = vsel %vm2175, %v2178, %v2181
        %v2183 = vsel %vm2172, nan, %v2182
        %v2184 = vand.u32 2147483647, %v2073
        %vm2185 = vcmp.le.f32.partialorder %v2184, 0.7853982
        %vm2186 = vcmp.lt.s32.totalorder %v2073, 0
        %v2187 = vand.u32 %v2073, 2139095040
        %v2188 = vshrl.u32 %v2187, 23
        %v2189 = vsub.s32 %v2188, 127
        %v2190 = vand.u32 2147483647, %v2073
        %v2191 = vand.u32 %v2190, 8388607
        %v2192 = vor.u32 %v2191, 8388608
        %v2193 = vsub.s32 0, %v2192
        %v2194 = vadd.s32 %v2189, 1
        %vm2195 = vcmp.gt.s32.totalorder %v2194, 0
        %v2196 = vsel %vm2195, %v2194, 0
        %v2197 = vshrl.u32 %v2196, 5
        %v2198 = vand.u32 %v2196, 31
        %v2199 = vsub.s32 32, %v2198
        %v2200 = vshrl.u32 683565275, %v2199
        %v2201 = vshll.u32 683565275, %v2198
        %v2202 = vshrl.u32 2475754826, %v2199
        %v2203 = vor.u32 %v2201, %v2202
        %v2204 = vshll.u32 2475754826, %v2198
        %v2205 = vshrl.u32 2131351028, %v2199
        %v2206 = vor.u32 %v2204, %v2205
        %v2207 = vshll.u32 2131351028, %v2198
        %v2208 = vshrl.u32 2102212464, %v2199
        %v2209 = vor.u32 %v2207, %v2208
        %v2210 = vshll.u32 2102212464, %v2198
        %v2211 = vshrl.u32 920167782, %v2199
        %v2212 = vor.u32 %v2210, %v2211
        %v2213 = vshll.u32 920167782, %v2198
        %v2214 = vshrl.u32 1326507024, %v2199
        %v2215 = vor.u32 %v2213, %v2214
        %vm2216 = vcmp.lt.s32.totalorder %v2197, 1
        %vm2217 = vcmp.lt.s32.totalorder %v2197, 2
        %vm2218 = vcmp.lt.s32.totalorder %v2197, 3
        %vm2219 = vcmp.lt.s32.totalorder %v2197, 4
        %v2220 = vsel %vm2216, %v2200, %v2203
        %v2221 = vsel %vm2219, %v2209, 2102212464
        %v2222 = vsel %vm2218, %v2206, %v2221
        %v2223 = vsel %vm2217, %v2220, %v2222
        %v2224 = vsel %vm2216, %v2203, %v2206
        %v2225 = vsel %vm2219, %v2212, 920167782
        %v2226 = vsel %vm2218, %v2209, %v2225
        %v2227 = vsel %vm2217, %v2224, %v2226
        %v2228 = vsel %vm2216, %v2206, %v2209
        %v2229 = vsel %vm2219, %v2215, 1326507024
        %v2230 = vsel %vm2218, %v2212, %v2229
        %v2231 = vsel %vm2217, %v2228, %v2230
        %v2232 = vshll.u32 %v2192, 8
        %v2233 = vmul.u32.u64.compose %v2232, %v2231
        %v2234 = vextract.low.u32 %v2233
        %v2235 = vextract.high.u32 %v2233
        %v2236 = vmul.u32.u64.compose %v2232, %v2227
        %v2237 = vextract.low.u32 %v2236
        %v2238 = vextract.high.u32 %v2236
        %v2239 = vmul.u32 %v2232, %v2223
        %v2240 = vadd.s32 %v2235, %v2237
        %vm2241 = vc.u32 %v2235, %v2237
        %v2242 = vadd.s32 %v2238, 1
        %v2243 = vsel %vm2241, %v2242, %v2238
        %v2244 = vadd.s32 %v2239, %v2243
        %v2245 = vadd.s32 %v2244, 536870912
        %v2246 = vshrl.u32 %v2245, 30
        %v2247 = vshll.u32 %v2246, 30
        %v2248 = vsub.s32 %v2244, %v2247
        %vm2249 = vcmp.lt.s32.totalorder %v2248, 0
        %v2250 = vsub.s32 0, %v2248
        %v2251 = vsel %vm2249, %v2250, %v2248
        %v2252 = vclz %v2251
        %v2253 = vsub.s32 %v2252, 2
        %vm2254 = vcmp.gt.s32.totalorder 0, %v2253
        %v2255 = vsel %vm2254, 0, %v2253
        %v2256 = vsub.s32 32, %v2255
        %v2257 = vshll.u32 %v2248, %v2255
        %v2258 = vshrl.u32 %v2240, %v2256
        %v2259 = vor.u32 %v2257, %v2258
        %v2260 = vsub.s32 4294967266, %v2255
        %v2261 = vadd.s32 %v2260, 127
        %v2262 = vshll.u32 %v2261, 23
        %v2263 = vor.u32 4788187, %v2262
        %v2264 = vand.u32 2147483647, %v2263
        %v2266 = vcvt.s32.f32 %v2259
        %v2267 = vmul.f32 %v2266, %v2264
        %v2268 = vxor.u32 %v2267, 2147483648
        %v2269 = vsel %vm2186, %v2268, %v2267
        %v2270 = vsub.s32 4, %v2246
        %v2271 = vsel %vm2186, %v2270, %v2246
        %v2272 = vsel %vm2185, %v2073, %v2269
        %v2273 = vsel %vm2185, 0, %v2271
        %v2274 = vcosq.f32.pop %v2272
        %v2275 = vsinq.f32.pop %v2272
        %vm2276 = vweird.f32 %v2073
        %v2277 = vadd.s32 %v2273, 3
        %v2278 = vand.u32 %v2277, 3
        %vm2279 = vcmp.lt.s32.totalorder %v2278, 2
        %vm2280 = vcmp.eq.s32.totalorder %v2278, 0
        %v2281 = vxor.u32 %v2275, 2147483648
        %v2282 = vsel %vm2280, %v2274, %v2281
        %vm2283 = vcmp.eq.s32.totalorder %v2278, 2
        %v2284 = vxor.u32 %v2274, 2147483648
        %v2285 = vsel %vm2283, %v2284, %v2275
        %v2286 = vsel %vm2279, %v2282, %v2285
        %v2287 = vsel %vm2276, nan, %v2286
        %v2288 = vand.u32 2147483647, %v2074
        %vm2289 = vcmp.le.f32.partialorder %v2288, 0.7853982
        %vm2290 = vcmp.lt.s32.totalorder %v2074, 0
        %v2291 = vand.u32 %v2074, 2139095040
        %v2292 = vshrl.u32 %v2291, 23
        %v2293 = vsub.s32 %v2292, 127
        %v2294 = vand.u32 2147483647, %v2074
        %v2295 = vand.u32 %v2294, 8388607
        %v2296 = vor.u32 %v2295, 8388608
        %v2297 = vsub.s32 0, %v2296
        %v2298 = vadd.s32 %v2293, 1
        %vm2299 = vcmp.gt.s32.totalorder %v2298, 0
        %v2300 = vsel %vm2299, %v2298, 0
        %v2301 = vshrl.u32 %v2300, 5
        %v2302 = vand.u32 %v2300, 31
        %v2303 = vsub.s32 32, %v2302
        %v2304 = vshrl.u32 683565275, %v2303
        %v2305 = vshll.u32 683565275, %v2302
        %v2306 = vshrl.u32 2475754826, %v2303
        %v2307 = vor.u32 %v2305, %v2306
        %v2308 = vshll.u32 2475754826, %v2302
        %v2309 = vshrl.u32 2131351028, %v2303
        %v2310 = vor.u32 %v2308, %v2309
        %v2311 = vshll.u32 2131351028, %v2302
        %v2312 = vshrl.u32 2102212464, %v2303
        %v2313 = vor.u32 %v2311, %v2312
        %v2314 = vshll.u32 2102212464, %v2302
        %v2315 = vshrl.u32 920167782, %v2303
        %v2316 = vor.u32 %v2314, %v2315
        %v2317 = vshll.u32 920167782, %v2302
        %v2318 = vshrl.u32 1326507024, %v2303
        %v2319 = vor.u32 %v2317, %v2318
        %vm2320 = vcmp.lt.s32.totalorder %v2301, 1
        %vm2321 = vcmp.lt.s32.totalorder %v2301, 2
        %vm2322 = vcmp.lt.s32.totalorder %v2301, 3
        %vm2323 = vcmp.lt.s32.totalorder %v2301, 4
        %v2324 = vsel %vm2320, %v2304, %v2307
        %v2325 = vsel %vm2323, %v2313, 2102212464
        %v2326 = vsel %vm2322, %v2310, %v2325
        %v2327 = vsel %vm2321, %v2324, %v2326
        %v2328 = vsel %vm2320, %v2307, %v2310
        %v2329 = vsel %vm2323, %v2316, 920167782
        %v2330 = vsel %vm2322, %v2313, %v2329
        %v2331 = vsel %vm2321, %v2328, %v2330
        %v2332 = vsel %vm2320, %v2310, %v2313
        %v2333 = vsel %vm2323, %v2319, 1326507024
        %v2334 = vsel %vm2322, %v2316, %v2333
        %v2335 = vsel %vm2321, %v2332, %v2334
        %v2336 = vshll.u32 %v2296, 8
        %v2337 = vmul.u32.u64.compose %v2336, %v2335
        %v2338 = vextract.low.u32 %v2337
        %v2339 = vextract.high.u32 %v2337
        %v2340 = vmul.u32.u64.compose %v2336, %v2331
        %v2341 = vextract.low.u32 %v2340
        %v2342 = vextract.high.u32 %v2340
        %v2343 = vmul.u32 %v2336, %v2327
        %v2344 = vadd.s32 %v2339, %v2341
        %vm2345 = vc.u32 %v2339, %v2341
        %v2346 = vadd.s32 %v2342, 1
        %v2347 = vsel %vm2345, %v2346, %v2342
        %v2348 = vadd.s32 %v2343, %v2347
        %v2349 = vadd.s32 %v2348, 536870912
        %v2350 = vshrl.u32 %v2349, 30
        %v2351 = vshll.u32 %v2350, 30
        %v2352 = vsub.s32 %v2348, %v2351
        %vm2353 = vcmp.lt.s32.totalorder %v2352, 0
        %v2354 = vsub.s32 0, %v2352
        %v2355 = vsel %vm2353, %v2354, %v2352
        %v2356 = vclz %v2355
        %v2357 = vsub.s32 %v2356, 2
        %vm2358 = vcmp.gt.s32.totalorder 0, %v2357
        %v2359 = vsel %vm2358, 0, %v2357
        %v2360 = vsub.s32 32, %v2359
        %v2361 = vshll.u32 %v2352, %v2359
        %v2362 = vshrl.u32 %v2344, %v2360
        %v2363 = vor.u32 %v2361, %v2362
        %v2364 = vsub.s32 4294967266, %v2359
        %v2365 = vadd.s32 %v2364, 127
        %v2366 = vshll.u32 %v2365, 23
        %v2367 = vor.u32 4788187, %v2366
        %v2368 = vand.u32 2147483647, %v2367
        %v2370 = vcvt.s32.f32 %v2363
        %v2371 = vmul.f32 %v2370, %v2368
        %v2372 = vxor.u32 %v2371, 2147483648
        %v2373 = vsel %vm2290, %v2372, %v2371
        %v2374 = vsub.s32 4, %v2350
        %v2375 = vsel %vm2290, %v2374, %v2350
        %v2376 = vsel %vm2289, %v2074, %v2373
        %v2377 = vsel %vm2289, 0, %v2375
        %v2378 = vcosq.f32.pop %v2376
        %v2379 = vsinq.f32.pop %v2376
        %vm2380 = vweird.f32 %v2074
        %v2381 = vadd.s32 %v2377, 3
        %v2382 = vand.u32 %v2381, 3
        %vm2383 = vcmp.lt.s32.totalorder %v2382, 2
        %vm2384 = vcmp.eq.s32.totalorder %v2382, 0
        %v2385 = vxor.u32 %v2379, 2147483648
        %v2386 = vsel %vm2384, %v2378, %v2385
        %vm2387 = vcmp.eq.s32.totalorder %v2382, 2
        %v2388 = vxor.u32 %v2378, 2147483648
        %v2389 = vsel %vm2387, %v2388, %v2379
        %v2390 = vsel %vm2383, %v2386, %v2389
        %v2391 = vsel %vm2380, nan, %v2390
        %v2392 = vand.u32 2147483647, %v2075
        %vm2393 = vcmp.le.f32.partialorder %v2392, 0.7853982
        %vm2394 = vcmp.lt.s32.totalorder %v2075, 0
        %v2395 = vand.u32 %v2075, 2139095040
        %v2396 = vshrl.u32 %v2395, 23
        %v2397 = vsub.s32 %v2396, 127
        %v2398 = vand.u32 2147483647, %v2075
        %v2399 = vand.u32 %v2398, 8388607
        %v2400 = vor.u32 %v2399, 8388608
        %v2401 = vsub.s32 0, %v2400
        %v2402 = vadd.s32 %v2397, 1
        %vm2403 = vcmp.gt.s32.totalorder %v2402, 0
        %v2404 = vsel %vm2403, %v2402, 0
        %v2405 = vshrl.u32 %v2404, 5
        %v2406 = vand.u32 %v2404, 31
        %v2407 = vsub.s32 32, %v2406
        %v2408 = vshrl.u32 683565275, %v2407
        %v2409 = vshll.u32 683565275, %v2406
        %v2410 = vshrl.u32 2475754826, %v2407
        %v2411 = vor.u32 %v2409, %v2410
        %v2412 = vshll.u32 2475754826, %v2406
        %v2413 = vshrl.u32 2131351028, %v2407
        %v2414 = vor.u32 %v2412, %v2413
        %v2415 = vshll.u32 2131351028, %v2406
        %v2416 = vshrl.u32 2102212464, %v2407
        %v2417 = vor.u32 %v2415, %v2416
        %v2418 = vshll.u32 2102212464, %v2406
        %v2419 = vshrl.u32 920167782, %v2407
        %v2420 = vor.u32 %v2418, %v2419
        %v2421 = vshll.u32 920167782, %v2406
        %v2422 = vshrl.u32 1326507024, %v2407
        %v2423 = vor.u32 %v2421, %v2422
        %vm2424 = vcmp.lt.s32.totalorder %v2405, 1
        %vm2425 = vcmp.lt.s32.totalorder %v2405, 2
        %vm2426 = vcmp.lt.s32.totalorder %v2405, 3
        %vm2427 = vcmp.lt.s32.totalorder %v2405, 4
        %v2428 = vsel %vm2424, %v2408, %v2411
        %v2429 = vsel %vm2427, %v2417, 2102212464
        %v2430 = vsel %vm2426, %v2414, %v2429
        %v2431 = vsel %vm2425, %v2428, %v2430
        %v2432 = vsel %vm2424, %v2411, %v2414
        %v2433 = vsel %vm2427, %v2420, 920167782
        %v2434 = vsel %vm2426, %v2417, %v2433
        %v2435 = vsel %vm2425, %v2432, %v2434
        %v2436 = vsel %vm2424, %v2414, %v2417
        %v2437 = vsel %vm2427, %v2423, 1326507024
        %v2438 = vsel %vm2426, %v2420, %v2437
        %v2439 = vsel %vm2425, %v2436, %v2438
        %v2440 = vshll.u32 %v2400, 8
        %v2441 = vmul.u32.u64.compose %v2440, %v2439
        %v2442 = vextract.low.u32 %v2441
        %v2443 = vextract.high.u32 %v2441
        %v2444 = vmul.u32.u64.compose %v2440, %v2435
        %v2445 = vextract.low.u32 %v2444
        %v2446 = vextract.high.u32 %v2444
        %v2447 = vmul.u32 %v2440, %v2431
        %v2448 = vadd.s32 %v2443, %v2445
        %vm2449 = vc.u32 %v2443, %v2445
        %v2450 = vadd.s32 %v2446, 1
        %v2451 = vsel %vm2449, %v2450, %v2446
        %v2452 = vadd.s32 %v2447, %v2451
        %v2453 = vadd.s32 %v2452, 536870912
        %v2454 = vshrl.u32 %v2453, 30
        %v2455 = vshll.u32 %v2454, 30
        %v2456 = vsub.s32 %v2452, %v2455
        %vm2457 = vcmp.lt.s32.totalorder %v2456, 0
        %v2458 = vsub.s32 0, %v2456
        %v2459 = vsel %vm2457, %v2458, %v2456
        %v2460 = vclz %v2459
        %v2461 = vsub.s32 %v2460, 2
        %vm2462 = vcmp.gt.s32.totalorder 0, %v2461
        %v2463 = vsel %vm2462, 0, %v2461
        %v2464 = vsub.s32 32, %v2463
        %v2465 = vshll.u32 %v2456, %v2463
        %v2466 = vshrl.u32 %v2448, %v2464
        %v2467 = vor.u32 %v2465, %v2466
        %v2468 = vsub.s32 4294967266, %v2463
        %v2469 = vadd.s32 %v2468, 127
        %v2470 = vshll.u32 %v2469, 23
        %v2471 = vor.u32 4788187, %v2470
        %v2472 = vand.u32 2147483647, %v2471
        %v2474 = vcvt.s32.f32 %v2467
        %v2475 = vmul.f32 %v2474, %v2472
        %v2476 = vxor.u32 %v2475, 2147483648
        %v2477 = vsel %vm2394, %v2476, %v2475
        %v2478 = vsub.s32 4, %v2454
        %v2479 = vsel %vm2394, %v2478, %v2454
        %v2480 = vsel %vm2393, %v2075, %v2477
        %v2481 = vsel %vm2393, 0, %v2479
        %v2482 = vcosq.f32.pop %v2480
        %v2483 = vsinq.f32.pop %v2480
        %vm2484 = vweird.f32 %v2075
        %v2485 = vadd.s32 %v2481, 3
        %v2486 = vand.u32 %v2485, 3
        %vm2487 = vcmp.lt.s32.totalorder %v2486, 2
        %vm2488 = vcmp.eq.s32.totalorder %v2486, 0
        %v2489 = vxor.u32 %v2483, 2147483648
        %v2490 = vsel %vm2488, %v2482, %v2489
        %vm2491 = vcmp.eq.s32.totalorder %v2486, 2
        %v2492 = vxor.u32 %v2482, 2147483648
        %v2493 = vsel %vm2491, %v2492, %v2483
        %v2494 = vsel %vm2487, %v2490, %v2493
        %v2495 = vsel %vm2484, nan, %v2494
        %v2496 = vand.u32 2147483647, %v2076
        %vm2497 = vcmp.le.f32.partialorder %v2496, 0.7853982
        %vm2498 = vcmp.lt.s32.totalorder %v2076, 0
        %v2499 = vand.u32 %v2076, 2139095040
        %v2500 = vshrl.u32 %v2499, 23
        %v2501 = vsub.s32 %v2500, 127
        %v2502 = vand.u32 2147483647, %v2076
        %v2503 = vand.u32 %v2502, 8388607
        %v2504 = vor.u32 %v2503, 8388608
        %v2505 = vsub.s32 0, %v2504
        %v2506 = vadd.s32 %v2501, 1
        %vm2507 = vcmp.gt.s32.totalorder %v2506, 0
        %v2508 = vsel %vm2507, %v2506, 0
        %v2509 = vshrl.u32 %v2508, 5
        %v2510 = vand.u32 %v2508, 31
        %v2511 = vsub.s32 32, %v2510
        %v2512 = vshrl.u32 683565275, %v2511
        %v2513 = vshll.u32 683565275, %v2510
        %v2514 = vshrl.u32 2475754826, %v2511
        %v2515 = vor.u32 %v2513, %v2514
        %v2516 = vshll.u32 2475754826, %v2510
        %v2517 = vshrl.u32 2131351028, %v2511
        %v2518 = vor.u32 %v2516, %v2517
        %v2519 = vshll.u32 2131351028, %v2510
        %v2520 = vshrl.u32 2102212464, %v2511
        %v2521 = vor.u32 %v2519, %v2520
        %v2522 = vshll.u32 2102212464, %v2510
        %v2523 = vshrl.u32 920167782, %v2511
        %v2524 = vor.u32 %v2522, %v2523
        %v2525 = vshll.u32 920167782, %v2510
        %v2526 = vshrl.u32 1326507024, %v2511
        %v2527 = vor.u32 %v2525, %v2526
        %vm2528 = vcmp.lt.s32.totalorder %v2509, 1
        %vm2529 = vcmp.lt.s32.totalorder %v2509, 2
        %vm2530 = vcmp.lt.s32.totalorder %v2509, 3
        %vm2531 = vcmp.lt.s32.totalorder %v2509, 4
        %v2532 = vsel %vm2528, %v2512, %v2515
        %v2533 = vsel %vm2531, %v2521, 2102212464
        %v2534 = vsel %vm2530, %v2518, %v2533
        %v2535 = vsel %vm2529, %v2532, %v2534
        %v2536 = vsel %vm2528, %v2515, %v2518
        %v2537 = vsel %vm2531, %v2524, 920167782
        %v2538 = vsel %vm2530, %v2521, %v2537
        %v2539 = vsel %vm2529, %v2536, %v2538
        %v2540 = vsel %vm2528, %v2518, %v2521
        %v2541 = vsel %vm2531, %v2527, 1326507024
        %v2542 = vsel %vm2530, %v2524, %v2541
        %v2543 = vsel %vm2529, %v2540, %v2542
        %v2544 = vshll.u32 %v2504, 8
        %v2545 = vmul.u32.u64.compose %v2544, %v2543
        %v2546 = vextract.low.u32 %v2545
        %v2547 = vextract.high.u32 %v2545
        %v2548 = vmul.u32.u64.compose %v2544, %v2539
        %v2549 = vextract.low.u32 %v2548
        %v2550 = vextract.high.u32 %v2548
        %v2551 = vmul.u32 %v2544, %v2535
        %v2552 = vadd.s32 %v2547, %v2549
        %vm2553 = vc.u32 %v2547, %v2549
        %v2554 = vadd.s32 %v2550, 1
        %v2555 = vsel %vm2553, %v2554, %v2550
        %v2556 = vadd.s32 %v2551, %v2555
        %v2557 = vadd.s32 %v2556, 536870912
        %v2558 = vshrl.u32 %v2557, 30
        %v2559 = vshll.u32 %v2558, 30
        %v2560 = vsub.s32 %v2556, %v2559
        %vm2561 = vcmp.lt.s32.totalorder %v2560, 0
        %v2562 = vsub.s32 0, %v2560
        %v2563 = vsel %vm2561, %v2562, %v2560
        %v2564 = vclz %v2563
        %v2565 = vsub.s32 %v2564, 2
        %vm2566 = vcmp.gt.s32.totalorder 0, %v2565
        %v2567 = vsel %vm2566, 0, %v2565
        %v2568 = vsub.s32 32, %v2567
        %v2569 = vshll.u32 %v2560, %v2567
        %v2570 = vshrl.u32 %v2552, %v2568
        %v2571 = vor.u32 %v2569, %v2570
        %v2572 = vsub.s32 4294967266, %v2567
        %v2573 = vadd.s32 %v2572, 127
        %v2574 = vshll.u32 %v2573, 23
        %v2575 = vor.u32 4788187, %v2574
        %v2576 = vand.u32 2147483647, %v2575
        %v2578 = vcvt.s32.f32 %v2571
        %v2579 = vmul.f32 %v2578, %v2576
        %v2580 = vxor.u32 %v2579, 2147483648
        %v2581 = vsel %vm2498, %v2580, %v2579
        %v2582 = vsub.s32 4, %v2558
        %v2583 = vsel %vm2498, %v2582, %v2558
        %v2584 = vsel %vm2497, %v2076, %v2581
        %v2585 = vsel %vm2497, 0, %v2583
        %v2586 = vcosq.f32.pop %v2584
        %v2587 = vsinq.f32.pop %v2584
        %vm2588 = vweird.f32 %v2076
        %v2589 = vadd.s32 %v2585, 3
        %v2590 = vand.u32 %v2589, 3
        %vm2591 = vcmp.lt.s32.totalorder %v2590, 2
        %vm2592 = vcmp.eq.s32.totalorder %v2590, 0
        %v2593 = vxor.u32 %v2587, 2147483648
        %v2594 = vsel %vm2592, %v2586, %v2593
        %vm2595 = vcmp.eq.s32.totalorder %v2590, 2
        %v2596 = vxor.u32 %v2586, 2147483648
        %v2597 = vsel %vm2595, %v2596, %v2587
        %v2598 = vsel %vm2591, %v2594, %v2597
        %v2599 = vsel %vm2588, nan, %v2598
        %v2600 = vand.u32 2147483647, %v2077
        %vm2601 = vcmp.le.f32.partialorder %v2600, 0.7853982
        %vm2602 = vcmp.lt.s32.totalorder %v2077, 0
        %v2603 = vand.u32 %v2077, 2139095040
        %v2604 = vshrl.u32 %v2603, 23
        %v2605 = vsub.s32 %v2604, 127
        %v2606 = vand.u32 2147483647, %v2077
        %v2607 = vand.u32 %v2606, 8388607
        %v2608 = vor.u32 %v2607, 8388608
        %v2609 = vsub.s32 0, %v2608
        %v2610 = vadd.s32 %v2605, 1
        %vm2611 = vcmp.gt.s32.totalorder %v2610, 0
        %v2612 = vsel %vm2611, %v2610, 0
        %v2613 = vshrl.u32 %v2612, 5
        %v2614 = vand.u32 %v2612, 31
        %v2615 = vsub.s32 32, %v2614
        %v2616 = vshrl.u32 683565275, %v2615
        %v2617 = vshll.u32 683565275, %v2614
        %v2618 = vshrl.u32 2475754826, %v2615
        %v2619 = vor.u32 %v2617, %v2618
        %v2620 = vshll.u32 2475754826, %v2614
        %v2621 = vshrl.u32 2131351028, %v2615
        %v2622 = vor.u32 %v2620, %v2621
        %v2623 = vshll.u32 2131351028, %v2614
        %v2624 = vshrl.u32 2102212464, %v2615
        %v2625 = vor.u32 %v2623, %v2624
        %v2626 = vshll.u32 2102212464, %v2614
        %v2627 = vshrl.u32 920167782, %v2615
        %v2628 = vor.u32 %v2626, %v2627
        %v2629 = vshll.u32 920167782, %v2614
        %v2630 = vshrl.u32 1326507024, %v2615
        %v2631 = vor.u32 %v2629, %v2630
        %vm2632 = vcmp.lt.s32.totalorder %v2613, 1
        %vm2633 = vcmp.lt.s32.totalorder %v2613, 2
        %vm2634 = vcmp.lt.s32.totalorder %v2613, 3
        %vm2635 = vcmp.lt.s32.totalorder %v2613, 4
        %v2636 = vsel %vm2632, %v2616, %v2619
        %v2637 = vsel %vm2635, %v2625, 2102212464
        %v2638 = vsel %vm2634, %v2622, %v2637
        %v2639 = vsel %vm2633, %v2636, %v2638
        %v2640 = vsel %vm2632, %v2619, %v2622
        %v2641 = vsel %vm2635, %v2628, 920167782
        %v2642 = vsel %vm2634, %v2625, %v2641
        %v2643 = vsel %vm2633, %v2640, %v2642
        %v2644 = vsel %vm2632, %v2622, %v2625
        %v2645 = vsel %vm2635, %v2631, 1326507024
        %v2646 = vsel %vm2634, %v2628, %v2645
        %v2647 = vsel %vm2633, %v2644, %v2646
        %v2648 = vshll.u32 %v2608, 8
        %v2649 = vmul.u32.u64.compose %v2648, %v2647
        %v2650 = vextract.low.u32 %v2649
        %v2651 = vextract.high.u32 %v2649
        %v2652 = vmul.u32.u64.compose %v2648, %v2643
        %v2653 = vextract.low.u32 %v2652
        %v2654 = vextract.high.u32 %v2652
        %v2655 = vmul.u32 %v2648, %v2639
        %v2656 = vadd.s32 %v2651, %v2653
        %vm2657 = vc.u32 %v2651, %v2653
        %v2658 = vadd.s32 %v2654, 1
        %v2659 = vsel %vm2657, %v2658, %v2654
        %v2660 = vadd.s32 %v2655, %v2659
        %v2661 = vadd.s32 %v2660, 536870912
        %v2662 = vshrl.u32 %v2661, 30
        %v2663 = vshll.u32 %v2662, 30
        %v2664 = vsub.s32 %v2660, %v2663
        %vm2665 = vcmp.lt.s32.totalorder %v2664, 0
        %v2666 = vsub.s32 0, %v2664
        %v2667 = vsel %vm2665, %v2666, %v2664
        %v2668 = vclz %v2667
        %v2669 = vsub.s32 %v2668, 2
        %vm2670 = vcmp.gt.s32.totalorder 0, %v2669
        %v2671 = vsel %vm2670, 0, %v2669
        %v2672 = vsub.s32 32, %v2671
        %v2673 = vshll.u32 %v2664, %v2671
        %v2674 = vshrl.u32 %v2656, %v2672
        %v2675 = vor.u32 %v2673, %v2674
        %v2676 = vsub.s32 4294967266, %v2671
        %v2677 = vadd.s32 %v2676, 127
        %v2678 = vshll.u32 %v2677, 23
        %v2679 = vor.u32 4788187, %v2678
        %v2680 = vand.u32 2147483647, %v2679
        %v2682 = vcvt.s32.f32 %v2675
        %v2683 = vmul.f32 %v2682, %v2680
        %v2684 = vxor.u32 %v2683, 2147483648
        %v2685 = vsel %vm2602, %v2684, %v2683
        %v2686 = vsub.s32 4, %v2662
        %v2687 = vsel %vm2602, %v2686, %v2662
        %v2688 = vsel %vm2601, %v2077, %v2685
        %v2689 = vsel %vm2601, 0, %v2687
        %v2690 = vcosq.f32.pop %v2688
        %v2691 = vsinq.f32.pop %v2688
        %vm2692 = vweird.f32 %v2077
        %v2693 = vadd.s32 %v2689, 3
        %v2694 = vand.u32 %v2693, 3
        %vm2695 = vcmp.lt.s32.totalorder %v2694, 2
        %vm2696 = vcmp.eq.s32.totalorder %v2694, 0
        %v2697 = vxor.u32 %v2691, 2147483648
        %v2698 = vsel %vm2696, %v2690, %v2697
        %vm2699 = vcmp.eq.s32.totalorder %v2694, 2
        %v2700 = vxor.u32 %v2690, 2147483648
        %v2701 = vsel %vm2699, %v2700, %v2691
        %v2702 = vsel %vm2695, %v2698, %v2701
        %v2703 = vsel %vm2692, nan, %v2702
        %v2704 = vand.u32 2147483647, %v2078
        %vm2705 = vcmp.le.f32.partialorder %v2704, 0.7853982
        %vm2706 = vcmp.lt.s32.totalorder %v2078, 0
        %v2707 = vand.u32 %v2078, 2139095040
        %v2708 = vshrl.u32 %v2707, 23
        %v2709 = vsub.s32 %v2708, 127
        %v2710 = vand.u32 2147483647, %v2078
        %v2711 = vand.u32 %v2710, 8388607
        %v2712 = vor.u32 %v2711, 8388608
        %v2713 = vsub.s32 0, %v2712
        %v2714 = vadd.s32 %v2709, 1
        %vm2715 = vcmp.gt.s32.totalorder %v2714, 0
        %v2716 = vsel %vm2715, %v2714, 0
        %v2717 = vshrl.u32 %v2716, 5
        %v2718 = vand.u32 %v2716, 31
        %v2719 = vsub.s32 32, %v2718
        %v2720 = vshrl.u32 683565275, %v2719
        %v2721 = vshll.u32 683565275, %v2718
        %v2722 = vshrl.u32 2475754826, %v2719
        %v2723 = vor.u32 %v2721, %v2722
        %v2724 = vshll.u32 2475754826, %v2718
        %v2725 = vshrl.u32 2131351028, %v2719
        %v2726 = vor.u32 %v2724, %v2725
        %v2727 = vshll.u32 2131351028, %v2718
        %v2728 = vshrl.u32 2102212464, %v2719
        %v2729 = vor.u32 %v2727, %v2728
        %v2730 = vshll.u32 2102212464, %v2718
        %v2731 = vshrl.u32 920167782, %v2719
        %v2732 = vor.u32 %v2730, %v2731
        %v2733 = vshll.u32 920167782, %v2718
        %v2734 = vshrl.u32 1326507024, %v2719
        %v2735 = vor.u32 %v2733, %v2734
        %vm2736 = vcmp.lt.s32.totalorder %v2717, 1
        %vm2737 = vcmp.lt.s32.totalorder %v2717, 2
        %vm2738 = vcmp.lt.s32.totalorder %v2717, 3
        %vm2739 = vcmp.lt.s32.totalorder %v2717, 4
        %v2740 = vsel %vm2736, %v2720, %v2723
        %v2741 = vsel %vm2739, %v2729, 2102212464
        %v2742 = vsel %vm2738, %v2726, %v2741
        %v2743 = vsel %vm2737, %v2740, %v2742
        %v2744 = vsel %vm2736, %v2723, %v2726
        %v2745 = vsel %vm2739, %v2732, 920167782
        %v2746 = vsel %vm2738, %v2729, %v2745
        %v2747 = vsel %vm2737, %v2744, %v2746
        %v2748 = vsel %vm2736, %v2726, %v2729
        %v2749 = vsel %vm2739, %v2735, 1326507024
        %v2750 = vsel %vm2738, %v2732, %v2749
        %v2751 = vsel %vm2737, %v2748, %v2750
        %v2752 = vshll.u32 %v2712, 8
        %v2753 = vmul.u32.u64.compose %v2752, %v2751
        %v2754 = vextract.low.u32 %v2753
        %v2755 = vextract.high.u32 %v2753
        %v2756 = vmul.u32.u64.compose %v2752, %v2747
        %v2757 = vextract.low.u32 %v2756
        %v2758 = vextract.high.u32 %v2756
        %v2759 = vmul.u32 %v2752, %v2743
        %v2760 = vadd.s32 %v2755, %v2757
        %vm2761 = vc.u32 %v2755, %v2757
        %v2762 = vadd.s32 %v2758, 1
        %v2763 = vsel %vm2761, %v2762, %v2758
        %v2764 = vadd.s32 %v2759, %v2763
        %v2765 = vadd.s32 %v2764, 536870912
        %v2766 = vshrl.u32 %v2765, 30
        %v2767 = vshll.u32 %v2766, 30
        %v2768 = vsub.s32 %v2764, %v2767
        %vm2769 = vcmp.lt.s32.totalorder %v2768, 0
        %v2770 = vsub.s32 0, %v2768
        %v2771 = vsel %vm2769, %v2770, %v2768
        %v2772 = vclz %v2771
        %v2773 = vsub.s32 %v2772, 2
        %vm2774 = vcmp.gt.s32.totalorder 0, %v2773
        %v2775 = vsel %vm2774, 0, %v2773
        %v2776 = vsub.s32 32, %v2775
        %v2777 = vshll.u32 %v2768, %v2775
        %v2778 = vshrl.u32 %v2760, %v2776
        %v2779 = vor.u32 %v2777, %v2778
        %v2780 = vsub.s32 4294967266, %v2775
        %v2781 = vadd.s32 %v2780, 127
        %v2782 = vshll.u32 %v2781, 23
        %v2783 = vor.u32 4788187, %v2782
        %v2784 = vand.u32 2147483647, %v2783
        %v2786 = vcvt.s32.f32 %v2779
        %v2787 = vmul.f32 %v2786, %v2784
        %v2788 = vxor.u32 %v2787, 2147483648
        %v2789 = vsel %vm2706, %v2788, %v2787
        %v2790 = vsub.s32 4, %v2766
        %v2791 = vsel %vm2706, %v2790, %v2766
        %v2792 = vsel %vm2705, %v2078, %v2789
        %v2793 = vsel %vm2705, 0, %v2791
        %v2794 = vcosq.f32.pop %v2792
        %v2795 = vsinq.f32.pop %v2792
        %vm2796 = vweird.f32 %v2078
        %v2797 = vadd.s32 %v2793, 3
        %v2798 = vand.u32 %v2797, 3
        %vm2799 = vcmp.lt.s32.totalorder %v2798, 2
        %vm2800 = vcmp.eq.s32.totalorder %v2798, 0
        %v2801 = vxor.u32 %v2795, 2147483648
        %v2802 = vsel %vm2800, %v2794, %v2801
        %vm2803 = vcmp.eq.s32.totalorder %v2798, 2
        %v2804 = vxor.u32 %v2794, 2147483648
        %v2805 = vsel %vm2803, %v2804, %v2795
        %v2806 = vsel %vm2799, %v2802, %v2805
        %v2807 = vsel %vm2796, nan, %v2806
        %v2808 = vand.u32 2147483647, %v2079
        %vm2809 = vcmp.le.f32.partialorder %v2808, 0.7853982
        %vm2810 = vcmp.lt.s32.totalorder %v2079, 0
        %v2811 = vand.u32 %v2079, 2139095040
        %v2812 = vshrl.u32 %v2811, 23
        %v2813 = vsub.s32 %v2812, 127
        %v2814 = vand.u32 2147483647, %v2079
        %v2815 = vand.u32 %v2814, 8388607
        %v2816 = vor.u32 %v2815, 8388608
        %v2817 = vsub.s32 0, %v2816
        %v2818 = vadd.s32 %v2813, 1
        %vm2819 = vcmp.gt.s32.totalorder %v2818, 0
        %v2820 = vsel %vm2819, %v2818, 0
        %v2821 = vshrl.u32 %v2820, 5
        %v2822 = vand.u32 %v2820, 31
        %v2823 = vsub.s32 32, %v2822
        %v2824 = vshrl.u32 683565275, %v2823
        %v2825 = vshll.u32 683565275, %v2822
        %v2826 = vshrl.u32 2475754826, %v2823
        %v2827 = vor.u32 %v2825, %v2826
        %v2828 = vshll.u32 2475754826, %v2822
        %v2829 = vshrl.u32 2131351028, %v2823
        %v2830 = vor.u32 %v2828, %v2829
        %v2831 = vshll.u32 2131351028, %v2822
        %v2832 = vshrl.u32 2102212464, %v2823
        %v2833 = vor.u32 %v2831, %v2832
        %v2834 = vshll.u32 2102212464, %v2822
        %v2835 = vshrl.u32 920167782, %v2823
        %v2836 = vor.u32 %v2834, %v2835
        %v2837 = vshll.u32 920167782, %v2822
        %v2838 = vshrl.u32 1326507024, %v2823
        %v2839 = vor.u32 %v2837, %v2838
        %vm2840 = vcmp.lt.s32.totalorder %v2821, 1
        %vm2841 = vcmp.lt.s32.totalorder %v2821, 2
        %vm2842 = vcmp.lt.s32.totalorder %v2821, 3
        %vm2843 = vcmp.lt.s32.totalorder %v2821, 4
        %v2844 = vsel %vm2840, %v2824, %v2827
        %v2845 = vsel %vm2843, %v2833, 2102212464
        %v2846 = vsel %vm2842, %v2830, %v2845
        %v2847 = vsel %vm2841, %v2844, %v2846
        %v2848 = vsel %vm2840, %v2827, %v2830
        %v2849 = vsel %vm2843, %v2836, 920167782
        %v2850 = vsel %vm2842, %v2833, %v2849
        %v2851 = vsel %vm2841, %v2848, %v2850
        %v2852 = vsel %vm2840, %v2830, %v2833
        %v2853 = vsel %vm2843, %v2839, 1326507024
        %v2854 = vsel %vm2842, %v2836, %v2853
        %v2855 = vsel %vm2841, %v2852, %v2854
        %v2856 = vshll.u32 %v2816, 8
        %v2857 = vmul.u32.u64.compose %v2856, %v2855
        %v2858 = vextract.low.u32 %v2857
        %v2859 = vextract.high.u32 %v2857
        %v2860 = vmul.u32.u64.compose %v2856, %v2851
        %v2861 = vextract.low.u32 %v2860
        %v2862 = vextract.high.u32 %v2860
        %v2863 = vmul.u32 %v2856, %v2847
        %v2864 = vadd.s32 %v2859, %v2861
        %vm2865 = vc.u32 %v2859, %v2861
        %v2866 = vadd.s32 %v2862, 1
        %v2867 = vsel %vm2865, %v2866, %v2862
        %v2868 = vadd.s32 %v2863, %v2867
        %v2869 = vadd.s32 %v2868, 536870912
        %v2870 = vshrl.u32 %v2869, 30
        %v2871 = vshll.u32 %v2870, 30
        %v2872 = vsub.s32 %v2868, %v2871
        %vm2873 = vcmp.lt.s32.totalorder %v2872, 0
        %v2874 = vsub.s32 0, %v2872
        %v2875 = vsel %vm2873, %v2874, %v2872
        %v2876 = vclz %v2875
        %v2877 = vsub.s32 %v2876, 2
        %vm2878 = vcmp.gt.s32.totalorder 0, %v2877
        %v2879 = vsel %vm2878, 0, %v2877
        %v2880 = vsub.s32 32, %v2879
        %v2881 = vshll.u32 %v2872, %v2879
        %v2882 = vshrl.u32 %v2864, %v2880
        %v2883 = vor.u32 %v2881, %v2882
        %v2884 = vsub.s32 4294967266, %v2879
        %v2885 = vadd.s32 %v2884, 127
        %v2886 = vshll.u32 %v2885, 23
        %v2887 = vor.u32 4788187, %v2886
        %v2888 = vand.u32 2147483647, %v2887
        %v2890 = vcvt.s32.f32 %v2883
        %v2891 = vmul.f32 %v2890, %v2888
        %v2892 = vxor.u32 %v2891, 2147483648
        %v2893 = vsel %vm2810, %v2892, %v2891
        %v2894 = vsub.s32 4, %v2870
        %v2895 = vsel %vm2810, %v2894, %v2870
        %v2896 = vsel %vm2809, %v2079, %v2893
        %v2897 = vsel %vm2809, 0, %v2895
        %v2898 = vcosq.f32.pop %v2896
        %v2899 = vsinq.f32.pop %v2896
        %vm2900 = vweird.f32 %v2079
        %v2901 = vadd.s32 %v2897, 3
        %v2902 = vand.u32 %v2901, 3
        %vm2903 = vcmp.lt.s32.totalorder %v2902, 2
        %vm2904 = vcmp.eq.s32.totalorder %v2902, 0
        %v2905 = vxor.u32 %v2899, 2147483648
        %v2906 = vsel %vm2904, %v2898, %v2905
        %vm2907 = vcmp.eq.s32.totalorder %v2902, 2
        %v2908 = vxor.u32 %v2898, 2147483648
        %v2909 = vsel %vm2907, %v2908, %v2899
        %v2910 = vsel %vm2903, %v2906, %v2909
        %v2911 = vsel %vm2900, nan, %v2910
        %v2912 = vand.u32 2147483647, %v2072
        %vm2913 = vcmp.le.f32.partialorder %v2912, 0.7853982
        %vm2914 = vcmp.lt.s32.totalorder %v2072, 0
        %v2915 = vand.u32 %v2072, 2139095040
        %v2916 = vshrl.u32 %v2915, 23
        %v2917 = vsub.s32 %v2916, 127
        %v2918 = vand.u32 2147483647, %v2072
        %v2919 = vand.u32 %v2918, 8388607
        %v2920 = vor.u32 %v2919, 8388608
        %v2921 = vsub.s32 0, %v2920
        %v2922 = vadd.s32 %v2917, 1
        %vm2923 = vcmp.gt.s32.totalorder %v2922, 0
        %v2924 = vsel %vm2923, %v2922, 0
        %v2925 = vshrl.u32 %v2924, 5
        %v2926 = vand.u32 %v2924, 31
        %v2927 = vsub.s32 32, %v2926
        %v2928 = vshrl.u32 683565275, %v2927
        %v2929 = vshll.u32 683565275, %v2926
        %v2930 = vshrl.u32 2475754826, %v2927
        %v2931 = vor.u32 %v2929, %v2930
        %v2932 = vshll.u32 2475754826, %v2926
        %v2933 = vshrl.u32 2131351028, %v2927
        %v2934 = vor.u32 %v2932, %v2933
        %v2935 = vshll.u32 2131351028, %v2926
        %v2936 = vshrl.u32 2102212464, %v2927
        %v2937 = vor.u32 %v2935, %v2936
        %v2938 = vshll.u32 2102212464, %v2926
        %v2939 = vshrl.u32 920167782, %v2927
        %v2940 = vor.u32 %v2938, %v2939
        %v2941 = vshll.u32 920167782, %v2926
        %v2942 = vshrl.u32 1326507024, %v2927
        %v2943 = vor.u32 %v2941, %v2942
        %vm2944 = vcmp.lt.s32.totalorder %v2925, 1
        %vm2945 = vcmp.lt.s32.totalorder %v2925, 2
        %vm2946 = vcmp.lt.s32.totalorder %v2925, 3
        %vm2947 = vcmp.lt.s32.totalorder %v2925, 4
        %v2948 = vsel %vm2944, %v2928, %v2931
        %v2949 = vsel %vm2947, %v2937, 2102212464
        %v2950 = vsel %vm2946, %v2934, %v2949
        %v2951 = vsel %vm2945, %v2948, %v2950
        %v2952 = vsel %vm2944, %v2931, %v2934
        %v2953 = vsel %vm2947, %v2940, 920167782
        %v2954 = vsel %vm2946, %v2937, %v2953
        %v2955 = vsel %vm2945, %v2952, %v2954
        %v2956 = vsel %vm2944, %v2934, %v2937
        %v2957 = vsel %vm2947, %v2943, 1326507024
        %v2958 = vsel %vm2946, %v2940, %v2957
        %v2959 = vsel %vm2945, %v2956, %v2958
        %v2960 = vshll.u32 %v2920, 8
        %v2961 = vmul.u32.u64.compose %v2960, %v2959
        %v2962 = vextract.low.u32 %v2961
        %v2963 = vextract.high.u32 %v2961
        %v2964 = vmul.u32.u64.compose %v2960, %v2955
        %v2965 = vextract.low.u32 %v2964
        %v2966 = vextract.high.u32 %v2964
        %v2967 = vmul.u32 %v2960, %v2951
        %v2968 = vadd.s32 %v2963, %v2965
        %vm2969 = vc.u32 %v2963, %v2965
        %v2970 = vadd.s32 %v2966, 1
        %v2971 = vsel %vm2969, %v2970, %v2966
        %v2972 = vadd.s32 %v2967, %v2971
        %v2973 = vadd.s32 %v2972, 536870912
        %v2974 = vshrl.u32 %v2973, 30
        %v2975 = vshll.u32 %v2974, 30
        %v2976 = vsub.s32 %v2972, %v2975
        %vm2977 = vcmp.lt.s32.totalorder %v2976, 0
        %v2978 = vsub.s32 0, %v2976
        %v2979 = vsel %vm2977, %v2978, %v2976
        %v2980 = vclz %v2979
        %v2981 = vsub.s32 %v2980, 2
        %vm2982 = vcmp.gt.s32.totalorder 0, %v2981
        %v2983 = vsel %vm2982, 0, %v2981
        %v2984 = vsub.s32 32, %v2983
        %v2985 = vshll.u32 %v2976, %v2983
        %v2986 = vshrl.u32 %v2968, %v2984
        %v2987 = vor.u32 %v2985, %v2986
        %v2988 = vsub.s32 4294967266, %v2983
        %v2989 = vadd.s32 %v2988, 127
        %v2990 = vshll.u32 %v2989, 23
        %v2991 = vor.u32 4788187, %v2990
        %v2992 = vand.u32 2147483647, %v2991
        %v2994 = vcvt.s32.f32 %v2987
        %v2995 = vmul.f32 %v2994, %v2992
        %v2996 = vxor.u32 %v2995, 2147483648
        %v2997 = vsel %vm2914, %v2996, %v2995
        %v2998 = vsub.s32 4, %v2974
        %v2999 = vsel %vm2914, %v2998, %v2974
        %v3000 = vsel %vm2913, %v2072, %v2997
        %v3001 = vsel %vm2913, 0, %v2999
        %v3002 = vcosq.f32.pop %v3000
        %v3003 = vsinq.f32.pop %v3000
        %vm3004 = vweird.f32 %v2072
        %v3005 = vand.u32 %v3001, 3
        %vm3006 = vcmp.lt.s32.totalorder %v3005, 2
        %vm3007 = vcmp.eq.s32.totalorder %v3005, 0
        %v3008 = vxor.u32 %v3003, 2147483648
        %v3009 = vsel %vm3007, %v3002, %v3008
        %vm3010 = vcmp.eq.s32.totalorder %v3005, 2
        %v3011 = vxor.u32 %v3002, 2147483648
        %v3012 = vsel %vm3010, %v3011, %v3003
        %v3013 = vsel %vm3006, %v3009, %v3012
        %v3014 = vsel %vm3004, nan, %v3013
        %v3015 = vand.u32 2147483647, %v2073
        %vm3016 = vcmp.le.f32.partialorder %v3015, 0.7853982
        %vm3017 = vcmp.lt.s32.totalorder %v2073, 0
        %v3018 = vand.u32 %v2073, 2139095040
        %v3019 = vshrl.u32 %v3018, 23
        %v3020 = vsub.s32 %v3019, 127
        %v3021 = vand.u32 2147483647, %v2073
        %v3022 = vand.u32 %v3021, 8388607
        %v3023 = vor.u32 %v3022, 8388608
        %v3024 = vsub.s32 0, %v3023
        %v3025 = vadd.s32 %v3020, 1
        %vm3026 = vcmp.gt.s32.totalorder %v3025, 0
        %v3027 = vsel %vm3026, %v3025, 0
        %v3028 = vshrl.u32 %v3027, 5
        %v3029 = vand.u32 %v3027, 31
        %v3030 = vsub.s32 32, %v3029
        %v3031 = vshrl.u32 683565275, %v3030
        %v3032 = vshll.u32 683565275, %v3029
        %v3033 = vshrl.u32 2475754826, %v3030
        %v3034 = vor.u32 %v3032, %v3033
        %v3035 = vshll.u32 2475754826, %v3029
        %v3036 = vshrl.u32 2131351028, %v3030
        %v3037 = vor.u32 %v3035, %v3036
        %v3038 = vshll.u32 2131351028, %v3029
        %v3039 = vshrl.u32 2102212464, %v3030
        %v3040 = vor.u32 %v3038, %v3039
        %v3041 = vshll.u32 2102212464, %v3029
        %v3042 = vshrl.u32 920167782, %v3030
        %v3043 = vor.u32 %v3041, %v3042
        %v3044 = vshll.u32 920167782, %v3029
        %v3045 = vshrl.u32 1326507024, %v3030
        %v3046 = vor.u32 %v3044, %v3045
        %vm3047 = vcmp.lt.s32.totalorder %v3028, 1
        %vm3048 = vcmp.lt.s32.totalorder %v3028, 2
        %vm3049 = vcmp.lt.s32.totalorder %v3028, 3
        %vm3050 = vcmp.lt.s32.totalorder %v3028, 4
        %v3051 = vsel %vm3047, %v3031, %v3034
        %v3052 = vsel %vm3050, %v3040, 2102212464
        %v3053 = vsel %vm3049, %v3037, %v3052
        %v3054 = vsel %vm3048, %v3051, %v3053
        %v3055 = vsel %vm3047, %v3034, %v3037
        %v3056 = vsel %vm3050, %v3043, 920167782
        %v3057 = vsel %vm3049, %v3040, %v3056
        %v3058 = vsel %vm3048, %v3055, %v3057
        %v3059 = vsel %vm3047, %v3037, %v3040
        %v3060 = vsel %vm3050, %v3046, 1326507024
        %v3061 = vsel %vm3049, %v3043, %v3060
        %v3062 = vsel %vm3048, %v3059, %v3061
        %v3063 = vshll.u32 %v3023, 8
        %v3064 = vmul.u32.u64.compose %v3063, %v3062
        %v3065 = vextract.low.u32 %v3064
        %v3066 = vextract.high.u32 %v3064
        %v3067 = vmul.u32.u64.compose %v3063, %v3058
        %v3068 = vextract.low.u32 %v3067
        %v3069 = vextract.high.u32 %v3067
        %v3070 = vmul.u32 %v3063, %v3054
        %v3071 = vadd.s32 %v3066, %v3068
        %vm3072 = vc.u32 %v3066, %v3068
        %v3073 = vadd.s32 %v3069, 1
        %v3074 = vsel %vm3072, %v3073, %v3069
        %v3075 = vadd.s32 %v3070, %v3074
        %v3076 = vadd.s32 %v3075, 536870912
        %v3077 = vshrl.u32 %v3076, 30
        %v3078 = vshll.u32 %v3077, 30
        %v3079 = vsub.s32 %v3075, %v3078
        %vm3080 = vcmp.lt.s32.totalorder %v3079, 0
        %v3081 = vsub.s32 0, %v3079
        %v3082 = vsel %vm3080, %v3081, %v3079
        %v3083 = vclz %v3082
        %v3084 = vsub.s32 %v3083, 2
        %vm3085 = vcmp.gt.s32.totalorder 0, %v3084
        %v3086 = vsel %vm3085, 0, %v3084
        %v3087 = vsub.s32 32, %v3086
        %v3088 = vshll.u32 %v3079, %v3086
        %v3089 = vshrl.u32 %v3071, %v3087
        %v3090 = vor.u32 %v3088, %v3089
        %v3091 = vsub.s32 4294967266, %v3086
        %v3092 = vadd.s32 %v3091, 127
        %v3093 = vshll.u32 %v3092, 23
        %v3094 = vor.u32 4788187, %v3093
        %v3095 = vand.u32 2147483647, %v3094
        %v3097 = vcvt.s32.f32 %v3090
        %v3098 = vmul.f32 %v3097, %v3095
        %v3099 = vxor.u32 %v3098, 2147483648
        %v3100 = vsel %vm3017, %v3099, %v3098
        %v3101 = vsub.s32 4, %v3077
        %v3102 = vsel %vm3017, %v3101, %v3077
        %v3103 = vsel %vm3016, %v2073, %v3100
        %v3104 = vsel %vm3016, 0, %v3102
        %v3105 = vcosq.f32.pop %v3103
        %v3106 = vsinq.f32.pop %v3103
        %vm3107 = vweird.f32 %v2073
        %v3108 = vand.u32 %v3104, 3
        %vm3109 = vcmp.lt.s32.totalorder %v3108, 2
        %vm3110 = vcmp.eq.s32.totalorder %v3108, 0
        %v3111 = vxor.u32 %v3106, 2147483648
        %v3112 = vsel %vm3110, %v3105, %v3111
        %vm3113 = vcmp.eq.s32.totalorder %v3108, 2
        %v3114 = vxor.u32 %v3105, 2147483648
        %v3115 = vsel %vm3113, %v3114, %v3106
        %v3116 = vsel %vm3109, %v3112, %v3115
        %v3117 = vsel %vm3107, nan, %v3116
        %v3118 = vand.u32 2147483647, %v2074
        %vm3119 = vcmp.le.f32.partialorder %v3118, 0.7853982
        %vm3120 = vcmp.lt.s32.totalorder %v2074, 0
        %v3121 = vand.u32 %v2074, 2139095040
        %v3122 = vshrl.u32 %v3121, 23
        %v3123 = vsub.s32 %v3122, 127
        %v3124 = vand.u32 2147483647, %v2074
        %v3125 = vand.u32 %v3124, 8388607
        %v3126 = vor.u32 %v3125, 8388608
        %v3127 = vsub.s32 0, %v3126
        %v3128 = vadd.s32 %v3123, 1
        %vm3129 = vcmp.gt.s32.totalorder %v3128, 0
        %v3130 = vsel %vm3129, %v3128, 0
        %v3131 = vshrl.u32 %v3130, 5
        %v3132 = vand.u32 %v3130, 31
        %v3133 = vsub.s32 32, %v3132
        %v3134 = vshrl.u32 683565275, %v3133
        %v3135 = vshll.u32 683565275, %v3132
        %v3136 = vshrl.u32 2475754826, %v3133
        %v3137 = vor.u32 %v3135, %v3136
        %v3138 = vshll.u32 2475754826, %v3132
        %v3139 = vshrl.u32 2131351028, %v3133
        %v3140 = vor.u32 %v3138, %v3139
        %v3141 = vshll.u32 2131351028, %v3132
        %v3142 = vshrl.u32 2102212464, %v3133
        %v3143 = vor.u32 %v3141, %v3142
        %v3144 = vshll.u32 2102212464, %v3132
        %v3145 = vshrl.u32 920167782, %v3133
        %v3146 = vor.u32 %v3144, %v3145
        %v3147 = vshll.u32 920167782, %v3132
        %v3148 = vshrl.u32 1326507024, %v3133
        %v3149 = vor.u32 %v3147, %v3148
        %vm3150 = vcmp.lt.s32.totalorder %v3131, 1
        %vm3151 = vcmp.lt.s32.totalorder %v3131, 2
        %vm3152 = vcmp.lt.s32.totalorder %v3131, 3
        %vm3153 = vcmp.lt.s32.totalorder %v3131, 4
        %v3154 = vsel %vm3150, %v3134, %v3137
        %v3155 = vsel %vm3153, %v3143, 2102212464
        %v3156 = vsel %vm3152, %v3140, %v3155
        %v3157 = vsel %vm3151, %v3154, %v3156
        %v3158 = vsel %vm3150, %v3137, %v3140
        %v3159 = vsel %vm3153, %v3146, 920167782
        %v3160 = vsel %vm3152, %v3143, %v3159
        %v3161 = vsel %vm3151, %v3158, %v3160
        %v3162 = vsel %vm3150, %v3140, %v3143
        %v3163 = vsel %vm3153, %v3149, 1326507024
        %v3164 = vsel %vm3152, %v3146, %v3163
        %v3165 = vsel %vm3151, %v3162, %v3164
        %v3166 = vshll.u32 %v3126, 8
        %v3167 = vmul.u32.u64.compose %v3166, %v3165
        %v3168 = vextract.low.u32 %v3167
        %v3169 = vextract.high.u32 %v3167
        %v3170 = vmul.u32.u64.compose %v3166, %v3161
        %v3171 = vextract.low.u32 %v3170
        %v3172 = vextract.high.u32 %v3170
        %v3173 = vmul.u32 %v3166, %v3157
        %v3174 = vadd.s32 %v3169, %v3171
        %vm3175 = vc.u32 %v3169, %v3171
        %v3176 = vadd.s32 %v3172, 1
        %v3177 = vsel %vm3175, %v3176, %v3172
        %v3178 = vadd.s32 %v3173, %v3177
        %v3179 = vadd.s32 %v3178, 536870912
        %v3180 = vshrl.u32 %v3179, 30
        %v3181 = vshll.u32 %v3180, 30
        %v3182 = vsub.s32 %v3178, %v3181
        %vm3183 = vcmp.lt.s32.totalorder %v3182, 0
        %v3184 = vsub.s32 0, %v3182
        %v3185 = vsel %vm3183, %v3184, %v3182
        %v3186 = vclz %v3185
        %v3187 = vsub.s32 %v3186, 2
        %vm3188 = vcmp.gt.s32.totalorder 0, %v3187
        %v3189 = vsel %vm3188, 0, %v3187
        %v3190 = vsub.s32 32, %v3189
        %v3191 = vshll.u32 %v3182, %v3189
        %v3192 = vshrl.u32 %v3174, %v3190
        %v3193 = vor.u32 %v3191, %v3192
        %v3194 = vsub.s32 4294967266, %v3189
        %v3195 = vadd.s32 %v3194, 127
        %v3196 = vshll.u32 %v3195, 23
        %v3197 = vor.u32 4788187, %v3196
        %v3198 = vand.u32 2147483647, %v3197
        %v3200 = vcvt.s32.f32 %v3193
        %v3201 = vmul.f32 %v3200, %v3198
        %v3202 = vxor.u32 %v3201, 2147483648
        %v3203 = vsel %vm3120, %v3202, %v3201
        %v3204 = vsub.s32 4, %v3180
        %v3205 = vsel %vm3120, %v3204, %v3180
        %v3206 = vsel %vm3119, %v2074, %v3203
        %v3207 = vsel %vm3119, 0, %v3205
        %v3208 = vcosq.f32.pop %v3206
        %v3209 = vsinq.f32.pop %v3206
        %vm3210 = vweird.f32 %v2074
        %v3211 = vand.u32 %v3207, 3
        %vm3212 = vcmp.lt.s32.totalorder %v3211, 2
        %vm3213 = vcmp.eq.s32.totalorder %v3211, 0
        %v3214 = vxor.u32 %v3209, 2147483648
        %v3215 = vsel %vm3213, %v3208, %v3214
        %vm3216 = vcmp.eq.s32.totalorder %v3211, 2
        %v3217 = vxor.u32 %v3208, 2147483648
        %v3218 = vsel %vm3216, %v3217, %v3209
        %v3219 = vsel %vm3212, %v3215, %v3218
        %v3220 = vsel %vm3210, nan, %v3219
        %v3221 = vand.u32 2147483647, %v2075
        %vm3222 = vcmp.le.f32.partialorder %v3221, 0.7853982
        %vm3223 = vcmp.lt.s32.totalorder %v2075, 0
        %v3224 = vand.u32 %v2075, 2139095040
        %v3225 = vshrl.u32 %v3224, 23
        %v3226 = vsub.s32 %v3225, 127
        %v3227 = vand.u32 2147483647, %v2075
        %v3228 = vand.u32 %v3227, 8388607
        %v3229 = vor.u32 %v3228, 8388608
        %v3230 = vsub.s32 0, %v3229
        %v3231 = vadd.s32 %v3226, 1
        %vm3232 = vcmp.gt.s32.totalorder %v3231, 0
        %v3233 = vsel %vm3232, %v3231, 0
        %v3234 = vshrl.u32 %v3233, 5
        %v3235 = vand.u32 %v3233, 31
        %v3236 = vsub.s32 32, %v3235
        %v3237 = vshrl.u32 683565275, %v3236
        %v3238 = vshll.u32 683565275, %v3235
        %v3239 = vshrl.u32 2475754826, %v3236
        %v3240 = vor.u32 %v3238, %v3239
        %v3241 = vshll.u32 2475754826, %v3235
        %v3242 = vshrl.u32 2131351028, %v3236
        %v3243 = vor.u32 %v3241, %v3242
        %v3244 = vshll.u32 2131351028, %v3235
        %v3245 = vshrl.u32 2102212464, %v3236
        %v3246 = vor.u32 %v3244, %v3245
        %v3247 = vshll.u32 2102212464, %v3235
        %v3248 = vshrl.u32 920167782, %v3236
        %v3249 = vor.u32 %v3247, %v3248
        %v3250 = vshll.u32 920167782, %v3235
        %v3251 = vshrl.u32 1326507024, %v3236
        %v3252 = vor.u32 %v3250, %v3251
        %vm3253 = vcmp.lt.s32.totalorder %v3234, 1
        %vm3254 = vcmp.lt.s32.totalorder %v3234, 2
        %vm3255 = vcmp.lt.s32.totalorder %v3234, 3
        %vm3256 = vcmp.lt.s32.totalorder %v3234, 4
        %v3257 = vsel %vm3253, %v3237, %v3240
        %v3258 = vsel %vm3256, %v3246, 2102212464
        %v3259 = vsel %vm3255, %v3243, %v3258
        %v3260 = vsel %vm3254, %v3257, %v3259
        %v3261 = vsel %vm3253, %v3240, %v3243
        %v3262 = vsel %vm3256, %v3249, 920167782
        %v3263 = vsel %vm3255, %v3246, %v3262
        %v3264 = vsel %vm3254, %v3261, %v3263
        %v3265 = vsel %vm3253, %v3243, %v3246
        %v3266 = vsel %vm3256, %v3252, 1326507024
        %v3267 = vsel %vm3255, %v3249, %v3266
        %v3268 = vsel %vm3254, %v3265, %v3267
        %v3269 = vshll.u32 %v3229, 8
        %v3270 = vmul.u32.u64.compose %v3269, %v3268
        %v3271 = vextract.low.u32 %v3270
        %v3272 = vextract.high.u32 %v3270
        %v3273 = vmul.u32.u64.compose %v3269, %v3264
        %v3274 = vextract.low.u32 %v3273
        %v3275 = vextract.high.u32 %v3273
        %v3276 = vmul.u32 %v3269, %v3260
        %v3277 = vadd.s32 %v3272, %v3274
        %vm3278 = vc.u32 %v3272, %v3274
        %v3279 = vadd.s32 %v3275, 1
        %v3280 = vsel %vm3278, %v3279, %v3275
        %v3281 = vadd.s32 %v3276, %v3280
        %v3282 = vadd.s32 %v3281, 536870912
        %v3283 = vshrl.u32 %v3282, 30
        %v3284 = vshll.u32 %v3283, 30
        %v3285 = vsub.s32 %v3281, %v3284
        %vm3286 = vcmp.lt.s32.totalorder %v3285, 0
        %v3287 = vsub.s32 0, %v3285
        %v3288 = vsel %vm3286, %v3287, %v3285
        %v3289 = vclz %v3288
        %v3290 = vsub.s32 %v3289, 2
        %vm3291 = vcmp.gt.s32.totalorder 0, %v3290
        %v3292 = vsel %vm3291, 0, %v3290
        %v3293 = vsub.s32 32, %v3292
        %v3294 = vshll.u32 %v3285, %v3292
        %v3295 = vshrl.u32 %v3277, %v3293
        %v3296 = vor.u32 %v3294, %v3295
        %v3297 = vsub.s32 4294967266, %v3292
        %v3298 = vadd.s32 %v3297, 127
        %v3299 = vshll.u32 %v3298, 23
        %v3300 = vor.u32 4788187, %v3299
        %v3301 = vand.u32 2147483647, %v3300
        %v3303 = vcvt.s32.f32 %v3296
        %v3304 = vmul.f32 %v3303, %v3301
        %v3305 = vxor.u32 %v3304, 2147483648
        %v3306 = vsel %vm3223, %v3305, %v3304
        %v3307 = vsub.s32 4, %v3283
        %v3308 = vsel %vm3223, %v3307, %v3283
        %v3309 = vsel %vm3222, %v2075, %v3306
        %v3310 = vsel %vm3222, 0, %v3308
        %v3311 = vcosq.f32.pop %v3309
        %v3312 = vsinq.f32.pop %v3309
        %vm3313 = vweird.f32 %v2075
        %v3314 = vand.u32 %v3310, 3
        %vm3315 = vcmp.lt.s32.totalorder %v3314, 2
        %vm3316 = vcmp.eq.s32.totalorder %v3314, 0
        %v3317 = vxor.u32 %v3312, 2147483648
        %v3318 = vsel %vm3316, %v3311, %v3317
        %vm3319 = vcmp.eq.s32.totalorder %v3314, 2
        %v3320 = vxor.u32 %v3311, 2147483648
        %v3321 = vsel %vm3319, %v3320, %v3312
        %v3322 = vsel %vm3315, %v3318, %v3321
        %v3323 = vsel %vm3313, nan, %v3322
        %v3324 = vand.u32 2147483647, %v2076
        %vm3325 = vcmp.le.f32.partialorder %v3324, 0.7853982
        %vm3326 = vcmp.lt.s32.totalorder %v2076, 0
        %v3327 = vand.u32 %v2076, 2139095040
        %v3328 = vshrl.u32 %v3327, 23
        %v3329 = vsub.s32 %v3328, 127
        %v3330 = vand.u32 2147483647, %v2076
        %v3331 = vand.u32 %v3330, 8388607
        %v3332 = vor.u32 %v3331, 8388608
        %v3333 = vsub.s32 0, %v3332
        %v3334 = vadd.s32 %v3329, 1
        %vm3335 = vcmp.gt.s32.totalorder %v3334, 0
        %v3336 = vsel %vm3335, %v3334, 0
        %v3337 = vshrl.u32 %v3336, 5
        %v3338 = vand.u32 %v3336, 31
        %v3339 = vsub.s32 32, %v3338
        %v3340 = vshrl.u32 683565275, %v3339
        %v3341 = vshll.u32 683565275, %v3338
        %v3342 = vshrl.u32 2475754826, %v3339
        %v3343 = vor.u32 %v3341, %v3342
        %v3344 = vshll.u32 2475754826, %v3338
        %v3345 = vshrl.u32 2131351028, %v3339
        %v3346 = vor.u32 %v3344, %v3345
        %v3347 = vshll.u32 2131351028, %v3338
        %v3348 = vshrl.u32 2102212464, %v3339
        %v3349 = vor.u32 %v3347, %v3348
        %v3350 = vshll.u32 2102212464, %v3338
        %v3351 = vshrl.u32 920167782, %v3339
        %v3352 = vor.u32 %v3350, %v3351
        %v3353 = vshll.u32 920167782, %v3338
        %v3354 = vshrl.u32 1326507024, %v3339
        %v3355 = vor.u32 %v3353, %v3354
        %vm3356 = vcmp.lt.s32.totalorder %v3337, 1
        %vm3357 = vcmp.lt.s32.totalorder %v3337, 2
        %vm3358 = vcmp.lt.s32.totalorder %v3337, 3
        %vm3359 = vcmp.lt.s32.totalorder %v3337, 4
        %v3360 = vsel %vm3356, %v3340, %v3343
        %v3361 = vsel %vm3359, %v3349, 2102212464
        %v3362 = vsel %vm3358, %v3346, %v3361
        %v3363 = vsel %vm3357, %v3360, %v3362
        %v3364 = vsel %vm3356, %v3343, %v3346
        %v3365 = vsel %vm3359, %v3352, 920167782
        %v3366 = vsel %vm3358, %v3349, %v3365
        %v3367 = vsel %vm3357, %v3364, %v3366
        %v3368 = vsel %vm3356, %v3346, %v3349
        %v3369 = vsel %vm3359, %v3355, 1326507024
        %v3370 = vsel %vm3358, %v3352, %v3369
        %v3371 = vsel %vm3357, %v3368, %v3370
        %v3372 = vshll.u32 %v3332, 8
        %v3373 = vmul.u32.u64.compose %v3372, %v3371
        %v3374 = vextract.low.u32 %v3373
        %v3375 = vextract.high.u32 %v3373
        %v3376 = vmul.u32.u64.compose %v3372, %v3367
        %v3377 = vextract.low.u32 %v3376
        %v3378 = vextract.high.u32 %v3376
        %v3379 = vmul.u32 %v3372, %v3363
        %v3380 = vadd.s32 %v3375, %v3377
        %vm3381 = vc.u32 %v3375, %v3377
        %v3382 = vadd.s32 %v3378, 1
        %v3383 = vsel %vm3381, %v3382, %v3378
        %v3384 = vadd.s32 %v3379, %v3383
        %v3385 = vadd.s32 %v3384, 536870912
        %v3386 = vshrl.u32 %v3385, 30
        %v3387 = vshll.u32 %v3386, 30
        %v3388 = vsub.s32 %v3384, %v3387
        %vm3389 = vcmp.lt.s32.totalorder %v3388, 0
        %v3390 = vsub.s32 0, %v3388
        %v3391 = vsel %vm3389, %v3390, %v3388
        %v3392 = vclz %v3391
        %v3393 = vsub.s32 %v3392, 2
        %vm3394 = vcmp.gt.s32.totalorder 0, %v3393
        %v3395 = vsel %vm3394, 0, %v3393
        %v3396 = vsub.s32 32, %v3395
        %v3397 = vshll.u32 %v3388, %v3395
        %v3398 = vshrl.u32 %v3380, %v3396
        %v3399 = vor.u32 %v3397, %v3398
        %v3400 = vsub.s32 4294967266, %v3395
        %v3401 = vadd.s32 %v3400, 127
        %v3402 = vshll.u32 %v3401, 23
        %v3403 = vor.u32 4788187, %v3402
        %v3404 = vand.u32 2147483647, %v3403
        %v3406 = vcvt.s32.f32 %v3399
        %v3407 = vmul.f32 %v3406, %v3404
        %v3408 = vxor.u32 %v3407, 2147483648
        %v3409 = vsel %vm3326, %v3408, %v3407
        %v3410 = vsub.s32 4, %v3386
        %v3411 = vsel %vm3326, %v3410, %v3386
        %v3412 = vsel %vm3325, %v2076, %v3409
        %v3413 = vsel %vm3325, 0, %v3411
        %v3414 = vcosq.f32.pop %v3412
        %v3415 = vsinq.f32.pop %v3412
        %vm3416 = vweird.f32 %v2076
        %v3417 = vand.u32 %v3413, 3
        %vm3418 = vcmp.lt.s32.totalorder %v3417, 2
        %vm3419 = vcmp.eq.s32.totalorder %v3417, 0
        %v3420 = vxor.u32 %v3415, 2147483648
        %v3421 = vsel %vm3419, %v3414, %v3420
        %vm3422 = vcmp.eq.s32.totalorder %v3417, 2
        %v3423 = vxor.u32 %v3414, 2147483648
        %v3424 = vsel %vm3422, %v3423, %v3415
        %v3425 = vsel %vm3418, %v3421, %v3424
        %v3426 = vsel %vm3416, nan, %v3425
        %v3427 = vand.u32 2147483647, %v2077
        %vm3428 = vcmp.le.f32.partialorder %v3427, 0.7853982
        %vm3429 = vcmp.lt.s32.totalorder %v2077, 0
        %v3430 = vand.u32 %v2077, 2139095040
        %v3431 = vshrl.u32 %v3430, 23
        %v3432 = vsub.s32 %v3431, 127
        %v3433 = vand.u32 2147483647, %v2077
        %v3434 = vand.u32 %v3433, 8388607
        %v3435 = vor.u32 %v3434, 8388608
        %v3436 = vsub.s32 0, %v3435
        %v3437 = vadd.s32 %v3432, 1
        %vm3438 = vcmp.gt.s32.totalorder %v3437, 0
        %v3439 = vsel %vm3438, %v3437, 0
        %v3440 = vshrl.u32 %v3439, 5
        %v3441 = vand.u32 %v3439, 31
        %v3442 = vsub.s32 32, %v3441
        %v3443 = vshrl.u32 683565275, %v3442
        %v3444 = vshll.u32 683565275, %v3441
        %v3445 = vshrl.u32 2475754826, %v3442
        %v3446 = vor.u32 %v3444, %v3445
        %v3447 = vshll.u32 2475754826, %v3441
        %v3448 = vshrl.u32 2131351028, %v3442
        %v3449 = vor.u32 %v3447, %v3448
        %v3450 = vshll.u32 2131351028, %v3441
        %v3451 = vshrl.u32 2102212464, %v3442
        %v3452 = vor.u32 %v3450, %v3451
        %v3453 = vshll.u32 2102212464, %v3441
        %v3454 = vshrl.u32 920167782, %v3442
        %v3455 = vor.u32 %v3453, %v3454
        %v3456 = vshll.u32 920167782, %v3441
        %v3457 = vshrl.u32 1326507024, %v3442
        %v3458 = vor.u32 %v3456, %v3457
        %vm3459 = vcmp.lt.s32.totalorder %v3440, 1
        %vm3460 = vcmp.lt.s32.totalorder %v3440, 2
        %vm3461 = vcmp.lt.s32.totalorder %v3440, 3
        %vm3462 = vcmp.lt.s32.totalorder %v3440, 4
        %v3463 = vsel %vm3459, %v3443, %v3446
        %v3464 = vsel %vm3462, %v3452, 2102212464
        %v3465 = vsel %vm3461, %v3449, %v3464
        %v3466 = vsel %vm3460, %v3463, %v3465
        %v3467 = vsel %vm3459, %v3446, %v3449
        %v3468 = vsel %vm3462, %v3455, 920167782
        %v3469 = vsel %vm3461, %v3452, %v3468
        %v3470 = vsel %vm3460, %v3467, %v3469
        %v3471 = vsel %vm3459, %v3449, %v3452
        %v3472 = vsel %vm3462, %v3458, 1326507024
        %v3473 = vsel %vm3461, %v3455, %v3472
        %v3474 = vsel %vm3460, %v3471, %v3473
        %v3475 = vshll.u32 %v3435, 8
        %v3476 = vmul.u32.u64.compose %v3475, %v3474
        %v3477 = vextract.low.u32 %v3476
        %v3478 = vextract.high.u32 %v3476
        %v3479 = vmul.u32.u64.compose %v3475, %v3470
        %v3480 = vextract.low.u32 %v3479
        %v3481 = vextract.high.u32 %v3479
        %v3482 = vmul.u32 %v3475, %v3466
        %v3483 = vadd.s32 %v3478, %v3480
        %vm3484 = vc.u32 %v3478, %v3480
        %v3485 = vadd.s32 %v3481, 1
        %v3486 = vsel %vm3484, %v3485, %v3481
        %v3487 = vadd.s32 %v3482, %v3486
        %v3488 = vadd.s32 %v3487, 536870912
        %v3489 = vshrl.u32 %v3488, 30
        %v3490 = vshll.u32 %v3489, 30
        %v3491 = vsub.s32 %v3487, %v3490
        %vm3492 = vcmp.lt.s32.totalorder %v3491, 0
        %v3493 = vsub.s32 0, %v3491
        %v3494 = vsel %vm3492, %v3493, %v3491
        %v3495 = vclz %v3494
        %v3496 = vsub.s32 %v3495, 2
        %vm3497 = vcmp.gt.s32.totalorder 0, %v3496
        %v3498 = vsel %vm3497, 0, %v3496
        %v3499 = vsub.s32 32, %v3498
        %v3500 = vshll.u32 %v3491, %v3498
        %v3501 = vshrl.u32 %v3483, %v3499
        %v3502 = vor.u32 %v3500, %v3501
        %v3503 = vsub.s32 4294967266, %v3498
        %v3504 = vadd.s32 %v3503, 127
        %v3505 = vshll.u32 %v3504, 23
        %v3506 = vor.u32 4788187, %v3505
        %v3507 = vand.u32 2147483647, %v3506
        %v3509 = vcvt.s32.f32 %v3502
        %v3510 = vmul.f32 %v3509, %v3507
        %v3511 = vxor.u32 %v3510, 2147483648
        %v3512 = vsel %vm3429, %v3511, %v3510
        %v3513 = vsub.s32 4, %v3489
        %v3514 = vsel %vm3429, %v3513, %v3489
        %v3515 = vsel %vm3428, %v2077, %v3512
        %v3516 = vsel %vm3428, 0, %v3514
        %v3517 = vcosq.f32.pop %v3515
        %v3518 = vsinq.f32.pop %v3515
        %vm3519 = vweird.f32 %v2077
        %v3520 = vand.u32 %v3516, 3
        %vm3521 = vcmp.lt.s32.totalorder %v3520, 2
        %vm3522 = vcmp.eq.s32.totalorder %v3520, 0
        %v3523 = vxor.u32 %v3518, 2147483648
        %v3524 = vsel %vm3522, %v3517, %v3523
        %vm3525 = vcmp.eq.s32.totalorder %v3520, 2
        %v3526 = vxor.u32 %v3517, 2147483648
        %v3527 = vsel %vm3525, %v3526, %v3518
        %v3528 = vsel %vm3521, %v3524, %v3527
        %v3529 = vsel %vm3519, nan, %v3528
        %v3530 = vand.u32 2147483647, %v2078
        %vm3531 = vcmp.le.f32.partialorder %v3530, 0.7853982
        %vm3532 = vcmp.lt.s32.totalorder %v2078, 0
        %v3533 = vand.u32 %v2078, 2139095040
        %v3534 = vshrl.u32 %v3533, 23
        %v3535 = vsub.s32 %v3534, 127
        %v3536 = vand.u32 2147483647, %v2078
        %v3537 = vand.u32 %v3536, 8388607
        %v3538 = vor.u32 %v3537, 8388608
        %v3539 = vsub.s32 0, %v3538
        %v3540 = vadd.s32 %v3535, 1
        %vm3541 = vcmp.gt.s32.totalorder %v3540, 0
        %v3542 = vsel %vm3541, %v3540, 0
        %v3543 = vshrl.u32 %v3542, 5
        %v3544 = vand.u32 %v3542, 31
        %v3545 = vsub.s32 32, %v3544
        %v3546 = vshrl.u32 683565275, %v3545
        %v3547 = vshll.u32 683565275, %v3544
        %v3548 = vshrl.u32 2475754826, %v3545
        %v3549 = vor.u32 %v3547, %v3548
        %v3550 = vshll.u32 2475754826, %v3544
        %v3551 = vshrl.u32 2131351028, %v3545
        %v3552 = vor.u32 %v3550, %v3551
        %v3553 = vshll.u32 2131351028, %v3544
        %v3554 = vshrl.u32 2102212464, %v3545
        %v3555 = vor.u32 %v3553, %v3554
        %v3556 = vshll.u32 2102212464, %v3544
        %v3557 = vshrl.u32 920167782, %v3545
        %v3558 = vor.u32 %v3556, %v3557
        %v3559 = vshll.u32 920167782, %v3544
        %v3560 = vshrl.u32 1326507024, %v3545
        %v3561 = vor.u32 %v3559, %v3560
        %vm3562 = vcmp.lt.s32.totalorder %v3543, 1
        %vm3563 = vcmp.lt.s32.totalorder %v3543, 2
        %vm3564 = vcmp.lt.s32.totalorder %v3543, 3
        %vm3565 = vcmp.lt.s32.totalorder %v3543, 4
        %v3566 = vsel %vm3562, %v3546, %v3549
        %v3567 = vsel %vm3565, %v3555, 2102212464
        %v3568 = vsel %vm3564, %v3552, %v3567
        %v3569 = vsel %vm3563, %v3566, %v3568
        %v3570 = vsel %vm3562, %v3549, %v3552
        %v3571 = vsel %vm3565, %v3558, 920167782
        %v3572 = vsel %vm3564, %v3555, %v3571
        %v3573 = vsel %vm3563, %v3570, %v3572
        %v3574 = vsel %vm3562, %v3552, %v3555
        %v3575 = vsel %vm3565, %v3561, 1326507024
        %v3576 = vsel %vm3564, %v3558, %v3575
        %v3577 = vsel %vm3563, %v3574, %v3576
        %v3578 = vshll.u32 %v3538, 8
        %v3579 = vmul.u32.u64.compose %v3578, %v3577
        %v3580 = vextract.low.u32 %v3579
        %v3581 = vextract.high.u32 %v3579
        %v3582 = vmul.u32.u64.compose %v3578, %v3573
        %v3583 = vextract.low.u32 %v3582
        %v3584 = vextract.high.u32 %v3582
        %v3585 = vmul.u32 %v3578, %v3569
        %v3586 = vadd.s32 %v3581, %v3583
        %vm3587 = vc.u32 %v3581, %v3583
        %v3588 = vadd.s32 %v3584, 1
        %v3589 = vsel %vm3587, %v3588, %v3584
        %v3590 = vadd.s32 %v3585, %v3589
        %v3591 = vadd.s32 %v3590, 536870912
        %v3592 = vshrl.u32 %v3591, 30
        %v3593 = vshll.u32 %v3592, 30
        %v3594 = vsub.s32 %v3590, %v3593
        %vm3595 = vcmp.lt.s32.totalorder %v3594, 0
        %v3596 = vsub.s32 0, %v3594
        %v3597 = vsel %vm3595, %v3596, %v3594
        %v3598 = vclz %v3597
        %v3599 = vsub.s32 %v3598, 2
        %vm3600 = vcmp.gt.s32.totalorder 0, %v3599
        %v3601 = vsel %vm3600, 0, %v3599
        %v3602 = vsub.s32 32, %v3601
        %v3603 = vshll.u32 %v3594, %v3601
        %v3604 = vshrl.u32 %v3586, %v3602
        %v3605 = vor.u32 %v3603, %v3604
        %v3606 = vsub.s32 4294967266, %v3601
        %v3607 = vadd.s32 %v3606, 127
        %v3608 = vshll.u32 %v3607, 23
        %v3609 = vor.u32 4788187, %v3608
        %v3610 = vand.u32 2147483647, %v3609
        %v3612 = vcvt.s32.f32 %v3605
        %v3613 = vmul.f32 %v3612, %v3610
        %v3614 = vxor.u32 %v3613, 2147483648
        %v3615 = vsel %vm3532, %v3614, %v3613
        %v3616 = vsub.s32 4, %v3592
        %v3617 = vsel %vm3532, %v3616, %v3592
        %v3618 = vsel %vm3531, %v2078, %v3615
        %v3619 = vsel %vm3531, 0, %v3617
        %v3620 = vcosq.f32.pop %v3618
        %v3621 = vsinq.f32.pop %v3618
        %vm3622 = vweird.f32 %v2078
        %v3623 = vand.u32 %v3619, 3
        %vm3624 = vcmp.lt.s32.totalorder %v3623, 2
        %vm3625 = vcmp.eq.s32.totalorder %v3623, 0
        %v3626 = vxor.u32 %v3621, 2147483648
        %v3627 = vsel %vm3625, %v3620, %v3626
        %vm3628 = vcmp.eq.s32.totalorder %v3623, 2
        %v3629 = vxor.u32 %v3620, 2147483648
        %v3630 = vsel %vm3628, %v3629, %v3621
        %v3631 = vsel %vm3624, %v3627, %v3630
        %v3632 = vsel %vm3622, nan, %v3631
        %v3633 = vand.u32 2147483647, %v2079
        %vm3634 = vcmp.le.f32.partialorder %v3633, 0.7853982
        %vm3635 = vcmp.lt.s32.totalorder %v2079, 0
        %v3636 = vand.u32 %v2079, 2139095040
        %v3637 = vshrl.u32 %v3636, 23
        %v3638 = vsub.s32 %v3637, 127
        %v3639 = vand.u32 2147483647, %v2079
        %v3640 = vand.u32 %v3639, 8388607
        %v3641 = vor.u32 %v3640, 8388608
        %v3642 = vsub.s32 0, %v3641
        %v3643 = vadd.s32 %v3638, 1
        %vm3644 = vcmp.gt.s32.totalorder %v3643, 0
        %v3645 = vsel %vm3644, %v3643, 0
        %v3646 = vshrl.u32 %v3645, 5
        %v3647 = vand.u32 %v3645, 31
        %v3648 = vsub.s32 32, %v3647
        %v3649 = vshrl.u32 683565275, %v3648
        %v3650 = vshll.u32 683565275, %v3647
        %v3651 = vshrl.u32 2475754826, %v3648
        %v3652 = vor.u32 %v3650, %v3651
        %v3653 = vshll.u32 2475754826, %v3647
        %v3654 = vshrl.u32 2131351028, %v3648
        %v3655 = vor.u32 %v3653, %v3654
        %v3656 = vshll.u32 2131351028, %v3647
        %v3657 = vshrl.u32 2102212464, %v3648
        %v3658 = vor.u32 %v3656, %v3657
        %v3659 = vshll.u32 2102212464, %v3647
        %v3660 = vshrl.u32 920167782, %v3648
        %v3661 = vor.u32 %v3659, %v3660
        %v3662 = vshll.u32 920167782, %v3647
        %v3663 = vshrl.u32 1326507024, %v3648
        %v3664 = vor.u32 %v3662, %v3663
        %vm3665 = vcmp.lt.s32.totalorder %v3646, 1
        %vm3666 = vcmp.lt.s32.totalorder %v3646, 2
        %vm3667 = vcmp.lt.s32.totalorder %v3646, 3
        %vm3668 = vcmp.lt.s32.totalorder %v3646, 4
        %v3669 = vsel %vm3665, %v3649, %v3652
        %v3670 = vsel %vm3668, %v3658, 2102212464
        %v3671 = vsel %vm3667, %v3655, %v3670
        %v3672 = vsel %vm3666, %v3669, %v3671
        %v3673 = vsel %vm3665, %v3652, %v3655
        %v3674 = vsel %vm3668, %v3661, 920167782
        %v3675 = vsel %vm3667, %v3658, %v3674
        %v3676 = vsel %vm3666, %v3673, %v3675
        %v3677 = vsel %vm3665, %v3655, %v3658
        %v3678 = vsel %vm3668, %v3664, 1326507024
        %v3679 = vsel %vm3667, %v3661, %v3678
        %v3680 = vsel %vm3666, %v3677, %v3679
        %v3681 = vshll.u32 %v3641, 8
        %v3682 = vmul.u32.u64.compose %v3681, %v3680
        %v3683 = vextract.low.u32 %v3682
        %v3684 = vextract.high.u32 %v3682
        %v3685 = vmul.u32.u64.compose %v3681, %v3676
        %v3686 = vextract.low.u32 %v3685
        %v3687 = vextract.high.u32 %v3685
        %v3688 = vmul.u32 %v3681, %v3672
        %v3689 = vadd.s32 %v3684, %v3686
        %vm3690 = vc.u32 %v3684, %v3686
        %v3691 = vadd.s32 %v3687, 1
        %v3692 = vsel %vm3690, %v3691, %v3687
        %v3693 = vadd.s32 %v3688, %v3692
        %v3694 = vadd.s32 %v3693, 536870912
        %v3695 = vshrl.u32 %v3694, 30
        %v3696 = vshll.u32 %v3695, 30
        %v3697 = vsub.s32 %v3693, %v3696
        %vm3698 = vcmp.lt.s32.totalorder %v3697, 0
        %v3699 = vsub.s32 0, %v3697
        %v3700 = vsel %vm3698, %v3699, %v3697
        %v3701 = vclz %v3700
        %v3702 = vsub.s32 %v3701, 2
        %vm3703 = vcmp.gt.s32.totalorder 0, %v3702
        %v3704 = vsel %vm3703, 0, %v3702
        %v3705 = vsub.s32 32, %v3704
        %v3706 = vshll.u32 %v3697, %v3704
        %v3707 = vshrl.u32 %v3689, %v3705
        %v3708 = vor.u32 %v3706, %v3707
        %v3709 = vsub.s32 4294967266, %v3704
        %v3710 = vadd.s32 %v3709, 127
        %v3711 = vshll.u32 %v3710, 23
        %v3712 = vor.u32 4788187, %v3711
        %v3713 = vand.u32 2147483647, %v3712
        %v3715 = vcvt.s32.f32 %v3708
        %v3716 = vmul.f32 %v3715, %v3713
        %v3717 = vxor.u32 %v3716, 2147483648
        %v3718 = vsel %vm3635, %v3717, %v3716
        %v3719 = vsub.s32 4, %v3695
        %v3720 = vsel %vm3635, %v3719, %v3695
        %v3721 = vsel %vm3634, %v2079, %v3718
        %v3722 = vsel %vm3634, 0, %v3720
        %v3723 = vcosq.f32.pop %v3721
        %v3724 = vsinq.f32.pop %v3721
        %vm3725 = vweird.f32 %v2079
        %v3726 = vand.u32 %v3722, 3
        %vm3727 = vcmp.lt.s32.totalorder %v3726, 2
        %vm3728 = vcmp.eq.s32.totalorder %v3726, 0
        %v3729 = vxor.u32 %v3724, 2147483648
        %v3730 = vsel %vm3728, %v3723, %v3729
        %vm3731 = vcmp.eq.s32.totalorder %v3726, 2
        %v3732 = vxor.u32 %v3723, 2147483648
        %v3733 = vsel %vm3731, %v3732, %v3724
        %v3734 = vsel %vm3727, %v3730, %v3733
        %v3735 = vsel %vm3725, nan, %v3734
        %3737 = vset.pattern.permute.xlu0 0
        %3738 = vperm.xlu0 %3737, %v352
        %v3739 = vpop.permute.xlu0 %3738
        %3742 = vset.pattern.permute.xlu0 0
        %3743 = vperm.xlu0 %3742, %v353
        %v3744 = vpop.permute.xlu0 %3743
        %3747 = vset.pattern.permute.xlu0 0
        %3748 = vperm.xlu0 %3747, %v354
        %v3749 = vpop.permute.xlu0 %3748
        %3752 = vset.pattern.permute.xlu0 0
        %3753 = vperm.xlu0 %3752, %v355
        %v3754 = vpop.permute.xlu0 %3753
        %3757 = vset.pattern.permute.xlu0 0
        %3758 = vperm.xlu0 %3757, %v356
        %v3759 = vpop.permute.xlu0 %3758
        %3762 = vset.pattern.permute.xlu0 0
        %3763 = vperm.xlu0 %3762, %v357
        %v3764 = vpop.permute.xlu0 %3763
        %3767 = vset.pattern.permute.xlu0 0
        %3768 = vperm.xlu0 %3767, %v358
        %v3769 = vpop.permute.xlu0 %3768
        %3772 = vset.pattern.permute.xlu0 0
        %3773 = vperm.xlu0 %3772, %v359
        %v3774 = vpop.permute.xlu0 %3773
        %v3776 = vlaneseq
        %v3777 = vshrl.u32 %v3776, 7
        %v3778 = vsub.s32 2, %v3777
        %v3779 = vrot.slane %v343, %v3778
        %v3780 = vmul.f32 %v3739, %v3779
        %v3781 = vmul.f32 %v3744, %v3779
        %v3782 = vmul.f32 %v3749, %v3779
        %v3783 = vmul.f32 %v3754, %v3779
        %v3784 = vmul.f32 %v3759, %v3779
        %v3785 = vmul.f32 %v3764, %v3779
        %v3786 = vmul.f32 %v3769, %v3779
        %v3787 = vmul.f32 %v3774, %v3779
        %v3788 = vand.u32 2147483647, %v3780
        %vm3789 = vcmp.le.f32.partialorder %v3788, 0.7853982
        %vm3790 = vcmp.lt.s32.totalorder %v3780, 0
        %v3791 = vand.u32 %v3780, 2139095040
        %v3792 = vshrl.u32 %v3791, 23
        %v3793 = vsub.s32 %v3792, 127
        %v3794 = vand.u32 2147483647, %v3780
        %v3795 = vand.u32 %v3794, 8388607
        %v3796 = vor.u32 %v3795, 8388608
        %v3797 = vsub.s32 0, %v3796
        %v3798 = vadd.s32 %v3793, 1
        %vm3799 = vcmp.gt.s32.totalorder %v3798, 0
        %v3800 = vsel %vm3799, %v3798, 0
        %v3801 = vshrl.u32 %v3800, 5
        %v3802 = vand.u32 %v3800, 31
        %v3803 = vsub.s32 32, %v3802
        %v3804 = vshrl.u32 683565275, %v3803
        %v3805 = vshll.u32 683565275, %v3802
        %v3806 = vshrl.u32 2475754826, %v3803
        %v3807 = vor.u32 %v3805, %v3806
        %v3808 = vshll.u32 2475754826, %v3802
        %v3809 = vshrl.u32 2131351028, %v3803
        %v3810 = vor.u32 %v3808, %v3809
        %v3811 = vshll.u32 2131351028, %v3802
        %v3812 = vshrl.u32 2102212464, %v3803
        %v3813 = vor.u32 %v3811, %v3812
        %v3814 = vshll.u32 2102212464, %v3802
        %v3815 = vshrl.u32 920167782, %v3803
        %v3816 = vor.u32 %v3814, %v3815
        %v3817 = vshll.u32 920167782, %v3802
        %v3818 = vshrl.u32 1326507024, %v3803
        %v3819 = vor.u32 %v3817, %v3818
        %vm3820 = vcmp.lt.s32.totalorder %v3801, 1
        %vm3821 = vcmp.lt.s32.totalorder %v3801, 2
        %vm3822 = vcmp.lt.s32.totalorder %v3801, 3
        %vm3823 = vcmp.lt.s32.totalorder %v3801, 4
        %v3824 = vsel %vm3820, %v3804, %v3807
        %v3825 = vsel %vm3823, %v3813, 2102212464
        %v3826 = vsel %vm3822, %v3810, %v3825
        %v3827 = vsel %vm3821, %v3824, %v3826
        %v3828 = vsel %vm3820, %v3807, %v3810
        %v3829 = vsel %vm3823, %v3816, 920167782
        %v3830 = vsel %vm3822, %v3813, %v3829
        %v3831 = vsel %vm3821, %v3828, %v3830
        %v3832 = vsel %vm3820, %v3810, %v3813
        %v3833 = vsel %vm3823, %v3819, 1326507024
        %v3834 = vsel %vm3822, %v3816, %v3833
        %v3835 = vsel %vm3821, %v3832, %v3834
        %v3836 = vshll.u32 %v3796, 8
        %v3837 = vmul.u32.u64.compose %v3836, %v3835
        %v3838 = vextract.low.u32 %v3837
        %v3839 = vextract.high.u32 %v3837
        %v3840 = vmul.u32.u64.compose %v3836, %v3831
        %v3841 = vextract.low.u32 %v3840
        %v3842 = vextract.high.u32 %v3840
        %v3843 = vmul.u32 %v3836, %v3827
        %v3844 = vadd.s32 %v3839, %v3841
        %vm3845 = vc.u32 %v3839, %v3841
        %v3846 = vadd.s32 %v3842, 1
        %v3847 = vsel %vm3845, %v3846, %v3842
        %v3848 = vadd.s32 %v3843, %v3847
        %v3849 = vadd.s32 %v3848, 536870912
        %v3850 = vshrl.u32 %v3849, 30
        %v3851 = vshll.u32 %v3850, 30
        %v3852 = vsub.s32 %v3848, %v3851
        %vm3853 = vcmp.lt.s32.totalorder %v3852, 0
        %v3854 = vsub.s32 0, %v3852
        %v3855 = vsel %vm3853, %v3854, %v3852
        %v3856 = vclz %v3855
        %v3857 = vsub.s32 %v3856, 2
        %vm3858 = vcmp.gt.s32.totalorder 0, %v3857
        %v3859 = vsel %vm3858, 0, %v3857
        %v3860 = vsub.s32 32, %v3859
        %v3861 = vshll.u32 %v3852, %v3859
        %v3862 = vshrl.u32 %v3844, %v3860
        %v3863 = vor.u32 %v3861, %v3862
        %v3864 = vsub.s32 4294967266, %v3859
        %v3865 = vadd.s32 %v3864, 127
        %v3866 = vshll.u32 %v3865, 23
        %v3867 = vor.u32 4788187, %v3866
        %v3868 = vand.u32 2147483647, %v3867
        %v3870 = vcvt.s32.f32 %v3863
        %v3871 = vmul.f32 %v3870, %v3868
        %v3872 = vxor.u32 %v3871, 2147483648
        %v3873 = vsel %vm3790, %v3872, %v3871
        %v3874 = vsub.s32 4, %v3850
        %v3875 = vsel %vm3790, %v3874, %v3850
        %v3876 = vsel %vm3789, %v3780, %v3873
        %v3877 = vsel %vm3789, 0, %v3875
        %v3878 = vcosq.f32.pop %v3876
        %v3879 = vsinq.f32.pop %v3876
        %vm3880 = vweird.f32 %v3780
        %v3881 = vadd.s32 %v3877, 3
        %v3882 = vand.u32 %v3881, 3
        %vm3883 = vcmp.lt.s32.totalorder %v3882, 2
        %vm3884 = vcmp.eq.s32.totalorder %v3882, 0
        %v3885 = vxor.u32 %v3879, 2147483648
        %v3886 = vsel %vm3884, %v3878, %v3885
        %vm3887 = vcmp.eq.s32.totalorder %v3882, 2
        %v3888 = vxor.u32 %v3878, 2147483648
        %v3889 = vsel %vm3887, %v3888, %v3879
        %v3890 = vsel %vm3883, %v3886, %v3889
        %v3891 = vsel %vm3880, nan, %v3890
        %v3892 = vand.u32 2147483647, %v3781
        %vm3893 = vcmp.le.f32.partialorder %v3892, 0.7853982
        %vm3894 = vcmp.lt.s32.totalorder %v3781, 0
        %v3895 = vand.u32 %v3781, 2139095040
        %v3896 = vshrl.u32 %v3895, 23
        %v3897 = vsub.s32 %v3896, 127
        %v3898 = vand.u32 2147483647, %v3781
        %v3899 = vand.u32 %v3898, 8388607
        %v3900 = vor.u32 %v3899, 8388608
        %v3901 = vsub.s32 0, %v3900
        %v3902 = vadd.s32 %v3897, 1
        %vm3903 = vcmp.gt.s32.totalorder %v3902, 0
        %v3904 = vsel %vm3903, %v3902, 0
        %v3905 = vshrl.u32 %v3904, 5
        %v3906 = vand.u32 %v3904, 31
        %v3907 = vsub.s32 32, %v3906
        %v3908 = vshrl.u32 683565275, %v3907
        %v3909 = vshll.u32 683565275, %v3906
        %v3910 = vshrl.u32 2475754826, %v3907
        %v3911 = vor.u32 %v3909, %v3910
        %v3912 = vshll.u32 2475754826, %v3906
        %v3913 = vshrl.u32 2131351028, %v3907
        %v3914 = vor.u32 %v3912, %v3913
        %v3915 = vshll.u32 2131351028, %v3906
        %v3916 = vshrl.u32 2102212464, %v3907
        %v3917 = vor.u32 %v3915, %v3916
        %v3918 = vshll.u32 2102212464, %v3906
        %v3919 = vshrl.u32 920167782, %v3907
        %v3920 = vor.u32 %v3918, %v3919
        %v3921 = vshll.u32 920167782, %v3906
        %v3922 = vshrl.u32 1326507024, %v3907
        %v3923 = vor.u32 %v3921, %v3922
        %vm3924 = vcmp.lt.s32.totalorder %v3905, 1
        %vm3925 = vcmp.lt.s32.totalorder %v3905, 2
        %vm3926 = vcmp.lt.s32.totalorder %v3905, 3
        %vm3927 = vcmp.lt.s32.totalorder %v3905, 4
        %v3928 = vsel %vm3924, %v3908, %v3911
        %v3929 = vsel %vm3927, %v3917, 2102212464
        %v3930 = vsel %vm3926, %v3914, %v3929
        %v3931 = vsel %vm3925, %v3928, %v3930
        %v3932 = vsel %vm3924, %v3911, %v3914
        %v3933 = vsel %vm3927, %v3920, 920167782
        %v3934 = vsel %vm3926, %v3917, %v3933
        %v3935 = vsel %vm3925, %v3932, %v3934
        %v3936 = vsel %vm3924, %v3914, %v3917
        %v3937 = vsel %vm3927, %v3923, 1326507024
        %v3938 = vsel %vm3926, %v3920, %v3937
        %v3939 = vsel %vm3925, %v3936, %v3938
        %v3940 = vshll.u32 %v3900, 8
        %v3941 = vmul.u32.u64.compose %v3940, %v3939
        %v3942 = vextract.low.u32 %v3941
        %v3943 = vextract.high.u32 %v3941
        %v3944 = vmul.u32.u64.compose %v3940, %v3935
        %v3945 = vextract.low.u32 %v3944
        %v3946 = vextract.high.u32 %v3944
        %v3947 = vmul.u32 %v3940, %v3931
        %v3948 = vadd.s32 %v3943, %v3945
        %vm3949 = vc.u32 %v3943, %v3945
        %v3950 = vadd.s32 %v3946, 1
        %v3951 = vsel %vm3949, %v3950, %v3946
        %v3952 = vadd.s32 %v3947, %v3951
        %v3953 = vadd.s32 %v3952, 536870912
        %v3954 = vshrl.u32 %v3953, 30
        %v3955 = vshll.u32 %v3954, 30
        %v3956 = vsub.s32 %v3952, %v3955
        %vm3957 = vcmp.lt.s32.totalorder %v3956, 0
        %v3958 = vsub.s32 0, %v3956
        %v3959 = vsel %vm3957, %v3958, %v3956
        %v3960 = vclz %v3959
        %v3961 = vsub.s32 %v3960, 2
        %vm3962 = vcmp.gt.s32.totalorder 0, %v3961
        %v3963 = vsel %vm3962, 0, %v3961
        %v3964 = vsub.s32 32, %v3963
        %v3965 = vshll.u32 %v3956, %v3963
        %v3966 = vshrl.u32 %v3948, %v3964
        %v3967 = vor.u32 %v3965, %v3966
        %v3968 = vsub.s32 4294967266, %v3963
        %v3969 = vadd.s32 %v3968, 127
        %v3970 = vshll.u32 %v3969, 23
        %v3971 = vor.u32 4788187, %v3970
        %v3972 = vand.u32 2147483647, %v3971
        %v3974 = vcvt.s32.f32 %v3967
        %v3975 = vmul.f32 %v3974, %v3972
        %v3976 = vxor.u32 %v3975, 2147483648
        %v3977 = vsel %vm3894, %v3976, %v3975
        %v3978 = vsub.s32 4, %v3954
        %v3979 = vsel %vm3894, %v3978, %v3954
        %v3980 = vsel %vm3893, %v3781, %v3977
        %v3981 = vsel %vm3893, 0, %v3979
        %v3982 = vcosq.f32.pop %v3980
        %v3983 = vsinq.f32.pop %v3980
        %vm3984 = vweird.f32 %v3781
        %v3985 = vadd.s32 %v3981, 3
        %v3986 = vand.u32 %v3985, 3
        %vm3987 = vcmp.lt.s32.totalorder %v3986, 2
        %vm3988 = vcmp.eq.s32.totalorder %v3986, 0
        %v3989 = vxor.u32 %v3983, 2147483648
        %v3990 = vsel %vm3988, %v3982, %v3989
        %vm3991 = vcmp.eq.s32.totalorder %v3986, 2
        %v3992 = vxor.u32 %v3982, 2147483648
        %v3993 = vsel %vm3991, %v3992, %v3983
        %v3994 = vsel %vm3987, %v3990, %v3993
        %v3995 = vsel %vm3984, nan, %v3994
        %v3996 = vand.u32 2147483647, %v3782
        %vm3997 = vcmp.le.f32.partialorder %v3996, 0.7853982
        %vm3998 = vcmp.lt.s32.totalorder %v3782, 0
        %v3999 = vand.u32 %v3782, 2139095040
        %v4000 = vshrl.u32 %v3999, 23
        %v4001 = vsub.s32 %v4000, 127
        %v4002 = vand.u32 2147483647, %v3782
        %v4003 = vand.u32 %v4002, 8388607
        %v4004 = vor.u32 %v4003, 8388608
        %v4005 = vsub.s32 0, %v4004
        %v4006 = vadd.s32 %v4001, 1
        %vm4007 = vcmp.gt.s32.totalorder %v4006, 0
        %v4008 = vsel %vm4007, %v4006, 0
        %v4009 = vshrl.u32 %v4008, 5
        %v4010 = vand.u32 %v4008, 31
        %v4011 = vsub.s32 32, %v4010
        %v4012 = vshrl.u32 683565275, %v4011
        %v4013 = vshll.u32 683565275, %v4010
        %v4014 = vshrl.u32 2475754826, %v4011
        %v4015 = vor.u32 %v4013, %v4014
        %v4016 = vshll.u32 2475754826, %v4010
        %v4017 = vshrl.u32 2131351028, %v4011
        %v4018 = vor.u32 %v4016, %v4017
        %v4019 = vshll.u32 2131351028, %v4010
        %v4020 = vshrl.u32 2102212464, %v4011
        %v4021 = vor.u32 %v4019, %v4020
        %v4022 = vshll.u32 2102212464, %v4010
        %v4023 = vshrl.u32 920167782, %v4011
        %v4024 = vor.u32 %v4022, %v4023
        %v4025 = vshll.u32 920167782, %v4010
        %v4026 = vshrl.u32 1326507024, %v4011
        %v4027 = vor.u32 %v4025, %v4026
        %vm4028 = vcmp.lt.s32.totalorder %v4009, 1
        %vm4029 = vcmp.lt.s32.totalorder %v4009, 2
        %vm4030 = vcmp.lt.s32.totalorder %v4009, 3
        %vm4031 = vcmp.lt.s32.totalorder %v4009, 4
        %v4032 = vsel %vm4028, %v4012, %v4015
        %v4033 = vsel %vm4031, %v4021, 2102212464
        %v4034 = vsel %vm4030, %v4018, %v4033
        %v4035 = vsel %vm4029, %v4032, %v4034
        %v4036 = vsel %vm4028, %v4015, %v4018
        %v4037 = vsel %vm4031, %v4024, 920167782
        %v4038 = vsel %vm4030, %v4021, %v4037
        %v4039 = vsel %vm4029, %v4036, %v4038
        %v4040 = vsel %vm4028, %v4018, %v4021
        %v4041 = vsel %vm4031, %v4027, 1326507024
        %v4042 = vsel %vm4030, %v4024, %v4041
        %v4043 = vsel %vm4029, %v4040, %v4042
        %v4044 = vshll.u32 %v4004, 8
        %v4045 = vmul.u32.u64.compose %v4044, %v4043
        %v4046 = vextract.low.u32 %v4045
        %v4047 = vextract.high.u32 %v4045
        %v4048 = vmul.u32.u64.compose %v4044, %v4039
        %v4049 = vextract.low.u32 %v4048
        %v4050 = vextract.high.u32 %v4048
        %v4051 = vmul.u32 %v4044, %v4035
        %v4052 = vadd.s32 %v4047, %v4049
        %vm4053 = vc.u32 %v4047, %v4049
        %v4054 = vadd.s32 %v4050, 1
        %v4055 = vsel %vm4053, %v4054, %v4050
        %v4056 = vadd.s32 %v4051, %v4055
        %v4057 = vadd.s32 %v4056, 536870912
        %v4058 = vshrl.u32 %v4057, 30
        %v4059 = vshll.u32 %v4058, 30
        %v4060 = vsub.s32 %v4056, %v4059
        %vm4061 = vcmp.lt.s32.totalorder %v4060, 0
        %v4062 = vsub.s32 0, %v4060
        %v4063 = vsel %vm4061, %v4062, %v4060
        %v4064 = vclz %v4063
        %v4065 = vsub.s32 %v4064, 2
        %vm4066 = vcmp.gt.s32.totalorder 0, %v4065
        %v4067 = vsel %vm4066, 0, %v4065
        %v4068 = vsub.s32 32, %v4067
        %v4069 = vshll.u32 %v4060, %v4067
        %v4070 = vshrl.u32 %v4052, %v4068
        %v4071 = vor.u32 %v4069, %v4070
        %v4072 = vsub.s32 4294967266, %v4067
        %v4073 = vadd.s32 %v4072, 127
        %v4074 = vshll.u32 %v4073, 23
        %v4075 = vor.u32 4788187, %v4074
        %v4076 = vand.u32 2147483647, %v4075
        %v4078 = vcvt.s32.f32 %v4071
        %v4079 = vmul.f32 %v4078, %v4076
        %v4080 = vxor.u32 %v4079, 2147483648
        %v4081 = vsel %vm3998, %v4080, %v4079
        %v4082 = vsub.s32 4, %v4058
        %v4083 = vsel %vm3998, %v4082, %v4058
        %v4084 = vsel %vm3997, %v3782, %v4081
        %v4085 = vsel %vm3997, 0, %v4083
        %v4086 = vcosq.f32.pop %v4084
        %v4087 = vsinq.f32.pop %v4084
        %vm4088 = vweird.f32 %v3782
        %v4089 = vadd.s32 %v4085, 3
        %v4090 = vand.u32 %v4089, 3
        %vm4091 = vcmp.lt.s32.totalorder %v4090, 2
        %vm4092 = vcmp.eq.s32.totalorder %v4090, 0
        %v4093 = vxor.u32 %v4087, 2147483648
        %v4094 = vsel %vm4092, %v4086, %v4093
        %vm4095 = vcmp.eq.s32.totalorder %v4090, 2
        %v4096 = vxor.u32 %v4086, 2147483648
        %v4097 = vsel %vm4095, %v4096, %v4087
        %v4098 = vsel %vm4091, %v4094, %v4097
        %v4099 = vsel %vm4088, nan, %v4098
        %v4100 = vand.u32 2147483647, %v3783
        %vm4101 = vcmp.le.f32.partialorder %v4100, 0.7853982
        %vm4102 = vcmp.lt.s32.totalorder %v3783, 0
        %v4103 = vand.u32 %v3783, 2139095040
        %v4104 = vshrl.u32 %v4103, 23
        %v4105 = vsub.s32 %v4104, 127
        %v4106 = vand.u32 2147483647, %v3783
        %v4107 = vand.u32 %v4106, 8388607
        %v4108 = vor.u32 %v4107, 8388608
        %v4109 = vsub.s32 0, %v4108
        %v4110 = vadd.s32 %v4105, 1
        %vm4111 = vcmp.gt.s32.totalorder %v4110, 0
        %v4112 = vsel %vm4111, %v4110, 0
        %v4113 = vshrl.u32 %v4112, 5
        %v4114 = vand.u32 %v4112, 31
        %v4115 = vsub.s32 32, %v4114
        %v4116 = vshrl.u32 683565275, %v4115
        %v4117 = vshll.u32 683565275, %v4114
        %v4118 = vshrl.u32 2475754826, %v4115
        %v4119 = vor.u32 %v4117, %v4118
        %v4120 = vshll.u32 2475754826, %v4114
        %v4121 = vshrl.u32 2131351028, %v4115
        %v4122 = vor.u32 %v4120, %v4121
        %v4123 = vshll.u32 2131351028, %v4114
        %v4124 = vshrl.u32 2102212464, %v4115
        %v4125 = vor.u32 %v4123, %v4124
        %v4126 = vshll.u32 2102212464, %v4114
        %v4127 = vshrl.u32 920167782, %v4115
        %v4128 = vor.u32 %v4126, %v4127
        %v4129 = vshll.u32 920167782, %v4114
        %v4130 = vshrl.u32 1326507024, %v4115
        %v4131 = vor.u32 %v4129, %v4130
        %vm4132 = vcmp.lt.s32.totalorder %v4113, 1
        %vm4133 = vcmp.lt.s32.totalorder %v4113, 2
        %vm4134 = vcmp.lt.s32.totalorder %v4113, 3
        %vm4135 = vcmp.lt.s32.totalorder %v4113, 4
        %v4136 = vsel %vm4132, %v4116, %v4119
        %v4137 = vsel %vm4135, %v4125, 2102212464
        %v4138 = vsel %vm4134, %v4122, %v4137
        %v4139 = vsel %vm4133, %v4136, %v4138
        %v4140 = vsel %vm4132, %v4119, %v4122
        %v4141 = vsel %vm4135, %v4128, 920167782
        %v4142 = vsel %vm4134, %v4125, %v4141
        %v4143 = vsel %vm4133, %v4140, %v4142
        %v4144 = vsel %vm4132, %v4122, %v4125
        %v4145 = vsel %vm4135, %v4131, 1326507024
        %v4146 = vsel %vm4134, %v4128, %v4145
        %v4147 = vsel %vm4133, %v4144, %v4146
        %v4148 = vshll.u32 %v4108, 8
        %v4149 = vmul.u32.u64.compose %v4148, %v4147
        %v4150 = vextract.low.u32 %v4149
        %v4151 = vextract.high.u32 %v4149
        %v4152 = vmul.u32.u64.compose %v4148, %v4143
        %v4153 = vextract.low.u32 %v4152
        %v4154 = vextract.high.u32 %v4152
        %v4155 = vmul.u32 %v4148, %v4139
        %v4156 = vadd.s32 %v4151, %v4153
        %vm4157 = vc.u32 %v4151, %v4153
        %v4158 = vadd.s32 %v4154, 1
        %v4159 = vsel %vm4157, %v4158, %v4154
        %v4160 = vadd.s32 %v4155, %v4159
        %v4161 = vadd.s32 %v4160, 536870912
        %v4162 = vshrl.u32 %v4161, 30
        %v4163 = vshll.u32 %v4162, 30
        %v4164 = vsub.s32 %v4160, %v4163
        %vm4165 = vcmp.lt.s32.totalorder %v4164, 0
        %v4166 = vsub.s32 0, %v4164
        %v4167 = vsel %vm4165, %v4166, %v4164
        %v4168 = vclz %v4167
        %v4169 = vsub.s32 %v4168, 2
        %vm4170 = vcmp.gt.s32.totalorder 0, %v4169
        %v4171 = vsel %vm4170, 0, %v4169
        %v4172 = vsub.s32 32, %v4171
        %v4173 = vshll.u32 %v4164, %v4171
        %v4174 = vshrl.u32 %v4156, %v4172
        %v4175 = vor.u32 %v4173, %v4174
        %v4176 = vsub.s32 4294967266, %v4171
        %v4177 = vadd.s32 %v4176, 127
        %v4178 = vshll.u32 %v4177, 23
        %v4179 = vor.u32 4788187, %v4178
        %v4180 = vand.u32 2147483647, %v4179
        %v4182 = vcvt.s32.f32 %v4175
        %v4183 = vmul.f32 %v4182, %v4180
        %v4184 = vxor.u32 %v4183, 2147483648
        %v4185 = vsel %vm4102, %v4184, %v4183
        %v4186 = vsub.s32 4, %v4162
        %v4187 = vsel %vm4102, %v4186, %v4162
        %v4188 = vsel %vm4101, %v3783, %v4185
        %v4189 = vsel %vm4101, 0, %v4187
        %v4190 = vcosq.f32.pop %v4188
        %v4191 = vsinq.f32.pop %v4188
        %vm4192 = vweird.f32 %v3783
        %v4193 = vadd.s32 %v4189, 3
        %v4194 = vand.u32 %v4193, 3
        %vm4195 = vcmp.lt.s32.totalorder %v4194, 2
        %vm4196 = vcmp.eq.s32.totalorder %v4194, 0
        %v4197 = vxor.u32 %v4191, 2147483648
        %v4198 = vsel %vm4196, %v4190, %v4197
        %vm4199 = vcmp.eq.s32.totalorder %v4194, 2
        %v4200 = vxor.u32 %v4190, 2147483648
        %v4201 = vsel %vm4199, %v4200, %v4191
        %v4202 = vsel %vm4195, %v4198, %v4201
        %v4203 = vsel %vm4192, nan, %v4202
        %v4204 = vand.u32 2147483647, %v3784
        %vm4205 = vcmp.le.f32.partialorder %v4204, 0.7853982
        %vm4206 = vcmp.lt.s32.totalorder %v3784, 0
        %v4207 = vand.u32 %v3784, 2139095040
        %v4208 = vshrl.u32 %v4207, 23
        %v4209 = vsub.s32 %v4208, 127
        %v4210 = vand.u32 2147483647, %v3784
        %v4211 = vand.u32 %v4210, 8388607
        %v4212 = vor.u32 %v4211, 8388608
        %v4213 = vsub.s32 0, %v4212
        %v4214 = vadd.s32 %v4209, 1
        %vm4215 = vcmp.gt.s32.totalorder %v4214, 0
        %v4216 = vsel %vm4215, %v4214, 0
        %v4217 = vshrl.u32 %v4216, 5
        %v4218 = vand.u32 %v4216, 31
        %v4219 = vsub.s32 32, %v4218
        %v4220 = vshrl.u32 683565275, %v4219
        %v4221 = vshll.u32 683565275, %v4218
        %v4222 = vshrl.u32 2475754826, %v4219
        %v4223 = vor.u32 %v4221, %v4222
        %v4224 = vshll.u32 2475754826, %v4218
        %v4225 = vshrl.u32 2131351028, %v4219
        %v4226 = vor.u32 %v4224, %v4225
        %v4227 = vshll.u32 2131351028, %v4218
        %v4228 = vshrl.u32 2102212464, %v4219
        %v4229 = vor.u32 %v4227, %v4228
        %v4230 = vshll.u32 2102212464, %v4218
        %v4231 = vshrl.u32 920167782, %v4219
        %v4232 = vor.u32 %v4230, %v4231
        %v4233 = vshll.u32 920167782, %v4218
        %v4234 = vshrl.u32 1326507024, %v4219
        %v4235 = vor.u32 %v4233, %v4234
        %vm4236 = vcmp.lt.s32.totalorder %v4217, 1
        %vm4237 = vcmp.lt.s32.totalorder %v4217, 2
        %vm4238 = vcmp.lt.s32.totalorder %v4217, 3
        %vm4239 = vcmp.lt.s32.totalorder %v4217, 4
        %v4240 = vsel %vm4236, %v4220, %v4223
        %v4241 = vsel %vm4239, %v4229, 2102212464
        %v4242 = vsel %vm4238, %v4226, %v4241
        %v4243 = vsel %vm4237, %v4240, %v4242
        %v4244 = vsel %vm4236, %v4223, %v4226
        %v4245 = vsel %vm4239, %v4232, 920167782
        %v4246 = vsel %vm4238, %v4229, %v4245
        %v4247 = vsel %vm4237, %v4244, %v4246
        %v4248 = vsel %vm4236, %v4226, %v4229
        %v4249 = vsel %vm4239, %v4235, 1326507024
        %v4250 = vsel %vm4238, %v4232, %v4249
        %v4251 = vsel %vm4237, %v4248, %v4250
        %v4252 = vshll.u32 %v4212, 8
        %v4253 = vmul.u32.u64.compose %v4252, %v4251
        %v4254 = vextract.low.u32 %v4253
        %v4255 = vextract.high.u32 %v4253
        %v4256 = vmul.u32.u64.compose %v4252, %v4247
        %v4257 = vextract.low.u32 %v4256
        %v4258 = vextract.high.u32 %v4256
        %v4259 = vmul.u32 %v4252, %v4243
        %v4260 = vadd.s32 %v4255, %v4257
        %vm4261 = vc.u32 %v4255, %v4257
        %v4262 = vadd.s32 %v4258, 1
        %v4263 = vsel %vm4261, %v4262, %v4258
        %v4264 = vadd.s32 %v4259, %v4263
        %v4265 = vadd.s32 %v4264, 536870912
        %v4266 = vshrl.u32 %v4265, 30
        %v4267 = vshll.u32 %v4266, 30
        %v4268 = vsub.s32 %v4264, %v4267
        %vm4269 = vcmp.lt.s32.totalorder %v4268, 0
        %v4270 = vsub.s32 0, %v4268
        %v4271 = vsel %vm4269, %v4270, %v4268
        %v4272 = vclz %v4271
        %v4273 = vsub.s32 %v4272, 2
        %vm4274 = vcmp.gt.s32.totalorder 0, %v4273
        %v4275 = vsel %vm4274, 0, %v4273
        %v4276 = vsub.s32 32, %v4275
        %v4277 = vshll.u32 %v4268, %v4275
        %v4278 = vshrl.u32 %v4260, %v4276
        %v4279 = vor.u32 %v4277, %v4278
        %v4280 = vsub.s32 4294967266, %v4275
        %v4281 = vadd.s32 %v4280, 127
        %v4282 = vshll.u32 %v4281, 23
        %v4283 = vor.u32 4788187, %v4282
        %v4284 = vand.u32 2147483647, %v4283
        %v4286 = vcvt.s32.f32 %v4279
        %v4287 = vmul.f32 %v4286, %v4284
        %v4288 = vxor.u32 %v4287, 2147483648
        %v4289 = vsel %vm4206, %v4288, %v4287
        %v4290 = vsub.s32 4, %v4266
        %v4291 = vsel %vm4206, %v4290, %v4266
        %v4292 = vsel %vm4205, %v3784, %v4289
        %v4293 = vsel %vm4205, 0, %v4291
        %v4294 = vcosq.f32.pop %v4292
        %v4295 = vsinq.f32.pop %v4292
        %vm4296 = vweird.f32 %v3784
        %v4297 = vadd.s32 %v4293, 3
        %v4298 = vand.u32 %v4297, 3
        %vm4299 = vcmp.lt.s32.totalorder %v4298, 2
        %vm4300 = vcmp.eq.s32.totalorder %v4298, 0
        %v4301 = vxor.u32 %v4295, 2147483648
        %v4302 = vsel %vm4300, %v4294, %v4301
        %vm4303 = vcmp.eq.s32.totalorder %v4298, 2
        %v4304 = vxor.u32 %v4294, 2147483648
        %v4305 = vsel %vm4303, %v4304, %v4295
        %v4306 = vsel %vm4299, %v4302, %v4305
        %v4307 = vsel %vm4296, nan, %v4306
        %v4308 = vand.u32 2147483647, %v3785
        %vm4309 = vcmp.le.f32.partialorder %v4308, 0.7853982
        %vm4310 = vcmp.lt.s32.totalorder %v3785, 0
        %v4311 = vand.u32 %v3785, 2139095040
        %v4312 = vshrl.u32 %v4311, 23
        %v4313 = vsub.s32 %v4312, 127
        %v4314 = vand.u32 2147483647, %v3785
        %v4315 = vand.u32 %v4314, 8388607
        %v4316 = vor.u32 %v4315, 8388608
        %v4317 = vsub.s32 0, %v4316
        %v4318 = vadd.s32 %v4313, 1
        %vm4319 = vcmp.gt.s32.totalorder %v4318, 0
        %v4320 = vsel %vm4319, %v4318, 0
        %v4321 = vshrl.u32 %v4320, 5
        %v4322 = vand.u32 %v4320, 31
        %v4323 = vsub.s32 32, %v4322
        %v4324 = vshrl.u32 683565275, %v4323
        %v4325 = vshll.u32 683565275, %v4322
        %v4326 = vshrl.u32 2475754826, %v4323
        %v4327 = vor.u32 %v4325, %v4326
        %v4328 = vshll.u32 2475754826, %v4322
        %v4329 = vshrl.u32 2131351028, %v4323
        %v4330 = vor.u32 %v4328, %v4329
        %v4331 = vshll.u32 2131351028, %v4322
        %v4332 = vshrl.u32 2102212464, %v4323
        %v4333 = vor.u32 %v4331, %v4332
        %v4334 = vshll.u32 2102212464, %v4322
        %v4335 = vshrl.u32 920167782, %v4323
        %v4336 = vor.u32 %v4334, %v4335
        %v4337 = vshll.u32 920167782, %v4322
        %v4338 = vshrl.u32 1326507024, %v4323
        %v4339 = vor.u32 %v4337, %v4338
        %vm4340 = vcmp.lt.s32.totalorder %v4321, 1
        %vm4341 = vcmp.lt.s32.totalorder %v4321, 2
        %vm4342 = vcmp.lt.s32.totalorder %v4321, 3
        %vm4343 = vcmp.lt.s32.totalorder %v4321, 4
        %v4344 = vsel %vm4340, %v4324, %v4327
        %v4345 = vsel %vm4343, %v4333, 2102212464
        %v4346 = vsel %vm4342, %v4330, %v4345
        %v4347 = vsel %vm4341, %v4344, %v4346
        %v4348 = vsel %vm4340, %v4327, %v4330
        %v4349 = vsel %vm4343, %v4336, 920167782
        %v4350 = vsel %vm4342, %v4333, %v4349
        %v4351 = vsel %vm4341, %v4348, %v4350
        %v4352 = vsel %vm4340, %v4330, %v4333
        %v4353 = vsel %vm4343, %v4339, 1326507024
        %v4354 = vsel %vm4342, %v4336, %v4353
        %v4355 = vsel %vm4341, %v4352, %v4354
        %v4356 = vshll.u32 %v4316, 8
        %v4357 = vmul.u32.u64.compose %v4356, %v4355
        %v4358 = vextract.low.u32 %v4357
        %v4359 = vextract.high.u32 %v4357
        %v4360 = vmul.u32.u64.compose %v4356, %v4351
        %v4361 = vextract.low.u32 %v4360
        %v4362 = vextract.high.u32 %v4360
        %v4363 = vmul.u32 %v4356, %v4347
        %v4364 = vadd.s32 %v4359, %v4361
        %vm4365 = vc.u32 %v4359, %v4361
        %v4366 = vadd.s32 %v4362, 1
        %v4367 = vsel %vm4365, %v4366, %v4362
        %v4368 = vadd.s32 %v4363, %v4367
        %v4369 = vadd.s32 %v4368, 536870912
        %v4370 = vshrl.u32 %v4369, 30
        %v4371 = vshll.u32 %v4370, 30
        %v4372 = vsub.s32 %v4368, %v4371
        %vm4373 = vcmp.lt.s32.totalorder %v4372, 0
        %v4374 = vsub.s32 0, %v4372
        %v4375 = vsel %vm4373, %v4374, %v4372
        %v4376 = vclz %v4375
        %v4377 = vsub.s32 %v4376, 2
        %vm4378 = vcmp.gt.s32.totalorder 0, %v4377
        %v4379 = vsel %vm4378, 0, %v4377
        %v4380 = vsub.s32 32, %v4379
        %v4381 = vshll.u32 %v4372, %v4379
        %v4382 = vshrl.u32 %v4364, %v4380
        %v4383 = vor.u32 %v4381, %v4382
        %v4384 = vsub.s32 4294967266, %v4379
        %v4385 = vadd.s32 %v4384, 127
        %v4386 = vshll.u32 %v4385, 23
        %v4387 = vor.u32 4788187, %v4386
        %v4388 = vand.u32 2147483647, %v4387
        %v4390 = vcvt.s32.f32 %v4383
        %v4391 = vmul.f32 %v4390, %v4388
        %v4392 = vxor.u32 %v4391, 2147483648
        %v4393 = vsel %vm4310, %v4392, %v4391
        %v4394 = vsub.s32 4, %v4370
        %v4395 = vsel %vm4310, %v4394, %v4370
        %v4396 = vsel %vm4309, %v3785, %v4393
        %v4397 = vsel %vm4309, 0, %v4395
        %v4398 = vcosq.f32.pop %v4396
        %v4399 = vsinq.f32.pop %v4396
        %vm4400 = vweird.f32 %v3785
        %v4401 = vadd.s32 %v4397, 3
        %v4402 = vand.u32 %v4401, 3
        %vm4403 = vcmp.lt.s32.totalorder %v4402, 2
        %vm4404 = vcmp.eq.s32.totalorder %v4402, 0
        %v4405 = vxor.u32 %v4399, 2147483648
        %v4406 = vsel %vm4404, %v4398, %v4405
        %vm4407 = vcmp.eq.s32.totalorder %v4402, 2
        %v4408 = vxor.u32 %v4398, 2147483648
        %v4409 = vsel %vm4407, %v4408, %v4399
        %v4410 = vsel %vm4403, %v4406, %v4409
        %v4411 = vsel %vm4400, nan, %v4410
        %v4412 = vand.u32 2147483647, %v3786
        %vm4413 = vcmp.le.f32.partialorder %v4412, 0.7853982
        %vm4414 = vcmp.lt.s32.totalorder %v3786, 0
        %v4415 = vand.u32 %v3786, 2139095040
        %v4416 = vshrl.u32 %v4415, 23
        %v4417 = vsub.s32 %v4416, 127
        %v4418 = vand.u32 2147483647, %v3786
        %v4419 = vand.u32 %v4418, 8388607
        %v4420 = vor.u32 %v4419, 8388608
        %v4421 = vsub.s32 0, %v4420
        %v4422 = vadd.s32 %v4417, 1
        %vm4423 = vcmp.gt.s32.totalorder %v4422, 0
        %v4424 = vsel %vm4423, %v4422, 0
        %v4425 = vshrl.u32 %v4424, 5
        %v4426 = vand.u32 %v4424, 31
        %v4427 = vsub.s32 32, %v4426
        %v4428 = vshrl.u32 683565275, %v4427
        %v4429 = vshll.u32 683565275, %v4426
        %v4430 = vshrl.u32 2475754826, %v4427
        %v4431 = vor.u32 %v4429, %v4430
        %v4432 = vshll.u32 2475754826, %v4426
        %v4433 = vshrl.u32 2131351028, %v4427
        %v4434 = vor.u32 %v4432, %v4433
        %v4435 = vshll.u32 2131351028, %v4426
        %v4436 = vshrl.u32 2102212464, %v4427
        %v4437 = vor.u32 %v4435, %v4436
        %v4438 = vshll.u32 2102212464, %v4426
        %v4439 = vshrl.u32 920167782, %v4427
        %v4440 = vor.u32 %v4438, %v4439
        %v4441 = vshll.u32 920167782, %v4426
        %v4442 = vshrl.u32 1326507024, %v4427
        %v4443 = vor.u32 %v4441, %v4442
        %vm4444 = vcmp.lt.s32.totalorder %v4425, 1
        %vm4445 = vcmp.lt.s32.totalorder %v4425, 2
        %vm4446 = vcmp.lt.s32.totalorder %v4425, 3
        %vm4447 = vcmp.lt.s32.totalorder %v4425, 4
        %v4448 = vsel %vm4444, %v4428, %v4431
        %v4449 = vsel %vm4447, %v4437, 2102212464
        %v4450 = vsel %vm4446, %v4434, %v4449
        %v4451 = vsel %vm4445, %v4448, %v4450
        %v4452 = vsel %vm4444, %v4431, %v4434
        %v4453 = vsel %vm4447, %v4440, 920167782
        %v4454 = vsel %vm4446, %v4437, %v4453
        %v4455 = vsel %vm4445, %v4452, %v4454
        %v4456 = vsel %vm4444, %v4434, %v4437
        %v4457 = vsel %vm4447, %v4443, 1326507024
        %v4458 = vsel %vm4446, %v4440, %v4457
        %v4459 = vsel %vm4445, %v4456, %v4458
        %v4460 = vshll.u32 %v4420, 8
        %v4461 = vmul.u32.u64.compose %v4460, %v4459
        %v4462 = vextract.low.u32 %v4461
        %v4463 = vextract.high.u32 %v4461
        %v4464 = vmul.u32.u64.compose %v4460, %v4455
        %v4465 = vextract.low.u32 %v4464
        %v4466 = vextract.high.u32 %v4464
        %v4467 = vmul.u32 %v4460, %v4451
        %v4468 = vadd.s32 %v4463, %v4465
        %vm4469 = vc.u32 %v4463, %v4465
        %v4470 = vadd.s32 %v4466, 1
        %v4471 = vsel %vm4469, %v4470, %v4466
        %v4472 = vadd.s32 %v4467, %v4471
        %v4473 = vadd.s32 %v4472, 536870912
        %v4474 = vshrl.u32 %v4473, 30
        %v4475 = vshll.u32 %v4474, 30
        %v4476 = vsub.s32 %v4472, %v4475
        %vm4477 = vcmp.lt.s32.totalorder %v4476, 0
        %v4478 = vsub.s32 0, %v4476
        %v4479 = vsel %vm4477, %v4478, %v4476
        %v4480 = vclz %v4479
        %v4481 = vsub.s32 %v4480, 2
        %vm4482 = vcmp.gt.s32.totalorder 0, %v4481
        %v4483 = vsel %vm4482, 0, %v4481
        %v4484 = vsub.s32 32, %v4483
        %v4485 = vshll.u32 %v4476, %v4483
        %v4486 = vshrl.u32 %v4468, %v4484
        %v4487 = vor.u32 %v4485, %v4486
        %v4488 = vsub.s32 4294967266, %v4483
        %v4489 = vadd.s32 %v4488, 127
        %v4490 = vshll.u32 %v4489, 23
        %v4491 = vor.u32 4788187, %v4490
        %v4492 = vand.u32 2147483647, %v4491
        %v4494 = vcvt.s32.f32 %v4487
        %v4495 = vmul.f32 %v4494, %v4492
        %v4496 = vxor.u32 %v4495, 2147483648
        %v4497 = vsel %vm4414, %v4496, %v4495
        %v4498 = vsub.s32 4, %v4474
        %v4499 = vsel %vm4414, %v4498, %v4474
        %v4500 = vsel %vm4413, %v3786, %v4497
        %v4501 = vsel %vm4413, 0, %v4499
        %v4502 = vcosq.f32.pop %v4500
        %v4503 = vsinq.f32.pop %v4500
        %vm4504 = vweird.f32 %v3786
        %v4505 = vadd.s32 %v4501, 3
        %v4506 = vand.u32 %v4505, 3
        %vm4507 = vcmp.lt.s32.totalorder %v4506, 2
        %vm4508 = vcmp.eq.s32.totalorder %v4506, 0
        %v4509 = vxor.u32 %v4503, 2147483648
        %v4510 = vsel %vm4508, %v4502, %v4509
        %vm4511 = vcmp.eq.s32.totalorder %v4506, 2
        %v4512 = vxor.u32 %v4502, 2147483648
        %v4513 = vsel %vm4511, %v4512, %v4503
        %v4514 = vsel %vm4507, %v4510, %v4513
        %v4515 = vsel %vm4504, nan, %v4514
        %v4516 = vand.u32 2147483647, %v3787
        %vm4517 = vcmp.le.f32.partialorder %v4516, 0.7853982
        %vm4518 = vcmp.lt.s32.totalorder %v3787, 0
        %v4519 = vand.u32 %v3787, 2139095040
        %v4520 = vshrl.u32 %v4519, 23
        %v4521 = vsub.s32 %v4520, 127
        %v4522 = vand.u32 2147483647, %v3787
        %v4523 = vand.u32 %v4522, 8388607
        %v4524 = vor.u32 %v4523, 8388608
        %v4525 = vsub.s32 0, %v4524
        %v4526 = vadd.s32 %v4521, 1
        %vm4527 = vcmp.gt.s32.totalorder %v4526, 0
        %v4528 = vsel %vm4527, %v4526, 0
        %v4529 = vshrl.u32 %v4528, 5
        %v4530 = vand.u32 %v4528, 31
        %v4531 = vsub.s32 32, %v4530
        %v4532 = vshrl.u32 683565275, %v4531
        %v4533 = vshll.u32 683565275, %v4530
        %v4534 = vshrl.u32 2475754826, %v4531
        %v4535 = vor.u32 %v4533, %v4534
        %v4536 = vshll.u32 2475754826, %v4530
        %v4537 = vshrl.u32 2131351028, %v4531
        %v4538 = vor.u32 %v4536, %v4537
        %v4539 = vshll.u32 2131351028, %v4530
        %v4540 = vshrl.u32 2102212464, %v4531
        %v4541 = vor.u32 %v4539, %v4540
        %v4542 = vshll.u32 2102212464, %v4530
        %v4543 = vshrl.u32 920167782, %v4531
        %v4544 = vor.u32 %v4542, %v4543
        %v4545 = vshll.u32 920167782, %v4530
        %v4546 = vshrl.u32 1326507024, %v4531
        %v4547 = vor.u32 %v4545, %v4546
        %vm4548 = vcmp.lt.s32.totalorder %v4529, 1
        %vm4549 = vcmp.lt.s32.totalorder %v4529, 2
        %vm4550 = vcmp.lt.s32.totalorder %v4529, 3
        %vm4551 = vcmp.lt.s32.totalorder %v4529, 4
        %v4552 = vsel %vm4548, %v4532, %v4535
        %v4553 = vsel %vm4551, %v4541, 2102212464
        %v4554 = vsel %vm4550, %v4538, %v4553
        %v4555 = vsel %vm4549, %v4552, %v4554
        %v4556 = vsel %vm4548, %v4535, %v4538
        %v4557 = vsel %vm4551, %v4544, 920167782
        %v4558 = vsel %vm4550, %v4541, %v4557
        %v4559 = vsel %vm4549, %v4556, %v4558
        %v4560 = vsel %vm4548, %v4538, %v4541
        %v4561 = vsel %vm4551, %v4547, 1326507024
        %v4562 = vsel %vm4550, %v4544, %v4561
        %v4563 = vsel %vm4549, %v4560, %v4562
        %v4564 = vshll.u32 %v4524, 8
        %v4565 = vmul.u32.u64.compose %v4564, %v4563
        %v4566 = vextract.low.u32 %v4565
        %v4567 = vextract.high.u32 %v4565
        %v4568 = vmul.u32.u64.compose %v4564, %v4559
        %v4569 = vextract.low.u32 %v4568
        %v4570 = vextract.high.u32 %v4568
        %v4571 = vmul.u32 %v4564, %v4555
        %v4572 = vadd.s32 %v4567, %v4569
        %vm4573 = vc.u32 %v4567, %v4569
        %v4574 = vadd.s32 %v4570, 1
        %v4575 = vsel %vm4573, %v4574, %v4570
        %v4576 = vadd.s32 %v4571, %v4575
        %v4577 = vadd.s32 %v4576, 536870912
        %v4578 = vshrl.u32 %v4577, 30
        %v4579 = vshll.u32 %v4578, 30
        %v4580 = vsub.s32 %v4576, %v4579
        %vm4581 = vcmp.lt.s32.totalorder %v4580, 0
        %v4582 = vsub.s32 0, %v4580
        %v4583 = vsel %vm4581, %v4582, %v4580
        %v4584 = vclz %v4583
        %v4585 = vsub.s32 %v4584, 2
        %vm4586 = vcmp.gt.s32.totalorder 0, %v4585
        %v4587 = vsel %vm4586, 0, %v4585
        %v4588 = vsub.s32 32, %v4587
        %v4589 = vshll.u32 %v4580, %v4587
        %v4590 = vshrl.u32 %v4572, %v4588
        %v4591 = vor.u32 %v4589, %v4590
        %v4592 = vsub.s32 4294967266, %v4587
        %v4593 = vadd.s32 %v4592, 127
        %v4594 = vshll.u32 %v4593, 23
        %v4595 = vor.u32 4788187, %v4594
        %v4596 = vand.u32 2147483647, %v4595
        %v4598 = vcvt.s32.f32 %v4591
        %v4599 = vmul.f32 %v4598, %v4596
        %v4600 = vxor.u32 %v4599, 2147483648
        %v4601 = vsel %vm4518, %v4600, %v4599
        %v4602 = vsub.s32 4, %v4578
        %v4603 = vsel %vm4518, %v4602, %v4578
        %v4604 = vsel %vm4517, %v3787, %v4601
        %v4605 = vsel %vm4517, 0, %v4603
        %v4606 = vcosq.f32.pop %v4604
        %v4607 = vsinq.f32.pop %v4604
        %vm4608 = vweird.f32 %v3787
        %v4609 = vadd.s32 %v4605, 3
        %v4610 = vand.u32 %v4609, 3
        %vm4611 = vcmp.lt.s32.totalorder %v4610, 2
        %vm4612 = vcmp.eq.s32.totalorder %v4610, 0
        %v4613 = vxor.u32 %v4607, 2147483648
        %v4614 = vsel %vm4612, %v4606, %v4613
        %vm4615 = vcmp.eq.s32.totalorder %v4610, 2
        %v4616 = vxor.u32 %v4606, 2147483648
        %v4617 = vsel %vm4615, %v4616, %v4607
        %v4618 = vsel %vm4611, %v4614, %v4617
        %v4619 = vsel %vm4608, nan, %v4618
        %v4620 = vand.u32 2147483647, %v3780
        %vm4621 = vcmp.le.f32.partialorder %v4620, 0.7853982
        %vm4622 = vcmp.lt.s32.totalorder %v3780, 0
        %v4623 = vand.u32 %v3780, 2139095040
        %v4624 = vshrl.u32 %v4623, 23
        %v4625 = vsub.s32 %v4624, 127
        %v4626 = vand.u32 2147483647, %v3780
        %v4627 = vand.u32 %v4626, 8388607
        %v4628 = vor.u32 %v4627, 8388608
        %v4629 = vsub.s32 0, %v4628
        %v4630 = vadd.s32 %v4625, 1
        %vm4631 = vcmp.gt.s32.totalorder %v4630, 0
        %v4632 = vsel %vm4631, %v4630, 0
        %v4633 = vshrl.u32 %v4632, 5
        %v4634 = vand.u32 %v4632, 31
        %v4635 = vsub.s32 32, %v4634
        %v4636 = vshrl.u32 683565275, %v4635
        %v4637 = vshll.u32 683565275, %v4634
        %v4638 = vshrl.u32 2475754826, %v4635
        %v4639 = vor.u32 %v4637, %v4638
        %v4640 = vshll.u32 2475754826, %v4634
        %v4641 = vshrl.u32 2131351028, %v4635
        %v4642 = vor.u32 %v4640, %v4641
        %v4643 = vshll.u32 2131351028, %v4634
        %v4644 = vshrl.u32 2102212464, %v4635
        %v4645 = vor.u32 %v4643, %v4644
        %v4646 = vshll.u32 2102212464, %v4634
        %v4647 = vshrl.u32 920167782, %v4635
        %v4648 = vor.u32 %v4646, %v4647
        %v4649 = vshll.u32 920167782, %v4634
        %v4650 = vshrl.u32 1326507024, %v4635
        %v4651 = vor.u32 %v4649, %v4650
        %vm4652 = vcmp.lt.s32.totalorder %v4633, 1
        %vm4653 = vcmp.lt.s32.totalorder %v4633, 2
        %vm4654 = vcmp.lt.s32.totalorder %v4633, 3
        %vm4655 = vcmp.lt.s32.totalorder %v4633, 4
        %v4656 = vsel %vm4652, %v4636, %v4639
        %v4657 = vsel %vm4655, %v4645, 2102212464
        %v4658 = vsel %vm4654, %v4642, %v4657
        %v4659 = vsel %vm4653, %v4656, %v4658
        %v4660 = vsel %vm4652, %v4639, %v4642
        %v4661 = vsel %vm4655, %v4648, 920167782
        %v4662 = vsel %vm4654, %v4645, %v4661
        %v4663 = vsel %vm4653, %v4660, %v4662
        %v4664 = vsel %vm4652, %v4642, %v4645
        %v4665 = vsel %vm4655, %v4651, 1326507024
        %v4666 = vsel %vm4654, %v4648, %v4665
        %v4667 = vsel %vm4653, %v4664, %v4666
        %v4668 = vshll.u32 %v4628, 8
        %v4669 = vmul.u32.u64.compose %v4668, %v4667
        %v4670 = vextract.low.u32 %v4669
        %v4671 = vextract.high.u32 %v4669
        %v4672 = vmul.u32.u64.compose %v4668, %v4663
        %v4673 = vextract.low.u32 %v4672
        %v4674 = vextract.high.u32 %v4672
        %v4675 = vmul.u32 %v4668, %v4659
        %v4676 = vadd.s32 %v4671, %v4673
        %vm4677 = vc.u32 %v4671, %v4673
        %v4678 = vadd.s32 %v4674, 1
        %v4679 = vsel %vm4677, %v4678, %v4674
        %v4680 = vadd.s32 %v4675, %v4679
        %v4681 = vadd.s32 %v4680, 536870912
        %v4682 = vshrl.u32 %v4681, 30
        %v4683 = vshll.u32 %v4682, 30
        %v4684 = vsub.s32 %v4680, %v4683
        %vm4685 = vcmp.lt.s32.totalorder %v4684, 0
        %v4686 = vsub.s32 0, %v4684
        %v4687 = vsel %vm4685, %v4686, %v4684
        %v4688 = vclz %v4687
        %v4689 = vsub.s32 %v4688, 2
        %vm4690 = vcmp.gt.s32.totalorder 0, %v4689
        %v4691 = vsel %vm4690, 0, %v4689
        %v4692 = vsub.s32 32, %v4691
        %v4693 = vshll.u32 %v4684, %v4691
        %v4694 = vshrl.u32 %v4676, %v4692
        %v4695 = vor.u32 %v4693, %v4694
        %v4696 = vsub.s32 4294967266, %v4691
        %v4697 = vadd.s32 %v4696, 127
        %v4698 = vshll.u32 %v4697, 23
        %v4699 = vor.u32 4788187, %v4698
        %v4700 = vand.u32 2147483647, %v4699
        %v4702 = vcvt.s32.f32 %v4695
        %v4703 = vmul.f32 %v4702, %v4700
        %v4704 = vxor.u32 %v4703, 2147483648
        %v4705 = vsel %vm4622, %v4704, %v4703
        %v4706 = vsub.s32 4, %v4682
        %v4707 = vsel %vm4622, %v4706, %v4682
        %v4708 = vsel %vm4621, %v3780, %v4705
        %v4709 = vsel %vm4621, 0, %v4707
        %v4710 = vcosq.f32.pop %v4708
        %v4711 = vsinq.f32.pop %v4708
        %vm4712 = vweird.f32 %v3780
        %v4713 = vand.u32 %v4709, 3
        %vm4714 = vcmp.lt.s32.totalorder %v4713, 2
        %vm4715 = vcmp.eq.s32.totalorder %v4713, 0
        %v4716 = vxor.u32 %v4711, 2147483648
        %v4717 = vsel %vm4715, %v4710, %v4716
        %vm4718 = vcmp.eq.s32.totalorder %v4713, 2
        %v4719 = vxor.u32 %v4710, 2147483648
        %v4720 = vsel %vm4718, %v4719, %v4711
        %v4721 = vsel %vm4714, %v4717, %v4720
        %v4722 = vsel %vm4712, nan, %v4721
        %v4723 = vand.u32 2147483647, %v3781
        %vm4724 = vcmp.le.f32.partialorder %v4723, 0.7853982
        %vm4725 = vcmp.lt.s32.totalorder %v3781, 0
        %v4726 = vand.u32 %v3781, 2139095040
        %v4727 = vshrl.u32 %v4726, 23
        %v4728 = vsub.s32 %v4727, 127
        %v4729 = vand.u32 2147483647, %v3781
        %v4730 = vand.u32 %v4729, 8388607
        %v4731 = vor.u32 %v4730, 8388608
        %v4732 = vsub.s32 0, %v4731
        %v4733 = vadd.s32 %v4728, 1
        %vm4734 = vcmp.gt.s32.totalorder %v4733, 0
        %v4735 = vsel %vm4734, %v4733, 0
        %v4736 = vshrl.u32 %v4735, 5
        %v4737 = vand.u32 %v4735, 31
        %v4738 = vsub.s32 32, %v4737
        %v4739 = vshrl.u32 683565275, %v4738
        %v4740 = vshll.u32 683565275, %v4737
        %v4741 = vshrl.u32 2475754826, %v4738
        %v4742 = vor.u32 %v4740, %v4741
        %v4743 = vshll.u32 2475754826, %v4737
        %v4744 = vshrl.u32 2131351028, %v4738
        %v4745 = vor.u32 %v4743, %v4744
        %v4746 = vshll.u32 2131351028, %v4737
        %v4747 = vshrl.u32 2102212464, %v4738
        %v4748 = vor.u32 %v4746, %v4747
        %v4749 = vshll.u32 2102212464, %v4737
        %v4750 = vshrl.u32 920167782, %v4738
        %v4751 = vor.u32 %v4749, %v4750
        %v4752 = vshll.u32 920167782, %v4737
        %v4753 = vshrl.u32 1326507024, %v4738
        %v4754 = vor.u32 %v4752, %v4753
        %vm4755 = vcmp.lt.s32.totalorder %v4736, 1
        %vm4756 = vcmp.lt.s32.totalorder %v4736, 2
        %vm4757 = vcmp.lt.s32.totalorder %v4736, 3
        %vm4758 = vcmp.lt.s32.totalorder %v4736, 4
        %v4759 = vsel %vm4755, %v4739, %v4742
        %v4760 = vsel %vm4758, %v4748, 2102212464
        %v4761 = vsel %vm4757, %v4745, %v4760
        %v4762 = vsel %vm4756, %v4759, %v4761
        %v4763 = vsel %vm4755, %v4742, %v4745
        %v4764 = vsel %vm4758, %v4751, 920167782
        %v4765 = vsel %vm4757, %v4748, %v4764
        %v4766 = vsel %vm4756, %v4763, %v4765
        %v4767 = vsel %vm4755, %v4745, %v4748
        %v4768 = vsel %vm4758, %v4754, 1326507024
        %v4769 = vsel %vm4757, %v4751, %v4768
        %v4770 = vsel %vm4756, %v4767, %v4769
        %v4771 = vshll.u32 %v4731, 8
        %v4772 = vmul.u32.u64.compose %v4771, %v4770
        %v4773 = vextract.low.u32 %v4772
        %v4774 = vextract.high.u32 %v4772
        %v4775 = vmul.u32.u64.compose %v4771, %v4766
        %v4776 = vextract.low.u32 %v4775
        %v4777 = vextract.high.u32 %v4775
        %v4778 = vmul.u32 %v4771, %v4762
        %v4779 = vadd.s32 %v4774, %v4776
        %vm4780 = vc.u32 %v4774, %v4776
        %v4781 = vadd.s32 %v4777, 1
        %v4782 = vsel %vm4780, %v4781, %v4777
        %v4783 = vadd.s32 %v4778, %v4782
        %v4784 = vadd.s32 %v4783, 536870912
        %v4785 = vshrl.u32 %v4784, 30
        %v4786 = vshll.u32 %v4785, 30
        %v4787 = vsub.s32 %v4783, %v4786
        %vm4788 = vcmp.lt.s32.totalorder %v4787, 0
        %v4789 = vsub.s32 0, %v4787
        %v4790 = vsel %vm4788, %v4789, %v4787
        %v4791 = vclz %v4790
        %v4792 = vsub.s32 %v4791, 2
        %vm4793 = vcmp.gt.s32.totalorder 0, %v4792
        %v4794 = vsel %vm4793, 0, %v4792
        %v4795 = vsub.s32 32, %v4794
        %v4796 = vshll.u32 %v4787, %v4794
        %v4797 = vshrl.u32 %v4779, %v4795
        %v4798 = vor.u32 %v4796, %v4797
        %v4799 = vsub.s32 4294967266, %v4794
        %v4800 = vadd.s32 %v4799, 127
        %v4801 = vshll.u32 %v4800, 23
        %v4802 = vor.u32 4788187, %v4801
        %v4803 = vand.u32 2147483647, %v4802
        %v4805 = vcvt.s32.f32 %v4798
        %v4806 = vmul.f32 %v4805, %v4803
        %v4807 = vxor.u32 %v4806, 2147483648
        %v4808 = vsel %vm4725, %v4807, %v4806
        %v4809 = vsub.s32 4, %v4785
        %v4810 = vsel %vm4725, %v4809, %v4785
        %v4811 = vsel %vm4724, %v3781, %v4808
        %v4812 = vsel %vm4724, 0, %v4810
        %v4813 = vcosq.f32.pop %v4811
        %v4814 = vsinq.f32.pop %v4811
        %vm4815 = vweird.f32 %v3781
        %v4816 = vand.u32 %v4812, 3
        %vm4817 = vcmp.lt.s32.totalorder %v4816, 2
        %vm4818 = vcmp.eq.s32.totalorder %v4816, 0
        %v4819 = vxor.u32 %v4814, 2147483648
        %v4820 = vsel %vm4818, %v4813, %v4819
        %vm4821 = vcmp.eq.s32.totalorder %v4816, 2
        %v4822 = vxor.u32 %v4813, 2147483648
        %v4823 = vsel %vm4821, %v4822, %v4814
        %v4824 = vsel %vm4817, %v4820, %v4823
        %v4825 = vsel %vm4815, nan, %v4824
        %v4826 = vand.u32 2147483647, %v3782
        %vm4827 = vcmp.le.f32.partialorder %v4826, 0.7853982
        %vm4828 = vcmp.lt.s32.totalorder %v3782, 0
        %v4829 = vand.u32 %v3782, 2139095040
        %v4830 = vshrl.u32 %v4829, 23
        %v4831 = vsub.s32 %v4830, 127
        %v4832 = vand.u32 2147483647, %v3782
        %v4833 = vand.u32 %v4832, 8388607
        %v4834 = vor.u32 %v4833, 8388608
        %v4835 = vsub.s32 0, %v4834
        %v4836 = vadd.s32 %v4831, 1
        %vm4837 = vcmp.gt.s32.totalorder %v4836, 0
        %v4838 = vsel %vm4837, %v4836, 0
        %v4839 = vshrl.u32 %v4838, 5
        %v4840 = vand.u32 %v4838, 31
        %v4841 = vsub.s32 32, %v4840
        %v4842 = vshrl.u32 683565275, %v4841
        %v4843 = vshll.u32 683565275, %v4840
        %v4844 = vshrl.u32 2475754826, %v4841
        %v4845 = vor.u32 %v4843, %v4844
        %v4846 = vshll.u32 2475754826, %v4840
        %v4847 = vshrl.u32 2131351028, %v4841
        %v4848 = vor.u32 %v4846, %v4847
        %v4849 = vshll.u32 2131351028, %v4840
        %v4850 = vshrl.u32 2102212464, %v4841
        %v4851 = vor.u32 %v4849, %v4850
        %v4852 = vshll.u32 2102212464, %v4840
        %v4853 = vshrl.u32 920167782, %v4841
        %v4854 = vor.u32 %v4852, %v4853
        %v4855 = vshll.u32 920167782, %v4840
        %v4856 = vshrl.u32 1326507024, %v4841
        %v4857 = vor.u32 %v4855, %v4856
        %vm4858 = vcmp.lt.s32.totalorder %v4839, 1
        %vm4859 = vcmp.lt.s32.totalorder %v4839, 2
        %vm4860 = vcmp.lt.s32.totalorder %v4839, 3
        %vm4861 = vcmp.lt.s32.totalorder %v4839, 4
        %v4862 = vsel %vm4858, %v4842, %v4845
        %v4863 = vsel %vm4861, %v4851, 2102212464
        %v4864 = vsel %vm4860, %v4848, %v4863
        %v4865 = vsel %vm4859, %v4862, %v4864
        %v4866 = vsel %vm4858, %v4845, %v4848
        %v4867 = vsel %vm4861, %v4854, 920167782
        %v4868 = vsel %vm4860, %v4851, %v4867
        %v4869 = vsel %vm4859, %v4866, %v4868
        %v4870 = vsel %vm4858, %v4848, %v4851
        %v4871 = vsel %vm4861, %v4857, 1326507024
        %v4872 = vsel %vm4860, %v4854, %v4871
        %v4873 = vsel %vm4859, %v4870, %v4872
        %v4874 = vshll.u32 %v4834, 8
        %v4875 = vmul.u32.u64.compose %v4874, %v4873
        %v4876 = vextract.low.u32 %v4875
        %v4877 = vextract.high.u32 %v4875
        %v4878 = vmul.u32.u64.compose %v4874, %v4869
        %v4879 = vextract.low.u32 %v4878
        %v4880 = vextract.high.u32 %v4878
        %v4881 = vmul.u32 %v4874, %v4865
        %v4882 = vadd.s32 %v4877, %v4879
        %vm4883 = vc.u32 %v4877, %v4879
        %v4884 = vadd.s32 %v4880, 1
        %v4885 = vsel %vm4883, %v4884, %v4880
        %v4886 = vadd.s32 %v4881, %v4885
        %v4887 = vadd.s32 %v4886, 536870912
        %v4888 = vshrl.u32 %v4887, 30
        %v4889 = vshll.u32 %v4888, 30
        %v4890 = vsub.s32 %v4886, %v4889
        %vm4891 = vcmp.lt.s32.totalorder %v4890, 0
        %v4892 = vsub.s32 0, %v4890
        %v4893 = vsel %vm4891, %v4892, %v4890
        %v4894 = vclz %v4893
        %v4895 = vsub.s32 %v4894, 2
        %vm4896 = vcmp.gt.s32.totalorder 0, %v4895
        %v4897 = vsel %vm4896, 0, %v4895
        %v4898 = vsub.s32 32, %v4897
        %v4899 = vshll.u32 %v4890, %v4897
        %v4900 = vshrl.u32 %v4882, %v4898
        %v4901 = vor.u32 %v4899, %v4900
        %v4902 = vsub.s32 4294967266, %v4897
        %v4903 = vadd.s32 %v4902, 127
        %v4904 = vshll.u32 %v4903, 23
        %v4905 = vor.u32 4788187, %v4904
        %v4906 = vand.u32 2147483647, %v4905
        %v4908 = vcvt.s32.f32 %v4901
        %v4909 = vmul.f32 %v4908, %v4906
        %v4910 = vxor.u32 %v4909, 2147483648
        %v4911 = vsel %vm4828, %v4910, %v4909
        %v4912 = vsub.s32 4, %v4888
        %v4913 = vsel %vm4828, %v4912, %v4888
        %v4914 = vsel %vm4827, %v3782, %v4911
        %v4915 = vsel %vm4827, 0, %v4913
        %v4916 = vcosq.f32.pop %v4914
        %v4917 = vsinq.f32.pop %v4914
        %vm4918 = vweird.f32 %v3782
        %v4919 = vand.u32 %v4915, 3
        %vm4920 = vcmp.lt.s32.totalorder %v4919, 2
        %vm4921 = vcmp.eq.s32.totalorder %v4919, 0
        %v4922 = vxor.u32 %v4917, 2147483648
        %v4923 = vsel %vm4921, %v4916, %v4922
        %vm4924 = vcmp.eq.s32.totalorder %v4919, 2
        %v4925 = vxor.u32 %v4916, 2147483648
        %v4926 = vsel %vm4924, %v4925, %v4917
        %v4927 = vsel %vm4920, %v4923, %v4926
        %v4928 = vsel %vm4918, nan, %v4927
        %v4929 = vand.u32 2147483647, %v3783
        %vm4930 = vcmp.le.f32.partialorder %v4929, 0.7853982
        %vm4931 = vcmp.lt.s32.totalorder %v3783, 0
        %v4932 = vand.u32 %v3783, 2139095040
        %v4933 = vshrl.u32 %v4932, 23
        %v4934 = vsub.s32 %v4933, 127
        %v4935 = vand.u32 2147483647, %v3783
        %v4936 = vand.u32 %v4935, 8388607
        %v4937 = vor.u32 %v4936, 8388608
        %v4938 = vsub.s32 0, %v4937
        %v4939 = vadd.s32 %v4934, 1
        %vm4940 = vcmp.gt.s32.totalorder %v4939, 0
        %v4941 = vsel %vm4940, %v4939, 0
        %v4942 = vshrl.u32 %v4941, 5
        %v4943 = vand.u32 %v4941, 31
        %v4944 = vsub.s32 32, %v4943
        %v4945 = vshrl.u32 683565275, %v4944
        %v4946 = vshll.u32 683565275, %v4943
        %v4947 = vshrl.u32 2475754826, %v4944
        %v4948 = vor.u32 %v4946, %v4947
        %v4949 = vshll.u32 2475754826, %v4943
        %v4950 = vshrl.u32 2131351028, %v4944
        %v4951 = vor.u32 %v4949, %v4950
        %v4952 = vshll.u32 2131351028, %v4943
        %v4953 = vshrl.u32 2102212464, %v4944
        %v4954 = vor.u32 %v4952, %v4953
        %v4955 = vshll.u32 2102212464, %v4943
        %v4956 = vshrl.u32 920167782, %v4944
        %v4957 = vor.u32 %v4955, %v4956
        %v4958 = vshll.u32 920167782, %v4943
        %v4959 = vshrl.u32 1326507024, %v4944
        %v4960 = vor.u32 %v4958, %v4959
        %vm4961 = vcmp.lt.s32.totalorder %v4942, 1
        %vm4962 = vcmp.lt.s32.totalorder %v4942, 2
        %vm4963 = vcmp.lt.s32.totalorder %v4942, 3
        %vm4964 = vcmp.lt.s32.totalorder %v4942, 4
        %v4965 = vsel %vm4961, %v4945, %v4948
        %v4966 = vsel %vm4964, %v4954, 2102212464
        %v4967 = vsel %vm4963, %v4951, %v4966
        %v4968 = vsel %vm4962, %v4965, %v4967
        %v4969 = vsel %vm4961, %v4948, %v4951
        %v4970 = vsel %vm4964, %v4957, 920167782
        %v4971 = vsel %vm4963, %v4954, %v4970
        %v4972 = vsel %vm4962, %v4969, %v4971
        %v4973 = vsel %vm4961, %v4951, %v4954
        %v4974 = vsel %vm4964, %v4960, 1326507024
        %v4975 = vsel %vm4963, %v4957, %v4974
        %v4976 = vsel %vm4962, %v4973, %v4975
        %v4977 = vshll.u32 %v4937, 8
        %v4978 = vmul.u32.u64.compose %v4977, %v4976
        %v4979 = vextract.low.u32 %v4978
        %v4980 = vextract.high.u32 %v4978
        %v4981 = vmul.u32.u64.compose %v4977, %v4972
        %v4982 = vextract.low.u32 %v4981
        %v4983 = vextract.high.u32 %v4981
        %v4984 = vmul.u32 %v4977, %v4968
        %v4985 = vadd.s32 %v4980, %v4982
        %vm4986 = vc.u32 %v4980, %v4982
        %v4987 = vadd.s32 %v4983, 1
        %v4988 = vsel %vm4986, %v4987, %v4983
        %v4989 = vadd.s32 %v4984, %v4988
        %v4990 = vadd.s32 %v4989, 536870912
        %v4991 = vshrl.u32 %v4990, 30
        %v4992 = vshll.u32 %v4991, 30
        %v4993 = vsub.s32 %v4989, %v4992
        %vm4994 = vcmp.lt.s32.totalorder %v4993, 0
        %v4995 = vsub.s32 0, %v4993
        %v4996 = vsel %vm4994, %v4995, %v4993
        %v4997 = vclz %v4996
        %v4998 = vsub.s32 %v4997, 2
        %vm4999 = vcmp.gt.s32.totalorder 0, %v4998
        %v5000 = vsel %vm4999, 0, %v4998
        %v5001 = vsub.s32 32, %v5000
        %v5002 = vshll.u32 %v4993, %v5000
        %v5003 = vshrl.u32 %v4985, %v5001
        %v5004 = vor.u32 %v5002, %v5003
        %v5005 = vsub.s32 4294967266, %v5000
        %v5006 = vadd.s32 %v5005, 127
        %v5007 = vshll.u32 %v5006, 23
        %v5008 = vor.u32 4788187, %v5007
        %v5009 = vand.u32 2147483647, %v5008
        %v5011 = vcvt.s32.f32 %v5004
        %v5012 = vmul.f32 %v5011, %v5009
        %v5013 = vxor.u32 %v5012, 2147483648
        %v5014 = vsel %vm4931, %v5013, %v5012
        %v5015 = vsub.s32 4, %v4991
        %v5016 = vsel %vm4931, %v5015, %v4991
        %v5017 = vsel %vm4930, %v3783, %v5014
        %v5018 = vsel %vm4930, 0, %v5016
        %v5019 = vcosq.f32.pop %v5017
        %v5020 = vsinq.f32.pop %v5017
        %vm5021 = vweird.f32 %v3783
        %v5022 = vand.u32 %v5018, 3
        %vm5023 = vcmp.lt.s32.totalorder %v5022, 2
        %vm5024 = vcmp.eq.s32.totalorder %v5022, 0
        %v5025 = vxor.u32 %v5020, 2147483648
        %v5026 = vsel %vm5024, %v5019, %v5025
        %vm5027 = vcmp.eq.s32.totalorder %v5022, 2
        %v5028 = vxor.u32 %v5019, 2147483648
        %v5029 = vsel %vm5027, %v5028, %v5020
        %v5030 = vsel %vm5023, %v5026, %v5029
        %v5031 = vsel %vm5021, nan, %v5030
        %v5032 = vand.u32 2147483647, %v3784
        %vm5033 = vcmp.le.f32.partialorder %v5032, 0.7853982
        %vm5034 = vcmp.lt.s32.totalorder %v3784, 0
        %v5035 = vand.u32 %v3784, 2139095040
        %v5036 = vshrl.u32 %v5035, 23
        %v5037 = vsub.s32 %v5036, 127
        %v5038 = vand.u32 2147483647, %v3784
        %v5039 = vand.u32 %v5038, 8388607
        %v5040 = vor.u32 %v5039, 8388608
        %v5041 = vsub.s32 0, %v5040
        %v5042 = vadd.s32 %v5037, 1
        %vm5043 = vcmp.gt.s32.totalorder %v5042, 0
        %v5044 = vsel %vm5043, %v5042, 0
        %v5045 = vshrl.u32 %v5044, 5
        %v5046 = vand.u32 %v5044, 31
        %v5047 = vsub.s32 32, %v5046
        %v5048 = vshrl.u32 683565275, %v5047
        %v5049 = vshll.u32 683565275, %v5046
        %v5050 = vshrl.u32 2475754826, %v5047
        %v5051 = vor.u32 %v5049, %v5050
        %v5052 = vshll.u32 2475754826, %v5046
        %v5053 = vshrl.u32 2131351028, %v5047
        %v5054 = vor.u32 %v5052, %v5053
        %v5055 = vshll.u32 2131351028, %v5046
        %v5056 = vshrl.u32 2102212464, %v5047
        %v5057 = vor.u32 %v5055, %v5056
        %v5058 = vshll.u32 2102212464, %v5046
        %v5059 = vshrl.u32 920167782, %v5047
        %v5060 = vor.u32 %v5058, %v5059
        %v5061 = vshll.u32 920167782, %v5046
        %v5062 = vshrl.u32 1326507024, %v5047
        %v5063 = vor.u32 %v5061, %v5062
        %vm5064 = vcmp.lt.s32.totalorder %v5045, 1
        %vm5065 = vcmp.lt.s32.totalorder %v5045, 2
        %vm5066 = vcmp.lt.s32.totalorder %v5045, 3
        %vm5067 = vcmp.lt.s32.totalorder %v5045, 4
        %v5068 = vsel %vm5064, %v5048, %v5051
        %v5069 = vsel %vm5067, %v5057, 2102212464
        %v5070 = vsel %vm5066, %v5054, %v5069
        %v5071 = vsel %vm5065, %v5068, %v5070
        %v5072 = vsel %vm5064, %v5051, %v5054
        %v5073 = vsel %vm5067, %v5060, 920167782
        %v5074 = vsel %vm5066, %v5057, %v5073
        %v5075 = vsel %vm5065, %v5072, %v5074
        %v5076 = vsel %vm5064, %v5054, %v5057
        %v5077 = vsel %vm5067, %v5063, 1326507024
        %v5078 = vsel %vm5066, %v5060, %v5077
        %v5079 = vsel %vm5065, %v5076, %v5078
        %v5080 = vshll.u32 %v5040, 8
        %v5081 = vmul.u32.u64.compose %v5080, %v5079
        %v5082 = vextract.low.u32 %v5081
        %v5083 = vextract.high.u32 %v5081
        %v5084 = vmul.u32.u64.compose %v5080, %v5075
        %v5085 = vextract.low.u32 %v5084
        %v5086 = vextract.high.u32 %v5084
        %v5087 = vmul.u32 %v5080, %v5071
        %v5088 = vadd.s32 %v5083, %v5085
        %vm5089 = vc.u32 %v5083, %v5085
        %v5090 = vadd.s32 %v5086, 1
        %v5091 = vsel %vm5089, %v5090, %v5086
        %v5092 = vadd.s32 %v5087, %v5091
        %v5093 = vadd.s32 %v5092, 536870912
        %v5094 = vshrl.u32 %v5093, 30
        %v5095 = vshll.u32 %v5094, 30
        %v5096 = vsub.s32 %v5092, %v5095
        %vm5097 = vcmp.lt.s32.totalorder %v5096, 0
        %v5098 = vsub.s32 0, %v5096
        %v5099 = vsel %vm5097, %v5098, %v5096
        %v5100 = vclz %v5099
        %v5101 = vsub.s32 %v5100, 2
        %vm5102 = vcmp.gt.s32.totalorder 0, %v5101
        %v5103 = vsel %vm5102, 0, %v5101
        %v5104 = vsub.s32 32, %v5103
        %v5105 = vshll.u32 %v5096, %v5103
        %v5106 = vshrl.u32 %v5088, %v5104
        %v5107 = vor.u32 %v5105, %v5106
        %v5108 = vsub.s32 4294967266, %v5103
        %v5109 = vadd.s32 %v5108, 127
        %v5110 = vshll.u32 %v5109, 23
        %v5111 = vor.u32 4788187, %v5110
        %v5112 = vand.u32 2147483647, %v5111
        %v5114 = vcvt.s32.f32 %v5107
        %v5115 = vmul.f32 %v5114, %v5112
        %v5116 = vxor.u32 %v5115, 2147483648
        %v5117 = vsel %vm5034, %v5116, %v5115
        %v5118 = vsub.s32 4, %v5094
        %v5119 = vsel %vm5034, %v5118, %v5094
        %v5120 = vsel %vm5033, %v3784, %v5117
        %v5121 = vsel %vm5033, 0, %v5119
        %v5122 = vcosq.f32.pop %v5120
        %v5123 = vsinq.f32.pop %v5120
        %vm5124 = vweird.f32 %v3784
        %v5125 = vand.u32 %v5121, 3
        %vm5126 = vcmp.lt.s32.totalorder %v5125, 2
        %vm5127 = vcmp.eq.s32.totalorder %v5125, 0
        %v5128 = vxor.u32 %v5123, 2147483648
        %v5129 = vsel %vm5127, %v5122, %v5128
        %vm5130 = vcmp.eq.s32.totalorder %v5125, 2
        %v5131 = vxor.u32 %v5122, 2147483648
        %v5132 = vsel %vm5130, %v5131, %v5123
        %v5133 = vsel %vm5126, %v5129, %v5132
        %v5134 = vsel %vm5124, nan, %v5133
        %v5135 = vand.u32 2147483647, %v3785
        %vm5136 = vcmp.le.f32.partialorder %v5135, 0.7853982
        %vm5137 = vcmp.lt.s32.totalorder %v3785, 0
        %v5138 = vand.u32 %v3785, 2139095040
        %v5139 = vshrl.u32 %v5138, 23
        %v5140 = vsub.s32 %v5139, 127
        %v5141 = vand.u32 2147483647, %v3785
        %v5142 = vand.u32 %v5141, 8388607
        %v5143 = vor.u32 %v5142, 8388608
        %v5144 = vsub.s32 0, %v5143
        %v5145 = vadd.s32 %v5140, 1
        %vm5146 = vcmp.gt.s32.totalorder %v5145, 0
        %v5147 = vsel %vm5146, %v5145, 0
        %v5148 = vshrl.u32 %v5147, 5
        %v5149 = vand.u32 %v5147, 31
        %v5150 = vsub.s32 32, %v5149
        %v5151 = vshrl.u32 683565275, %v5150
        %v5152 = vshll.u32 683565275, %v5149
        %v5153 = vshrl.u32 2475754826, %v5150
        %v5154 = vor.u32 %v5152, %v5153
        %v5155 = vshll.u32 2475754826, %v5149
        %v5156 = vshrl.u32 2131351028, %v5150
        %v5157 = vor.u32 %v5155, %v5156
        %v5158 = vshll.u32 2131351028, %v5149
        %v5159 = vshrl.u32 2102212464, %v5150
        %v5160 = vor.u32 %v5158, %v5159
        %v5161 = vshll.u32 2102212464, %v5149
        %v5162 = vshrl.u32 920167782, %v5150
        %v5163 = vor.u32 %v5161, %v5162
        %v5164 = vshll.u32 920167782, %v5149
        %v5165 = vshrl.u32 1326507024, %v5150
        %v5166 = vor.u32 %v5164, %v5165
        %vm5167 = vcmp.lt.s32.totalorder %v5148, 1
        %vm5168 = vcmp.lt.s32.totalorder %v5148, 2
        %vm5169 = vcmp.lt.s32.totalorder %v5148, 3
        %vm5170 = vcmp.lt.s32.totalorder %v5148, 4
        %v5171 = vsel %vm5167, %v5151, %v5154
        %v5172 = vsel %vm5170, %v5160, 2102212464
        %v5173 = vsel %vm5169, %v5157, %v5172
        %v5174 = vsel %vm5168, %v5171, %v5173
        %v5175 = vsel %vm5167, %v5154, %v5157
        %v5176 = vsel %vm5170, %v5163, 920167782
        %v5177 = vsel %vm5169, %v5160, %v5176
        %v5178 = vsel %vm5168, %v5175, %v5177
        %v5179 = vsel %vm5167, %v5157, %v5160
        %v5180 = vsel %vm5170, %v5166, 1326507024
        %v5181 = vsel %vm5169, %v5163, %v5180
        %v5182 = vsel %vm5168, %v5179, %v5181
        %v5183 = vshll.u32 %v5143, 8
        %v5184 = vmul.u32.u64.compose %v5183, %v5182
        %v5185 = vextract.low.u32 %v5184
        %v5186 = vextract.high.u32 %v5184
        %v5187 = vmul.u32.u64.compose %v5183, %v5178
        %v5188 = vextract.low.u32 %v5187
        %v5189 = vextract.high.u32 %v5187
        %v5190 = vmul.u32 %v5183, %v5174
        %v5191 = vadd.s32 %v5186, %v5188
        %vm5192 = vc.u32 %v5186, %v5188
        %v5193 = vadd.s32 %v5189, 1
        %v5194 = vsel %vm5192, %v5193, %v5189
        %v5195 = vadd.s32 %v5190, %v5194
        %v5196 = vadd.s32 %v5195, 536870912
        %v5197 = vshrl.u32 %v5196, 30
        %v5198 = vshll.u32 %v5197, 30
        %v5199 = vsub.s32 %v5195, %v5198
        %vm5200 = vcmp.lt.s32.totalorder %v5199, 0
        %v5201 = vsub.s32 0, %v5199
        %v5202 = vsel %vm5200, %v5201, %v5199
        %v5203 = vclz %v5202
        %v5204 = vsub.s32 %v5203, 2
        %vm5205 = vcmp.gt.s32.totalorder 0, %v5204
        %v5206 = vsel %vm5205, 0, %v5204
        %v5207 = vsub.s32 32, %v5206
        %v5208 = vshll.u32 %v5199, %v5206
        %v5209 = vshrl.u32 %v5191, %v5207
        %v5210 = vor.u32 %v5208, %v5209
        %v5211 = vsub.s32 4294967266, %v5206
        %v5212 = vadd.s32 %v5211, 127
        %v5213 = vshll.u32 %v5212, 23
        %v5214 = vor.u32 4788187, %v5213
        %v5215 = vand.u32 2147483647, %v5214
        %v5217 = vcvt.s32.f32 %v5210
        %v5218 = vmul.f32 %v5217, %v5215
        %v5219 = vxor.u32 %v5218, 2147483648
        %v5220 = vsel %vm5137, %v5219, %v5218
        %v5221 = vsub.s32 4, %v5197
        %v5222 = vsel %vm5137, %v5221, %v5197
        %v5223 = vsel %vm5136, %v3785, %v5220
        %v5224 = vsel %vm5136, 0, %v5222
        %v5225 = vcosq.f32.pop %v5223
        %v5226 = vsinq.f32.pop %v5223
        %vm5227 = vweird.f32 %v3785
        %v5228 = vand.u32 %v5224, 3
        %vm5229 = vcmp.lt.s32.totalorder %v5228, 2
        %vm5230 = vcmp.eq.s32.totalorder %v5228, 0
        %v5231 = vxor.u32 %v5226, 2147483648
        %v5232 = vsel %vm5230, %v5225, %v5231
        %vm5233 = vcmp.eq.s32.totalorder %v5228, 2
        %v5234 = vxor.u32 %v5225, 2147483648
        %v5235 = vsel %vm5233, %v5234, %v5226
        %v5236 = vsel %vm5229, %v5232, %v5235
        %v5237 = vsel %vm5227, nan, %v5236
        %v5238 = vand.u32 2147483647, %v3786
        %vm5239 = vcmp.le.f32.partialorder %v5238, 0.7853982
        %vm5240 = vcmp.lt.s32.totalorder %v3786, 0
        %v5241 = vand.u32 %v3786, 2139095040
        %v5242 = vshrl.u32 %v5241, 23
        %v5243 = vsub.s32 %v5242, 127
        %v5244 = vand.u32 2147483647, %v3786
        %v5245 = vand.u32 %v5244, 8388607
        %v5246 = vor.u32 %v5245, 8388608
        %v5247 = vsub.s32 0, %v5246
        %v5248 = vadd.s32 %v5243, 1
        %vm5249 = vcmp.gt.s32.totalorder %v5248, 0
        %v5250 = vsel %vm5249, %v5248, 0
        %v5251 = vshrl.u32 %v5250, 5
        %v5252 = vand.u32 %v5250, 31
        %v5253 = vsub.s32 32, %v5252
        %v5254 = vshrl.u32 683565275, %v5253
        %v5255 = vshll.u32 683565275, %v5252
        %v5256 = vshrl.u32 2475754826, %v5253
        %v5257 = vor.u32 %v5255, %v5256
        %v5258 = vshll.u32 2475754826, %v5252
        %v5259 = vshrl.u32 2131351028, %v5253
        %v5260 = vor.u32 %v5258, %v5259
        %v5261 = vshll.u32 2131351028, %v5252
        %v5262 = vshrl.u32 2102212464, %v5253
        %v5263 = vor.u32 %v5261, %v5262
        %v5264 = vshll.u32 2102212464, %v5252
        %v5265 = vshrl.u32 920167782, %v5253
        %v5266 = vor.u32 %v5264, %v5265
        %v5267 = vshll.u32 920167782, %v5252
        %v5268 = vshrl.u32 1326507024, %v5253
        %v5269 = vor.u32 %v5267, %v5268
        %vm5270 = vcmp.lt.s32.totalorder %v5251, 1
        %vm5271 = vcmp.lt.s32.totalorder %v5251, 2
        %vm5272 = vcmp.lt.s32.totalorder %v5251, 3
        %vm5273 = vcmp.lt.s32.totalorder %v5251, 4
        %v5274 = vsel %vm5270, %v5254, %v5257
        %v5275 = vsel %vm5273, %v5263, 2102212464
        %v5276 = vsel %vm5272, %v5260, %v5275
        %v5277 = vsel %vm5271, %v5274, %v5276
        %v5278 = vsel %vm5270, %v5257, %v5260
        %v5279 = vsel %vm5273, %v5266, 920167782
        %v5280 = vsel %vm5272, %v5263, %v5279
        %v5281 = vsel %vm5271, %v5278, %v5280
        %v5282 = vsel %vm5270, %v5260, %v5263
        %v5283 = vsel %vm5273, %v5269, 1326507024
        %v5284 = vsel %vm5272, %v5266, %v5283
        %v5285 = vsel %vm5271, %v5282, %v5284
        %v5286 = vshll.u32 %v5246, 8
        %v5287 = vmul.u32.u64.compose %v5286, %v5285
        %v5288 = vextract.low.u32 %v5287
        %v5289 = vextract.high.u32 %v5287
        %v5290 = vmul.u32.u64.compose %v5286, %v5281
        %v5291 = vextract.low.u32 %v5290
        %v5292 = vextract.high.u32 %v5290
        %v5293 = vmul.u32 %v5286, %v5277
        %v5294 = vadd.s32 %v5289, %v5291
        %vm5295 = vc.u32 %v5289, %v5291
        %v5296 = vadd.s32 %v5292, 1
        %v5297 = vsel %vm5295, %v5296, %v5292
        %v5298 = vadd.s32 %v5293, %v5297
        %v5299 = vadd.s32 %v5298, 536870912
        %v5300 = vshrl.u32 %v5299, 30
        %v5301 = vshll.u32 %v5300, 30
        %v5302 = vsub.s32 %v5298, %v5301
        %vm5303 = vcmp.lt.s32.totalorder %v5302, 0
        %v5304 = vsub.s32 0, %v5302
        %v5305 = vsel %vm5303, %v5304, %v5302
        %v5306 = vclz %v5305
        %v5307 = vsub.s32 %v5306, 2
        %vm5308 = vcmp.gt.s32.totalorder 0, %v5307
        %v5309 = vsel %vm5308, 0, %v5307
        %v5310 = vsub.s32 32, %v5309
        %v5311 = vshll.u32 %v5302, %v5309
        %v5312 = vshrl.u32 %v5294, %v5310
        %v5313 = vor.u32 %v5311, %v5312
        %v5314 = vsub.s32 4294967266, %v5309
        %v5315 = vadd.s32 %v5314, 127
        %v5316 = vshll.u32 %v5315, 23
        %v5317 = vor.u32 4788187, %v5316
        %v5318 = vand.u32 2147483647, %v5317
        %v5320 = vcvt.s32.f32 %v5313
        %v5321 = vmul.f32 %v5320, %v5318
        %v5322 = vxor.u32 %v5321, 2147483648
        %v5323 = vsel %vm5240, %v5322, %v5321
        %v5324 = vsub.s32 4, %v5300
        %v5325 = vsel %vm5240, %v5324, %v5300
        %v5326 = vsel %vm5239, %v3786, %v5323
        %v5327 = vsel %vm5239, 0, %v5325
        %v5328 = vcosq.f32.pop %v5326
        %v5329 = vsinq.f32.pop %v5326
        %vm5330 = vweird.f32 %v3786
        %v5331 = vand.u32 %v5327, 3
        %vm5332 = vcmp.lt.s32.totalorder %v5331, 2
        %vm5333 = vcmp.eq.s32.totalorder %v5331, 0
        %v5334 = vxor.u32 %v5329, 2147483648
        %v5335 = vsel %vm5333, %v5328, %v5334
        %vm5336 = vcmp.eq.s32.totalorder %v5331, 2
        %v5337 = vxor.u32 %v5328, 2147483648
        %v5338 = vsel %vm5336, %v5337, %v5329
        %v5339 = vsel %vm5332, %v5335, %v5338
        %v5340 = vsel %vm5330, nan, %v5339
        %v5341 = vand.u32 2147483647, %v3787
        %vm5342 = vcmp.le.f32.partialorder %v5341, 0.7853982
        %vm5343 = vcmp.lt.s32.totalorder %v3787, 0
        %v5344 = vand.u32 %v3787, 2139095040
        %v5345 = vshrl.u32 %v5344, 23
        %v5346 = vsub.s32 %v5345, 127
        %v5347 = vand.u32 2147483647, %v3787
        %v5348 = vand.u32 %v5347, 8388607
        %v5349 = vor.u32 %v5348, 8388608
        %v5350 = vsub.s32 0, %v5349
        %v5351 = vadd.s32 %v5346, 1
        %vm5352 = vcmp.gt.s32.totalorder %v5351, 0
        %v5353 = vsel %vm5352, %v5351, 0
        %v5354 = vshrl.u32 %v5353, 5
        %v5355 = vand.u32 %v5353, 31
        %v5356 = vsub.s32 32, %v5355
        %v5357 = vshrl.u32 683565275, %v5356
        %v5358 = vshll.u32 683565275, %v5355
        %v5359 = vshrl.u32 2475754826, %v5356
        %v5360 = vor.u32 %v5358, %v5359
        %v5361 = vshll.u32 2475754826, %v5355
        %v5362 = vshrl.u32 2131351028, %v5356
        %v5363 = vor.u32 %v5361, %v5362
        %v5364 = vshll.u32 2131351028, %v5355
        %v5365 = vshrl.u32 2102212464, %v5356
        %v5366 = vor.u32 %v5364, %v5365
        %v5367 = vshll.u32 2102212464, %v5355
        %v5368 = vshrl.u32 920167782, %v5356
        %v5369 = vor.u32 %v5367, %v5368
        %v5370 = vshll.u32 920167782, %v5355
        %v5371 = vshrl.u32 1326507024, %v5356
        %v5372 = vor.u32 %v5370, %v5371
        %vm5373 = vcmp.lt.s32.totalorder %v5354, 1
        %vm5374 = vcmp.lt.s32.totalorder %v5354, 2
        %vm5375 = vcmp.lt.s32.totalorder %v5354, 3
        %vm5376 = vcmp.lt.s32.totalorder %v5354, 4
        %v5377 = vsel %vm5373, %v5357, %v5360
        %v5378 = vsel %vm5376, %v5366, 2102212464
        %v5379 = vsel %vm5375, %v5363, %v5378
        %v5380 = vsel %vm5374, %v5377, %v5379
        %v5381 = vsel %vm5373, %v5360, %v5363
        %v5382 = vsel %vm5376, %v5369, 920167782
        %v5383 = vsel %vm5375, %v5366, %v5382
        %v5384 = vsel %vm5374, %v5381, %v5383
        %v5385 = vsel %vm5373, %v5363, %v5366
        %v5386 = vsel %vm5376, %v5372, 1326507024
        %v5387 = vsel %vm5375, %v5369, %v5386
        %v5388 = vsel %vm5374, %v5385, %v5387
        %v5389 = vshll.u32 %v5349, 8
        %v5390 = vmul.u32.u64.compose %v5389, %v5388
        %v5391 = vextract.low.u32 %v5390
        %v5392 = vextract.high.u32 %v5390
        %v5393 = vmul.u32.u64.compose %v5389, %v5384
        %v5394 = vextract.low.u32 %v5393
        %v5395 = vextract.high.u32 %v5393
        %v5396 = vmul.u32 %v5389, %v5380
        %v5397 = vadd.s32 %v5392, %v5394
        %vm5398 = vc.u32 %v5392, %v5394
        %v5399 = vadd.s32 %v5395, 1
        %v5400 = vsel %vm5398, %v5399, %v5395
        %v5401 = vadd.s32 %v5396, %v5400
        %v5402 = vadd.s32 %v5401, 536870912
        %v5403 = vshrl.u32 %v5402, 30
        %v5404 = vshll.u32 %v5403, 30
        %v5405 = vsub.s32 %v5401, %v5404
        %vm5406 = vcmp.lt.s32.totalorder %v5405, 0
        %v5407 = vsub.s32 0, %v5405
        %v5408 = vsel %vm5406, %v5407, %v5405
        %v5409 = vclz %v5408
        %v5410 = vsub.s32 %v5409, 2
        %vm5411 = vcmp.gt.s32.totalorder 0, %v5410
        %v5412 = vsel %vm5411, 0, %v5410
        %v5413 = vsub.s32 32, %v5412
        %v5414 = vshll.u32 %v5405, %v5412
        %v5415 = vshrl.u32 %v5397, %v5413
        %v5416 = vor.u32 %v5414, %v5415
        %v5417 = vsub.s32 4294967266, %v5412
        %v5418 = vadd.s32 %v5417, 127
        %v5419 = vshll.u32 %v5418, 23
        %v5420 = vor.u32 4788187, %v5419
        %v5421 = vand.u32 2147483647, %v5420
        %v5423 = vcvt.s32.f32 %v5416
        %v5424 = vmul.f32 %v5423, %v5421
        %v5425 = vxor.u32 %v5424, 2147483648
        %v5426 = vsel %vm5343, %v5425, %v5424
        %v5427 = vsub.s32 4, %v5403
        %v5428 = vsel %vm5343, %v5427, %v5403
        %v5429 = vsel %vm5342, %v3787, %v5426
        %v5430 = vsel %vm5342, 0, %v5428
        %v5431 = vcosq.f32.pop %v5429
        %v5432 = vsinq.f32.pop %v5429
        %vm5433 = vweird.f32 %v3787
        %v5434 = vand.u32 %v5430, 3
        %vm5435 = vcmp.lt.s32.totalorder %v5434, 2
        %vm5436 = vcmp.eq.s32.totalorder %v5434, 0
        %v5437 = vxor.u32 %v5432, 2147483648
        %v5438 = vsel %vm5436, %v5431, %v5437
        %vm5439 = vcmp.eq.s32.totalorder %v5434, 2
        %v5440 = vxor.u32 %v5431, 2147483648
        %v5441 = vsel %vm5439, %v5440, %v5432
        %v5442 = vsel %vm5435, %v5438, %v5441
        %v5443 = vsel %vm5433, nan, %v5442
        %v5444 = vld [vmem:[%s3] sm:$0xff]
        %v5445 = vld [vmem:[%s3 + $0x8] sm:$0xff]
        %v5446 = vld [vmem:[%s3 + $0x10] sm:$0xff]
        %v5447 = vld [vmem:[%s3 + $0x18] sm:$0xff]
        %v5448 = vld [vmem:[%s3 + $0x20] sm:$0xff]
        %v5449 = vld [vmem:[%s3 + $0x28] sm:$0xff]
        %v5450 = vld [vmem:[%s3 + $0x30] sm:$0xff]
        %v5451 = vld [vmem:[%s3 + $0x38] sm:$0xff]
        %v5452 = vld [vmem:[%s3 + $0x40] sm:$0xff]
        %v5453 = vld [vmem:[%s3 + $0x48] sm:$0xff]
        %v5454 = vld [vmem:[%s3 + $0x50] sm:$0xff]
        %v5455 = vld [vmem:[%s3 + $0x58] sm:$0xff]
        %v5456 = vld [vmem:[%s3 + $0x60] sm:$0xff]
        %v5457 = vld [vmem:[%s3 + $0x68] sm:$0xff]
        %v5458 = vld [vmem:[%s3 + $0x70] sm:$0xff]
        %v5459 = vld [vmem:[%s3 + $0x78] sm:$0xff]
        %v5460 = vld [vmem:[%s3 + $0x80] sm:$0xff]
        %v5461 = vld [vmem:[%s3 + $0x88] sm:$0xff]
        %v5462 = vld [vmem:[%s3 + $0x90] sm:$0xff]
        %v5463 = vld [vmem:[%s3 + $0x98] sm:$0xff]
        %v5464 = vld [vmem:[%s3 + $0xa0] sm:$0xff]
        %v5465 = vld [vmem:[%s3 + $0xa8] sm:$0xff]
        %v5466 = vld [vmem:[%s3 + $0xb0] sm:$0xff]
        %v5467 = vld [vmem:[%s3 + $0xb8] sm:$0xff]
        %v5468 = vld [vmem:[%s3 + $0xc0] sm:$0xff]
        %v5469 = vld [vmem:[%s3 + $0xc8] sm:$0xff]
        %v5470 = vld [vmem:[%s3 + $0xd0] sm:$0xff]
        %v5471 = vld [vmem:[%s3 + $0xd8] sm:$0xff]
        %v5472 = vld [vmem:[%s3 + $0xe0] sm:$0xff]
        %v5473 = vld [vmem:[%s3 + $0xe8] sm:$0xff]
        %v5474 = vld [vmem:[%s3 + $0xf0] sm:$0xff]
        %v5475 = vld [vmem:[%s3 + $0xf8] sm:$0xff]
        %v5476 = vld [vmem:[%s3 + $0x100] sm:$0xff]
        %v5477 = vld [vmem:[%s3 + $0x108] sm:$0xff]
        %v5478 = vld [vmem:[%s3 + $0x110] sm:$0xff]
        %v5479 = vld [vmem:[%s3 + $0x118] sm:$0xff]
        %v5480 = vld [vmem:[%s3 + $0x120] sm:$0xff]
        %v5481 = vld [vmem:[%s3 + $0x128] sm:$0xff]
        %v5482 = vld [vmem:[%s3 + $0x130] sm:$0xff]
        %v5483 = vld [vmem:[%s3 + $0x138] sm:$0xff]
        %v5484 = vld [vmem:[%s3 + $0x140] sm:$0xff]
        %v5485 = vld [vmem:[%s3 + $0x148] sm:$0xff]
        %v5486 = vld [vmem:[%s3 + $0x150] sm:$0xff]
        %v5487 = vld [vmem:[%s3 + $0x158] sm:$0xff]
        %v5488 = vld [vmem:[%s3 + $0x160] sm:$0xff]
        %v5489 = vld [vmem:[%s3 + $0x168] sm:$0xff]
        %v5490 = vld [vmem:[%s3 + $0x170] sm:$0xff]
        %v5491 = vld [vmem:[%s3 + $0x178] sm:$0xff]
        %v5492 = vld [vmem:[%s4] sm:$0xff]
        %v5493 = vld [vmem:[%s4 + $0x8] sm:$0xff]
        %v5494 = vld [vmem:[%s4 + $0x10] sm:$0xff]
        %v5495 = vld [vmem:[%s4 + $0x18] sm:$0xff]
        %v5496 = vld [vmem:[%s4 + $0x20] sm:$0xff]
        %v5497 = vld [vmem:[%s4 + $0x28] sm:$0xff]
        %v5498 = vld [vmem:[%s4 + $0x30] sm:$0xff]
        %v5499 = vld [vmem:[%s4 + $0x38] sm:$0xff]
        %v5500 = vld [vmem:[%s4 + $0x40] sm:$0xff]
        %v5501 = vld [vmem:[%s4 + $0x48] sm:$0xff]
        %v5502 = vld [vmem:[%s4 + $0x50] sm:$0xff]
        %v5503 = vld [vmem:[%s4 + $0x58] sm:$0xff]
        %v5504 = vld [vmem:[%s4 + $0x60] sm:$0xff]
        %v5505 = vld [vmem:[%s4 + $0x68] sm:$0xff]
        %v5506 = vld [vmem:[%s4 + $0x70] sm:$0xff]
        %v5507 = vld [vmem:[%s4 + $0x78] sm:$0xff]
        %5509 = vset.pattern.permute.xlu0 0
        %5510 = vperm.xlu0 %5509, %v5492
        %v5511 = vpop.permute.xlu0 %5510
        %5514 = vset.pattern.permute.xlu0 0
        %5515 = vperm.xlu0 %5514, %v5493
        %v5516 = vpop.permute.xlu0 %5515
        %5519 = vset.pattern.permute.xlu0 0
        %5520 = vperm.xlu0 %5519, %v5494
        %v5521 = vpop.permute.xlu0 %5520
        %5524 = vset.pattern.permute.xlu0 0
        %5525 = vperm.xlu0 %5524, %v5495
        %v5526 = vpop.permute.xlu0 %5525
        %5529 = vset.pattern.permute.xlu0 0
        %5530 = vperm.xlu0 %5529, %v5496
        %v5531 = vpop.permute.xlu0 %5530
        %5534 = vset.pattern.permute.xlu0 0
        %5535 = vperm.xlu0 %5534, %v5497
        %v5536 = vpop.permute.xlu0 %5535
        %5539 = vset.pattern.permute.xlu0 0
        %5540 = vperm.xlu0 %5539, %v5498
        %v5541 = vpop.permute.xlu0 %5540
        %5544 = vset.pattern.permute.xlu0 0
        %5545 = vperm.xlu0 %5544, %v5499
        %v5546 = vpop.permute.xlu0 %5545
        %5549 = vset.pattern.permute.xlu0 0
        %5550 = vperm.xlu0 %5549, %v5500
        %v5551 = vpop.permute.xlu0 %5550
        %5554 = vset.pattern.permute.xlu0 0
        %5555 = vperm.xlu0 %5554, %v5501
        %v5556 = vpop.permute.xlu0 %5555
        %5559 = vset.pattern.permute.xlu0 0
        %5560 = vperm.xlu0 %5559, %v5502
        %v5561 = vpop.permute.xlu0 %5560
        %5564 = vset.pattern.permute.xlu0 0
        %5565 = vperm.xlu0 %5564, %v5503
        %v5566 = vpop.permute.xlu0 %5565
        %5569 = vset.pattern.permute.xlu0 0
        %5570 = vperm.xlu0 %5569, %v5504
        %v5571 = vpop.permute.xlu0 %5570
        %5574 = vset.pattern.permute.xlu0 0
        %5575 = vperm.xlu0 %5574, %v5505
        %v5576 = vpop.permute.xlu0 %5575
        %5579 = vset.pattern.permute.xlu0 0
        %5580 = vperm.xlu0 %5579, %v5506
        %v5581 = vpop.permute.xlu0 %5580
        %5584 = vset.pattern.permute.xlu0 0
        %5585 = vperm.xlu0 %5584, %v5507
        %v5586 = vpop.permute.xlu0 %5585
        %5588 = vmatprep.subr.mxu0 0.0
        %5589 = vmatpush1.msra.mxu0 %v2067
        %5590 = vmatprep.subr.mxu0 0.0
        %5591 = vmatpush1.msra.mxu0 %v1964
        %5592 = vmatprep.subr.mxu0 0.0
        %5593 = vmatpush1.msra.mxu0 %v1861
        %5594 = vmatprep.subr.mxu0 0.0
        %5595 = vmatpush1.msra.mxu0 %v1758
        %5596 = vmatprep.subr.mxu0 0.0
        %5597 = vmatpush1.msra.mxu0 %v1655
        %5598 = vmatprep.subr.mxu0 0.0
        %5599 = vmatpush1.msra.mxu0 %v1552
        %5600 = vmatprep.subr.mxu0 0.0
        %5601 = vmatpush1.msra.mxu0 %v1449
        %5602 = vmatprep.subr.mxu0 0.0
        %5603 = vmatpush1.msra.mxu0 %v1346
        %5604 = vmatprep.subr.mxu0 0.0
        %5605 = vmatpush1.msra.mxu0 %v1243
        %5606 = vmatprep.subr.mxu0 0.0
        %5607 = vmatpush1.msra.mxu0 %v1139
        %5608 = vmatprep.subr.mxu0 0.0
        %5609 = vmatpush1.msra.mxu0 %v1035
        %5610 = vmatprep.subr.mxu0 0.0
        %5611 = vmatpush1.msra.mxu0 %v931
        %5612 = vmatprep.subr.mxu0 0.0
        %5613 = vmatpush1.msra.mxu0 %v827
        %5614 = vmatprep.subr.mxu0 0.0
        %5615 = vmatpush1.msra.mxu0 %v723
        %5616 = vmatprep.subr.mxu0 0.0
        %5617 = vmatpush1.msra.mxu0 %v619
        %5618 = vmatprep.subr.mxu0 0.0
        %5619 = vmatpush1.msra.mxu0 %v515
        %5620 = vmatprep.subr.mxu0 0.0
        %5621 = vmatpush2.msra.mxu0 %v3735
        %5622 = vmatprep.subr.mxu0 0.0
        %5623 = vmatpush2.msra.mxu0 %v3632
        %5624 = vmatprep.subr.mxu0 0.0
        %5625 = vmatpush2.msra.mxu0 %v3529
        %5626 = vmatprep.subr.mxu0 0.0
        %5627 = vmatpush2.msra.mxu0 %v3426
        %5628 = vmatprep.subr.mxu0 0.0
        %5629 = vmatpush2.msra.mxu0 %v3323
        %5630 = vmatprep.subr.mxu0 0.0
        %5631 = vmatpush2.msra.mxu0 %v3220
        %5632 = vmatprep.subr.mxu0 0.0
        %5633 = vmatpush2.msra.mxu0 %v3117
        %5634 = vmatprep.subr.mxu0 0.0
        %5635 = vmatpush2.msra.mxu0 %v3014
        %5636 = vmatprep.subr.mxu0 0.0
        %5637 = vmatpush2.msra.mxu0 %v2911
        %5638 = vmatprep.subr.mxu0 0.0
        %5639 = vmatpush2.msra.mxu0 %v2807
        %5640 = vmatprep.subr.mxu0 0.0
        %5641 = vmatpush2.msra.mxu0 %v2703
        %5642 = vmatprep.subr.mxu0 0.0
        %5643 = vmatpush2.msra.mxu0 %v2599
        %5644 = vmatprep.subr.mxu0 0.0
        %5645 = vmatpush2.msra.mxu0 %v2495
        %5646 = vmatprep.subr.mxu0 0.0
        %5647 = vmatpush2.msra.mxu0 %v2391
        %5648 = vmatprep.subr.mxu0 0.0
        %5649 = vmatpush2.msra.mxu0 %v2287
        %5650 = vmatprep.subr.mxu0 0.0
        %5651 = vmatpush2.msra.mxu0 %v2183
        %5652 = vmatprep.mubr.f32.mxu0 %v5445
        %5653 = vmatmul.mubr.f32.gmra.mxu0 %v5444
        %v5654 = vpop.f32.mrf.mxu0
        %v5655 = vadd.f32 %v5511, %v5654
        %v5656 = vpop.f32.mrf.mxu0
        %5657 = vmatprep.mubr.f32.mxu0 %v5448
        %5658 = vmatmul.mubr.f32.gmra.mxu0 %v5447
        %v5659 = vpop.f32.mrf.mxu0
        %v5660 = vadd.f32 %v5516, %v5659
        %v5661 = vpop.f32.mrf.mxu0
        %5662 = vmatprep.mubr.f32.mxu0 %v5451
        %5663 = vmatmul.mubr.f32.gmra.mxu0 %v5450
        %v5664 = vpop.f32.mrf.mxu0
        %v5665 = vadd.f32 %v5521, %v5664
        %v5666 = vpop.f32.mrf.mxu0
        %5667 = vmatprep.mubr.f32.mxu0 %v5454
        %5668 = vmatmul.mubr.f32.gmra.mxu0 %v5453
        %v5669 = vpop.f32.mrf.mxu0
        %v5670 = vadd.f32 %v5526, %v5669
        %v5671 = vpop.f32.mrf.mxu0
        %5672 = vmatprep.mubr.f32.mxu0 %v5457
        %5673 = vmatmul.mubr.f32.gmra.mxu0 %v5456
        %v5674 = vpop.f32.mrf.mxu0
        %v5675 = vadd.f32 %v5531, %v5674
        %v5676 = vpop.f32.mrf.mxu0
        %5677 = vmatprep.mubr.f32.mxu0 %v5460
        %5678 = vmatmul.mubr.f32.gmra.mxu0 %v5459
        %v5679 = vpop.f32.mrf.mxu0
        %v5680 = vadd.f32 %v5536, %v5679
        %v5681 = vpop.f32.mrf.mxu0
        %5682 = vmatprep.mubr.f32.mxu0 %v5463
        %5683 = vmatmul.mubr.f32.gmra.mxu0 %v5462
        %v5684 = vpop.f32.mrf.mxu0
        %v5685 = vadd.f32 %v5541, %v5684
        %v5686 = vpop.f32.mrf.mxu0
        %5687 = vmatprep.mubr.f32.mxu0 %v5466
        %5688 = vmatmul.mubr.f32.gmra.mxu0 %v5465
        %v5689 = vpop.f32.mrf.mxu0
        %v5690 = vadd.f32 %v5546, %v5689
        %v5691 = vpop.f32.mrf.mxu0
        %5692 = vmatprep.mubr.f32.mxu0 %v5469
        %5693 = vmatmul.mubr.f32.gmra.mxu0 %v5468
        %v5694 = vpop.f32.mrf.mxu0
        %v5695 = vadd.f32 %v5551, %v5694
        %v5696 = vpop.f32.mrf.mxu0
        %5697 = vmatprep.mubr.f32.mxu0 %v5472
        %5698 = vmatmul.mubr.f32.gmra.mxu0 %v5471
        %v5699 = vpop.f32.mrf.mxu0
        %v5700 = vadd.f32 %v5556, %v5699
        %v5701 = vpop.f32.mrf.mxu0
        %5702 = vmatprep.mubr.f32.mxu0 %v5475
        %5703 = vmatmul.mubr.f32.gmra.mxu0 %v5474
        %v5704 = vpop.f32.mrf.mxu0
        %v5705 = vadd.f32 %v5561, %v5704
        %v5706 = vpop.f32.mrf.mxu0
        %5707 = vmatprep.mubr.f32.mxu0 %v5478
        %5708 = vmatmul.mubr.f32.gmra.mxu0 %v5477
        %v5709 = vpop.f32.mrf.mxu0
        %v5710 = vadd.f32 %v5566, %v5709
        %v5711 = vpop.f32.mrf.mxu0
        %5712 = vmatprep.mubr.f32.mxu0 %v5481
        %5713 = vmatmul.mubr.f32.gmra.mxu0 %v5480
        %v5714 = vpop.f32.mrf.mxu0
        %v5715 = vadd.f32 %v5571, %v5714
        %v5716 = vpop.f32.mrf.mxu0
        %5717 = vmatprep.mubr.f32.mxu0 %v5484
        %5718 = vmatmul.mubr.f32.gmra.mxu0 %v5483
        %v5719 = vpop.f32.mrf.mxu0
        %v5720 = vadd.f32 %v5576, %v5719
        %v5721 = vpop.f32.mrf.mxu0
        %5722 = vmatprep.mubr.f32.mxu0 %v5487
        %5723 = vmatmul.mubr.f32.gmra.mxu0 %v5486
        %v5724 = vpop.f32.mrf.mxu0
        %v5725 = vadd.f32 %v5581, %v5724
        %v5726 = vpop.f32.mrf.mxu0
        %5727 = vmatprep.mubr.f32.mxu0 %v5490
        %5728 = vmatmul.mubr.f32.gmra.mxu0 %v5489
        %v5729 = vpop.f32.mrf.mxu0
        %v5730 = vadd.f32 %v5586, %v5729
        %v5731 = vpop.f32.mrf.mxu0
        %5732 = vdwg.mxu0
        %5733 = vmatprep.subr.mxu0 0.0
        %5734 = vmatpush1.msra.mxu0 %v5443
        %5735 = vmatprep.subr.mxu0 0.0
        %5736 = vmatpush1.msra.mxu0 %v5340
        %5737 = vmatprep.subr.mxu0 0.0
        %5738 = vmatpush1.msra.mxu0 %v5237
        %5739 = vmatprep.subr.mxu0 0.0
        %5740 = vmatpush1.msra.mxu0 %v5134
        %5741 = vmatprep.subr.mxu0 0.0
        %5742 = vmatpush1.msra.mxu0 %v5031
        %5743 = vmatprep.subr.mxu0 0.0
        %5744 = vmatpush1.msra.mxu0 %v4928
        %5745 = vmatprep.subr.mxu0 0.0
        %5746 = vmatpush1.msra.mxu0 %v4825
        %5747 = vmatprep.subr.mxu0 0.0
        %5748 = vmatpush1.msra.mxu0 %v4722
        %5749 = vmatprep.subr.mxu0 0.0
        %5750 = vmatpush1.msra.mxu0 %v4619
        %5751 = vmatprep.subr.mxu0 0.0
        %5752 = vmatpush1.msra.mxu0 %v4515
        %5753 = vmatprep.subr.mxu0 0.0
        %5754 = vmatpush1.msra.mxu0 %v4411
        %5755 = vmatprep.subr.mxu0 0.0
        %5756 = vmatpush1.msra.mxu0 %v4307
        %5757 = vmatprep.subr.mxu0 0.0
        %5758 = vmatpush1.msra.mxu0 %v4203
        %5759 = vmatprep.subr.mxu0 0.0
        %5760 = vmatpush1.msra.mxu0 %v4099
        %5761 = vmatprep.subr.mxu0 0.0
        %5762 = vmatpush1.msra.mxu0 %v3995
        %5763 = vmatprep.subr.mxu0 0.0
        %5764 = vmatpush1.msra.mxu0 %v3891
        %5765 = vmatprep.subr.mxu0 0.0
        %5766 = vmatpush2.msra.mxu0 0.0
        %5767 = vmatprep.subr.mxu0 0.0
        %5768 = vmatpush2.msra.mxu0 0.0
        %5769 = vmatprep.subr.mxu0 0.0
        %5770 = vmatpush2.msra.mxu0 0.0
        %5771 = vmatprep.subr.mxu0 0.0
        %5772 = vmatpush2.msra.mxu0 0.0
        %5773 = vmatprep.subr.mxu0 0.0
        %5774 = vmatpush2.msra.mxu0 0.0
        %5775 = vmatprep.subr.mxu0 0.0
        %5776 = vmatpush2.msra.mxu0 0.0
        %5777 = vmatprep.subr.mxu0 0.0
        %5778 = vmatpush2.msra.mxu0 0.0
        %5779 = vmatprep.subr.mxu0 0.0
        %5780 = vmatpush2.msra.mxu0 0.0
        %5781 = vmatprep.subr.mxu0 0.0
        %5782 = vmatpush2.msra.mxu0 0.0
        %5783 = vmatprep.subr.mxu0 0.0
        %5784 = vmatpush2.msra.mxu0 0.0
        %5785 = vmatprep.subr.mxu0 0.0
        %5786 = vmatpush2.msra.mxu0 0.0
        %5787 = vmatprep.subr.mxu0 0.0
        %5788 = vmatpush2.msra.mxu0 0.0
        %5789 = vmatprep.subr.mxu0 0.0
        %5790 = vmatpush2.msra.mxu0 0.0
        %5791 = vmatprep.subr.mxu0 0.0
        %5792 = vmatpush2.msra.mxu0 0.0
        %5793 = vmatprep.subr.mxu0 0.0
        %5794 = vmatpush2.msra.mxu0 0.0
        %5795 = vmatprep.subr.mxu0 0.0
        %5796 = vmatpush2.msra.mxu0 0.0
        %5797 = vmatprep.mubr.f32.mxu0 0.0
        %5798 = vmatmul.mubr.f32.gmra.mxu0 %v5446
        %v5799 = vpop.f32.mrf.mxu0
        %v5800 = vadd.f32 %v5655, %v5799
        %v5801 = vpop.f32.mrf.mxu0
        %5802 = vmatprep.mubr.f32.mxu0 0.0
        %5803 = vmatmul.mubr.f32.gmra.mxu0 %v5449
        %v5804 = vpop.f32.mrf.mxu0
        %v5805 = vadd.f32 %v5660, %v5804
        %v5806 = vpop.f32.mrf.mxu0
        %5807 = vmatprep.mubr.f32.mxu0 0.0
        %5808 = vmatmul.mubr.f32.gmra.mxu0 %v5452
        %v5809 = vpop.f32.mrf.mxu0
        %v5810 = vadd.f32 %v5665, %v5809
        %v5811 = vpop.f32.mrf.mxu0
        %5812 = vmatprep.mubr.f32.mxu0 0.0
        %5813 = vmatmul.mubr.f32.gmra.mxu0 %v5455
        %v5814 = vpop.f32.mrf.mxu0
        %v5815 = vadd.f32 %v5670, %v5814
        %v5816 = vpop.f32.mrf.mxu0
        %5817 = vmatprep.mubr.f32.mxu0 0.0
        %5818 = vmatmul.mubr.f32.gmra.mxu0 %v5458
        %v5819 = vpop.f32.mrf.mxu0
        %v5820 = vadd.f32 %v5675, %v5819
        %v5821 = vpop.f32.mrf.mxu0
        %5822 = vmatprep.mubr.f32.mxu0 0.0
        %5823 = vmatmul.mubr.f32.gmra.mxu0 %v5461
        %v5824 = vpop.f32.mrf.mxu0
        %v5825 = vadd.f32 %v5680, %v5824
        %v5826 = vpop.f32.mrf.mxu0
        %5827 = vmatprep.mubr.f32.mxu0 0.0
        %5828 = vmatmul.mubr.f32.gmra.mxu0 %v5464
        %v5829 = vpop.f32.mrf.mxu0
        %v5830 = vadd.f32 %v5685, %v5829
        %v5831 = vpop.f32.mrf.mxu0
        %5832 = vmatprep.mubr.f32.mxu0 0.0
        %5833 = vmatmul.mubr.f32.gmra.mxu0 %v5467
        %v5834 = vpop.f32.mrf.mxu0
        %v5835 = vadd.f32 %v5690, %v5834
        %v5836 = vpop.f32.mrf.mxu0
        %5837 = vmatprep.mubr.f32.mxu0 0.0
        %5838 = vmatmul.mubr.f32.gmra.mxu0 %v5470
        %v5839 = vpop.f32.mrf.mxu0
        %v5840 = vadd.f32 %v5695, %v5839
        %v5841 = vpop.f32.mrf.mxu0
        %5842 = vmatprep.mubr.f32.mxu0 0.0
        %5843 = vmatmul.mubr.f32.gmra.mxu0 %v5473
        %v5844 = vpop.f32.mrf.mxu0
        %v5845 = vadd.f32 %v5700, %v5844
        %v5846 = vpop.f32.mrf.mxu0
        %5847 = vmatprep.mubr.f32.mxu0 0.0
        %5848 = vmatmul.mubr.f32.gmra.mxu0 %v5476
        %v5849 = vpop.f32.mrf.mxu0
        %v5850 = vadd.f32 %v5705, %v5849
        %v5851 = vpop.f32.mrf.mxu0
        %5852 = vmatprep.mubr.f32.mxu0 0.0
        %5853 = vmatmul.mubr.f32.gmra.mxu0 %v5479
        %v5854 = vpop.f32.mrf.mxu0
        %v5855 = vadd.f32 %v5710, %v5854
        %v5856 = vpop.f32.mrf.mxu0
        %5857 = vmatprep.mubr.f32.mxu0 0.0
        %5858 = vmatmul.mubr.f32.gmra.mxu0 %v5482
        %v5859 = vpop.f32.mrf.mxu0
        %v5860 = vadd.f32 %v5715, %v5859
        %v5861 = vpop.f32.mrf.mxu0
        %5862 = vmatprep.mubr.f32.mxu0 0.0
        %5863 = vmatmul.mubr.f32.gmra.mxu0 %v5485
        %v5864 = vpop.f32.mrf.mxu0
        %v5865 = vadd.f32 %v5720, %v5864
        %v5866 = vpop.f32.mrf.mxu0
        %5867 = vmatprep.mubr.f32.mxu0 0.0
        %5868 = vmatmul.mubr.f32.gmra.mxu0 %v5488
        %v5869 = vpop.f32.mrf.mxu0
        %v5870 = vadd.f32 %v5725, %v5869
        %v5871 = vpop.f32.mrf.mxu0
        %5872 = vmatprep.mubr.f32.mxu0 0.0
        %5873 = vmatmul.mubr.f32.gmra.mxu0 %v5491
        %v5874 = vpop.f32.mrf.mxu0
        %v5875 = vadd.f32 %v5730, %v5874
        %v5876 = vpop.f32.mrf.mxu0
        %5877 = vdwg.mxu0
        %v5878 = vmul.f32 %v5800, 0.5
        %v5879 = vmul.f32 %v5805, 0.5
        %v5880 = vmul.f32 %v5810, 0.5
        %v5881 = vmul.f32 %v5815, 0.5
        %v5882 = vmul.f32 %v5820, 0.5
        %v5883 = vmul.f32 %v5825, 0.5
        %v5884 = vmul.f32 %v5830, 0.5
        %v5885 = vmul.f32 %v5835, 0.5
        %v5886 = vmul.f32 %v5840, 0.5
        %v5887 = vmul.f32 %v5845, 0.5
        %v5888 = vmul.f32 %v5850, 0.5
        %v5889 = vmul.f32 %v5855, 0.5
        %v5890 = vmul.f32 %v5860, 0.5
        %v5891 = vmul.f32 %v5865, 0.5
        %v5892 = vmul.f32 %v5870, 0.5
        %v5893 = vmul.f32 %v5875, 0.5
        %v5894 = vmul.f32 %v5800, 0.044715
        %v5895 = vmul.f32 %v5805, 0.044715
        %v5896 = vmul.f32 %v5810, 0.044715
        %v5897 = vmul.f32 %v5815, 0.044715
        %v5898 = vmul.f32 %v5820, 0.044715
        %v5899 = vmul.f32 %v5825, 0.044715
        %v5900 = vmul.f32 %v5830, 0.044715
        %v5901 = vmul.f32 %v5835, 0.044715
        %v5902 = vmul.f32 %v5840, 0.044715
        %v5903 = vmul.f32 %v5845, 0.044715
        %v5904 = vmul.f32 %v5850, 0.044715
        %v5905 = vmul.f32 %v5855, 0.044715
        %v5906 = vmul.f32 %v5860, 0.044715
        %v5907 = vmul.f32 %v5865, 0.044715
        %v5908 = vmul.f32 %v5870, 0.044715
        %v5909 = vmul.f32 %v5875, 0.044715
        %v5910 = vmul.f32 %v5894, %v5800
        %v5911 = vmul.f32 %v5895, %v5805
        %v5912 = vmul.f32 %v5896, %v5810
        %v5913 = vmul.f32 %v5897, %v5815
        %v5914 = vmul.f32 %v5898, %v5820
        %v5915 = vmul.f32 %v5899, %v5825
        %v5916 = vmul.f32 %v5900, %v5830
        %v5917 = vmul.f32 %v5901, %v5835
        %v5918 = vmul.f32 %v5902, %v5840
        %v5919 = vmul.f32 %v5903, %v5845
        %v5920 = vmul.f32 %v5904, %v5850
        %v5921 = vmul.f32 %v5905, %v5855
        %v5922 = vmul.f32 %v5906, %v5860
        %v5923 = vmul.f32 %v5907, %v5865
        %v5924 = vmul.f32 %v5908, %v5870
        %v5925 = vmul.f32 %v5909, %v5875
        %v5926 = vmul.f32 %v5910, %v5800
        %v5927 = vmul.f32 %v5911, %v5805
        %v5928 = vmul.f32 %v5912, %v5810
        %v5929 = vmul.f32 %v5913, %v5815
        %v5930 = vmul.f32 %v5914, %v5820
        %v5931 = vmul.f32 %v5915, %v5825
        %v5932 = vmul.f32 %v5916, %v5830
        %v5933 = vmul.f32 %v5917, %v5835
        %v5934 = vmul.f32 %v5918, %v5840
        %v5935 = vmul.f32 %v5919, %v5845
        %v5936 = vmul.f32 %v5920, %v5850
        %v5937 = vmul.f32 %v5921, %v5855
        %v5938 = vmul.f32 %v5922, %v5860
        %v5939 = vmul.f32 %v5923, %v5865
        %v5940 = vmul.f32 %v5924, %v5870
        %v5941 = vmul.f32 %v5925, %v5875
        %v5942 = vadd.f32 %v5800, %v5926
        %v5943 = vadd.f32 %v5805, %v5927
        %v5944 = vadd.f32 %v5810, %v5928
        %v5945 = vadd.f32 %v5815, %v5929
        %v5946 = vadd.f32 %v5820, %v5930
        %v5947 = vadd.f32 %v5825, %v5931
        %v5948 = vadd.f32 %v5830, %v5932
        %v5949 = vadd.f32 %v5835, %v5933
        %v5950 = vadd.f32 %v5840, %v5934
        %v5951 = vadd.f32 %v5845, %v5935
        %v5952 = vadd.f32 %v5850, %v5936
        %v5953 = vadd.f32 %v5855, %v5937
        %v5954 = vadd.f32 %v5860, %v5938
        %v5955 = vadd.f32 %v5865, %v5939
        %v5956 = vadd.f32 %v5870, %v5940
        %v5957 = vadd.f32 %v5875, %v5941
        %v5958 = vmul.f32 %v5942, 0.7978846
        %v5959 = vmul.f32 %v5943, 0.7978846
        %v5960 = vmul.f32 %v5944, 0.7978846
        %v5961 = vmul.f32 %v5945, 0.7978846
        %v5962 = vmul.f32 %v5946, 0.7978846
        %v5963 = vmul.f32 %v5947, 0.7978846
        %v5964 = vmul.f32 %v5948, 0.7978846
        %v5965 = vmul.f32 %v5949, 0.7978846
        %v5966 = vmul.f32 %v5950, 0.7978846
        %v5967 = vmul.f32 %v5951, 0.7978846
        %v5968 = vmul.f32 %v5952, 0.7978846
        %v5969 = vmul.f32 %v5953, 0.7978846
        %v5970 = vmul.f32 %v5954, 0.7978846
        %v5971 = vmul.f32 %v5955, 0.7978846
        %v5972 = vmul.f32 %v5956, 0.7978846
        %v5973 = vmul.f32 %v5957, 0.7978846
        %v5974 = vtanh.pop %v5958
        %v5975 = vtanh.pop %v5959
        %v5976 = vtanh.pop %v5960
        %v5977 = vtanh.pop %v5961
        %v5978 = vtanh.pop %v5962
        %v5979 = vtanh.pop %v5963
        %v5980 = vtanh.pop %v5964
        %v5981 = vtanh.pop %v5965
        %v5982 = vtanh.pop %v5966
        %v5983 = vtanh.pop %v5967
        %v5984 = vtanh.pop %v5968
        %v5985 = vtanh.pop %v5969
        %v5986 = vtanh.pop %v5970
        %v5987 = vtanh.pop %v5971
        %v5988 = vtanh.pop %v5972
        %v5989 = vtanh.pop %v5973
        %v5990 = vadd.f32 %v5974, 1.0
        %v5991 = vadd.f32 %v5975, 1.0
        %v5992 = vadd.f32 %v5976, 1.0
        %v5993 = vadd.f32 %v5977, 1.0
        %v5994 = vadd.f32 %v5978, 1.0
        %v5995 = vadd.f32 %v5979, 1.0
        %v5996 = vadd.f32 %v5980, 1.0
        %v5997 = vadd.f32 %v5981, 1.0
        %v5998 = vadd.f32 %v5982, 1.0
        %v5999 = vadd.f32 %v5983, 1.0
        %v6000 = vadd.f32 %v5984, 1.0
        %v6001 = vadd.f32 %v5985, 1.0
        %v6002 = vadd.f32 %v5986, 1.0
        %v6003 = vadd.f32 %v5987, 1.0
        %v6004 = vadd.f32 %v5988, 1.0
        %v6005 = vadd.f32 %v5989, 1.0
        %v6006 = vmul.f32 %v5878, %v5990
        %v6007 = vmul.f32 %v5879, %v5991
        %v6008 = vmul.f32 %v5880, %v5992
        %v6009 = vmul.f32 %v5881, %v5993
        %v6010 = vmul.f32 %v5882, %v5994
        %v6011 = vmul.f32 %v5883, %v5995
        %v6012 = vmul.f32 %v5884, %v5996
        %v6013 = vmul.f32 %v5885, %v5997
        %v6014 = vmul.f32 %v5886, %v5998
        %v6015 = vmul.f32 %v5887, %v5999
        %v6016 = vmul.f32 %v5888, %v6000
        %v6017 = vmul.f32 %v5889, %v6001
        %v6018 = vmul.f32 %v5890, %v6002
        %v6019 = vmul.f32 %v5891, %v6003
        %v6020 = vmul.f32 %v5892, %v6004
        %v6021 = vmul.f32 %v5893, %v6005
        %v6022 = vld [vmem:[#allocation2] sm:$0xff]
        %v6023 = vld [vmem:[#allocation2 + $0x8] sm:$0xff]
        %v6024 = vld [vmem:[#allocation2 + $0x10] sm:$0xff]
        %v6025 = vld [vmem:[#allocation2 + $0x18] sm:$0xff]
        %v6026 = vld [vmem:[#allocation2 + $0x20] sm:$0xff]
        %v6027 = vld [vmem:[#allocation2 + $0x28] sm:$0xff]
        %v6028 = vld [vmem:[#allocation2 + $0x30] sm:$0xff]
        %v6029 = vld [vmem:[#allocation2 + $0x38] sm:$0xff]
        %v6030 = vld [vmem:[#allocation2 + $0x40] sm:$0xff]
        %v6031 = vld [vmem:[#allocation2 + $0x48] sm:$0xff]
        %v6032 = vld [vmem:[#allocation2 + $0x50] sm:$0xff]
        %v6033 = vld [vmem:[#allocation2 + $0x58] sm:$0xff]
        %v6034 = vld [vmem:[#allocation2 + $0x60] sm:$0xff]
        %v6035 = vld [vmem:[#allocation2 + $0x68] sm:$0xff]
        %v6036 = vld [vmem:[#allocation2 + $0x70] sm:$0xff]
        %v6037 = vld [vmem:[#allocation2 + $0x78] sm:$0xff]
        %v6038 = vld [vmem:[%s6] sm:$0xff]
        %v6039 = vld [vmem:[%s6 + $0x8] sm:$0xff]
        %v6040 = vld [vmem:[%s6 + $0x10] sm:$0xff]
        %v6041 = vld [vmem:[%s6 + $0x18] sm:$0xff]
        %v6042 = vld [vmem:[%s6 + $0x20] sm:$0xff]
        %v6043 = vld [vmem:[%s6 + $0x28] sm:$0xff]
        %v6044 = vld [vmem:[%s6 + $0x30] sm:$0xff]
        %v6045 = vld [vmem:[%s6 + $0x38] sm:$0xff]
        %v6046 = vld [vmem:[%s6 + $0x40] sm:$0xff]
        %v6047 = vld [vmem:[%s6 + $0x48] sm:$0xff]
        %v6048 = vld [vmem:[%s6 + $0x50] sm:$0xff]
        %v6049 = vld [vmem:[%s6 + $0x58] sm:$0xff]
        %v6050 = vld [vmem:[%s6 + $0x60] sm:$0xff]
        %v6051 = vld [vmem:[%s6 + $0x68] sm:$0xff]
        %v6052 = vld [vmem:[%s6 + $0x70] sm:$0xff]
        %v6053 = vld [vmem:[%s6 + $0x78] sm:$0xff]
        %6055 = vset.pattern.permute.xlu0 0
        %6056 = vperm.xlu0 %6055, %v6038
        %v6057 = vpop.permute.xlu0 %6056
        %6060 = vset.pattern.permute.xlu0 0
        %6061 = vperm.xlu0 %6060, %v6039
        %v6062 = vpop.permute.xlu0 %6061
        %6065 = vset.pattern.permute.xlu0 0
        %6066 = vperm.xlu0 %6065, %v6040
        %v6067 = vpop.permute.xlu0 %6066
        %6070 = vset.pattern.permute.xlu0 0
        %6071 = vperm.xlu0 %6070, %v6041
        %v6072 = vpop.permute.xlu0 %6071
        %6075 = vset.pattern.permute.xlu0 0
        %6076 = vperm.xlu0 %6075, %v6042
        %v6077 = vpop.permute.xlu0 %6076
        %6080 = vset.pattern.permute.xlu0 0
        %6081 = vperm.xlu0 %6080, %v6043
        %v6082 = vpop.permute.xlu0 %6081
        %6085 = vset.pattern.permute.xlu0 0
        %6086 = vperm.xlu0 %6085, %v6044
        %v6087 = vpop.permute.xlu0 %6086
        %6090 = vset.pattern.permute.xlu0 0
        %6091 = vperm.xlu0 %6090, %v6045
        %v6092 = vpop.permute.xlu0 %6091
        %6095 = vset.pattern.permute.xlu0 0
        %6096 = vperm.xlu0 %6095, %v6046
        %v6097 = vpop.permute.xlu0 %6096
        %6100 = vset.pattern.permute.xlu0 0
        %6101 = vperm.xlu0 %6100, %v6047
        %v6102 = vpop.permute.xlu0 %6101
        %6105 = vset.pattern.permute.xlu0 0
        %6106 = vperm.xlu0 %6105, %v6048
        %v6107 = vpop.permute.xlu0 %6106
        %6110 = vset.pattern.permute.xlu0 0
        %6111 = vperm.xlu0 %6110, %v6049
        %v6112 = vpop.permute.xlu0 %6111
        %6115 = vset.pattern.permute.xlu0 0
        %6116 = vperm.xlu0 %6115, %v6050
        %v6117 = vpop.permute.xlu0 %6116
        %6120 = vset.pattern.permute.xlu0 0
        %6121 = vperm.xlu0 %6120, %v6051
        %v6122 = vpop.permute.xlu0 %6121
        %6125 = vset.pattern.permute.xlu0 0
        %6126 = vperm.xlu0 %6125, %v6052
        %v6127 = vpop.permute.xlu0 %6126
        %6130 = vset.pattern.permute.xlu0 0
        %6131 = vperm.xlu0 %6130, %v6053
        %v6132 = vpop.permute.xlu0 %6131
        %6134 = vmatprep.subr.mxu0 0.0
        %6135 = vmatpush1.msra.mxu0 %v6021
        %6136 = vmatprep.subr.mxu0 0.0
        %6137 = vmatpush1.msra.mxu0 %v6020
        %6138 = vmatprep.subr.mxu0 0.0
        %6139 = vmatpush1.msra.mxu0 %v6019
        %6140 = vmatprep.subr.mxu0 0.0
        %6141 = vmatpush1.msra.mxu0 %v6018
        %6142 = vmatprep.subr.mxu0 0.0
        %6143 = vmatpush1.msra.mxu0 %v6017
        %6144 = vmatprep.subr.mxu0 0.0
        %6145 = vmatpush1.msra.mxu0 %v6016
        %6146 = vmatprep.subr.mxu0 0.0
        %6147 = vmatpush1.msra.mxu0 %v6015
        %6148 = vmatprep.subr.mxu0 0.0
        %6149 = vmatpush1.msra.mxu0 %v6014
        %6150 = vmatprep.subr.mxu0 0.0
        %6151 = vmatpush1.msra.mxu0 %v6013
        %6152 = vmatprep.subr.mxu0 0.0
        %6153 = vmatpush1.msra.mxu0 %v6012
        %6154 = vmatprep.subr.mxu0 0.0
        %6155 = vmatpush1.msra.mxu0 %v6011
        %6156 = vmatprep.subr.mxu0 0.0
        %6157 = vmatpush1.msra.mxu0 %v6010
        %6158 = vmatprep.subr.mxu0 0.0
        %6159 = vmatpush1.msra.mxu0 %v6009
        %6160 = vmatprep.subr.mxu0 0.0
        %6161 = vmatpush1.msra.mxu0 %v6008
        %6162 = vmatprep.subr.mxu0 0.0
        %6163 = vmatpush1.msra.mxu0 %v6007
        %6164 = vmatprep.subr.mxu0 0.0
        %6165 = vmatpush1.msra.mxu0 %v6006
        %6166 = vmatprep.subr.mxu0 0.0
        %6167 = vmatpush2.msra.mxu0 0.0
        %6168 = vmatprep.subr.mxu0 0.0
        %6169 = vmatpush2.msra.mxu0 0.0
        %6170 = vmatprep.subr.mxu0 0.0
        %6171 = vmatpush2.msra.mxu0 0.0
        %6172 = vmatprep.subr.mxu0 0.0
        %6173 = vmatpush2.msra.mxu0 0.0
        %6174 = vmatprep.subr.mxu0 0.0
        %6175 = vmatpush2.msra.mxu0 0.0
        %6176 = vmatprep.subr.mxu0 0.0
        %6177 = vmatpush2.msra.mxu0 0.0
        %6178 = vmatprep.subr.mxu0 0.0
        %6179 = vmatpush2.msra.mxu0 0.0
        %6180 = vmatprep.subr.mxu0 0.0
        %6181 = vmatpush2.msra.mxu0 0.0
        %6182 = vmatprep.subr.mxu0 0.0
        %6183 = vmatpush2.msra.mxu0 0.0
        %6184 = vmatprep.subr.mxu0 0.0
        %6185 = vmatpush2.msra.mxu0 0.0
        %6186 = vmatprep.subr.mxu0 0.0
        %6187 = vmatpush2.msra.mxu0 0.0
        %6188 = vmatprep.subr.mxu0 0.0
        %6189 = vmatpush2.msra.mxu0 0.0
        %6190 = vmatprep.subr.mxu0 0.0
        %6191 = vmatpush2.msra.mxu0 0.0
        %6192 = vmatprep.subr.mxu0 0.0
        %6193 = vmatpush2.msra.mxu0 0.0
        %6194 = vmatprep.subr.mxu0 0.0
        %6195 = vmatpush2.msra.mxu0 0.0
        %6196 = vmatprep.subr.mxu0 0.0
        %6197 = vmatpush2.msra.mxu0 0.0
        %6198 = vmatprep.mubr.f32.mxu0 0.0
        %6199 = vmatmul.mubr.f32.gmra.mxu0 %v6022
        %v6200 = vpop.f32.mrf.mxu0
        %v6201 = vadd.f32 %v6057, %v6200
        %v6202 = vpop.f32.mrf.mxu0
        %6203 = vmatprep.mubr.f32.mxu0 0.0
        %6204 = vmatmul.mubr.f32.gmra.mxu0 %v6023
        %v6205 = vpop.f32.mrf.mxu0
        %v6206 = vadd.f32 %v6062, %v6205
        %v6207 = vpop.f32.mrf.mxu0
        %6208 = vmatprep.mubr.f32.mxu0 0.0
        %6209 = vmatmul.mubr.f32.gmra.mxu0 %v6024
        %v6210 = vpop.f32.mrf.mxu0
        %v6211 = vadd.f32 %v6067, %v6210
        %v6212 = vpop.f32.mrf.mxu0
        %6213 = vmatprep.mubr.f32.mxu0 0.0
        %6214 = vmatmul.mubr.f32.gmra.mxu0 %v6025
        %v6215 = vpop.f32.mrf.mxu0
        %v6216 = vadd.f32 %v6072, %v6215
        %v6217 = vpop.f32.mrf.mxu0
        %6218 = vmatprep.mubr.f32.mxu0 0.0
        %6219 = vmatmul.mubr.f32.gmra.mxu0 %v6026
        %v6220 = vpop.f32.mrf.mxu0
        %v6221 = vadd.f32 %v6077, %v6220
        %v6222 = vpop.f32.mrf.mxu0
        %6223 = vmatprep.mubr.f32.mxu0 0.0
        %6224 = vmatmul.mubr.f32.gmra.mxu0 %v6027
        %v6225 = vpop.f32.mrf.mxu0
        %v6226 = vadd.f32 %v6082, %v6225
        %v6227 = vpop.f32.mrf.mxu0
        %6228 = vmatprep.mubr.f32.mxu0 0.0
        %6229 = vmatmul.mubr.f32.gmra.mxu0 %v6028
        %v6230 = vpop.f32.mrf.mxu0
        %v6231 = vadd.f32 %v6087, %v6230
        %v6232 = vpop.f32.mrf.mxu0
        %6233 = vmatprep.mubr.f32.mxu0 0.0
        %6234 = vmatmul.mubr.f32.gmra.mxu0 %v6029
        %v6235 = vpop.f32.mrf.mxu0
        %v6236 = vadd.f32 %v6092, %v6235
        %v6237 = vpop.f32.mrf.mxu0
        %6238 = vmatprep.mubr.f32.mxu0 0.0
        %6239 = vmatmul.mubr.f32.gmra.mxu0 %v6030
        %v6240 = vpop.f32.mrf.mxu0
        %v6241 = vadd.f32 %v6097, %v6240
        %v6242 = vpop.f32.mrf.mxu0
        %6243 = vmatprep.mubr.f32.mxu0 0.0
        %6244 = vmatmul.mubr.f32.gmra.mxu0 %v6031
        %v6245 = vpop.f32.mrf.mxu0
        %v6246 = vadd.f32 %v6102, %v6245
        %v6247 = vpop.f32.mrf.mxu0
        %6248 = vmatprep.mubr.f32.mxu0 0.0
        %6249 = vmatmul.mubr.f32.gmra.mxu0 %v6032
        %v6250 = vpop.f32.mrf.mxu0
        %v6251 = vadd.f32 %v6107, %v6250
        %v6252 = vpop.f32.mrf.mxu0
        %6253 = vmatprep.mubr.f32.mxu0 0.0
        %6254 = vmatmul.mubr.f32.gmra.mxu0 %v6033
        %v6255 = vpop.f32.mrf.mxu0
        %v6256 = vadd.f32 %v6112, %v6255
        %v6257 = vpop.f32.mrf.mxu0
        %6258 = vmatprep.mubr.f32.mxu0 0.0
        %6259 = vmatmul.mubr.f32.gmra.mxu0 %v6034
        %v6260 = vpop.f32.mrf.mxu0
        %v6261 = vadd.f32 %v6117, %v6260
        %v6262 = vpop.f32.mrf.mxu0
        %6263 = vmatprep.mubr.f32.mxu0 0.0
        %6264 = vmatmul.mubr.f32.gmra.mxu0 %v6035
        %v6265 = vpop.f32.mrf.mxu0
        %v6266 = vadd.f32 %v6122, %v6265
        %v6267 = vpop.f32.mrf.mxu0
        %6268 = vmatprep.mubr.f32.mxu0 0.0
        %6269 = vmatmul.mubr.f32.gmra.mxu0 %v6036
        %v6270 = vpop.f32.mrf.mxu0
        %v6271 = vadd.f32 %v6127, %v6270
        %v6272 = vpop.f32.mrf.mxu0
        %6273 = vmatprep.mubr.f32.mxu0 0.0
        %6274 = vmatmul.mubr.f32.gmra.mxu0 %v6037
        %v6275 = vpop.f32.mrf.mxu0
        %v6276 = vadd.f32 %v6132, %v6275
        %v6277 = vpop.f32.mrf.mxu0
        %6278 = vdwg.mxu0
        %v6279 = vmul.f32 %v6201, 0.5
        %v6280 = vmul.f32 %v6206, 0.5
        %v6281 = vmul.f32 %v6211, 0.5
        %v6282 = vmul.f32 %v6216, 0.5
        %v6283 = vmul.f32 %v6221, 0.5
        %v6284 = vmul.f32 %v6226, 0.5
        %v6285 = vmul.f32 %v6231, 0.5
        %v6286 = vmul.f32 %v6236, 0.5
        %v6287 = vmul.f32 %v6241, 0.5
        %v6288 = vmul.f32 %v6246, 0.5
        %v6289 = vmul.f32 %v6251, 0.5
        %v6290 = vmul.f32 %v6256, 0.5
        %v6291 = vmul.f32 %v6261, 0.5
        %v6292 = vmul.f32 %v6266, 0.5
        %v6293 = vmul.f32 %v6271, 0.5
        %v6294 = vmul.f32 %v6276, 0.5
        %v6295 = vmul.f32 %v6201, 0.044715
        %v6296 = vmul.f32 %v6206, 0.044715
        %v6297 = vmul.f32 %v6211, 0.044715
        %v6298 = vmul.f32 %v6216, 0.044715
        %v6299 = vmul.f32 %v6221, 0.044715
        %v6300 = vmul.f32 %v6226, 0.044715
        %v6301 = vmul.f32 %v6231, 0.044715
        %v6302 = vmul.f32 %v6236, 0.044715
        %v6303 = vmul.f32 %v6241, 0.044715
        %v6304 = vmul.f32 %v6246, 0.044715
        %v6305 = vmul.f32 %v6251, 0.044715
        %v6306 = vmul.f32 %v6256, 0.044715
        %v6307 = vmul.f32 %v6261, 0.044715
        %v6308 = vmul.f32 %v6266, 0.044715
        %v6309 = vmul.f32 %v6271, 0.044715
        %v6310 = vmul.f32 %v6276, 0.044715
        %v6311 = vmul.f32 %v6295, %v6201
        %v6312 = vmul.f32 %v6296, %v6206
        %v6313 = vmul.f32 %v6297, %v6211
        %v6314 = vmul.f32 %v6298, %v6216
        %v6315 = vmul.f32 %v6299, %v6221
        %v6316 = vmul.f32 %v6300, %v6226
        %v6317 = vmul.f32 %v6301, %v6231
        %v6318 = vmul.f32 %v6302, %v6236
        %v6319 = vmul.f32 %v6303, %v6241
        %v6320 = vmul.f32 %v6304, %v6246
        %v6321 = vmul.f32 %v6305, %v6251
        %v6322 = vmul.f32 %v6306, %v6256
        %v6323 = vmul.f32 %v6307, %v6261
        %v6324 = vmul.f32 %v6308, %v6266
        %v6325 = vmul.f32 %v6309, %v6271
        %v6326 = vmul.f32 %v6310, %v6276
        %v6327 = vmul.f32 %v6311, %v6201
        %v6328 = vmul.f32 %v6312, %v6206
        %v6329 = vmul.f32 %v6313, %v6211
        %v6330 = vmul.f32 %v6314, %v6216
        %v6331 = vmul.f32 %v6315, %v6221
        %v6332 = vmul.f32 %v6316, %v6226
        %v6333 = vmul.f32 %v6317, %v6231
        %v6334 = vmul.f32 %v6318, %v6236
        %v6335 = vmul.f32 %v6319, %v6241
        %v6336 = vmul.f32 %v6320, %v6246
        %v6337 = vmul.f32 %v6321, %v6251
        %v6338 = vmul.f32 %v6322, %v6256
        %v6339 = vmul.f32 %v6323, %v6261
        %v6340 = vmul.f32 %v6324, %v6266
        %v6341 = vmul.f32 %v6325, %v6271
        %v6342 = vmul.f32 %v6326, %v6276
        %v6343 = vadd.f32 %v6201, %v6327
        %v6344 = vadd.f32 %v6206, %v6328
        %v6345 = vadd.f32 %v6211, %v6329
        %v6346 = vadd.f32 %v6216, %v6330
        %v6347 = vadd.f32 %v6221, %v6331
        %v6348 = vadd.f32 %v6226, %v6332
        %v6349 = vadd.f32 %v6231, %v6333
        %v6350 = vadd.f32 %v6236, %v6334
        %v6351 = vadd.f32 %v6241, %v6335
        %v6352 = vadd.f32 %v6246, %v6336
        %v6353 = vadd.f32 %v6251, %v6337
        %v6354 = vadd.f32 %v6256, %v6338
        %v6355 = vadd.f32 %v6261, %v6339
        %v6356 = vadd.f32 %v6266, %v6340
        %v6357 = vadd.f32 %v6271, %v6341
        %v6358 = vadd.f32 %v6276, %v6342
        %v6359 = vmul.f32 %v6343, 0.7978846
        %v6360 = vmul.f32 %v6344, 0.7978846
        %v6361 = vmul.f32 %v6345, 0.7978846
        %v6362 = vmul.f32 %v6346, 0.7978846
        %v6363 = vmul.f32 %v6347, 0.7978846
        %v6364 = vmul.f32 %v6348, 0.7978846
        %v6365 = vmul.f32 %v6349, 0.7978846
        %v6366 = vmul.f32 %v6350, 0.7978846
        %v6367 = vmul.f32 %v6351, 0.7978846
        %v6368 = vmul.f32 %v6352, 0.7978846
        %v6369 = vmul.f32 %v6353, 0.7978846
        %v6370 = vmul.f32 %v6354, 0.7978846
        %v6371 = vmul.f32 %v6355, 0.7978846
        %v6372 = vmul.f32 %v6356, 0.7978846
        %v6373 = vmul.f32 %v6357, 0.7978846
        %v6374 = vmul.f32 %v6358, 0.7978846
        %v6375 = vtanh.pop %v6359
        %v6376 = vtanh.pop %v6360
        %v6377 = vtanh.pop %v6361
        %v6378 = vtanh.pop %v6362
        %v6379 = vtanh.pop %v6363
        %v6380 = vtanh.pop %v6364
        %v6381 = vtanh.pop %v6365
        %v6382 = vtanh.pop %v6366
        %v6383 = vtanh.pop %v6367
        %v6384 = vtanh.pop %v6368
        %v6385 = vtanh.pop %v6369
        %v6386 = vtanh.pop %v6370
        %v6387 = vtanh.pop %v6371
        %v6388 = vtanh.pop %v6372
        %v6389 = vtanh.pop %v6373
        %v6390 = vtanh.pop %v6374
        %v6391 = vadd.f32 %v6375, 1.0
        %v6392 = vadd.f32 %v6376, 1.0
        %v6393 = vadd.f32 %v6377, 1.0
        %v6394 = vadd.f32 %v6378, 1.0
        %v6395 = vadd.f32 %v6379, 1.0
        %v6396 = vadd.f32 %v6380, 1.0
        %v6397 = vadd.f32 %v6381, 1.0
        %v6398 = vadd.f32 %v6382, 1.0
        %v6399 = vadd.f32 %v6383, 1.0
        %v6400 = vadd.f32 %v6384, 1.0
        %v6401 = vadd.f32 %v6385, 1.0
        %v6402 = vadd.f32 %v6386, 1.0
        %v6403 = vadd.f32 %v6387, 1.0
        %v6404 = vadd.f32 %v6388, 1.0
        %v6405 = vadd.f32 %v6389, 1.0
        %v6406 = vadd.f32 %v6390, 1.0
        %v6407 = vmul.f32 %v6279, %v6391
        %v6408 = vmul.f32 %v6280, %v6392
        %v6409 = vmul.f32 %v6281, %v6393
        %v6410 = vmul.f32 %v6282, %v6394
        %v6411 = vmul.f32 %v6283, %v6395
        %v6412 = vmul.f32 %v6284, %v6396
        %v6413 = vmul.f32 %v6285, %v6397
        %v6414 = vmul.f32 %v6286, %v6398
        %v6415 = vmul.f32 %v6287, %v6399
        %v6416 = vmul.f32 %v6288, %v6400
        %v6417 = vmul.f32 %v6289, %v6401
        %v6418 = vmul.f32 %v6290, %v6402
        %v6419 = vmul.f32 %v6291, %v6403
        %v6420 = vmul.f32 %v6292, %v6404
        %v6421 = vmul.f32 %v6293, %v6405
        %v6422 = vmul.f32 %v6294, %v6406
        %v6423 = vadd.f32 %v6006, %v6407
        %v6424 = vadd.f32 %v6007, %v6408
        %v6425 = vadd.f32 %v6008, %v6409
        %v6426 = vadd.f32 %v6009, %v6410
        %v6427 = vadd.f32 %v6010, %v6411
        %v6428 = vadd.f32 %v6011, %v6412
        %v6429 = vadd.f32 %v6012, %v6413
        %v6430 = vadd.f32 %v6013, %v6414
        %v6431 = vadd.f32 %v6014, %v6415
        %v6432 = vadd.f32 %v6015, %v6416
        %v6433 = vadd.f32 %v6016, %v6417
        %v6434 = vadd.f32 %v6017, %v6418
        %v6435 = vadd.f32 %v6018, %v6419
        %v6436 = vadd.f32 %v6019, %v6420
        %v6437 = vadd.f32 %v6020, %v6421
        %v6438 = vadd.f32 %v6021, %v6422
        %s6439 = scalar_lea.vmem [#allocation2], 128
        %v6440 = vld [vmem:[%s6439] sm:$0xff]
        %v6441 = vld [vmem:[%s6439 + $0x8] sm:$0xff]
        %v6442 = vld [vmem:[%s6439 + $0x10] sm:$0xff]
        %v6443 = vld [vmem:[%s6439 + $0x18] sm:$0xff]
        %v6444 = vld [vmem:[%s6439 + $0x20] sm:$0xff]
        %v6445 = vld [vmem:[%s6439 + $0x28] sm:$0xff]
        %v6446 = vld [vmem:[%s6439 + $0x30] sm:$0xff]
        %v6447 = vld [vmem:[%s6439 + $0x38] sm:$0xff]
        %v6448 = vld [vmem:[%s6439 + $0x40] sm:$0xff]
        %v6449 = vld [vmem:[%s6439 + $0x48] sm:$0xff]
        %v6450 = vld [vmem:[%s6439 + $0x50] sm:$0xff]
        %v6451 = vld [vmem:[%s6439 + $0x58] sm:$0xff]
        %v6452 = vld [vmem:[%s6439 + $0x60] sm:$0xff]
        %v6453 = vld [vmem:[%s6439 + $0x68] sm:$0xff]
        %v6454 = vld [vmem:[%s6439 + $0x70] sm:$0xff]
        %v6455 = vld [vmem:[%s6439 + $0x78] sm:$0xff]
        %s6456 = scalar_lea.vmem %s6, 128
        %v6457 = vld [vmem:[%s6456] sm:$0xff]
        %v6458 = vld [vmem:[%s6456 + $0x8] sm:$0xff]
        %v6459 = vld [vmem:[%s6456 + $0x10] sm:$0xff]
        %v6460 = vld [vmem:[%s6456 + $0x18] sm:$0xff]
        %v6461 = vld [vmem:[%s6456 + $0x20] sm:$0xff]
        %v6462 = vld [vmem:[%s6456 + $0x28] sm:$0xff]
        %v6463 = vld [vmem:[%s6456 + $0x30] sm:$0xff]
        %v6464 = vld [vmem:[%s6456 + $0x38] sm:$0xff]
        %v6465 = vld [vmem:[%s6456 + $0x40] sm:$0xff]
        %v6466 = vld [vmem:[%s6456 + $0x48] sm:$0xff]
        %v6467 = vld [vmem:[%s6456 + $0x50] sm:$0xff]
        %v6468 = vld [vmem:[%s6456 + $0x58] sm:$0xff]
        %v6469 = vld [vmem:[%s6456 + $0x60] sm:$0xff]
        %v6470 = vld [vmem:[%s6456 + $0x68] sm:$0xff]
        %v6471 = vld [vmem:[%s6456 + $0x70] sm:$0xff]
        %v6472 = vld [vmem:[%s6456 + $0x78] sm:$0xff]
        %6474 = vset.pattern.permute.xlu0 0
        %6475 = vperm.xlu0 %6474, %v6457
        %v6476 = vpop.permute.xlu0 %6475
        %6479 = vset.pattern.permute.xlu0 0
        %6480 = vperm.xlu0 %6479, %v6458
        %v6481 = vpop.permute.xlu0 %6480
        %6484 = vset.pattern.permute.xlu0 0
        %6485 = vperm.xlu0 %6484, %v6459
        %v6486 = vpop.permute.xlu0 %6485
        %6489 = vset.pattern.permute.xlu0 0
        %6490 = vperm.xlu0 %6489, %v6460
        %v6491 = vpop.permute.xlu0 %6490
        %6494 = vset.pattern.permute.xlu0 0
        %6495 = vperm.xlu0 %6494, %v6461
        %v6496 = vpop.permute.xlu0 %6495
        %6499 = vset.pattern.permute.xlu0 0
        %6500 = vperm.xlu0 %6499, %v6462
        %v6501 = vpop.permute.xlu0 %6500
        %6504 = vset.pattern.permute.xlu0 0
        %6505 = vperm.xlu0 %6504, %v6463
        %v6506 = vpop.permute.xlu0 %6505
        %6509 = vset.pattern.permute.xlu0 0
        %6510 = vperm.xlu0 %6509, %v6464
        %v6511 = vpop.permute.xlu0 %6510
        %6514 = vset.pattern.permute.xlu0 0
        %6515 = vperm.xlu0 %6514, %v6465
        %v6516 = vpop.permute.xlu0 %6515
        %6519 = vset.pattern.permute.xlu0 0
        %6520 = vperm.xlu0 %6519, %v6466
        %v6521 = vpop.permute.xlu0 %6520
        %6524 = vset.pattern.permute.xlu0 0
        %6525 = vperm.xlu0 %6524, %v6467
        %v6526 = vpop.permute.xlu0 %6525
        %6529 = vset.pattern.permute.xlu0 0
        %6530 = vperm.xlu0 %6529, %v6468
        %v6531 = vpop.permute.xlu0 %6530
        %6534 = vset.pattern.permute.xlu0 0
        %6535 = vperm.xlu0 %6534, %v6469
        %v6536 = vpop.permute.xlu0 %6535
        %6539 = vset.pattern.permute.xlu0 0
        %6540 = vperm.xlu0 %6539, %v6470
        %v6541 = vpop.permute.xlu0 %6540
        %6544 = vset.pattern.permute.xlu0 0
        %6545 = vperm.xlu0 %6544, %v6471
        %v6546 = vpop.permute.xlu0 %6545
        %6549 = vset.pattern.permute.xlu0 0
        %6550 = vperm.xlu0 %6549, %v6472
        %v6551 = vpop.permute.xlu0 %6550
        %6553 = vmatprep.subr.mxu0 0.0
        %6554 = vmatpush1.msra.mxu0 %v6438
        %6555 = vmatprep.subr.mxu0 0.0
        %6556 = vmatpush1.msra.mxu0 %v6437
        %6557 = vmatprep.subr.mxu0 0.0
        %6558 = vmatpush1.msra.mxu0 %v6436
        %6559 = vmatprep.subr.mxu0 0.0
        %6560 = vmatpush1.msra.mxu0 %v6435
        %6561 = vmatprep.subr.mxu0 0.0
        %6562 = vmatpush1.msra.mxu0 %v6434
        %6563 = vmatprep.subr.mxu0 0.0
        %6564 = vmatpush1.msra.mxu0 %v6433
        %6565 = vmatprep.subr.mxu0 0.0
        %6566 = vmatpush1.msra.mxu0 %v6432
        %6567 = vmatprep.subr.mxu0 0.0
        %6568 = vmatpush1.msra.mxu0 %v6431
        %6569 = vmatprep.subr.mxu0 0.0
        %6570 = vmatpush1.msra.mxu0 %v6430
        %6571 = vmatprep.subr.mxu0 0.0
        %6572 = vmatpush1.msra.mxu0 %v6429
        %6573 = vmatprep.subr.mxu0 0.0
        %6574 = vmatpush1.msra.mxu0 %v6428
        %6575 = vmatprep.subr.mxu0 0.0
        %6576 = vmatpush1.msra.mxu0 %v6427
        %6577 = vmatprep.subr.mxu0 0.0
        %6578 = vmatpush1.msra.mxu0 %v6426
        %6579 = vmatprep.subr.mxu0 0.0
        %6580 = vmatpush1.msra.mxu0 %v6425
        %6581 = vmatprep.subr.mxu0 0.0
        %6582 = vmatpush1.msra.mxu0 %v6424
        %6583 = vmatprep.subr.mxu0 0.0
        %6584 = vmatpush1.msra.mxu0 %v6423
        %6585 = vmatprep.subr.mxu0 0.0
        %6586 = vmatpush2.msra.mxu0 0.0
        %6587 = vmatprep.subr.mxu0 0.0
        %6588 = vmatpush2.msra.mxu0 0.0
        %6589 = vmatprep.subr.mxu0 0.0
        %6590 = vmatpush2.msra.mxu0 0.0
        %6591 = vmatprep.subr.mxu0 0.0
        %6592 = vmatpush2.msra.mxu0 0.0
        %6593 = vmatprep.subr.mxu0 0.0
        %6594 = vmatpush2.msra.mxu0 0.0
        %6595 = vmatprep.subr.mxu0 0.0
        %6596 = vmatpush2.msra.mxu0 0.0
        %6597 = vmatprep.subr.mxu0 0.0
        %6598 = vmatpush2.msra.mxu0 0.0
        %6599 = vmatprep.subr.mxu0 0.0
        %6600 = vmatpush2.msra.mxu0 0.0
        %6601 = vmatprep.subr.mxu0 0.0
        %6602 = vmatpush2.msra.mxu0 0.0
        %6603 = vmatprep.subr.mxu0 0.0
        %6604 = vmatpush2.msra.mxu0 0.0
        %6605 = vmatprep.subr.mxu0 0.0
        %6606 = vmatpush2.msra.mxu0 0.0
        %6607 = vmatprep.subr.mxu0 0.0
        %6608 = vmatpush2.msra.mxu0 0.0
        %6609 = vmatprep.subr.mxu0 0.0
        %6610 = vmatpush2.msra.mxu0 0.0
        %6611 = vmatprep.subr.mxu0 0.0
        %6612 = vmatpush2.msra.mxu0 0.0
        %6613 = vmatprep.subr.mxu0 0.0
        %6614 = vmatpush2.msra.mxu0 0.0
        %6615 = vmatprep.subr.mxu0 0.0
        %6616 = vmatpush2.msra.mxu0 0.0
        %6617 = vmatprep.mubr.f32.mxu0 0.0
        %6618 = vmatmul.mubr.f32.gmra.mxu0 %v6440
        %v6619 = vpop.f32.mrf.mxu0
        %v6620 = vadd.f32 %v6476, %v6619
        %v6621 = vpop.f32.mrf.mxu0
        %6622 = vmatprep.mubr.f32.mxu0 0.0
        %6623 = vmatmul.mubr.f32.gmra.mxu0 %v6441
        %v6624 = vpop.f32.mrf.mxu0
        %v6625 = vadd.f32 %v6481, %v6624
        %v6626 = vpop.f32.mrf.mxu0
        %6627 = vmatprep.mubr.f32.mxu0 0.0
        %6628 = vmatmul.mubr.f32.gmra.mxu0 %v6442
        %v6629 = vpop.f32.mrf.mxu0
        %v6630 = vadd.f32 %v6486, %v6629
        %v6631 = vpop.f32.mrf.mxu0
        %6632 = vmatprep.mubr.f32.mxu0 0.0
        %6633 = vmatmul.mubr.f32.gmra.mxu0 %v6443
        %v6634 = vpop.f32.mrf.mxu0
        %v6635 = vadd.f32 %v6491, %v6634
        %v6636 = vpop.f32.mrf.mxu0
        %6637 = vmatprep.mubr.f32.mxu0 0.0
        %6638 = vmatmul.mubr.f32.gmra.mxu0 %v6444
        %v6639 = vpop.f32.mrf.mxu0
        %v6640 = vadd.f32 %v6496, %v6639
        %v6641 = vpop.f32.mrf.mxu0
        %6642 = vmatprep.mubr.f32.mxu0 0.0
        %6643 = vmatmul.mubr.f32.gmra.mxu0 %v6445
        %v6644 = vpop.f32.mrf.mxu0
        %v6645 = vadd.f32 %v6501, %v6644
        %v6646 = vpop.f32.mrf.mxu0
        %6647 = vmatprep.mubr.f32.mxu0 0.0
        %6648 = vmatmul.mubr.f32.gmra.mxu0 %v6446
        %v6649 = vpop.f32.mrf.mxu0
        %v6650 = vadd.f32 %v6506, %v6649
        %v6651 = vpop.f32.mrf.mxu0
        %6652 = vmatprep.mubr.f32.mxu0 0.0
        %6653 = vmatmul.mubr.f32.gmra.mxu0 %v6447
        %v6654 = vpop.f32.mrf.mxu0
        %v6655 = vadd.f32 %v6511, %v6654
        %v6656 = vpop.f32.mrf.mxu0
        %6657 = vmatprep.mubr.f32.mxu0 0.0
        %6658 = vmatmul.mubr.f32.gmra.mxu0 %v6448
        %v6659 = vpop.f32.mrf.mxu0
        %v6660 = vadd.f32 %v6516, %v6659
        %v6661 = vpop.f32.mrf.mxu0
        %6662 = vmatprep.mubr.f32.mxu0 0.0
        %6663 = vmatmul.mubr.f32.gmra.mxu0 %v6449
        %v6664 = vpop.f32.mrf.mxu0
        %v6665 = vadd.f32 %v6521, %v6664
        %v6666 = vpop.f32.mrf.mxu0
        %6667 = vmatprep.mubr.f32.mxu0 0.0
        %6668 = vmatmul.mubr.f32.gmra.mxu0 %v6450
        %v6669 = vpop.f32.mrf.mxu0
        %v6670 = vadd.f32 %v6526, %v6669
        %v6671 = vpop.f32.mrf.mxu0
        %6672 = vmatprep.mubr.f32.mxu0 0.0
        %6673 = vmatmul.mubr.f32.gmra.mxu0 %v6451
        %v6674 = vpop.f32.mrf.mxu0
        %v6675 = vadd.f32 %v6531, %v6674
        %v6676 = vpop.f32.mrf.mxu0
        %6677 = vmatprep.mubr.f32.mxu0 0.0
        %6678 = vmatmul.mubr.f32.gmra.mxu0 %v6452
        %v6679 = vpop.f32.mrf.mxu0
        %v6680 = vadd.f32 %v6536, %v6679
        %v6681 = vpop.f32.mrf.mxu0
        %6682 = vmatprep.mubr.f32.mxu0 0.0
        %6683 = vmatmul.mubr.f32.gmra.mxu0 %v6453
        %v6684 = vpop.f32.mrf.mxu0
        %v6685 = vadd.f32 %v6541, %v6684
        %v6686 = vpop.f32.mrf.mxu0
        %6687 = vmatprep.mubr.f32.mxu0 0.0
        %6688 = vmatmul.mubr.f32.gmra.mxu0 %v6454
        %v6689 = vpop.f32.mrf.mxu0
        %v6690 = vadd.f32 %v6546, %v6689
        %v6691 = vpop.f32.mrf.mxu0
        %6692 = vmatprep.mubr.f32.mxu0 0.0
        %6693 = vmatmul.mubr.f32.gmra.mxu0 %v6455
        %v6694 = vpop.f32.mrf.mxu0
        %v6695 = vadd.f32 %v6551, %v6694
        %v6696 = vpop.f32.mrf.mxu0
        %6697 = vdwg.mxu0
        %v6698 = vmul.f32 %v6620, 0.5
        %v6699 = vmul.f32 %v6625, 0.5
        %v6700 = vmul.f32 %v6630, 0.5
        %v6701 = vmul.f32 %v6635, 0.5
        %v6702 = vmul.f32 %v6640, 0.5
        %v6703 = vmul.f32 %v6645, 0.5
        %v6704 = vmul.f32 %v6650, 0.5
        %v6705 = vmul.f32 %v6655, 0.5
        %v6706 = vmul.f32 %v6660, 0.5
        %v6707 = vmul.f32 %v6665, 0.5
        %v6708 = vmul.f32 %v6670, 0.5
        %v6709 = vmul.f32 %v6675, 0.5
        %v6710 = vmul.f32 %v6680, 0.5
        %v6711 = vmul.f32 %v6685, 0.5
        %v6712 = vmul.f32 %v6690, 0.5
        %v6713 = vmul.f32 %v6695, 0.5
        %v6714 = vmul.f32 %v6620, 0.044715
        %v6715 = vmul.f32 %v6625, 0.044715
        %v6716 = vmul.f32 %v6630, 0.044715
        %v6717 = vmul.f32 %v6635, 0.044715
        %v6718 = vmul.f32 %v6640, 0.044715
        %v6719 = vmul.f32 %v6645, 0.044715
        %v6720 = vmul.f32 %v6650, 0.044715
        %v6721 = vmul.f32 %v6655, 0.044715
        %v6722 = vmul.f32 %v6660, 0.044715
        %v6723 = vmul.f32 %v6665, 0.044715
        %v6724 = vmul.f32 %v6670, 0.044715
        %v6725 = vmul.f32 %v6675, 0.044715
        %v6726 = vmul.f32 %v6680, 0.044715
        %v6727 = vmul.f32 %v6685, 0.044715
        %v6728 = vmul.f32 %v6690, 0.044715
        %v6729 = vmul.f32 %v6695, 0.044715
        %v6730 = vmul.f32 %v6714, %v6620
        %v6731 = vmul.f32 %v6715, %v6625
        %v6732 = vmul.f32 %v6716, %v6630
        %v6733 = vmul.f32 %v6717, %v6635
        %v6734 = vmul.f32 %v6718, %v6640
        %v6735 = vmul.f32 %v6719, %v6645
        %v6736 = vmul.f32 %v6720, %v6650
        %v6737 = vmul.f32 %v6721, %v6655
        %v6738 = vmul.f32 %v6722, %v6660
        %v6739 = vmul.f32 %v6723, %v6665
        %v6740 = vmul.f32 %v6724, %v6670
        %v6741 = vmul.f32 %v6725, %v6675
        %v6742 = vmul.f32 %v6726, %v6680
        %v6743 = vmul.f32 %v6727, %v6685
        %v6744 = vmul.f32 %v6728, %v6690
        %v6745 = vmul.f32 %v6729, %v6695
        %v6746 = vmul.f32 %v6730, %v6620
        %v6747 = vmul.f32 %v6731, %v6625
        %v6748 = vmul.f32 %v6732, %v6630
        %v6749 = vmul.f32 %v6733, %v6635
        %v6750 = vmul.f32 %v6734, %v6640
        %v6751 = vmul.f32 %v6735, %v6645
        %v6752 = vmul.f32 %v6736, %v6650
        %v6753 = vmul.f32 %v6737, %v6655
        %v6754 = vmul.f32 %v6738, %v6660
        %v6755 = vmul.f32 %v6739, %v6665
        %v6756 = vmul.f32 %v6740, %v6670
        %v6757 = vmul.f32 %v6741, %v6675
        %v6758 = vmul.f32 %v6742, %v6680
        %v6759 = vmul.f32 %v6743, %v6685
        %v6760 = vmul.f32 %v6744, %v6690
        %v6761 = vmul.f32 %v6745, %v6695
        %v6762 = vadd.f32 %v6620, %v6746
        %v6763 = vadd.f32 %v6625, %v6747
        %v6764 = vadd.f32 %v6630, %v6748
        %v6765 = vadd.f32 %v6635, %v6749
        %v6766 = vadd.f32 %v6640, %v6750
        %v6767 = vadd.f32 %v6645, %v6751
        %v6768 = vadd.f32 %v6650, %v6752
        %v6769 = vadd.f32 %v6655, %v6753
        %v6770 = vadd.f32 %v6660, %v6754
        %v6771 = vadd.f32 %v6665, %v6755
        %v6772 = vadd.f32 %v6670, %v6756
        %v6773 = vadd.f32 %v6675, %v6757
        %v6774 = vadd.f32 %v6680, %v6758
        %v6775 = vadd.f32 %v6685, %v6759
        %v6776 = vadd.f32 %v6690, %v6760
        %v6777 = vadd.f32 %v6695, %v6761
        %v6778 = vmul.f32 %v6762, 0.7978846
        %v6779 = vmul.f32 %v6763, 0.7978846
        %v6780 = vmul.f32 %v6764, 0.7978846
        %v6781 = vmul.f32 %v6765, 0.7978846
        %v6782 = vmul.f32 %v6766, 0.7978846
        %v6783 = vmul.f32 %v6767, 0.7978846
        %v6784 = vmul.f32 %v6768, 0.7978846
        %v6785 = vmul.f32 %v6769, 0.7978846
        %v6786 = vmul.f32 %v6770, 0.7978846
        %v6787 = vmul.f32 %v6771, 0.7978846
        %v6788 = vmul.f32 %v6772, 0.7978846
        %v6789 = vmul.f32 %v6773, 0.7978846
        %v6790 = vmul.f32 %v6774, 0.7978846
        %v6791 = vmul.f32 %v6775, 0.7978846
        %v6792 = vmul.f32 %v6776, 0.7978846
        %v6793 = vmul.f32 %v6777, 0.7978846
        %v6794 = vtanh.pop %v6778
        %v6795 = vtanh.pop %v6779
        %v6796 = vtanh.pop %v6780
        %v6797 = vtanh.pop %v6781
        %v6798 = vtanh.pop %v6782
        %v6799 = vtanh.pop %v6783
        %v6800 = vtanh.pop %v6784
        %v6801 = vtanh.pop %v6785
        %v6802 = vtanh.pop %v6786
        %v6803 = vtanh.pop %v6787
        %v6804 = vtanh.pop %v6788
        %v6805 = vtanh.pop %v6789
        %v6806 = vtanh.pop %v6790
        %v6807 = vtanh.pop %v6791
        %v6808 = vtanh.pop %v6792
        %v6809 = vtanh.pop %v6793
        %v6810 = vadd.f32 %v6794, 1.0
        %v6811 = vadd.f32 %v6795, 1.0
        %v6812 = vadd.f32 %v6796, 1.0
        %v6813 = vadd.f32 %v6797, 1.0
        %v6814 = vadd.f32 %v6798, 1.0
        %v6815 = vadd.f32 %v6799, 1.0
        %v6816 = vadd.f32 %v6800, 1.0
        %v6817 = vadd.f32 %v6801, 1.0
        %v6818 = vadd.f32 %v6802, 1.0
        %v6819 = vadd.f32 %v6803, 1.0
        %v6820 = vadd.f32 %v6804, 1.0
        %v6821 = vadd.f32 %v6805, 1.0
        %v6822 = vadd.f32 %v6806, 1.0
        %v6823 = vadd.f32 %v6807, 1.0
        %v6824 = vadd.f32 %v6808, 1.0
        %v6825 = vadd.f32 %v6809, 1.0
        %v6826 = vmul.f32 %v6698, %v6810
        %v6827 = vmul.f32 %v6699, %v6811
        %v6828 = vmul.f32 %v6700, %v6812
        %v6829 = vmul.f32 %v6701, %v6813
        %v6830 = vmul.f32 %v6702, %v6814
        %v6831 = vmul.f32 %v6703, %v6815
        %v6832 = vmul.f32 %v6704, %v6816
        %v6833 = vmul.f32 %v6705, %v6817
        %v6834 = vmul.f32 %v6706, %v6818
        %v6835 = vmul.f32 %v6707, %v6819
        %v6836 = vmul.f32 %v6708, %v6820
        %v6837 = vmul.f32 %v6709, %v6821
        %v6838 = vmul.f32 %v6710, %v6822
        %v6839 = vmul.f32 %v6711, %v6823
        %v6840 = vmul.f32 %v6712, %v6824
        %v6841 = vmul.f32 %v6713, %v6825
        %v6842 = vadd.f32 %v6423, %v6826
        %v6843 = vadd.f32 %v6424, %v6827
        %v6844 = vadd.f32 %v6425, %v6828
        %v6845 = vadd.f32 %v6426, %v6829
        %v6846 = vadd.f32 %v6427, %v6830
        %v6847 = vadd.f32 %v6428, %v6831
        %v6848 = vadd.f32 %v6429, %v6832
        %v6849 = vadd.f32 %v6430, %v6833
        %v6850 = vadd.f32 %v6431, %v6834
        %v6851 = vadd.f32 %v6432, %v6835
        %v6852 = vadd.f32 %v6433, %v6836
        %v6853 = vadd.f32 %v6434, %v6837
        %v6854 = vadd.f32 %v6435, %v6838
        %v6855 = vadd.f32 %v6436, %v6839
        %v6856 = vadd.f32 %v6437, %v6840
        %v6857 = vadd.f32 %v6438, %v6841
        %s6858 = scalar_lea.vmem [#allocation2], 256
        %v6859 = vld [vmem:[%s6858] sm:$0xff]
        %v6860 = vld [vmem:[%s6858 + $0x8] sm:$0xff]
        %v6861 = vld [vmem:[%s6858 + $0x10] sm:$0xff]
        %v6862 = vld [vmem:[%s6858 + $0x18] sm:$0xff]
        %v6863 = vld [vmem:[%s6858 + $0x20] sm:$0xff]
        %v6864 = vld [vmem:[%s6858 + $0x28] sm:$0xff]
        %v6865 = vld [vmem:[%s6858 + $0x30] sm:$0xff]
        %v6866 = vld [vmem:[%s6858 + $0x38] sm:$0xff]
        %v6867 = vld [vmem:[%s6858 + $0x40] sm:$0xff]
        %v6868 = vld [vmem:[%s6858 + $0x48] sm:$0xff]
        %v6869 = vld [vmem:[%s6858 + $0x50] sm:$0xff]
        %v6870 = vld [vmem:[%s6858 + $0x58] sm:$0xff]
        %v6871 = vld [vmem:[%s6858 + $0x60] sm:$0xff]
        %v6872 = vld [vmem:[%s6858 + $0x68] sm:$0xff]
        %v6873 = vld [vmem:[%s6858 + $0x70] sm:$0xff]
        %v6874 = vld [vmem:[%s6858 + $0x78] sm:$0xff]
        %s6875 = scalar_lea.vmem %s6, 256
        %v6876 = vld [vmem:[%s6875] sm:$0xff]
        %v6877 = vld [vmem:[%s6875 + $0x8] sm:$0xff]
        %v6878 = vld [vmem:[%s6875 + $0x10] sm:$0xff]
        %v6879 = vld [vmem:[%s6875 + $0x18] sm:$0xff]
        %v6880 = vld [vmem:[%s6875 + $0x20] sm:$0xff]
        %v6881 = vld [vmem:[%s6875 + $0x28] sm:$0xff]
        %v6882 = vld [vmem:[%s6875 + $0x30] sm:$0xff]
        %v6883 = vld [vmem:[%s6875 + $0x38] sm:$0xff]
        %v6884 = vld [vmem:[%s6875 + $0x40] sm:$0xff]
        %v6885 = vld [vmem:[%s6875 + $0x48] sm:$0xff]
        %v6886 = vld [vmem:[%s6875 + $0x50] sm:$0xff]
        %v6887 = vld [vmem:[%s6875 + $0x58] sm:$0xff]
        %v6888 = vld [vmem:[%s6875 + $0x60] sm:$0xff]
        %v6889 = vld [vmem:[%s6875 + $0x68] sm:$0xff]
        %v6890 = vld [vmem:[%s6875 + $0x70] sm:$0xff]
        %v6891 = vld [vmem:[%s6875 + $0x78] sm:$0xff]
        %6893 = vset.pattern.permute.xlu0 0
        %6894 = vperm.xlu0 %6893, %v6876
        %v6895 = vpop.permute.xlu0 %6894
        %6898 = vset.pattern.permute.xlu0 0
        %6899 = vperm.xlu0 %6898, %v6877
        %v6900 = vpop.permute.xlu0 %6899
        %6903 = vset.pattern.permute.xlu0 0
        %6904 = vperm.xlu0 %6903, %v6878
        %v6905 = vpop.permute.xlu0 %6904
        %6908 = vset.pattern.permute.xlu0 0
        %6909 = vperm.xlu0 %6908, %v6879
        %v6910 = vpop.permute.xlu0 %6909
        %6913 = vset.pattern.permute.xlu0 0
        %6914 = vperm.xlu0 %6913, %v6880
        %v6915 = vpop.permute.xlu0 %6914
        %6918 = vset.pattern.permute.xlu0 0
        %6919 = vperm.xlu0 %6918, %v6881
        %v6920 = vpop.permute.xlu0 %6919
        %6923 = vset.pattern.permute.xlu0 0
        %6924 = vperm.xlu0 %6923, %v6882
        %v6925 = vpop.permute.xlu0 %6924
        %6928 = vset.pattern.permute.xlu0 0
        %6929 = vperm.xlu0 %6928, %v6883
        %v6930 = vpop.permute.xlu0 %6929
        %6933 = vset.pattern.permute.xlu0 0
        %6934 = vperm.xlu0 %6933, %v6884
        %v6935 = vpop.permute.xlu0 %6934
        %6938 = vset.pattern.permute.xlu0 0
        %6939 = vperm.xlu0 %6938, %v6885
        %v6940 = vpop.permute.xlu0 %6939
        %6943 = vset.pattern.permute.xlu0 0
        %6944 = vperm.xlu0 %6943, %v6886
        %v6945 = vpop.permute.xlu0 %6944
        %6948 = vset.pattern.permute.xlu0 0
        %6949 = vperm.xlu0 %6948, %v6887
        %v6950 = vpop.permute.xlu0 %6949
        %6953 = vset.pattern.permute.xlu0 0
        %6954 = vperm.xlu0 %6953, %v6888
        %v6955 = vpop.permute.xlu0 %6954
        %6958 = vset.pattern.permute.xlu0 0
        %6959 = vperm.xlu0 %6958, %v6889
        %v6960 = vpop.permute.xlu0 %6959
        %6963 = vset.pattern.permute.xlu0 0
        %6964 = vperm.xlu0 %6963, %v6890
        %v6965 = vpop.permute.xlu0 %6964
        %6968 = vset.pattern.permute.xlu0 0
        %6969 = vperm.xlu0 %6968, %v6891
        %v6970 = vpop.permute.xlu0 %6969
        %6972 = vmatprep.subr.mxu0 0.0
        %6973 = vmatpush1.msra.mxu0 %v6857
        %6974 = vmatprep.subr.mxu0 0.0
        %6975 = vmatpush1.msra.mxu0 %v6856
        %6976 = vmatprep.subr.mxu0 0.0
        %6977 = vmatpush1.msra.mxu0 %v6855
        %6978 = vmatprep.subr.mxu0 0.0
        %6979 = vmatpush1.msra.mxu0 %v6854
        %6980 = vmatprep.subr.mxu0 0.0
        %6981 = vmatpush1.msra.mxu0 %v6853
        %6982 = vmatprep.subr.mxu0 0.0
        %6983 = vmatpush1.msra.mxu0 %v6852
        %6984 = vmatprep.subr.mxu0 0.0
        %6985 = vmatpush1.msra.mxu0 %v6851
        %6986 = vmatprep.subr.mxu0 0.0
        %6987 = vmatpush1.msra.mxu0 %v6850
        %6988 = vmatprep.subr.mxu0 0.0
        %6989 = vmatpush1.msra.mxu0 %v6849
        %6990 = vmatprep.subr.mxu0 0.0
        %6991 = vmatpush1.msra.mxu0 %v6848
        %6992 = vmatprep.subr.mxu0 0.0
        %6993 = vmatpush1.msra.mxu0 %v6847
        %6994 = vmatprep.subr.mxu0 0.0
        %6995 = vmatpush1.msra.mxu0 %v6846
        %6996 = vmatprep.subr.mxu0 0.0
        %6997 = vmatpush1.msra.mxu0 %v6845
        %6998 = vmatprep.subr.mxu0 0.0
        %6999 = vmatpush1.msra.mxu0 %v6844
        %7000 = vmatprep.subr.mxu0 0.0
        %7001 = vmatpush1.msra.mxu0 %v6843
        %7002 = vmatprep.subr.mxu0 0.0
        %7003 = vmatpush1.msra.mxu0 %v6842
        %7004 = vmatprep.subr.mxu0 0.0
        %7005 = vmatpush2.msra.mxu0 0.0
        %7006 = vmatprep.subr.mxu0 0.0
        %7007 = vmatpush2.msra.mxu0 0.0
        %7008 = vmatprep.subr.mxu0 0.0
        %7009 = vmatpush2.msra.mxu0 0.0
        %7010 = vmatprep.subr.mxu0 0.0
        %7011 = vmatpush2.msra.mxu0 0.0
        %7012 = vmatprep.subr.mxu0 0.0
        %7013 = vmatpush2.msra.mxu0 0.0
        %7014 = vmatprep.subr.mxu0 0.0
        %7015 = vmatpush2.msra.mxu0 0.0
        %7016 = vmatprep.subr.mxu0 0.0
        %7017 = vmatpush2.msra.mxu0 0.0
        %7018 = vmatprep.subr.mxu0 0.0
        %7019 = vmatpush2.msra.mxu0 0.0
        %7020 = vmatprep.subr.mxu0 0.0
        %7021 = vmatpush2.msra.mxu0 0.0
        %7022 = vmatprep.subr.mxu0 0.0
        %7023 = vmatpush2.msra.mxu0 0.0
        %7024 = vmatprep.subr.mxu0 0.0
        %7025 = vmatpush2.msra.mxu0 0.0
        %7026 = vmatprep.subr.mxu0 0.0
        %7027 = vmatpush2.msra.mxu0 0.0
        %7028 = vmatprep.subr.mxu0 0.0
        %7029 = vmatpush2.msra.mxu0 0.0
        %7030 = vmatprep.subr.mxu0 0.0
        %7031 = vmatpush2.msra.mxu0 0.0
        %7032 = vmatprep.subr.mxu0 0.0
        %7033 = vmatpush2.msra.mxu0 0.0
        %7034 = vmatprep.subr.mxu0 0.0
        %7035 = vmatpush2.msra.mxu0 0.0
        %7036 = vmatprep.mubr.f32.mxu0 0.0
        %7037 = vmatmul.mubr.f32.gmra.mxu0 %v6859
        %v7038 = vpop.f32.mrf.mxu0
        %v7039 = vadd.f32 %v6895, %v7038
        %v7040 = vpop.f32.mrf.mxu0
        %7041 = vmatprep.mubr.f32.mxu0 0.0
        %7042 = vmatmul.mubr.f32.gmra.mxu0 %v6860
        %v7043 = vpop.f32.mrf.mxu0
        %v7044 = vadd.f32 %v6900, %v7043
        %v7045 = vpop.f32.mrf.mxu0
        %7046 = vmatprep.mubr.f32.mxu0 0.0
        %7047 = vmatmul.mubr.f32.gmra.mxu0 %v6861
        %v7048 = vpop.f32.mrf.mxu0
        %v7049 = vadd.f32 %v6905, %v7048
        %v7050 = vpop.f32.mrf.mxu0
        %7051 = vmatprep.mubr.f32.mxu0 0.0
        %7052 = vmatmul.mubr.f32.gmra.mxu0 %v6862
        %v7053 = vpop.f32.mrf.mxu0
        %v7054 = vadd.f32 %v6910, %v7053
        %v7055 = vpop.f32.mrf.mxu0
        %7056 = vmatprep.mubr.f32.mxu0 0.0
        %7057 = vmatmul.mubr.f32.gmra.mxu0 %v6863
        %v7058 = vpop.f32.mrf.mxu0
        %v7059 = vadd.f32 %v6915, %v7058
        %v7060 = vpop.f32.mrf.mxu0
        %7061 = vmatprep.mubr.f32.mxu0 0.0
        %7062 = vmatmul.mubr.f32.gmra.mxu0 %v6864
        %v7063 = vpop.f32.mrf.mxu0
        %v7064 = vadd.f32 %v6920, %v7063
        %v7065 = vpop.f32.mrf.mxu0
        %7066 = vmatprep.mubr.f32.mxu0 0.0
        %7067 = vmatmul.mubr.f32.gmra.mxu0 %v6865
        %v7068 = vpop.f32.mrf.mxu0
        %v7069 = vadd.f32 %v6925, %v7068
        %v7070 = vpop.f32.mrf.mxu0
        %7071 = vmatprep.mubr.f32.mxu0 0.0
        %7072 = vmatmul.mubr.f32.gmra.mxu0 %v6866
        %v7073 = vpop.f32.mrf.mxu0
        %v7074 = vadd.f32 %v6930, %v7073
        %v7075 = vpop.f32.mrf.mxu0
        %7076 = vmatprep.mubr.f32.mxu0 0.0
        %7077 = vmatmul.mubr.f32.gmra.mxu0 %v6867
        %v7078 = vpop.f32.mrf.mxu0
        %v7079 = vadd.f32 %v6935, %v7078
        %v7080 = vpop.f32.mrf.mxu0
        %7081 = vmatprep.mubr.f32.mxu0 0.0
        %7082 = vmatmul.mubr.f32.gmra.mxu0 %v6868
        %v7083 = vpop.f32.mrf.mxu0
        %v7084 = vadd.f32 %v6940, %v7083
        %v7085 = vpop.f32.mrf.mxu0
        %7086 = vmatprep.mubr.f32.mxu0 0.0
        %7087 = vmatmul.mubr.f32.gmra.mxu0 %v6869
        %v7088 = vpop.f32.mrf.mxu0
        %v7089 = vadd.f32 %v6945, %v7088
        %v7090 = vpop.f32.mrf.mxu0
        %7091 = vmatprep.mubr.f32.mxu0 0.0
        %7092 = vmatmul.mubr.f32.gmra.mxu0 %v6870
        %v7093 = vpop.f32.mrf.mxu0
        %v7094 = vadd.f32 %v6950, %v7093
        %v7095 = vpop.f32.mrf.mxu0
        %7096 = vmatprep.mubr.f32.mxu0 0.0
        %7097 = vmatmul.mubr.f32.gmra.mxu0 %v6871
        %v7098 = vpop.f32.mrf.mxu0
        %v7099 = vadd.f32 %v6955, %v7098
        %v7100 = vpop.f32.mrf.mxu0
        %7101 = vmatprep.mubr.f32.mxu0 0.0
        %7102 = vmatmul.mubr.f32.gmra.mxu0 %v6872
        %v7103 = vpop.f32.mrf.mxu0
        %v7104 = vadd.f32 %v6960, %v7103
        %v7105 = vpop.f32.mrf.mxu0
        %7106 = vmatprep.mubr.f32.mxu0 0.0
        %7107 = vmatmul.mubr.f32.gmra.mxu0 %v6873
        %v7108 = vpop.f32.mrf.mxu0
        %v7109 = vadd.f32 %v6965, %v7108
        %v7110 = vpop.f32.mrf.mxu0
        %7111 = vmatprep.mubr.f32.mxu0 0.0
        %7112 = vmatmul.mubr.f32.gmra.mxu0 %v6874
        %v7113 = vpop.f32.mrf.mxu0
        %v7114 = vadd.f32 %v6970, %v7113
        %v7115 = vpop.f32.mrf.mxu0
        %7116 = vdwg.mxu0
        %v7117 = vmul.f32 %v7039, 0.5
        %v7118 = vmul.f32 %v7044, 0.5
        %v7119 = vmul.f32 %v7049, 0.5
        %v7120 = vmul.f32 %v7054, 0.5
        %v7121 = vmul.f32 %v7059, 0.5
        %v7122 = vmul.f32 %v7064, 0.5
        %v7123 = vmul.f32 %v7069, 0.5
        %v7124 = vmul.f32 %v7074, 0.5
        %v7125 = vmul.f32 %v7079, 0.5
        %v7126 = vmul.f32 %v7084, 0.5
        %v7127 = vmul.f32 %v7089, 0.5
        %v7128 = vmul.f32 %v7094, 0.5
        %v7129 = vmul.f32 %v7099, 0.5
        %v7130 = vmul.f32 %v7104, 0.5
        %v7131 = vmul.f32 %v7109, 0.5
        %v7132 = vmul.f32 %v7114, 0.5
        %v7133 = vmul.f32 %v7039, 0.044715
        %v7134 = vmul.f32 %v7044, 0.044715
        %v7135 = vmul.f32 %v7049, 0.044715
        %v7136 = vmul.f32 %v7054, 0.044715
        %v7137 = vmul.f32 %v7059, 0.044715
        %v7138 = vmul.f32 %v7064, 0.044715
        %v7139 = vmul.f32 %v7069, 0.044715
        %v7140 = vmul.f32 %v7074, 0.044715
        %v7141 = vmul.f32 %v7079, 0.044715
        %v7142 = vmul.f32 %v7084, 0.044715
        %v7143 = vmul.f32 %v7089, 0.044715
        %v7144 = vmul.f32 %v7094, 0.044715
        %v7145 = vmul.f32 %v7099, 0.044715
        %v7146 = vmul.f32 %v7104, 0.044715
        %v7147 = vmul.f32 %v7109, 0.044715
        %v7148 = vmul.f32 %v7114, 0.044715
        %v7149 = vmul.f32 %v7133, %v7039
        %v7150 = vmul.f32 %v7134, %v7044
        %v7151 = vmul.f32 %v7135, %v7049
        %v7152 = vmul.f32 %v7136, %v7054
        %v7153 = vmul.f32 %v7137, %v7059
        %v7154 = vmul.f32 %v7138, %v7064
        %v7155 = vmul.f32 %v7139, %v7069
        %v7156 = vmul.f32 %v7140, %v7074
        %v7157 = vmul.f32 %v7141, %v7079
        %v7158 = vmul.f32 %v7142, %v7084
        %v7159 = vmul.f32 %v7143, %v7089
        %v7160 = vmul.f32 %v7144, %v7094
        %v7161 = vmul.f32 %v7145, %v7099
        %v7162 = vmul.f32 %v7146, %v7104
        %v7163 = vmul.f32 %v7147, %v7109
        %v7164 = vmul.f32 %v7148, %v7114
        %v7165 = vmul.f32 %v7149, %v7039
        %v7166 = vmul.f32 %v7150, %v7044
        %v7167 = vmul.f32 %v7151, %v7049
        %v7168 = vmul.f32 %v7152, %v7054
        %v7169 = vmul.f32 %v7153, %v7059
        %v7170 = vmul.f32 %v7154, %v7064
        %v7171 = vmul.f32 %v7155, %v7069
        %v7172 = vmul.f32 %v7156, %v7074
        %v7173 = vmul.f32 %v7157, %v7079
        %v7174 = vmul.f32 %v7158, %v7084
        %v7175 = vmul.f32 %v7159, %v7089
        %v7176 = vmul.f32 %v7160, %v7094
        %v7177 = vmul.f32 %v7161, %v7099
        %v7178 = vmul.f32 %v7162, %v7104
        %v7179 = vmul.f32 %v7163, %v7109
        %v7180 = vmul.f32 %v7164, %v7114
        %v7181 = vadd.f32 %v7039, %v7165
        %v7182 = vadd.f32 %v7044, %v7166
        %v7183 = vadd.f32 %v7049, %v7167
        %v7184 = vadd.f32 %v7054, %v7168
        %v7185 = vadd.f32 %v7059, %v7169
        %v7186 = vadd.f32 %v7064, %v7170
        %v7187 = vadd.f32 %v7069, %v7171
        %v7188 = vadd.f32 %v7074, %v7172
        %v7189 = vadd.f32 %v7079, %v7173
        %v7190 = vadd.f32 %v7084, %v7174
        %v7191 = vadd.f32 %v7089, %v7175
        %v7192 = vadd.f32 %v7094, %v7176
        %v7193 = vadd.f32 %v7099, %v7177
        %v7194 = vadd.f32 %v7104, %v7178
        %v7195 = vadd.f32 %v7109, %v7179
        %v7196 = vadd.f32 %v7114, %v7180
        %v7197 = vmul.f32 %v7181, 0.7978846
        %v7198 = vmul.f32 %v7182, 0.7978846
        %v7199 = vmul.f32 %v7183, 0.7978846
        %v7200 = vmul.f32 %v7184, 0.7978846
        %v7201 = vmul.f32 %v7185, 0.7978846
        %v7202 = vmul.f32 %v7186, 0.7978846
        %v7203 = vmul.f32 %v7187, 0.7978846
        %v7204 = vmul.f32 %v7188, 0.7978846
        %v7205 = vmul.f32 %v7189, 0.7978846
        %v7206 = vmul.f32 %v7190, 0.7978846
        %v7207 = vmul.f32 %v7191, 0.7978846
        %v7208 = vmul.f32 %v7192, 0.7978846
        %v7209 = vmul.f32 %v7193, 0.7978846
        %v7210 = vmul.f32 %v7194, 0.7978846
        %v7211 = vmul.f32 %v7195, 0.7978846
        %v7212 = vmul.f32 %v7196, 0.7978846
        %v7213 = vtanh.pop %v7197
        %v7214 = vtanh.pop %v7198
        %v7215 = vtanh.pop %v7199
        %v7216 = vtanh.pop %v7200
        %v7217 = vtanh.pop %v7201
        %v7218 = vtanh.pop %v7202
        %v7219 = vtanh.pop %v7203
        %v7220 = vtanh.pop %v7204
        %v7221 = vtanh.pop %v7205
        %v7222 = vtanh.pop %v7206
        %v7223 = vtanh.pop %v7207
        %v7224 = vtanh.pop %v7208
        %v7225 = vtanh.pop %v7209
        %v7226 = vtanh.pop %v7210
        %v7227 = vtanh.pop %v7211
        %v7228 = vtanh.pop %v7212
        %v7229 = vadd.f32 %v7213, 1.0
        %v7230 = vadd.f32 %v7214, 1.0
        %v7231 = vadd.f32 %v7215, 1.0
        %v7232 = vadd.f32 %v7216, 1.0
        %v7233 = vadd.f32 %v7217, 1.0
        %v7234 = vadd.f32 %v7218, 1.0
        %v7235 = vadd.f32 %v7219, 1.0
        %v7236 = vadd.f32 %v7220, 1.0
        %v7237 = vadd.f32 %v7221, 1.0
        %v7238 = vadd.f32 %v7222, 1.0
        %v7239 = vadd.f32 %v7223, 1.0
        %v7240 = vadd.f32 %v7224, 1.0
        %v7241 = vadd.f32 %v7225, 1.0
        %v7242 = vadd.f32 %v7226, 1.0
        %v7243 = vadd.f32 %v7227, 1.0
        %v7244 = vadd.f32 %v7228, 1.0
        %v7245 = vmul.f32 %v7117, %v7229
        %v7246 = vmul.f32 %v7118, %v7230
        %v7247 = vmul.f32 %v7119, %v7231
        %v7248 = vmul.f32 %v7120, %v7232
        %v7249 = vmul.f32 %v7121, %v7233
        %v7250 = vmul.f32 %v7122, %v7234
        %v7251 = vmul.f32 %v7123, %v7235
        %v7252 = vmul.f32 %v7124, %v7236
        %v7253 = vmul.f32 %v7125, %v7237
        %v7254 = vmul.f32 %v7126, %v7238
        %v7255 = vmul.f32 %v7127, %v7239
        %v7256 = vmul.f32 %v7128, %v7240
        %v7257 = vmul.f32 %v7129, %v7241
        %v7258 = vmul.f32 %v7130, %v7242
        %v7259 = vmul.f32 %v7131, %v7243
        %v7260 = vmul.f32 %v7132, %v7244
        %v7261 = vadd.f32 %v6842, %v7245
        %v7262 = vadd.f32 %v6843, %v7246
        %v7263 = vadd.f32 %v6844, %v7247
        %v7264 = vadd.f32 %v6845, %v7248
        %v7265 = vadd.f32 %v6846, %v7249
        %v7266 = vadd.f32 %v6847, %v7250
        %v7267 = vadd.f32 %v6848, %v7251
        %v7268 = vadd.f32 %v6849, %v7252
        %v7269 = vadd.f32 %v6850, %v7253
        %v7270 = vadd.f32 %v6851, %v7254
        %v7271 = vadd.f32 %v6852, %v7255
        %v7272 = vadd.f32 %v6853, %v7256
        %v7273 = vadd.f32 %v6854, %v7257
        %v7274 = vadd.f32 %v6855, %v7258
        %v7275 = vadd.f32 %v6856, %v7259
        %v7276 = vadd.f32 %v6857, %v7260
        %v7277 = vld [vmem:[%s7] sm:$0x3]
        %v7278 = vld [vmem:[%s8] sm:$0x3]
        %7280 = vset.pattern.permute.xlu0 0
        %7281 = vperm.xlu0 %7280, %v7278
        %v7282 = vpop.permute.xlu0 %7281
        %7284 = vmatprep.subr.mxu0 0.0
        %7285 = vmatpush1.msra.mxu0 %v7276
        %7286 = vmatprep.subr.mxu0 0.0
        %7287 = vmatpush1.msra.mxu0 %v7275
        %7288 = vmatprep.subr.mxu0 0.0
        %7289 = vmatpush1.msra.mxu0 %v7274
        %7290 = vmatprep.subr.mxu0 0.0
        %7291 = vmatpush1.msra.mxu0 %v7273
        %7292 = vmatprep.subr.mxu0 0.0
        %7293 = vmatpush1.msra.mxu0 %v7272
        %7294 = vmatprep.subr.mxu0 0.0
        %7295 = vmatpush1.msra.mxu0 %v7271
        %7296 = vmatprep.subr.mxu0 0.0
        %7297 = vmatpush1.msra.mxu0 %v7270
        %7298 = vmatprep.subr.mxu0 0.0
        %7299 = vmatpush1.msra.mxu0 %v7269
        %7300 = vmatprep.subr.mxu0 0.0
        %7301 = vmatpush1.msra.mxu0 %v7268
        %7302 = vmatprep.subr.mxu0 0.0
        %7303 = vmatpush1.msra.mxu0 %v7267
        %7304 = vmatprep.subr.mxu0 0.0
        %7305 = vmatpush1.msra.mxu0 %v7266
        %7306 = vmatprep.subr.mxu0 0.0
        %7307 = vmatpush1.msra.mxu0 %v7265
        %7308 = vmatprep.subr.mxu0 0.0
        %7309 = vmatpush1.msra.mxu0 %v7264
        %7310 = vmatprep.subr.mxu0 0.0
        %7311 = vmatpush1.msra.mxu0 %v7263
        %7312 = vmatprep.subr.mxu0 0.0
        %7313 = vmatpush1.msra.mxu0 %v7262
        %7314 = vmatprep.subr.mxu0 0.0
        %7315 = vmatpush1.msra.mxu0 %v7261
        %7316 = vmatprep.subr.mxu0 0.0
        %7317 = vmatpush2.msra.mxu0 0.0
        %7318 = vmatprep.subr.mxu0 0.0
        %7319 = vmatpush2.msra.mxu0 0.0
        %7320 = vmatprep.subr.mxu0 0.0
        %7321 = vmatpush2.msra.mxu0 0.0
        %7322 = vmatprep.subr.mxu0 0.0
        %7323 = vmatpush2.msra.mxu0 0.0
        %7324 = vmatprep.subr.mxu0 0.0
        %7325 = vmatpush2.msra.mxu0 0.0
        %7326 = vmatprep.subr.mxu0 0.0
        %7327 = vmatpush2.msra.mxu0 0.0
        %7328 = vmatprep.subr.mxu0 0.0
        %7329 = vmatpush2.msra.mxu0 0.0
        %7330 = vmatprep.subr.mxu0 0.0
        %7331 = vmatpush2.msra.mxu0 0.0
        %7332 = vmatprep.subr.mxu0 0.0
        %7333 = vmatpush2.msra.mxu0 0.0
        %7334 = vmatprep.subr.mxu0 0.0
        %7335 = vmatpush2.msra.mxu0 0.0
        %7336 = vmatprep.subr.mxu0 0.0
        %7337 = vmatpush2.msra.mxu0 0.0
        %7338 = vmatprep.subr.mxu0 0.0
        %7339 = vmatpush2.msra.mxu0 0.0
        %7340 = vmatprep.subr.mxu0 0.0
        %7341 = vmatpush2.msra.mxu0 0.0
        %7342 = vmatprep.subr.mxu0 0.0
        %7343 = vmatpush2.msra.mxu0 0.0
        %7344 = vmatprep.subr.mxu0 0.0
        %7345 = vmatpush2.msra.mxu0 0.0
        %7346 = vmatprep.subr.mxu0 0.0
        %7347 = vmatpush2.msra.mxu0 0.0
        %7348 = vmatprep.mubr.f32.mxu0 0.0
        %7349 = vmatmul.mubr.f32.gmra.mxu0 %v7277
        %v7350 = vpop.f32.mrf.mxu0
        %v7351 = vadd.f32 %v7282, %v7350
        %v7352 = vpop.f32.mrf.mxu0
        %7353 = vdwg.mxu0
        %7354 = vst [vmem:[%s338] sm:$0x3] %v7351
        %s7355 = sand.u32 %s226, 1
        %s7356 = scalar_lea.sflag [#allocation4], %s7355
        %s7357 = sand.u32 %s226, 1
        %s7358 = smul.addr %s7357, 2
        %s7359 = scalar_lea.vmem [#allocation5], %s7358
        // Predicated region
        $region61: #{tpu_custom_call.1} parent=55 // pred_check
          %p7360 = pneg %p236
        $region62: #{tpu_custom_call.1} parent=55 // pred_check_branch
          %7362 = sbr.rel (%p7360) target = $region64
        $region63: #{tpu_custom_call.1} parent=55 // pred_region
          %s7364 = ssub.s32 32, 32
          %7365 = vsyncadd %s7356, %s7364
          %s7366 = smul.addr %s24, 32
          %s7367 = scalar_lea.hbm %s9, %s7366
          %s7369 = sshll.u32 %s7359, 4
          %s7370 = int_to_ptr.vmem [resolvable:$true] %s7369
          %7372 = dma.vmem_to_hbm [thread:$0]  %s7370, 32, %s7367, %s7356
        $region64: #{tpu_custom_call.1} parent=55 // pred_fallthru
          _
      $region56: #{tpu_custom_call.1} parent=5 // pred_fallthru
        _
      %p7373 = scmp.le.s32.totalorder 2, %s19
      // Predicated region
      $region65: #{tpu_custom_call.1} parent=5 // pred_check
        %p7374 = pneg %p7373
      $region66: #{tpu_custom_call.1} parent=5 // pred_check_branch
        %7376 = sbr.rel (%p7374) target = $region68
      $region67: #{tpu_custom_call.1} parent=5 // pred_region
        %s7377 = ssub.s32 %s19, 2
        // Predicated region
        $region69: #{tpu_custom_call.1} parent=67 // pred_check
          %p7378 = pneg %p242
        $region70: #{tpu_custom_call.1} parent=67 // pred_check_branch
          %7380 = sbr.rel (%p7378) target = $region72
        $region71: #{tpu_custom_call.1} parent=67 // pred_region
          %s7381 = sand.u32 %s227, 1
          %s7382 = scalar_lea.sflag [#allocation4], %s7381
          %s7383 = sand.u32 %s227, 1
          %s7384 = smul.addr %s7383, 2
          %s7385 = scalar_lea.vmem [#allocation5], %s7384
          %7386 = dma.done %s7382, 32
        $region72: #{tpu_custom_call.1} parent=67 // pred_fallthru
          _
      $region68: #{tpu_custom_call.1} parent=5 // pred_fallthru
        _
    $region6: #{tpu_custom_call.1} parent=1 // loop_footer
      %s23 = sadd.s32 1, %s19
    $region7: #{tpu_custom_call.1} parent=1 // loop_footer_branch
      %18 = sbr.rel target = $region3
    $region8: #{tpu_custom_call.1} parent=1 // loop_exit
      _
    %7387 = vsyncpa [#allocation3], 1
    %s7388 = scalar_lea.sflag [#allocation3], 1
    %7389 = vsyncpa %s7388, 1
    %7390 = vsyncpa [#allocation4], 1
    %s7391 = scalar_lea.sflag [#allocation4], 1
    %7392 = vsyncpa %s7391, 1

</llo_original>
